<compile_context>
chip_gen: v6e
topology: v6e:2x2x1
jax: 0.10.0
libtpu: 0.0.40
codegen_flags: <defaults>
</compile_context>

<pallas_src>
import jax
import jax.numpy as jnp
from jax.experimental import pallas as pl
from jax.experimental.pallas import tpu as pltpu


_WOFF = 16  # column offset of the halo interior inside scratch (bf16 tile aligned)


# ---------------------------------------------------------------------------
# Fused kernel: [x2 | up(x1)] -> Conv3x3 -> BN -> ReLU -> Conv3x3 -> BN -> ReLU
# Conv is 9 shifted [H*W, Cin] x [Cin, Cout] MXU matmuls; halos live in VMEM.
# ---------------------------------------------------------------------------
def _up_doubleconv_kernel(x2_ref, x1p_ref, w1_ref, s1_ref, b1_ref,
                          w2_ref, s2_ref, b2_ref, o_ref, xcat_ref, hmid_ref):
    _, H, W, c_out = o_ref.shape
    c2 = x2_ref.shape[-1]
    c1 = x1p_ref.shape[-1]
    c_in = xcat_ref.shape[-1]           # == c1 + c2
    c_mid = hmid_ref.shape[-1]
    cdt = xcat_ref.dtype

    # --- 1-px conv halo: zero only the border cells the 3x3 taps read.
    # Per-step (cheap: ~2(H+W) cells vs H*W interior) instead of a
    # program_id==0 guard, so a second TensorCore starting at i>0 under the
    # "parallel" batch axis never sees an uninitialized halo.
    def zero_border(ref, c):
        zrow = jnp.zeros((1, W + 2, c), cdt)
        zcol = jnp.zeros((H, 1, c), cdt)
        ref[0:1, _WOFF - 1:_WOFF + W + 1, :] = zrow
        ref[H + 1:H + 2, _WOFF - 1:_WOFF + W + 1, :] = zrow
        ref[1:H + 1, _WOFF - 1:_WOFF, :] = zcol
        ref[1:H + 1, _WOFF + W:_WOFF + W + 1, :] = zcol

    zero_border(xcat_ref, c_in)
    zero_border(hmid_ref, c_mid)

    # --- in-VMEM channel concat [x2 | pad(up(x1))]: torch.cat never hits HBM.
    xcat_ref[1:H + 1, _WOFF:_WOFF + W, 0:c2] = x2_ref[0].astype(cdt)
    xcat_ref[1:H + 1, _WOFF:_WOFF + W, c2:c2 + c1] = x1p_ref[0].astype(cdt)

    # --- 3x3 conv (pad=1, no bias): one full-K bf16 MXU dot per tap; taps are
    #     ref slices of the halo scratch; per-dy partial accumulators for ILP.
    def conv3x3(src_ref, w_ref, k, n_out):
        acc = jnp.zeros((H * W, n_out), jnp.float32)
        for dy in range(3):
            part = jnp.zeros((H * W, n_out), jnp.float32)
            for dx in range(3):
                tap = src_ref[dy:dy + H, _WOFF - 1 + dx:_WOFF - 1 + dx + W, :]
                part = part + jnp.dot(tap.reshape(H * W, k), w_ref[dy, dx],
                                      preferred_element_type=jnp.float32)
            acc = acc + part
        return acc

    acc1 = conv3x3(xcat_ref, w1_ref, c_in, c_mid)
    h_mid = jnp.maximum(acc1 * s1_ref[...] + b1_ref[...], 0.0)  # folded BN + ReLU (f32)

    # --- conv2: the mid activation lives only in VMEM scratch (never in HBM).
    hmid_ref[1:H + 1, _WOFF:_WOFF + W, :] = h_mid.reshape(H, W, c_mid).astype(cdt)
    acc2 = conv3x3(hmid_ref, w2_ref, c_mid, c_out)
    y = jnp.maximum(acc2 * s2_ref[...] + b2_ref[...], 0.0)
    o_ref[0] = y.reshape(H, W, c_out).astype(o_ref.dtype)


# ---------------------------------------------------------------------------
# Separable bilinear (align_corners=True) interpolation matrices with the
# F.pad zero padding folded in as zero rows (conv halo comes from the scratch).
# ---------------------------------------------------------------------------
def _interp_matrix(n_in, n_out):
    if n_in == 1:
        return jnp.ones((n_out, 1), jnp.float32)
    pos = jnp.arange(n_out, dtype=jnp.float32) * (n_in - 1) / (n_out - 1)
    lo = jnp.clip(jnp.floor(pos).astype(jnp.int32), 0, n_in - 2)
    frac = pos - lo.astype(jnp.float32)
    rows = jnp.arange(n_out)
    m = jnp.zeros((n_out, n_in), jnp.float32)
    m = m.at[rows, lo].add(1.0 - frac)
    m = m.at[rows, lo + 1].add(frac)
    return m


def _padded_interp_matrix(n_in, n_up, n_total, offset):
    base = _interp_matrix(n_in, n_up)
    return jnp.concatenate([
        jnp.zeros((offset, n_in), jnp.float32),
        base,
        jnp.zeros((n_total - offset - n_up, n_in), jnp.float32),
    ], axis=0)


def _fold_bn(bn, eps=1e-5):
    scale = bn["gamma"] / jnp.sqrt(bn["var"] + eps)
    bias = bn["beta"] - bn["mean"] * scale
    return scale, bias


def init_params(key, in_channels, out_channels):
    mid = in_channels // 2
    ks = jax.random.split(key, 6)
    return {
        "w1": 0.1 * jax.random.normal(ks[0], (3, 3, in_channels, mid), jnp.float32),
        "w2": 0.1 * jax.random.normal(ks[1], (3, 3, mid, out_channels), jnp.float32),
        "bn1": {
            "gamma": 1.0 + 0.1 * jax.random.normal(ks[2], (mid,), jnp.float32),
            "beta": 0.1 * jax.random.normal(ks[3], (mid,), jnp.float32),
            "mean": jnp.zeros((mid,), jnp.float32),
            "var": jnp.ones((mid,), jnp.float32),
        },
        "bn2": {
            "gamma": 1.0 + 0.1 * jax.random.normal(ks[4], (out_channels,), jnp.float32),
            "beta": 0.1 * jax.random.normal(ks[5], (out_channels,), jnp.float32),
            "mean": jnp.zeros((out_channels,), jnp.float32),
            "var": jnp.ones((out_channels,), jnp.float32),
        },
    }


def up_forward_nhwc(x1_nhwc, x2_nhwc, params, *, compute_dtype=jnp.bfloat16):
    """Up.forward(x1, x2) with NHWC activations (preferred; no layout round-trips).

    MXU operands (weights / scratch / up(x1) slab) use `compute_dtype`
    (default bf16); accumulation and the BN+ReLU epilogue are f32.
    """
    n, h1, w1_in, c1 = x1_nhwc.shape
    n2, H, W, c2 = x2_nhwc.shape
    assert n == n2
    h_up, w_up = 2 * h1, 2 * w1_in
    diff_y, diff_x = H - h_up, W - w_up
    assert diff_y >= 0 and diff_x >= 0

    # Separable x2 upsample (align_corners=True) + F.pad folded into two tiny
    # interp matrices; runs as XLA contractions on the smallest tensor.
    # TODO(synk): folding the two interp matmuls into the kernel itself would
    # need in-kernel contractions over non-lane axes; kept in the wrapper.
    whp = _padded_interp_matrix(h1, h_up, H, diff_y // 2)
    wwp = _padded_interp_matrix(w1_in, w_up, W, diff_x // 2)
    x1p = jnp.einsum("pw,nhwc->nhpc", wwp, x1_nhwc.astype(jnp.float32))
    x1p = jnp.einsum("oh,nhpc->nopc", whp, x1p).astype(compute_dtype)  # (n,H,W,c1)

    w1 = params["w1"]
    w2 = params["w2"]
    c_in = w1.shape[2]
    c_mid = w1.shape[3]
    c_out = w2.shape[3]
    # Channel order in the VMEM concat is [x2 | x1], matching torch.cat([x2, x1], 1).
    assert c_in == c1 + c2
    s1, b1 = _fold_bn(params["bn1"])
    s2, b2 = _fold_bn(params["bn2"])

    in_bytes = jnp.dtype(x2_nhwc.dtype).itemsize
    cd_bytes = jnp.dtype(compute_dtype).itemsize
    wpad = _WOFF + W + 8  # scratch column extent (interior at _WOFF, 1-px halo)

    # Explicit VMEM budget (double-buffered blocks + persistent scratch + a
    # rough working-value bound); re-derive per TPU generation if tiling changes.
    block_bytes = (H * W * c2 * in_bytes + H * W * c1 * cd_bytes
                   + H * W * c_out * in_bytes
                   + 9 * (c_in * c_mid + c_mid * c_out) * cd_bytes
                   + 2 * (c_mid + c_out) * 4)
    scratch_bytes = (H + 2) * wpad * (c_in + c_mid) * cd_bytes
    work_bytes = 8 * H * W * max(c_in, c_mid, c_out) * 4
    vmem_limit = int(min(max(2 * block_bytes + scratch_bytes + work_bytes + (4 << 20),
                             32 << 20), 96 << 20))

    flops = 2 * n * H * W * 9 * (c_in * c_mid + c_mid * c_out)
    bytes_accessed = (n * H * W * c2 * in_bytes + n * H * W * c1 * cd_bytes
                      + 9 * (c_in * c_mid + c_mid * c_out) * cd_bytes
                      + 2 * (c_mid + c_out) * 4
                      + n * H * W * c_out * in_bytes)

    return pl.pallas_call(
        _up_doubleconv_kernel,
        out_shape=jax.ShapeDtypeStruct((n, H, W, c_out), x2_nhwc.dtype),
        grid=(n,),
        in_specs=[
            pl.BlockSpec((1, H, W, c2), lambda i: (i, 0, 0, 0)),
            pl.BlockSpec((1, H, W, c1), lambda i: (i, 0, 0, 0)),
            pl.BlockSpec((3, 3, c_in, c_mid), lambda i: (0, 0, 0, 0)),
            pl.BlockSpec((1, c_mid), lambda i: (0, 0)),
            pl.BlockSpec((1, c_mid), lambda i: (0, 0)),
            pl.BlockSpec((3, 3, c_mid, c_out), lambda i: (0, 0, 0, 0)),
            pl.BlockSpec((1, c_out), lambda i: (0, 0)),
            pl.BlockSpec((1, c_out), lambda i: (0, 0)),
        ],
        out_specs=pl.BlockSpec((1, H, W, c_out), lambda i: (i, 0, 0, 0)),
        scratch_shapes=[
            pltpu.VMEM((H + 2, wpad, c_in), compute_dtype),   # [x2 | up(x1)] + halo
            pltpu.VMEM((H + 2, wpad, c_mid), compute_dtype),  # mid activation + halo
        ],
        compiler_params=pltpu.CompilerParams(
            dimension_semantics=("parallel",),
            vmem_limit_bytes=vmem_limit),
        cost_estimate=pl.CostEstimate(flops=flops, transcendentals=0,
                                      bytes_accessed=bytes_accessed),
    )(x2_nhwc, x1p,
      w1.astype(compute_dtype),
      s1.reshape(1, c_mid).astype(jnp.float32), b1.reshape(1, c_mid).astype(jnp.float32),
      w2.astype(compute_dtype),
      s2.reshape(1, c_out).astype(jnp.float32), b2.reshape(1, c_out).astype(jnp.float32))


def up_forward(x1_nchw, x2_nchw, params):
    """Up.forward(x1, x2) — NCHW in/out to mirror the PyTorch reference.

    NOTE: callers that can use NHWC directly should call up_forward_nhwc and
    skip these two XLA transposes (each is a full HBM pass over the activations).
    """
    x1 = jnp.transpose(x1_nchw, (0, 2, 3, 1))
    x2 = jnp.transpose(x2_nchw, (0, 2, 3, 1))
    y = up_forward_nhwc(x1, x2, params)
    return jnp.transpose(y, (0, 3, 1, 2))


if __name__ == "__main__":
    key = jax.random.PRNGKey(0)
    in_channels, out_channels = 8, 4   # Up(8, 4, bilinear=True)
    n = 2
    k_x1, k_x2, k_p = jax.random.split(key, 3)

    # Standard UNet usage: x1 (deep, small) and x2 (skip, large) each carry
    # in_channels // 2 channels; the implicit concat restores in_channels.
    x1 = jax.random.normal(k_x1, (n, in_channels // 2, 8, 8), jnp.float32)
    x2 = jax.random.normal(k_x2, (n, in_channels // 2, 16, 16), jnp.float32)

    params = init_params(k_p, in_channels, out_channels)
    y = jax.jit(up_forward)(x1, x2, params)
    jax.block_until_ready(y)
    assert y.shape == (n, out_channels, 16, 16), y.shape
    print("KERNEL_OK")
</pallas_src>

<mosaic_0001>
module attributes {stable_mosaic.version = 11 : i64} {
  func.func private @main(%arg0: i32) attributes {dimension_semantics = [#tpu.dimension_semantics<core_parallel>], iteration_bounds = array<i64: 2>, tpu.core_type = #tpu.core_type<sc_scalar_subcore>, window_params = []} {
    return
  }
}

module attributes {stable_mosaic.version = 11 : i64} {
  func.func private @main(%arg0: i32) attributes {dimension_semantics = [#tpu.dimension_semantics<core_parallel>], iteration_bounds = array<i64: 2>, tpu.core_type = #tpu.core_type<sc_scalar_subcore>, window_params = []} {
    return
  }
}

module attributes {stable_mosaic.version = 11 : i64} {
  func.func @_up_doubleconv_kernel(%arg0: i32, %arg1: memref<1x16x16x4xf32, #tpu.memory_space<vmem>>, %arg2: memref<1x16x16x4xbf16, #tpu.memory_space<vmem>>, %arg3: memref<3x3x8x4xbf16, #tpu.memory_space<vmem>>, %arg4: memref<1x4xf32, #tpu.memory_space<vmem>>, %arg5: memref<1x4xf32, #tpu.memory_space<vmem>>, %arg6: memref<3x3x4x4xbf16, #tpu.memory_space<vmem>>, %arg7: memref<1x4xf32, #tpu.memory_space<vmem>>, %arg8: memref<1x4xf32, #tpu.memory_space<vmem>>, %arg9: memref<1x16x16x4xf32, #tpu.memory_space<vmem>>, %arg10: memref<18x40x8xbf16, #tpu.memory_space<vmem>>, %arg11: memref<18x40x4xbf16, #tpu.memory_space<vmem>>) attributes {dimension_semantics = [#tpu.dimension_semantics<parallel>], iteration_bounds = array<i64: 2>, scalar_prefetch = 0 : i64, scratch_operands = 2 : i64, tpu.core_type = #tpu.core_type<tc>, window_params = [{transform_indices = @transform_0, window_bounds = array<i64: 1, 16, 16, 4>}, {transform_indices = @transform_1, window_bounds = array<i64: 1, 16, 16, 4>}, {pipeline_mode = #tpu.pipeline_mode<synchronous>, transform_indices = @transform_2, window_bounds = array<i64: 3, 3, 8, 4>}, {pipeline_mode = #tpu.pipeline_mode<synchronous>, transform_indices = @transform_3, window_bounds = array<i64: 1, 4>}, {pipeline_mode = #tpu.pipeline_mode<synchronous>, transform_indices = @transform_4, window_bounds = array<i64: 1, 4>}, {pipeline_mode = #tpu.pipeline_mode<synchronous>, transform_indices = @transform_5, window_bounds = array<i64: 3, 3, 4, 4>}, {pipeline_mode = #tpu.pipeline_mode<synchronous>, transform_indices = @transform_6, window_bounds = array<i64: 1, 4>}, {pipeline_mode = #tpu.pipeline_mode<synchronous>, transform_indices = @transform_7, window_bounds = array<i64: 1, 4>}, {transform_indices = @transform_8, window_bounds = array<i64: 1, 16, 16, 4>}]} {
    %cst = arith.constant 0.000000e+00 : bf16
    %0 = vector.broadcast %cst : bf16 to vector<1x18x8xbf16>
    %cst_0 = arith.constant 0.000000e+00 : bf16
    %1 = vector.broadcast %cst_0 : bf16 to vector<16x1x8xbf16>
    %c0 = arith.constant 0 : index
    %c15 = arith.constant 15 : index
    %c0_1 = arith.constant 0 : index
    %2 = vector.load %arg10[%c0, %c15, %c0_1] : memref<18x40x8xbf16, #tpu.memory_space<vmem>>, vector<1x18x8xbf16>
    tpu.vector_store %arg10[%c0, %c15, %c0_1], %0 {strides = array<i32>} : memref<18x40x8xbf16, #tpu.memory_space<vmem>>, vector<1x18x8xbf16>,
    %c17 = arith.constant 17 : index
    %c15_2 = arith.constant 15 : index
    %c0_3 = arith.constant 0 : index
    %3 = vector.load %arg10[%c17, %c15_2, %c0_3] : memref<18x40x8xbf16, #tpu.memory_space<vmem>>, vector<1x18x8xbf16>
    tpu.vector_store %arg10[%c17, %c15_2, %c0_3], %0 {strides = array<i32>} : memref<18x40x8xbf16, #tpu.memory_space<vmem>>, vector<1x18x8xbf16>,
    %c1 = arith.constant 1 : index
    %c15_4 = arith.constant 15 : index
    %c0_5 = arith.constant 0 : index
    %4 = vector.load %arg10[%c1, %c15_4, %c0_5] : memref<18x40x8xbf16, #tpu.memory_space<vmem>>, vector<16x1x8xbf16>
    tpu.vector_store %arg10[%c1, %c15_4, %c0_5], %1 {strides = array<i32>} : memref<18x40x8xbf16, #tpu.memory_space<vmem>>, vector<16x1x8xbf16>,
    %c1_6 = arith.constant 1 : index
    %c32 = arith.constant 32 : index
    %c0_7 = arith.constant 0 : index
    %5 = vector.load %arg10[%c1_6, %c32, %c0_7] : memref<18x40x8xbf16, #tpu.memory_space<vmem>>, vector<16x1x8xbf16>
    tpu.vector_store %arg10[%c1_6, %c32, %c0_7], %1 {strides = array<i32>} : memref<18x40x8xbf16, #tpu.memory_space<vmem>>, vector<16x1x8xbf16>,
    %cst_8 = arith.constant 0.000000e+00 : bf16
    %6 = vector.broadcast %cst_8 : bf16 to vector<1x18x4xbf16>
    %cst_9 = arith.constant 0.000000e+00 : bf16
    %7 = vector.broadcast %cst_9 : bf16 to vector<16x1x4xbf16>
    %c0_10 = arith.constant 0 : index
    %c15_11 = arith.constant 15 : index
    %c0_12 = arith.constant 0 : index
    %8 = vector.load %arg11[%c0_10, %c15_11, %c0_12] : memref<18x40x4xbf16, #tpu.memory_space<vmem>>, vector<1x18x4xbf16>
    tpu.vector_store %arg11[%c0_10, %c15_11, %c0_12], %6 {strides = array<i32>} : memref<18x40x4xbf16, #tpu.memory_space<vmem>>, vector<1x18x4xbf16>,
    %c17_13 = arith.constant 17 : index
    %c15_14 = arith.constant 15 : index
    %c0_15 = arith.constant 0 : index
    %9 = vector.load %arg11[%c17_13, %c15_14, %c0_15] : memref<18x40x4xbf16, #tpu.memory_space<vmem>>, vector<1x18x4xbf16>
    tpu.vector_store %arg11[%c17_13, %c15_14, %c0_15], %6 {strides = array<i32>} : memref<18x40x4xbf16, #tpu.memory_space<vmem>>, vector<1x18x4xbf16>,
    %c1_16 = arith.constant 1 : index
    %c15_17 = arith.constant 15 : index
    %c0_18 = arith.constant 0 : index
    %10 = vector.load %arg11[%c1_16, %c15_17, %c0_18] : memref<18x40x4xbf16, #tpu.memory_space<vmem>>, vector<16x1x4xbf16>
    tpu.vector_store %arg11[%c1_16, %c15_17, %c0_18], %7 {strides = array<i32>} : memref<18x40x4xbf16, #tpu.memory_space<vmem>>, vector<16x1x4xbf16>,
    %c1_19 = arith.constant 1 : index
    %c32_20 = arith.constant 32 : index
    %c0_21 = arith.constant 0 : index
    %11 = vector.load %arg11[%c1_19, %c32_20, %c0_21] : memref<18x40x4xbf16, #tpu.memory_space<vmem>>, vector<16x1x4xbf16>
    tpu.vector_store %arg11[%c1_19, %c32_20, %c0_21], %7 {strides = array<i32>} : memref<18x40x4xbf16, #tpu.memory_space<vmem>>, vector<16x1x4xbf16>,
    %c0_22 = arith.constant 0 : index
    %c0_23 = arith.constant 0 : index
    %c0_24 = arith.constant 0 : index
    %c0_25 = arith.constant 0 : index
    %12 = vector.load %arg1[%c0_22, %c0_23, %c0_24, %c0_25] : memref<1x16x16x4xf32, #tpu.memory_space<vmem>>, vector<1x16x16x4xf32>
    %13 = vector.shape_cast %12 : vector<1x16x16x4xf32> to vector<16x16x4xf32>
    %14 = arith.truncf %13 : vector<16x16x4xf32> to vector<16x16x4xbf16>
    %c1_26 = arith.constant 1 : index
    %c16 = arith.constant 16 : index
    %c0_27 = arith.constant 0 : index
    %15 = vector.load %arg10[%c1_26, %c16, %c0_27] : memref<18x40x8xbf16, #tpu.memory_space<vmem>>, vector<16x16x4xbf16>
    tpu.vector_store %arg10[%c1_26, %c16, %c0_27], %14 {strides = array<i32>} : memref<18x40x8xbf16, #tpu.memory_space<vmem>>, vector<16x16x4xbf16>,
    %c0_28 = arith.constant 0 : index
    %c0_29 = arith.constant 0 : index
    %c0_30 = arith.constant 0 : index
    %c0_31 = arith.constant 0 : index
    %16 = vector.load %arg2[%c0_28, %c0_29, %c0_30, %c0_31] : memref<1x16x16x4xbf16, #tpu.memory_space<vmem>>, vector<1x16x16x4xbf16>
    %17 = vector.shape_cast %16 : vector<1x16x16x4xbf16> to vector<16x16x4xbf16>
    %c1_32 = arith.constant 1 : index
    %c16_33 = arith.constant 16 : index
    %c4 = arith.constant 4 : index
    %18 = vector.load %arg10[%c1_32, %c16_33, %c4] : memref<18x40x8xbf16, #tpu.memory_space<vmem>>, vector<16x16x4xbf16>
    tpu.vector_store %arg10[%c1_32, %c16_33, %c4], %17 {strides = array<i32>} : memref<18x40x8xbf16, #tpu.memory_space<vmem>>, vector<16x16x4xbf16>,
    %cst_34 = arith.constant 0.000000e+00 : f32
    %19 = vector.broadcast %cst_34 : f32 to vector<256x4xf32>
    %cst_35 = arith.constant 0.000000e+00 : f32
    %20 = vector.broadcast %cst_35 : f32 to vector<256x4xf32>
    %c0_36 = arith.constant 0 : index
    %c15_37 = arith.constant 15 : index
    %c0_38 = arith.constant 0 : index
    %21 = vector.load %arg10[%c0_36, %c15_37, %c0_38] : memref<18x40x8xbf16, #tpu.memory_space<vmem>>, vector<16x16x8xbf16>
    %22 = vector.shape_cast %21 : vector<16x16x8xbf16> to vector<256x8xbf16>
    %c0_39 = arith.constant 0 : index
    %c0_40 = arith.constant 0 : index
    %c0_41 = arith.constant 0 : index
    %c0_42 = arith.constant 0 : index
    %23 = vector.load %arg3[%c0_39, %c0_40, %c0_41, %c0_42] : memref<3x3x8x4xbf16, #tpu.memory_space<vmem>>, vector<1x1x8x4xbf16>
    %24 = vector.shape_cast %23 : vector<1x1x8x4xbf16> to vector<8x4xbf16>
    %cst_43 = arith.constant dense<0.000000e+00> : vector<256x4xf32>
    %25 = tpu.matmul %22, %24, %cst_43 {dimension_numbers = #tpu.dot_dimension_numbers<[1], [0], [0], [1], [0, 0, 1, 1], [], []>} : vector<256x8xbf16>, vector<8x4xbf16>, vector<256x4xf32> -> vector<256x4xf32>
    %26 = arith.addf %20, %25 : vector<256x4xf32>
    %c0_44 = arith.constant 0 : index
    %c16_45 = arith.constant 16 : index
    %c0_46 = arith.constant 0 : index
    %27 = vector.load %arg10[%c0_44, %c16_45, %c0_46] : memref<18x40x8xbf16, #tpu.memory_space<vmem>>, vector<16x16x8xbf16>
    %28 = vector.shape_cast %27 : vector<16x16x8xbf16> to vector<256x8xbf16>
    %c0_47 = arith.constant 0 : index
    %c1_48 = arith.constant 1 : index
    %c0_49 = arith.constant 0 : index
    %c0_50 = arith.constant 0 : index
    %29 = vector.load %arg3[%c0_47, %c1_48, %c0_49, %c0_50] : memref<3x3x8x4xbf16, #tpu.memory_space<vmem>>, vector<1x1x8x4xbf16>
    %30 = vector.shape_cast %29 : vector<1x1x8x4xbf16> to vector<8x4xbf16>
    %cst_51 = arith.constant dense<0.000000e+00> : vector<256x4xf32>
    %31 = tpu.matmul %28, %30, %cst_51 {dimension_numbers = #tpu.dot_dimension_numbers<[1], [0], [0], [1], [0, 0, 1, 1], [], []>} : vector<256x8xbf16>, vector<8x4xbf16>, vector<256x4xf32> -> vector<256x4xf32>
    %32 = arith.addf %26, %31 : vector<256x4xf32>
    %c0_52 = arith.constant 0 : index
    %c17_53 = arith.constant 17 : index
    %c0_54 = arith.constant 0 : index
    %33 = vector.load %arg10[%c0_52, %c17_53, %c0_54] : memref<18x40x8xbf16, #tpu.memory_space<vmem>>, vector<16x16x8xbf16>
    %34 = vector.shape_cast %33 : vector<16x16x8xbf16> to vector<256x8xbf16>
    %c0_55 = arith.constant 0 : index
    %c2 = arith.constant 2 : index
    %c0_56 = arith.constant 0 : index
    %c0_57 = arith.constant 0 : index
    %35 = vector.load %arg3[%c0_55, %c2, %c0_56, %c0_57] : memref<3x3x8x4xbf16, #tpu.memory_space<vmem>>, vector<1x1x8x4xbf16>
    %36 = vector.shape_cast %35 : vector<1x1x8x4xbf16> to vector<8x4xbf16>
    %cst_58 = arith.constant dense<0.000000e+00> : vector<256x4xf32>
    %37 = tpu.matmul %34, %36, %cst_58 {dimension_numbers = #tpu.dot_dimension_numbers<[1], [0], [0], [1], [0, 0, 1, 1], [], []>} : vector<256x8xbf16>, vector<8x4xbf16>, vector<256x4xf32> -> vector<256x4xf32>
    %38 = arith.addf %32, %37 : vector<256x4xf32>
    %39 = arith.addf %19, %38 : vector<256x4xf32>
    %cst_59 = arith.constant 0.000000e+00 : f32
    %40 = vector.broadcast %cst_59 : f32 to vector<256x4xf32>
    %c1_60 = arith.constant 1 : index
    %c15_61 = arith.constant 15 : index
    %c0_62 = arith.constant 0 : index
    %41 = vector.load %arg10[%c1_60, %c15_61, %c0_62] : memref<18x40x8xbf16, #tpu.memory_space<vmem>>, vector<16x16x8xbf16>
    %42 = vector.shape_cast %41 : vector<16x16x8xbf16> to vector<256x8xbf16>
    %c1_63 = arith.constant 1 : index
    %c0_64 = arith.constant 0 : index
    %c0_65 = arith.constant 0 : index
    %c0_66 = arith.constant 0 : index
    %43 = vector.load %arg3[%c1_63, %c0_64, %c0_65, %c0_66] : memref<3x3x8x4xbf16, #tpu.memory_space<vmem>>, vector<1x1x8x4xbf16>
    %44 = vector.shape_cast %43 : vector<1x1x8x4xbf16> to vector<8x4xbf16>
    %cst_67 = arith.constant dense<0.000000e+00> : vector<256x4xf32>
    %45 = tpu.matmul %42, %44, %cst_67 {dimension_numbers = #tpu.dot_dimension_numbers<[1], [0], [0], [1], [0, 0, 1, 1], [], []>} : vector<256x8xbf16>, vector<8x4xbf16>, vector<256x4xf32> -> vector<256x4xf32>
    %46 = arith.addf %40, %45 : vector<256x4xf32>
    %c1_68 = arith.constant 1 : index
    %c16_69 = arith.constant 16 : index
    %c0_70 = arith.constant 0 : index
    %47 = vector.load %arg10[%c1_68, %c16_69, %c0_70] : memref<18x40x8xbf16, #tpu.memory_space<vmem>>, vector<16x16x8xbf16>
    %48 = vector.shape_cast %47 : vector<16x16x8xbf16> to vector<256x8xbf16>
    %c1_71 = arith.constant 1 : index
    %c1_72 = arith.constant 1 : index
    %c0_73 = arith.constant 0 : index
    %c0_74 = arith.constant 0 : index
    %49 = vector.load %arg3[%c1_71, %c1_72, %c0_73, %c0_74] : memref<3x3x8x4xbf16, #tpu.memory_space<vmem>>, vector<1x1x8x4xbf16>
    %50 = vector.shape_cast %49 : vector<1x1x8x4xbf16> to vector<8x4xbf16>
    %cst_75 = arith.constant dense<0.000000e+00> : vector<256x4xf32>
    %51 = tpu.matmul %48, %50, %cst_75 {dimension_numbers = #tpu.dot_dimension_numbers<[1], [0], [0], [1], [0, 0, 1, 1], [], []>} : vector<256x8xbf16>, vector<8x4xbf16>, vector<256x4xf32> -> vector<256x4xf32>
    %52 = arith.addf %46, %51 : vector<256x4xf32>
    %c1_76 = arith.constant 1 : index
    %c17_77 = arith.constant 17 : index
    %c0_78 = arith.constant 0 : index
    %53 = vector.load %arg10[%c1_76, %c17_77, %c0_78] : memref<18x40x8xbf16, #tpu.memory_space<vmem>>, vector<16x16x8xbf16>
    %54 = vector.shape_cast %53 : vector<16x16x8xbf16> to vector<256x8xbf16>
    %c1_79 = arith.constant 1 : index
    %c2_80 = arith.constant 2 : index
    %c0_81 = arith.constant 0 : index
    %c0_82 = arith.constant 0 : index
    %55 = vector.load %arg3[%c1_79, %c2_80, %c0_81, %c0_82] : memref<3x3x8x4xbf16, #tpu.memory_space<vmem>>, vector<1x1x8x4xbf16>
    %56 = vector.shape_cast %55 : vector<1x1x8x4xbf16> to vector<8x4xbf16>
    %cst_83 = arith.constant dense<0.000000e+00> : vector<256x4xf32>
    %57 = tpu.matmul %54, %56, %cst_83 {dimension_numbers = #tpu.dot_dimension_numbers<[1], [0], [0], [1], [0, 0, 1, 1], [], []>} : vector<256x8xbf16>, vector<8x4xbf16>, vector<256x4xf32> -> vector<256x4xf32>
    %58 = arith.addf %52, %57 : vector<256x4xf32>
    %59 = arith.addf %39, %58 : vector<256x4xf32>
    %cst_84 = arith.constant 0.000000e+00 : f32
    %60 = vector.broadcast %cst_84 : f32 to vector<256x4xf32>
    %c2_85 = arith.constant 2 : index
    %c15_86 = arith.constant 15 : index
    %c0_87 = arith.constant 0 : index
    %61 = vector.load %arg10[%c2_85, %c15_86, %c0_87] : memref<18x40x8xbf16, #tpu.memory_space<vmem>>, vector<16x16x8xbf16>
    %62 = vector.shape_cast %61 : vector<16x16x8xbf16> to vector<256x8xbf16>
    %c2_88 = arith.constant 2 : index
    %c0_89 = arith.constant 0 : index
    %c0_90 = arith.constant 0 : index
    %c0_91 = arith.constant 0 : index
    %63 = vector.load %arg3[%c2_88, %c0_89, %c0_90, %c0_91] : memref<3x3x8x4xbf16, #tpu.memory_space<vmem>>, vector<1x1x8x4xbf16>
    %64 = vector.shape_cast %63 : vector<1x1x8x4xbf16> to vector<8x4xbf16>
    %cst_92 = arith.constant dense<0.000000e+00> : vector<256x4xf32>
    %65 = tpu.matmul %62, %64, %cst_92 {dimension_numbers = #tpu.dot_dimension_numbers<[1], [0], [0], [1], [0, 0, 1, 1], [], []>} : vector<256x8xbf16>, vector<8x4xbf16>, vector<256x4xf32> -> vector<256x4xf32>
    %66 = arith.addf %60, %65 : vector<256x4xf32>
    %c2_93 = arith.constant 2 : index
    %c16_94 = arith.constant 16 : index
    %c0_95 = arith.constant 0 : index
    %67 = vector.load %arg10[%c2_93, %c16_94, %c0_95] : memref<18x40x8xbf16, #tpu.memory_space<vmem>>, vector<16x16x8xbf16>
    %68 = vector.shape_cast %67 : vector<16x16x8xbf16> to vector<256x8xbf16>
    %c2_96 = arith.constant 2 : index
    %c1_97 = arith.constant 1 : index
    %c0_98 = arith.constant 0 : index
    %c0_99 = arith.constant 0 : index
    %69 = vector.load %arg3[%c2_96, %c1_97, %c0_98, %c0_99] : memref<3x3x8x4xbf16, #tpu.memory_space<vmem>>, vector<1x1x8x4xbf16>
    %70 = vector.shape_cast %69 : vector<1x1x8x4xbf16> to vector<8x4xbf16>
    %cst_100 = arith.constant dense<0.000000e+00> : vector<256x4xf32>
    %71 = tpu.matmul %68, %70, %cst_100 {dimension_numbers = #tpu.dot_dimension_numbers<[1], [0], [0], [1], [0, 0, 1, 1], [], []>} : vector<256x8xbf16>, vector<8x4xbf16>, vector<256x4xf32> -> vector<256x4xf32>
    %72 = arith.addf %66, %71 : vector<256x4xf32>
    %c2_101 = arith.constant 2 : index
    %c17_102 = arith.constant 17 : index
    %c0_103 = arith.constant 0 : index
    %73 = vector.load %arg10[%c2_101, %c17_102, %c0_103] : memref<18x40x8xbf16, #tpu.memory_space<vmem>>, vector<16x16x8xbf16>
    %74 = vector.shape_cast %73 : vector<16x16x8xbf16> to vector<256x8xbf16>
    %c2_104 = arith.constant 2 : index
    %c2_105 = arith.constant 2 : index
    %c0_106 = arith.constant 0 : index
    %c0_107 = arith.constant 0 : index
    %75 = vector.load %arg3[%c2_104, %c2_105, %c0_106, %c0_107] : memref<3x3x8x4xbf16, #tpu.memory_space<vmem>>, vector<1x1x8x4xbf16>
    %76 = vector.shape_cast %75 : vector<1x1x8x4xbf16> to vector<8x4xbf16>
    %cst_108 = arith.constant dense<0.000000e+00> : vector<256x4xf32>
    %77 = tpu.matmul %74, %76, %cst_108 {dimension_numbers = #tpu.dot_dimension_numbers<[1], [0], [0], [1], [0, 0, 1, 1], [], []>} : vector<256x8xbf16>, vector<8x4xbf16>, vector<256x4xf32> -> vector<256x4xf32>
    %78 = arith.addf %72, %77 : vector<256x4xf32>
    %79 = arith.addf %59, %78 : vector<256x4xf32>
    %c0_109 = arith.constant 0 : index
    %c0_110 = arith.constant 0 : index
    %80 = vector.load %arg4[%c0_109, %c0_110] : memref<1x4xf32, #tpu.memory_space<vmem>>, vector<1x4xf32>
    %81 = vector.broadcast %80 : vector<1x4xf32> to vector<256x4xf32>
    %82 = arith.mulf %79, %81 : vector<256x4xf32>
    %c0_111 = arith.constant 0 : index
    %c0_112 = arith.constant 0 : index
    %83 = vector.load %arg5[%c0_111, %c0_112] : memref<1x4xf32, #tpu.memory_space<vmem>>, vector<1x4xf32>
    %84 = vector.broadcast %83 : vector<1x4xf32> to vector<256x4xf32>
    %85 = arith.addf %82, %84 : vector<256x4xf32>
    %cst_113 = arith.constant 0.000000e+00 : f32
    %86 = vector.broadcast %cst_113 : f32 to vector<256x4xf32>
    %87 = arith.maximumf %85, %86 : vector<256x4xf32>
    %88 = vector.shape_cast %87 : vector<256x4xf32> to vector<16x16x4xf32>
    %89 = arith.truncf %88 : vector<16x16x4xf32> to vector<16x16x4xbf16>
    %c1_114 = arith.constant 1 : index
    %c16_115 = arith.constant 16 : index
    %c0_116 = arith.constant 0 : index
    %90 = vector.load %arg11[%c1_114, %c16_115, %c0_116] : memref<18x40x4xbf16, #tpu.memory_space<vmem>>, vector<16x16x4xbf16>
    tpu.vector_store %arg11[%c1_114, %c16_115, %c0_116], %89 {strides = array<i32>} : memref<18x40x4xbf16, #tpu.memory_space<vmem>>, vector<16x16x4xbf16>,
    %cst_117 = arith.constant 0.000000e+00 : f32
    %91 = vector.broadcast %cst_117 : f32 to vector<256x4xf32>
    %cst_118 = arith.constant 0.000000e+00 : f32
    %92 = vector.broadcast %cst_118 : f32 to vector<256x4xf32>
    %c0_119 = arith.constant 0 : index
    %c15_120 = arith.constant 15 : index
    %c0_121 = arith.constant 0 : index
    %93 = vector.load %arg11[%c0_119, %c15_120, %c0_121] : memref<18x40x4xbf16, #tpu.memory_space<vmem>>, vector<16x16x4xbf16>
    %94 = vector.shape_cast %93 : vector<16x16x4xbf16> to vector<256x4xbf16>
    %c0_122 = arith.constant 0 : index
    %c0_123 = arith.constant 0 : index
    %c0_124 = arith.constant 0 : index
    %c0_125 = arith.constant 0 : index
    %95 = vector.load %arg6[%c0_122, %c0_123, %c0_124, %c0_125] : memref<3x3x4x4xbf16, #tpu.memory_space<vmem>>, vector<1x1x4x4xbf16>
    %96 = vector.shape_cast %95 : vector<1x1x4x4xbf16> to vector<4x4xbf16>
    %cst_126 = arith.constant dense<0.000000e+00> : vector<256x4xf32>
    %97 = tpu.matmul %94, %96, %cst_126 {dimension_numbers = #tpu.dot_dimension_numbers<[1], [0], [0], [1], [0, 0, 1, 1], [], []>} : vector<256x4xbf16>, vector<4x4xbf16>, vector<256x4xf32> -> vector<256x4xf32>
    %98 = arith.addf %92, %97 : vector<256x4xf32>
    %c0_127 = arith.constant 0 : index
    %c16_128 = arith.constant 16 : index
    %c0_129 = arith.constant 0 : index
    %99 = vector.load %arg11[%c0_127, %c16_128, %c0_129] : memref<18x40x4xbf16, #tpu.memory_space<vmem>>, vector<16x16x4xbf16>
    %100 = vector.shape_cast %99 : vector<16x16x4xbf16> to vector<256x4xbf16>
    %c0_130 = arith.constant 0 : index
    %c1_131 = arith.constant 1 : index
    %c0_132 = arith.constant 0 : index
    %c0_133 = arith.constant 0 : index
    %101 = vector.load %arg6[%c0_130, %c1_131, %c0_132, %c0_133] : memref<3x3x4x4xbf16, #tpu.memory_space<vmem>>, vector<1x1x4x4xbf16>
    %102 = vector.shape_cast %101 : vector<1x1x4x4xbf16> to vector<4x4xbf16>
    %cst_134 = arith.constant dense<0.000000e+00> : vector<256x4xf32>
    %103 = tpu.matmul %100, %102, %cst_134 {dimension_numbers = #tpu.dot_dimension_numbers<[1], [0], [0], [1], [0, 0, 1, 1], [], []>} : vector<256x4xbf16>, vector<4x4xbf16>, vector<256x4xf32> -> vector<256x4xf32>
    %104 = arith.addf %98, %103 : vector<256x4xf32>
    %c0_135 = arith.constant 0 : index
    %c17_136 = arith.constant 17 : index
    %c0_137 = arith.constant 0 : index
    %105 = vector.load %arg11[%c0_135, %c17_136, %c0_137] : memref<18x40x4xbf16, #tpu.memory_space<vmem>>, vector<16x16x4xbf16>
    %106 = vector.shape_cast %105 : vector<16x16x4xbf16> to vector<256x4xbf16>
    %c0_138 = arith.constant 0 : index
    %c2_139 = arith.constant 2 : index
    %c0_140 = arith.constant 0 : index
    %c0_141 = arith.constant 0 : index
    %107 = vector.load %arg6[%c0_138, %c2_139, %c0_140, %c0_141] : memref<3x3x4x4xbf16, #tpu.memory_space<vmem>>, vector<1x1x4x4xbf16>
    %108 = vector.shape_cast %107 : vector<1x1x4x4xbf16> to vector<4x4xbf16>
    %cst_142 = arith.constant dense<0.000000e+00> : vector<256x4xf32>
    %109 = tpu.matmul %106, %108, %cst_142 {dimension_numbers = #tpu.dot_dimension_numbers<[1], [0], [0], [1], [0, 0, 1, 1], [], []>} : vector<256x4xbf16>, vector<4x4xbf16>, vector<256x4xf32> -> vector<256x4xf32>
    %110 = arith.addf %104, %109 : vector<256x4xf32>
    %111 = arith.addf %91, %110 : vector<256x4xf32>
    %cst_143 = arith.constant 0.000000e+00 : f32
    %112 = vector.broadcast %cst_143 : f32 to vector<256x4xf32>
    %c1_144 = arith.constant 1 : index
    %c15_145 = arith.constant 15 : index
    %c0_146 = arith.constant 0 : index
    %113 = vector.load %arg11[%c1_144, %c15_145, %c0_146] : memref<18x40x4xbf16, #tpu.memory_space<vmem>>, vector<16x16x4xbf16>
    %114 = vector.shape_cast %113 : vector<16x16x4xbf16> to vector<256x4xbf16>
    %c1_147 = arith.constant 1 : index
    %c0_148 = arith.constant 0 : index
    %c0_149 = arith.constant 0 : index
    %c0_150 = arith.constant 0 : index
    %115 = vector.load %arg6[%c1_147, %c0_148, %c0_149, %c0_150] : memref<3x3x4x4xbf16, #tpu.memory_space<vmem>>, vector<1x1x4x4xbf16>
    %116 = vector.shape_cast %115 : vector<1x1x4x4xbf16> to vector<4x4xbf16>
    %cst_151 = arith.constant dense<0.000000e+00> : vector<256x4xf32>
    %117 = tpu.matmul %114, %116, %cst_151 {dimension_numbers = #tpu.dot_dimension_numbers<[1], [0], [0], [1], [0, 0, 1, 1], [], []>} : vector<256x4xbf16>, vector<4x4xbf16>, vector<256x4xf32> -> vector<256x4xf32>
    %118 = arith.addf %112, %117 : vector<256x4xf32>
    %c1_152 = arith.constant 1 : index
    %c16_153 = arith.constant 16 : index
    %c0_154 = arith.constant 0 : index
    %119 = vector.load %arg11[%c1_152, %c16_153, %c0_154] : memref<18x40x4xbf16, #tpu.memory_space<vmem>>, vector<16x16x4xbf16>
    %120 = vector.shape_cast %119 : vector<16x16x4xbf16> to vector<256x4xbf16>
    %c1_155 = arith.constant 1 : index
    %c1_156 = arith.constant 1 : index
    %c0_157 = arith.constant 0 : index
    %c0_158 = arith.constant 0 : index
    %121 = vector.load %arg6[%c1_155, %c1_156, %c0_157, %c0_158] : memref<3x3x4x4xbf16, #tpu.memory_space<vmem>>, vector<1x1x4x4xbf16>
    %122 = vector.shape_cast %121 : vector<1x1x4x4xbf16> to vector<4x4xbf16>
    %cst_159 = arith.constant dense<0.000000e+00> : vector<256x4xf32>
    %123 = tpu.matmul %120, %122, %cst_159 {dimension_numbers = #tpu.dot_dimension_numbers<[1], [0], [0], [1], [0, 0, 1, 1], [], []>} : vector<256x4xbf16>, vector<4x4xbf16>, vector<256x4xf32> -> vector<256x4xf32>
    %124 = arith.addf %118, %123 : vector<256x4xf32>
    %c1_160 = arith.constant 1 : index
    %c17_161 = arith.constant 17 : index
    %c0_162 = arith.constant 0 : index
    %125 = vector.load %arg11[%c1_160, %c17_161, %c0_162] : memref<18x40x4xbf16, #tpu.memory_space<vmem>>, vector<16x16x4xbf16>
    %126 = vector.shape_cast %125 : vector<16x16x4xbf16> to vector<256x4xbf16>
    %c1_163 = arith.constant 1 : index
    %c2_164 = arith.constant 2 : index
    %c0_165 = arith.constant 0 : index
    %c0_166 = arith.constant 0 : index
    %127 = vector.load %arg6[%c1_163, %c2_164, %c0_165, %c0_166] : memref<3x3x4x4xbf16, #tpu.memory_space<vmem>>, vector<1x1x4x4xbf16>
    %128 = vector.shape_cast %127 : vector<1x1x4x4xbf16> to vector<4x4xbf16>
    %cst_167 = arith.constant dense<0.000000e+00> : vector<256x4xf32>
    %129 = tpu.matmul %126, %128, %cst_167 {dimension_numbers = #tpu.dot_dimension_numbers<[1], [0], [0], [1], [0, 0, 1, 1], [], []>} : vector<256x4xbf16>, vector<4x4xbf16>, vector<256x4xf32> -> vector<256x4xf32>
    %130 = arith.addf %124, %129 : vector<256x4xf32>
    %131 = arith.addf %111, %130 : vector<256x4xf32>
    %cst_168 = arith.constant 0.000000e+00 : f32
    %132 = vector.broadcast %cst_168 : f32 to vector<256x4xf32>
    %c2_169 = arith.constant 2 : index
    %c15_170 = arith.constant 15 : index
    %c0_171 = arith.constant 0 : index
    %133 = vector.load %arg11[%c2_169, %c15_170, %c0_171] : memref<18x40x4xbf16, #tpu.memory_space<vmem>>, vector<16x16x4xbf16>
    %134 = vector.shape_cast %133 : vector<16x16x4xbf16> to vector<256x4xbf16>
    %c2_172 = arith.constant 2 : index
    %c0_173 = arith.constant 0 : index
    %c0_174 = arith.constant 0 : index
    %c0_175 = arith.constant 0 : index
    %135 = vector.load %arg6[%c2_172, %c0_173, %c0_174, %c0_175] : memref<3x3x4x4xbf16, #tpu.memory_space<vmem>>, vector<1x1x4x4xbf16>
    %136 = vector.shape_cast %135 : vector<1x1x4x4xbf16> to vector<4x4xbf16>
    %cst_176 = arith.constant dense<0.000000e+00> : vector<256x4xf32>
    %137 = tpu.matmul %134, %136, %cst_176 {dimension_numbers = #tpu.dot_dimension_numbers<[1], [0], [0], [1], [0, 0, 1, 1], [], []>} : vector<256x4xbf16>, vector<4x4xbf16>, vector<256x4xf32> -> vector<256x4xf32>
    %138 = arith.addf %132, %137 : vector<256x4xf32>
    %c2_177 = arith.constant 2 : index
    %c16_178 = arith.constant 16 : index
    %c0_179 = arith.constant 0 : index
    %139 = vector.load %arg11[%c2_177, %c16_178, %c0_179] : memref<18x40x4xbf16, #tpu.memory_space<vmem>>, vector<16x16x4xbf16>
    %140 = vector.shape_cast %139 : vector<16x16x4xbf16> to vector<256x4xbf16>
    %c2_180 = arith.constant 2 : index
    %c1_181 = arith.constant 1 : index
    %c0_182 = arith.constant 0 : index
    %c0_183 = arith.constant 0 : index
    %141 = vector.load %arg6[%c2_180, %c1_181, %c0_182, %c0_183] : memref<3x3x4x4xbf16, #tpu.memory_space<vmem>>, vector<1x1x4x4xbf16>
    %142 = vector.shape_cast %141 : vector<1x1x4x4xbf16> to vector<4x4xbf16>
    %cst_184 = arith.constant dense<0.000000e+00> : vector<256x4xf32>
    %143 = tpu.matmul %140, %142, %cst_184 {dimension_numbers = #tpu.dot_dimension_numbers<[1], [0], [0], [1], [0, 0, 1, 1], [], []>} : vector<256x4xbf16>, vector<4x4xbf16>, vector<256x4xf32> -> vector<256x4xf32>
    %144 = arith.addf %138, %143 : vector<256x4xf32>
    %c2_185 = arith.constant 2 : index
    %c17_186 = arith.constant 17 : index
    %c0_187 = arith.constant 0 : index
    %145 = vector.load %arg11[%c2_185, %c17_186, %c0_187] : memref<18x40x4xbf16, #tpu.memory_space<vmem>>, vector<16x16x4xbf16>
    %146 = vector.shape_cast %145 : vector<16x16x4xbf16> to vector<256x4xbf16>
    %c2_188 = arith.constant 2 : index
    %c2_189 = arith.constant 2 : index
    %c0_190 = arith.constant 0 : index
    %c0_191 = arith.constant 0 : index
    %147 = vector.load %arg6[%c2_188, %c2_189, %c0_190, %c0_191] : memref<3x3x4x4xbf16, #tpu.memory_space<vmem>>, vector<1x1x4x4xbf16>
    %148 = vector.shape_cast %147 : vector<1x1x4x4xbf16> to vector<4x4xbf16>
    %cst_192 = arith.constant dense<0.000000e+00> : vector<256x4xf32>
    %149 = tpu.matmul %146, %148, %cst_192 {dimension_numbers = #tpu.dot_dimension_numbers<[1], [0], [0], [1], [0, 0, 1, 1], [], []>} : vector<256x4xbf16>, vector<4x4xbf16>, vector<256x4xf32> -> vector<256x4xf32>
    %150 = arith.addf %144, %149 : vector<256x4xf32>
    %151 = arith.addf %131, %150 : vector<256x4xf32>
    %c0_193 = arith.constant 0 : index
    %c0_194 = arith.constant 0 : index
    %152 = vector.load %arg7[%c0_193, %c0_194] : memref<1x4xf32, #tpu.memory_space<vmem>>, vector<1x4xf32>
    %153 = vector.broadcast %152 : vector<1x4xf32> to vector<256x4xf32>
    %154 = arith.mulf %151, %153 : vector<256x4xf32>
    %c0_195 = arith.constant 0 : index
    %c0_196 = arith.constant 0 : index
    %155 = vector.load %arg8[%c0_195, %c0_196] : memref<1x4xf32, #tpu.memory_space<vmem>>, vector<1x4xf32>
    %156 = vector.broadcast %155 : vector<1x4xf32> to vector<256x4xf32>
    %157 = arith.addf %154, %156 : vector<256x4xf32>
    %cst_197 = arith.constant 0.000000e+00 : f32
    %158 = vector.broadcast %cst_197 : f32 to vector<256x4xf32>
    %159 = arith.maximumf %157, %158 : vector<256x4xf32>
    %160 = vector.shape_cast %159 : vector<256x4xf32> to vector<16x16x4xf32>
    %c0_198 = arith.constant 0 : index
    %c0_199 = arith.constant 0 : index
    %c0_200 = arith.constant 0 : index
    %c0_201 = arith.constant 0 : index
    %161 = vector.load %arg9[%c0_198, %c0_199, %c0_200, %c0_201] : memref<1x16x16x4xf32, #tpu.memory_space<vmem>>, vector<1x16x16x4xf32>
    %162 = vector.shape_cast %161 : vector<1x16x16x4xf32> to vector<16x16x4xf32>
    %163 = vector.shape_cast %160 : vector<16x16x4xf32> to vector<1x16x16x4xf32>
    tpu.vector_store %arg9[%c0_198, %c0_199, %c0_200, %c0_201], %163 {strides = array<i32>} : memref<1x16x16x4xf32, #tpu.memory_space<vmem>>, vector<1x16x16x4xf32>,
    return
  }
  func.func @transform_0(%arg0: i32) -> (i32, i32, i32, i32) {
    %c0_i32 = arith.constant 0 : i32
    %c0_i32_0 = arith.constant 0 : i32
    %c0_i32_1 = arith.constant 0 : i32
    %c0_i32_2 = arith.constant 0 : i32
    return %arg0, %c0_i32, %c0_i32_0, %c0_i32_1 : i32, i32, i32, i32
  }
  func.func @transform_1(%arg0: i32) -> (i32, i32, i32, i32) {
    %c0_i32 = arith.constant 0 : i32
    %c0_i32_0 = arith.constant 0 : i32
    %c0_i32_1 = arith.constant 0 : i32
    %c0_i32_2 = arith.constant 0 : i32
    return %arg0, %c0_i32, %c0_i32_0, %c0_i32_1 : i32, i32, i32, i32
  }
  func.func @transform_2(%arg0: i32) -> (i32, i32, i32, i32) {
    %c0_i32 = arith.constant 0 : i32
    %c0_i32_0 = arith.constant 0 : i32
    %c0_i32_1 = arith.constant 0 : i32
    %c0_i32_2 = arith.constant 0 : i32
    %c0_i32_3 = arith.constant 0 : i32
    return %c0_i32, %c0_i32_0, %c0_i32_1, %c0_i32_2 : i32, i32, i32, i32
  }
  func.func @transform_3(%arg0: i32) -> (i32, i32) {
    %c0_i32 = arith.constant 0 : i32
    %c0_i32_0 = arith.constant 0 : i32
    %c0_i32_1 = arith.constant 0 : i32
    return %c0_i32, %c0_i32_0 : i32, i32
  }
  func.func @transform_4(%arg0: i32) -> (i32, i32) {
    %c0_i32 = arith.constant 0 : i32
    %c0_i32_0 = arith.constant 0 : i32
    %c0_i32_1 = arith.constant 0 : i32
    return %c0_i32, %c0_i32_0 : i32, i32
  }
  func.func @transform_5(%arg0: i32) -> (i32, i32, i32, i32) {
    %c0_i32 = arith.constant 0 : i32
    %c0_i32_0 = arith.constant 0 : i32
    %c0_i32_1 = arith.constant 0 : i32
    %c0_i32_2 = arith.constant 0 : i32
    %c0_i32_3 = arith.constant 0 : i32
    return %c0_i32, %c0_i32_0, %c0_i32_1, %c0_i32_2 : i32, i32, i32, i32
  }
  func.func @transform_6(%arg0: i32) -> (i32, i32) {
    %c0_i32 = arith.constant 0 : i32
    %c0_i32_0 = arith.constant 0 : i32
    %c0_i32_1 = arith.constant 0 : i32
    return %c0_i32, %c0_i32_0 : i32, i32
  }
  func.func @transform_7(%arg0: i32) -> (i32, i32) {
    %c0_i32 = arith.constant 0 : i32
    %c0_i32_0 = arith.constant 0 : i32
    %c0_i32_1 = arith.constant 0 : i32
    return %c0_i32, %c0_i32_0 : i32, i32
  }
  func.func @transform_8(%arg0: i32) -> (i32, i32, i32, i32) {
    %c0_i32 = arith.constant 0 : i32
    %c0_i32_0 = arith.constant 0 : i32
    %c0_i32_1 = arith.constant 0 : i32
    %c0_i32_2 = arith.constant 0 : i32
    return %arg0, %c0_i32, %c0_i32_0, %c0_i32_1 : i32, i32, i32, i32
  }
}

</mosaic_0001>

<llo_original>
// kernel: up_forward.1
$region0: #{up_forward.1}
  #allocation0 [shape = 'u32[]', space=smem, size = 0x4, offset = 0x4, fixed_abs, tag = 'smem constant byte address 0x4 - core index']
  #allocation1 [shape = 'u32[144,128]{1,0:T(1,128)}', space=vmem, size = 0x12000, scoped, tag = 'internal scratch']
  #allocation2 [shape = 'bf16[18,40,8]{2,1,0:T(8,128)(2,1)}', space=vmem, size = 0x2d000, scoped, tag = 'scratch operand']
  #allocation3 [shape = 'bf16[18,40,4]{2,1,0:T(8,128)(2,1)}', space=vmem, size = 0x2d000, scoped, tag = 'scratch operand']
  %s0 = inlined_call_operand.vmem [shape: f32[2,16,16,4], index: 0, kind: input, shape index: {}]
  %s1 = inlined_call_operand.vmem [shape: bf16[2,16,16,4], index: 1, kind: input, shape index: {}]
  %s2 = inlined_call_operand.vmem [shape: bf16[3,3,8,4], index: 2, kind: input, shape index: {}]
  %s3 = inlined_call_operand.vmem [shape: f32[1,4], index: 3, kind: input, shape index: {}]
  %s4 = inlined_call_operand.vmem [shape: f32[1,4], index: 4, kind: input, shape index: {}]
  %s5 = inlined_call_operand.vmem [shape: bf16[3,3,4,4], index: 5, kind: input, shape index: {}]
  %s6 = inlined_call_operand.vmem [shape: f32[1,4], index: 6, kind: input, shape index: {}]
  %s7 = inlined_call_operand.vmem [shape: f32[1,4], index: 7, kind: input, shape index: {}]
  %s8 = inlined_call_operand.vmem [shape: f32[2,16,16,4], index: 8, kind: output, shape index: {}]
  %s9 = sld [smem:[#allocation0]]
  $region65: #{up_forward.1} parent=0
    _
  %s11 = ssub.s32 1, %s9
  %s12 = scalar_select 0, %s11, %s9
  loop: start=0, step=1, limit=4
  $region2: #{up_forward.1} parent=0 // loop_pre_header
    _
  $region3: #{up_forward.1} parent=0 // loop_header
    %s14 = sphi 0, %s18
    %p15 = scmp.ge.s32.totalorder %s14, 4
    %s24 = sphi 0, %s26
    %s27 = sphi 0, %s24
    %s28 = sphi 0, %s27
    %s44 = sphi 0, %s28
    %s50 = sphi 0, %s52
    %s53 = sphi 0, %s50
    %s54 = sphi 0, %s53
    %s70 = sphi 0, %s54
    %s74 = sphi 0, %s74
    %s76 = sphi 0, %s74
    %s77 = sphi 0, %s76
    %s91 = sphi 0, %s77
    %s95 = sphi 0, %s95
    %s97 = sphi 0, %s95
    %s98 = sphi 0, %s97
    %s112 = sphi 0, %s98
    %s116 = sphi 0, %s116
    %s118 = sphi 0, %s116
    %s119 = sphi 0, %s118
    %s133 = sphi 0, %s119
    %s137 = sphi 0, %s137
    %s139 = sphi 0, %s137
    %s140 = sphi 0, %s139
    %s154 = sphi 0, %s140
    %s158 = sphi 0, %s158
    %s160 = sphi 0, %s158
    %s161 = sphi 0, %s160
    %s175 = sphi 0, %s161
    %s179 = sphi 0, %s179
    %s181 = sphi 0, %s179
    %s182 = sphi 0, %s181
    %s196 = sphi 0, %s182
    %s202 = sphi 0, %s204
    %s205 = sphi 0, %s202
    %s206 = sphi 0, %s205
    %s222 = sphi 0, %s206
  $region4: #{up_forward.1} parent=0 // loop_header_branch
    %17 = sbr.rel (%p15) target = $region8
  $region5: #{up_forward.1} parent=0 // loop_body
    %s19 = ssub.s32 %s14, 1
    %s20 = ssub.s32 %s14, 2
    %s21 = sadd.s32 %s14, 1
    %s22 = ssub.s32 %s14, %s21
    %p23 = scmp.eq.s32.totalorder %s22, 0
    %s25 = sadd.s32 %s24, 1
    %s26 = scalar_select %p23, %s24, %s25
    %p29 = pneg %p23
    %p30 = scmp.eq.s32.totalorder %s14, 1
    %p31 = por %p29, %p30
    %p32 = scmp.ne.s32.totalorder %s24, %s27
    %p33 = scmp.eq.s32.totalorder %s14, 0
    %p34 = por %p32, %p33
    %p35 = scmp.ne.s32.totalorder %s24, %s27
    %p36 = scmp.eq.s32.totalorder %s19, 1
    %p37 = por %p35, %p36
    %p38 = scmp.ne.s32.totalorder %s27, %s28
    %p39 = scmp.eq.s32.totalorder %s19, 0
    %p40 = por %p38, %p39
    %p41 = scmp.ne.s32.totalorder %s27, %s28
    %p42 = scmp.eq.s32.totalorder %s20, 1
    %p43 = por %p41, %p42
    %p45 = scmp.ne.s32.totalorder %s28, %s44
    %p46 = scmp.eq.s32.totalorder %s20, 0
    %p47 = por %p45, %p46
    %s48 = ssub.s32 %s14, %s21
    %p49 = scmp.eq.s32.totalorder %s48, 0
    %s51 = sadd.s32 %s50, 1
    %s52 = scalar_select %p49, %s50, %s51
    %p55 = pneg %p49
    %p56 = scmp.eq.s32.totalorder %s14, 1
    %p57 = por %p55, %p56
    %p58 = scmp.ne.s32.totalorder %s50, %s53
    %p59 = scmp.eq.s32.totalorder %s14, 0
    %p60 = por %p58, %p59
    %p61 = scmp.ne.s32.totalorder %s50, %s53
    %p62 = scmp.eq.s32.totalorder %s19, 1
    %p63 = por %p61, %p62
    %p64 = scmp.ne.s32.totalorder %s53, %s54
    %p65 = scmp.eq.s32.totalorder %s19, 0
    %p66 = por %p64, %p65
    %p67 = scmp.ne.s32.totalorder %s53, %s54
    %p68 = scmp.eq.s32.totalorder %s20, 1
    %p69 = por %p67, %p68
    %p71 = scmp.ne.s32.totalorder %s54, %s70
    %p72 = scmp.eq.s32.totalorder %s20, 0
    %p73 = por %p71, %p72
    %s75 = sadd.s32 %s74, 1
    %p78 = scmp.eq.s32.totalorder %s14, 1
    %p79 = scmp.ne.s32.totalorder %s74, %s76
    %p80 = scmp.eq.s32.totalorder %s14, 0
    %p81 = por %p79, %p80
    %p82 = scmp.ne.s32.totalorder %s74, %s76
    %p83 = scmp.eq.s32.totalorder %s19, 1
    %p84 = por %p82, %p83
    %p85 = scmp.ne.s32.totalorder %s76, %s77
    %p86 = scmp.eq.s32.totalorder %s19, 0
    %p87 = por %p85, %p86
    %p88 = scmp.ne.s32.totalorder %s76, %s77
    %p89 = scmp.eq.s32.totalorder %s20, 1
    %p90 = por %p88, %p89
    %p92 = scmp.ne.s32.totalorder %s77, %s91
    %p93 = scmp.eq.s32.totalorder %s20, 0
    %p94 = por %p92, %p93
    %s96 = sadd.s32 %s95, 1
    %p99 = scmp.eq.s32.totalorder %s14, 1
    %p100 = scmp.ne.s32.totalorder %s95, %s97
    %p101 = scmp.eq.s32.totalorder %s14, 0
    %p102 = por %p100, %p101
    %p103 = scmp.ne.s32.totalorder %s95, %s97
    %p104 = scmp.eq.s32.totalorder %s19, 1
    %p105 = por %p103, %p104
    %p106 = scmp.ne.s32.totalorder %s97, %s98
    %p107 = scmp.eq.s32.totalorder %s19, 0
    %p108 = por %p106, %p107
    %p109 = scmp.ne.s32.totalorder %s97, %s98
    %p110 = scmp.eq.s32.totalorder %s20, 1
    %p111 = por %p109, %p110
    %p113 = scmp.ne.s32.totalorder %s98, %s112
    %p114 = scmp.eq.s32.totalorder %s20, 0
    %p115 = por %p113, %p114
    %s117 = sadd.s32 %s116, 1
    %p120 = scmp.eq.s32.totalorder %s14, 1
    %p121 = scmp.ne.s32.totalorder %s116, %s118
    %p122 = scmp.eq.s32.totalorder %s14, 0
    %p123 = por %p121, %p122
    %p124 = scmp.ne.s32.totalorder %s116, %s118
    %p125 = scmp.eq.s32.totalorder %s19, 1
    %p126 = por %p124, %p125
    %p127 = scmp.ne.s32.totalorder %s118, %s119
    %p128 = scmp.eq.s32.totalorder %s19, 0
    %p129 = por %p127, %p128
    %p130 = scmp.ne.s32.totalorder %s118, %s119
    %p131 = scmp.eq.s32.totalorder %s20, 1
    %p132 = por %p130, %p131
    %p134 = scmp.ne.s32.totalorder %s119, %s133
    %p135 = scmp.eq.s32.totalorder %s20, 0
    %p136 = por %p134, %p135
    %s138 = sadd.s32 %s137, 1
    %p141 = scmp.eq.s32.totalorder %s14, 1
    %p142 = scmp.ne.s32.totalorder %s137, %s139
    %p143 = scmp.eq.s32.totalorder %s14, 0
    %p144 = por %p142, %p143
    %p145 = scmp.ne.s32.totalorder %s137, %s139
    %p146 = scmp.eq.s32.totalorder %s19, 1
    %p147 = por %p145, %p146
    %p148 = scmp.ne.s32.totalorder %s139, %s140
    %p149 = scmp.eq.s32.totalorder %s19, 0
    %p150 = por %p148, %p149
    %p151 = scmp.ne.s32.totalorder %s139, %s140
    %p152 = scmp.eq.s32.totalorder %s20, 1
    %p153 = por %p151, %p152
    %p155 = scmp.ne.s32.totalorder %s140, %s154
    %p156 = scmp.eq.s32.totalorder %s20, 0
    %p157 = por %p155, %p156
    %s159 = sadd.s32 %s158, 1
    %p162 = scmp.eq.s32.totalorder %s14, 1
    %p163 = scmp.ne.s32.totalorder %s158, %s160
    %p164 = scmp.eq.s32.totalorder %s14, 0
    %p165 = por %p163, %p164
    %p166 = scmp.ne.s32.totalorder %s158, %s160
    %p167 = scmp.eq.s32.totalorder %s19, 1
    %p168 = por %p166, %p167
    %p169 = scmp.ne.s32.totalorder %s160, %s161
    %p170 = scmp.eq.s32.totalorder %s19, 0
    %p171 = por %p169, %p170
    %p172 = scmp.ne.s32.totalorder %s160, %s161
    %p173 = scmp.eq.s32.totalorder %s20, 1
    %p174 = por %p172, %p173
    %p176 = scmp.ne.s32.totalorder %s161, %s175
    %p177 = scmp.eq.s32.totalorder %s20, 0
    %p178 = por %p176, %p177
    %s180 = sadd.s32 %s179, 1
    %p183 = scmp.eq.s32.totalorder %s14, 1
    %p184 = scmp.ne.s32.totalorder %s179, %s181
    %p185 = scmp.eq.s32.totalorder %s14, 0
    %p186 = por %p184, %p185
    %p187 = scmp.ne.s32.totalorder %s179, %s181
    %p188 = scmp.eq.s32.totalorder %s19, 1
    %p189 = por %p187, %p188
    %p190 = scmp.ne.s32.totalorder %s181, %s182
    %p191 = scmp.eq.s32.totalorder %s19, 0
    %p192 = por %p190, %p191
    %p193 = scmp.ne.s32.totalorder %s181, %s182
    %p194 = scmp.eq.s32.totalorder %s20, 1
    %p195 = por %p193, %p194
    %p197 = scmp.ne.s32.totalorder %s182, %s196
    %p198 = scmp.eq.s32.totalorder %s20, 0
    %p199 = por %p197, %p198
    %s200 = ssub.s32 %s14, %s21
    %p201 = scmp.eq.s32.totalorder %s200, 0
    %s203 = sadd.s32 %s202, 1
    %s204 = scalar_select %p201, %s202, %s203
    %p207 = pneg %p201
    %p208 = scmp.eq.s32.totalorder %s14, 1
    %p209 = por %p207, %p208
    %p210 = scmp.ne.s32.totalorder %s202, %s205
    %p211 = scmp.eq.s32.totalorder %s14, 0
    %p212 = por %p210, %p211
    %p213 = scmp.ne.s32.totalorder %s202, %s205
    %p214 = scmp.eq.s32.totalorder %s19, 1
    %p215 = por %p213, %p214
    %p216 = scmp.ne.s32.totalorder %s205, %s206
    %p217 = scmp.eq.s32.totalorder %s19, 0
    %p218 = por %p216, %p217
    %p219 = scmp.ne.s32.totalorder %s205, %s206
    %p220 = scmp.eq.s32.totalorder %s20, 1
    %p221 = por %p219, %p220
    %p223 = scmp.ne.s32.totalorder %s206, %s222
    %p224 = scmp.eq.s32.totalorder %s20, 0
    %p225 = por %p223, %p224
    %p226 = scmp.le.s32.totalorder 1, %s14
    %p227 = scmp.lt.s32.totalorder %s14, 3
    %p228 = pnand %p226, %p227
    %p229 = pneg %p228
    // Predicated region
    $region9: #{up_forward.1} parent=5 // pred_check
      _
    $region10: #{up_forward.1} parent=5 // pred_check_branch
      %231 = sbr.rel (%p228) target = $region12
    $region11: #{up_forward.1} parent=5 // pred_region
      %s232 = ssub.s32 %s14, 1
      // Predicated region
      $region13: #{up_forward.1} parent=11 // pred_check
        %p233 = pneg %p87
      $region14: #{up_forward.1} parent=11 // pred_check_branch
        %235 = sbr.rel (%p233) target = $region16
      $region15: #{up_forward.1} parent=11 // pred_region
        _
      $region16: #{up_forward.1} parent=11 // pred_fallthru
        _
      // Predicated region
      $region17: #{up_forward.1} parent=11 // pred_check
        %p236 = pneg %p108
      $region18: #{up_forward.1} parent=11 // pred_check_branch
        %238 = sbr.rel (%p236) target = $region20
      $region19: #{up_forward.1} parent=11 // pred_region
        _
      $region20: #{up_forward.1} parent=11 // pred_fallthru
        _
      // Predicated region
      $region21: #{up_forward.1} parent=11 // pred_check
        %p239 = pneg %p129
      $region22: #{up_forward.1} parent=11 // pred_check_branch
        %241 = sbr.rel (%p239) target = $region24
      $region23: #{up_forward.1} parent=11 // pred_region
        _
      $region24: #{up_forward.1} parent=11 // pred_fallthru
        _
      // Predicated region
      $region25: #{up_forward.1} parent=11 // pred_check
        %p242 = pneg %p150
      $region26: #{up_forward.1} parent=11 // pred_check_branch
        %244 = sbr.rel (%p242) target = $region28
      $region27: #{up_forward.1} parent=11 // pred_region
        _
      $region28: #{up_forward.1} parent=11 // pred_fallthru
        _
      // Predicated region
      $region29: #{up_forward.1} parent=11 // pred_check
        %p245 = pneg %p171
      $region30: #{up_forward.1} parent=11 // pred_check_branch
        %247 = sbr.rel (%p245) target = $region32
      $region31: #{up_forward.1} parent=11 // pred_region
        _
      $region32: #{up_forward.1} parent=11 // pred_fallthru
        _
      // Predicated region
      $region33: #{up_forward.1} parent=11 // pred_check
        %p248 = pneg %p192
      $region34: #{up_forward.1} parent=11 // pred_check_branch
        %250 = sbr.rel (%p248) target = $region36
      $region35: #{up_forward.1} parent=11 // pred_region
        _
      $region36: #{up_forward.1} parent=11 // pred_fallthru
        _
    $region12: #{up_forward.1} parent=5 // pred_fallthru
      _
    %p251 = scmp.lt.s32.totalorder %s14, 2
    // Predicated region
    $region37: #{up_forward.1} parent=5 // pred_check
      %p252 = pneg %p251
    $region38: #{up_forward.1} parent=5 // pred_check_branch
      %254 = sbr.rel (%p252) target = $region40
    $region39: #{up_forward.1} parent=5 // pred_region
      // Predicated region
      $region41: #{up_forward.1} parent=39 // pred_check
        %p255 = pneg %p34
      $region42: #{up_forward.1} parent=39 // pred_check_branch
        %257 = sbr.rel (%p255) target = $region44
      $region43: #{up_forward.1} parent=39 // pred_region
        %p258 = scmp.lt.s32.totalorder %s14, 1
        %s259 = scalar_select %p258, %s14, 1
        %s260 = smul.addr %s259, 32
        %s261 = smul.addr %s260, 8
        %s262 = scalar_lea.vmem %s0, %s261
      $region44: #{up_forward.1} parent=39 // pred_fallthru
        _
      // Predicated region
      $region45: #{up_forward.1} parent=39 // pred_check
        %p263 = pneg %p60
      $region46: #{up_forward.1} parent=39 // pred_check_branch
        %265 = sbr.rel (%p263) target = $region48
      $region47: #{up_forward.1} parent=39 // pred_region
        %p266 = scmp.lt.s32.totalorder %s14, 1
        %s267 = scalar_select %p266, %s14, 1
        %s268 = smul.addr %s267, 32
        %s269 = smul.addr %s268, 4
        %s270 = scalar_lea.vmem %s1, %s269
      $region48: #{up_forward.1} parent=39 // pred_fallthru
        _
    $region40: #{up_forward.1} parent=5 // pred_fallthru
      _
    %p271 = scmp.le.s32.totalorder 1, %s14
    %p272 = scmp.lt.s32.totalorder %s14, 3
    %p273 = pnand %p271, %p272
    %p274 = pneg %p273
    // Predicated region
    $region49: #{up_forward.1} parent=5 // pred_check
      _
    $region50: #{up_forward.1} parent=5 // pred_check_branch
      %276 = sbr.rel (%p273) target = $region52
    $region51: #{up_forward.1} parent=5 // pred_region
      %s277 = ssub.s32 %s14, 1
      %p278 = scmp.lt.s32.totalorder %s19, 1
      %s279 = scalar_select %p278, %s19, 1
      %s280 = smul.addr %s279, 32
      %s281 = smul.addr %s280, 8
      %s282 = scalar_lea.vmem %s0, %s281
      %p283 = pneg %p40
      %p284 = pneg %p37
      %p285 = scmp.lt.s32.totalorder %s19, 1
      %s286 = scalar_select %p285, %s19, 1
      %s287 = smul.addr %s286, 32
      %s288 = smul.addr %s287, 4
      %s289 = scalar_lea.vmem %s1, %s288
      %p290 = pneg %p66
      %p291 = pneg %p63
      %p292 = pneg %p87
      %p293 = pneg %p84
      %p294 = pneg %p108
      %p295 = pneg %p105
      %p296 = pneg %p129
      %p297 = pneg %p126
      %p298 = pneg %p150
      %p299 = pneg %p147
      %p300 = pneg %p171
      %p301 = pneg %p168
      %p302 = pneg %p192
      %p303 = pneg %p189
      %p304 = pneg %p218
      %p305 = pneg %p215
      %p306 = scmp.lt.s32.totalorder %s19, 1
      %s307 = scalar_select %p306, %s19, 1
      %s308 = smul.addr %s307, 32
      %s309 = smul.addr %s308, 8
      %s310 = scalar_lea.vmem %s8, %s309
      %p311 = scmp.lt.s32.totalorder %s19, 1
      %s312 = scalar_select %p311, %s19, 1
      %s313 = smul.addr %s312, 32
      %s314 = smul.addr %s313, 8
      %s315 = scalar_lea.vmem %s0, %s314
      %p316 = scmp.lt.s32.totalorder %s19, 1
      %s317 = scalar_select %p316, %s19, 1
      %s318 = smul.addr %s317, 32
      %s319 = smul.addr %s318, 4
      %s320 = scalar_lea.vmem %s1, %s319
      %p321 = scmp.lt.s32.totalorder %s19, 1
      %s322 = scalar_select %p321, %s19, 1
      %s323 = smul.addr %s322, 32
      %s324 = smul.addr %s323, 8
      %s325 = scalar_lea.vmem %s8, %s324
      %vm327 = vcmask 60419
      %vm328 = vsmask.f32 7950
      %vm329 = vmand %vm327, %vm328
      %v330 = vld [vmem:[#allocation2 + $0x4] sm:$0x8]
      %v331 = vsel %vm329, 0, %v330
      %332 = vst [vmem:[#allocation2 + $0x4] sm:$0x8] %v331
      %vm333 = vcmask 60416
      %334 = vst.msk [vmem:[#allocation2 + $0x8] sm:$0xf] %vm333, 0
      %335 = vst.msk [vmem:[#allocation2 + $0xc] sm:$0xf] %vm333, 0
      %vm336 = vcmask 57344
      %vm337 = vsmask.f32 256
      %vm338 = vmand %vm336, %vm337
      %v339 = vld [vmem:[#allocation2 + $0x10] sm:$0x1]
      %v340 = vsel %vm338, 0, %v339
      %341 = vst [vmem:[#allocation2 + $0x10] sm:$0x1] %v340
      %s342 = scalar_lea.vmem [#allocation2], 340
      %v343 = vld [vmem:[%s342 + $0x4] sm:$0x8]
      %v344 = vsel %vm329, 0, %v343
      %345 = vst [vmem:[%s342 + $0x4] sm:$0x8] %v344
      %346 = vst.msk [vmem:[%s342 + $0x8] sm:$0xf] %vm333, 0
      %347 = vst.msk [vmem:[%s342 + $0xc] sm:$0xf] %vm333, 0
      %v348 = vld [vmem:[%s342 + $0x10] sm:$0x1]
      %v349 = vsel %vm338, 0, %v348
      %350 = vst [vmem:[%s342 + $0x10] sm:$0x1] %v349
      %s351 = scalar_lea.vmem [#allocation2], 20
      %v352 = vld [vmem:[%s351 + $0x4] sm:$0x8]
      %v353 = vsel %vm329, 0, %v352
      %354 = vst [vmem:[%s351 + $0x4] sm:$0x8] %v353
      %v355 = vld [vmem:[%s351 + $0x18] sm:$0x8]
      %v356 = vsel %vm329, 0, %v355
      %357 = vst [vmem:[%s351 + $0x18] sm:$0x8] %v356
      %v358 = vld [vmem:[%s351 + $0x2c] sm:$0x8]
      %v359 = vsel %vm329, 0, %v358
      %360 = vst [vmem:[%s351 + $0x2c] sm:$0x8] %v359
      %v361 = vld [vmem:[%s351 + $0x40] sm:$0x8]
      %v362 = vsel %vm329, 0, %v361
      %363 = vst [vmem:[%s351 + $0x40] sm:$0x8] %v362
      %v364 = vld [vmem:[%s351 + $0x54] sm:$0x8]
      %v365 = vsel %vm329, 0, %v364
      %366 = vst [vmem:[%s351 + $0x54] sm:$0x8] %v365
      %v367 = vld [vmem:[%s351 + $0x68] sm:$0x8]
      %v368 = vsel %vm329, 0, %v367
      %369 = vst [vmem:[%s351 + $0x68] sm:$0x8] %v368
      %v370 = vld [vmem:[%s351 + $0x7c] sm:$0x8]
      %v371 = vsel %vm329, 0, %v370
      %372 = vst [vmem:[%s351 + $0x7c] sm:$0x8] %v371
      %v373 = vld [vmem:[%s351 + $0x90] sm:$0x8]
      %v374 = vsel %vm329, 0, %v373
      %375 = vst [vmem:[%s351 + $0x90] sm:$0x8] %v374
      %v376 = vld [vmem:[%s351 + $0xa4] sm:$0x8]
      %v377 = vsel %vm329, 0, %v376
      %378 = vst [vmem:[%s351 + $0xa4] sm:$0x8] %v377
      %v379 = vld [vmem:[%s351 + $0xb8] sm:$0x8]
      %v380 = vsel %vm329, 0, %v379
      %381 = vst [vmem:[%s351 + $0xb8] sm:$0x8] %v380
      %v382 = vld [vmem:[%s351 + $0xcc] sm:$0x8]
      %v383 = vsel %vm329, 0, %v382
      %384 = vst [vmem:[%s351 + $0xcc] sm:$0x8] %v383
      %v385 = vld [vmem:[%s351 + $0xe0] sm:$0x8]
      %v386 = vsel %vm329, 0, %v385
      %387 = vst [vmem:[%s351 + $0xe0] sm:$0x8] %v386
      %v388 = vld [vmem:[%s351 + $0xf4] sm:$0x8]
      %v389 = vsel %vm329, 0, %v388
      %390 = vst [vmem:[%s351 + $0xf4] sm:$0x8] %v389
      %v391 = vld [vmem:[%s351 + $0x108] sm:$0x8]
      %v392 = vsel %vm329, 0, %v391
      %393 = vst [vmem:[%s351 + $0x108] sm:$0x8] %v392
      %v394 = vld [vmem:[%s351 + $0x11c] sm:$0x8]
      %v395 = vsel %vm329, 0, %v394
      %396 = vst [vmem:[%s351 + $0x11c] sm:$0x8] %v395
      %v397 = vld [vmem:[%s351 + $0x130] sm:$0x8]
      %v398 = vsel %vm329, 0, %v397
      %399 = vst [vmem:[%s351 + $0x130] sm:$0x8] %v398
      %v400 = vld [vmem:[%s351 + $0x10] sm:$0x1]
      %v401 = vsel %vm338, 0, %v400
      %402 = vst [vmem:[%s351 + $0x10] sm:$0x1] %v401
      %v403 = vld [vmem:[%s351 + $0x24] sm:$0x1]
      %v404 = vsel %vm338, 0, %v403
      %405 = vst [vmem:[%s351 + $0x24] sm:$0x1] %v404
      %v406 = vld [vmem:[%s351 + $0x38] sm:$0x1]
      %v407 = vsel %vm338, 0, %v406
      %408 = vst [vmem:[%s351 + $0x38] sm:$0x1] %v407
      %v409 = vld [vmem:[%s351 + $0x4c] sm:$0x1]
      %v410 = vsel %vm338, 0, %v409
      %411 = vst [vmem:[%s351 + $0x4c] sm:$0x1] %v410
      %v412 = vld [vmem:[%s351 + $0x60] sm:$0x1]
      %v413 = vsel %vm338, 0, %v412
      %414 = vst [vmem:[%s351 + $0x60] sm:$0x1] %v413
      %v415 = vld [vmem:[%s351 + $0x74] sm:$0x1]
      %v416 = vsel %vm338, 0, %v415
      %417 = vst [vmem:[%s351 + $0x74] sm:$0x1] %v416
      %v418 = vld [vmem:[%s351 + $0x88] sm:$0x1]
      %v419 = vsel %vm338, 0, %v418
      %420 = vst [vmem:[%s351 + $0x88] sm:$0x1] %v419
      %v421 = vld [vmem:[%s351 + $0x9c] sm:$0x1]
      %v422 = vsel %vm338, 0, %v421
      %423 = vst [vmem:[%s351 + $0x9c] sm:$0x1] %v422
      %v424 = vld [vmem:[%s351 + $0xb0] sm:$0x1]
      %v425 = vsel %vm338, 0, %v424
      %426 = vst [vmem:[%s351 + $0xb0] sm:$0x1] %v425
      %v427 = vld [vmem:[%s351 + $0xc4] sm:$0x1]
      %v428 = vsel %vm338, 0, %v427
      %429 = vst [vmem:[%s351 + $0xc4] sm:$0x1] %v428
      %v430 = vld [vmem:[%s351 + $0xd8] sm:$0x1]
      %v431 = vsel %vm338, 0, %v430
      %432 = vst [vmem:[%s351 + $0xd8] sm:$0x1] %v431
      %v433 = vld [vmem:[%s351 + $0xec] sm:$0x1]
      %v434 = vsel %vm338, 0, %v433
      %435 = vst [vmem:[%s351 + $0xec] sm:$0x1] %v434
      %v436 = vld [vmem:[%s351 + $0x100] sm:$0x1]
      %v437 = vsel %vm338, 0, %v436
      %438 = vst [vmem:[%s351 + $0x100] sm:$0x1] %v437
      %v439 = vld [vmem:[%s351 + $0x114] sm:$0x1]
      %v440 = vsel %vm338, 0, %v439
      %441 = vst [vmem:[%s351 + $0x114] sm:$0x1] %v440
      %v442 = vld [vmem:[%s351 + $0x128] sm:$0x1]
      %v443 = vsel %vm338, 0, %v442
      %444 = vst [vmem:[%s351 + $0x128] sm:$0x1] %v443
      %v445 = vld [vmem:[%s351 + $0x13c] sm:$0x1]
      %v446 = vsel %vm338, 0, %v445
      %447 = vst [vmem:[%s351 + $0x13c] sm:$0x1] %v446
      %vm448 = vcmask 27651
      %vm449 = vmand %vm448, %vm328
      %v450 = vld [vmem:[#allocation3 + $0x4] sm:$0x8]
      %v451 = vsel %vm449, 0, %v450
      %452 = vst [vmem:[#allocation3 + $0x4] sm:$0x8] %v451
      %vm453 = vcmask 27648
      %454 = vst.msk [vmem:[#allocation3 + $0x8] sm:$0xf] %vm453, 0
      %455 = vst.msk [vmem:[#allocation3 + $0xc] sm:$0xf] %vm453, 0
      %vm456 = vcmask 24576
      %vm457 = vmand %vm456, %vm337
      %v458 = vld [vmem:[#allocation3 + $0x10] sm:$0x1]
      %v459 = vsel %vm457, 0, %v458
      %460 = vst [vmem:[#allocation3 + $0x10] sm:$0x1] %v459
      %s461 = scalar_lea.vmem [#allocation3], 340
      %v462 = vld [vmem:[%s461 + $0x4] sm:$0x8]
      %v463 = vsel %vm449, 0, %v462
      %464 = vst [vmem:[%s461 + $0x4] sm:$0x8] %v463
      %465 = vst.msk [vmem:[%s461 + $0x8] sm:$0xf] %vm453, 0
      %466 = vst.msk [vmem:[%s461 + $0xc] sm:$0xf] %vm453, 0
      %v467 = vld [vmem:[%s461 + $0x10] sm:$0x1]
      %v468 = vsel %vm457, 0, %v467
      %469 = vst [vmem:[%s461 + $0x10] sm:$0x1] %v468
      %s470 = scalar_lea.vmem [#allocation3], 20
      %v471 = vld [vmem:[%s470 + $0x4] sm:$0x8]
      %v472 = vsel %vm449, 0, %v471
      %473 = vst [vmem:[%s470 + $0x4] sm:$0x8] %v472
      %v474 = vld [vmem:[%s470 + $0x18] sm:$0x8]
      %v475 = vsel %vm449, 0, %v474
      %476 = vst [vmem:[%s470 + $0x18] sm:$0x8] %v475
      %v477 = vld [vmem:[%s470 + $0x2c] sm:$0x8]
      %v478 = vsel %vm449, 0, %v477
      %479 = vst [vmem:[%s470 + $0x2c] sm:$0x8] %v478
      %v480 = vld [vmem:[%s470 + $0x40] sm:$0x8]
      %v481 = vsel %vm449, 0, %v480
      %482 = vst [vmem:[%s470 + $0x40] sm:$0x8] %v481
      %v483 = vld [vmem:[%s470 + $0x54] sm:$0x8]
      %v484 = vsel %vm449, 0, %v483
      %485 = vst [vmem:[%s470 + $0x54] sm:$0x8] %v484
      %v486 = vld [vmem:[%s470 + $0x68] sm:$0x8]
      %v487 = vsel %vm449, 0, %v486
      %488 = vst [vmem:[%s470 + $0x68] sm:$0x8] %v487
      %v489 = vld [vmem:[%s470 + $0x7c] sm:$0x8]
      %v490 = vsel %vm449, 0, %v489
      %491 = vst [vmem:[%s470 + $0x7c] sm:$0x8] %v490
      %v492 = vld [vmem:[%s470 + $0x90] sm:$0x8]
      %v493 = vsel %vm449, 0, %v492
      %494 = vst [vmem:[%s470 + $0x90] sm:$0x8] %v493
      %v495 = vld [vmem:[%s470 + $0xa4] sm:$0x8]
      %v496 = vsel %vm449, 0, %v495
      %497 = vst [vmem:[%s470 + $0xa4] sm:$0x8] %v496
      %v498 = vld [vmem:[%s470 + $0xb8] sm:$0x8]
      %v499 = vsel %vm449, 0, %v498
      %500 = vst [vmem:[%s470 + $0xb8] sm:$0x8] %v499
      %v501 = vld [vmem:[%s470 + $0xcc] sm:$0x8]
      %v502 = vsel %vm449, 0, %v501
      %503 = vst [vmem:[%s470 + $0xcc] sm:$0x8] %v502
      %v504 = vld [vmem:[%s470 + $0xe0] sm:$0x8]
      %v505 = vsel %vm449, 0, %v504
      %506 = vst [vmem:[%s470 + $0xe0] sm:$0x8] %v505
      %v507 = vld [vmem:[%s470 + $0xf4] sm:$0x8]
      %v508 = vsel %vm449, 0, %v507
      %509 = vst [vmem:[%s470 + $0xf4] sm:$0x8] %v508
      %v510 = vld [vmem:[%s470 + $0x108] sm:$0x8]
      %v511 = vsel %vm449, 0, %v510
      %512 = vst [vmem:[%s470 + $0x108] sm:$0x8] %v511
      %v513 = vld [vmem:[%s470 + $0x11c] sm:$0x8]
      %v514 = vsel %vm449, 0, %v513
      %515 = vst [vmem:[%s470 + $0x11c] sm:$0x8] %v514
      %v516 = vld [vmem:[%s470 + $0x130] sm:$0x8]
      %v517 = vsel %vm449, 0, %v516
      %518 = vst [vmem:[%s470 + $0x130] sm:$0x8] %v517
      %v519 = vld [vmem:[%s470 + $0x10] sm:$0x1]
      %v520 = vsel %vm457, 0, %v519
      %521 = vst [vmem:[%s470 + $0x10] sm:$0x1] %v520
      %v522 = vld [vmem:[%s470 + $0x24] sm:$0x1]
      %v523 = vsel %vm457, 0, %v522
      %524 = vst [vmem:[%s470 + $0x24] sm:$0x1] %v523
      %v525 = vld [vmem:[%s470 + $0x38] sm:$0x1]
      %v526 = vsel %vm457, 0, %v525
      %527 = vst [vmem:[%s470 + $0x38] sm:$0x1] %v526
      %v528 = vld [vmem:[%s470 + $0x4c] sm:$0x1]
      %v529 = vsel %vm457, 0, %v528
      %530 = vst [vmem:[%s470 + $0x4c] sm:$0x1] %v529
      %v531 = vld [vmem:[%s470 + $0x60] sm:$0x1]
      %v532 = vsel %vm457, 0, %v531
      %533 = vst [vmem:[%s470 + $0x60] sm:$0x1] %v532
      %v534 = vld [vmem:[%s470 + $0x74] sm:$0x1]
      %v535 = vsel %vm457, 0, %v534
      %536 = vst [vmem:[%s470 + $0x74] sm:$0x1] %v535
      %v537 = vld [vmem:[%s470 + $0x88] sm:$0x1]
      %v538 = vsel %vm457, 0, %v537
      %539 = vst [vmem:[%s470 + $0x88] sm:$0x1] %v538
      %v540 = vld [vmem:[%s470 + $0x9c] sm:$0x1]
      %v541 = vsel %vm457, 0, %v540
      %542 = vst [vmem:[%s470 + $0x9c] sm:$0x1] %v541
      %v543 = vld [vmem:[%s470 + $0xb0] sm:$0x1]
      %v544 = vsel %vm457, 0, %v543
      %545 = vst [vmem:[%s470 + $0xb0] sm:$0x1] %v544
      %v546 = vld [vmem:[%s470 + $0xc4] sm:$0x1]
      %v547 = vsel %vm457, 0, %v546
      %548 = vst [vmem:[%s470 + $0xc4] sm:$0x1] %v547
      %v549 = vld [vmem:[%s470 + $0xd8] sm:$0x1]
      %v550 = vsel %vm457, 0, %v549
      %551 = vst [vmem:[%s470 + $0xd8] sm:$0x1] %v550
      %v552 = vld [vmem:[%s470 + $0xec] sm:$0x1]
      %v553 = vsel %vm457, 0, %v552
      %554 = vst [vmem:[%s470 + $0xec] sm:$0x1] %v553
      %v555 = vld [vmem:[%s470 + $0x100] sm:$0x1]
      %v556 = vsel %vm457, 0, %v555
      %557 = vst [vmem:[%s470 + $0x100] sm:$0x1] %v556
      %v558 = vld [vmem:[%s470 + $0x114] sm:$0x1]
      %v559 = vsel %vm457, 0, %v558
      %560 = vst [vmem:[%s470 + $0x114] sm:$0x1] %v559
      %v561 = vld [vmem:[%s470 + $0x128] sm:$0x1]
      %v562 = vsel %vm457, 0, %v561
      %563 = vst [vmem:[%s470 + $0x128] sm:$0x1] %v562
      %v564 = vld [vmem:[%s470 + $0x13c] sm:$0x1]
      %v565 = vsel %vm457, 0, %v564
      %566 = vst [vmem:[%s470 + $0x13c] sm:$0x1] %v565
      %v567 = vld [vmem:[%s315] sm:$0xff]
      %v568 = vld [vmem:[%s315 + $0x8] sm:$0xff]
      %v569 = vld [vmem:[%s315 + $0x10] sm:$0xff]
      %v570 = vld [vmem:[%s315 + $0x18] sm:$0xff]
      %v571 = vld [vmem:[%s315 + $0x20] sm:$0xff]
      %v572 = vld [vmem:[%s315 + $0x28] sm:$0xff]
      %v573 = vld [vmem:[%s315 + $0x30] sm:$0xff]
      %v574 = vld [vmem:[%s315 + $0x38] sm:$0xff]
      %v575 = vld [vmem:[%s315 + $0x40] sm:$0xff]
      %v576 = vld [vmem:[%s315 + $0x48] sm:$0xff]
      %v577 = vld [vmem:[%s315 + $0x50] sm:$0xff]
      %v578 = vld [vmem:[%s315 + $0x58] sm:$0xff]
      %v579 = vld [vmem:[%s315 + $0x60] sm:$0xff]
      %v580 = vld [vmem:[%s315 + $0x68] sm:$0xff]
      %v581 = vld [vmem:[%s315 + $0x70] sm:$0xff]
      %v582 = vld [vmem:[%s315 + $0x78] sm:$0xff]
      %v583 = vld [vmem:[%s315 + $0x80] sm:$0xff]
      %v584 = vld [vmem:[%s315 + $0x88] sm:$0xff]
      %v585 = vld [vmem:[%s315 + $0x90] sm:$0xff]
      %v586 = vld [vmem:[%s315 + $0x98] sm:$0xff]
      %v587 = vld [vmem:[%s315 + $0xa0] sm:$0xff]
      %v588 = vld [vmem:[%s315 + $0xa8] sm:$0xff]
      %v589 = vld [vmem:[%s315 + $0xb0] sm:$0xff]
      %v590 = vld [vmem:[%s315 + $0xb8] sm:$0xff]
      %v591 = vld [vmem:[%s315 + $0xc0] sm:$0xff]
      %v592 = vld [vmem:[%s315 + $0xc8] sm:$0xff]
      %v593 = vld [vmem:[%s315 + $0xd0] sm:$0xff]
      %v594 = vld [vmem:[%s315 + $0xd8] sm:$0xff]
      %v595 = vld [vmem:[%s315 + $0xe0] sm:$0xff]
      %v596 = vld [vmem:[%s315 + $0xe8] sm:$0xff]
      %v597 = vld [vmem:[%s315 + $0xf0] sm:$0xff]
      %v598 = vld [vmem:[%s315 + $0xf8] sm:$0xff]
      %v599 = vpack.c.bf16 %v568, %v567
      %v600 = vpack.c.bf16 %v570, %v569
      %v601 = vpack.c.bf16 %v572, %v571
      %v602 = vpack.c.bf16 %v574, %v573
      %v603 = vpack.c.bf16 %v576, %v575
      %v604 = vpack.c.bf16 %v578, %v577
      %v605 = vpack.c.bf16 %v580, %v579
      %v606 = vpack.c.bf16 %v582, %v581
      %v607 = vpack.c.bf16 %v584, %v583
      %v608 = vpack.c.bf16 %v586, %v585
      %v609 = vpack.c.bf16 %v588, %v587
      %v610 = vpack.c.bf16 %v590, %v589
      %v611 = vpack.c.bf16 %v592, %v591
      %v612 = vpack.c.bf16 %v594, %v593
      %v613 = vpack.c.bf16 %v596, %v595
      %v614 = vpack.c.bf16 %v598, %v597
      %v631 = vunpack.c.l.b16 %v599
      %v632 = vunpack.c.h.b16 %v599
      %v633 = vunpack.c.l.b16 %v600
      %v634 = vunpack.c.h.b16 %v600
      %v635 = vunpack.c.l.b16 %v601
      %v636 = vunpack.c.h.b16 %v601
      %v637 = vunpack.c.l.b16 %v602
      %v638 = vunpack.c.h.b16 %v602
      %v639 = vunpack.c.l.b16 %v603
      %v640 = vunpack.c.h.b16 %v603
      %v641 = vunpack.c.l.b16 %v604
      %v642 = vunpack.c.h.b16 %v604
      %v643 = vunpack.c.l.b16 %v605
      %v644 = vunpack.c.h.b16 %v605
      %v645 = vunpack.c.l.b16 %v606
      %v646 = vunpack.c.h.b16 %v606
      %v647 = vunpack.c.l.b16 %v607
      %v648 = vunpack.c.h.b16 %v607
      %v649 = vunpack.c.l.b16 %v608
      %v650 = vunpack.c.h.b16 %v608
      %v651 = vunpack.c.l.b16 %v609
      %v652 = vunpack.c.h.b16 %v609
      %v653 = vunpack.c.l.b16 %v610
      %v654 = vunpack.c.h.b16 %v610
      %v655 = vunpack.c.l.b16 %v611
      %v656 = vunpack.c.h.b16 %v611
      %v657 = vunpack.c.l.b16 %v612
      %v658 = vunpack.c.h.b16 %v612
      %v659 = vunpack.c.l.b16 %v613
      %v660 = vunpack.c.h.b16 %v613
      %v661 = vunpack.c.l.b16 %v614
      %v662 = vunpack.c.h.b16 %v614
      %v663 = vpack.c.b16 %v631, %v631
      %v664 = vpack.c.b16 %v632, %v632
      %v665 = vpack.c.b16 %v633, %v633
      %v666 = vpack.c.b16 %v634, %v634
      %v667 = vpack.c.b16 %v635, %v635
      %v668 = vpack.c.b16 %v636, %v636
      %v669 = vpack.c.b16 %v637, %v637
      %v670 = vpack.c.b16 %v638, %v638
      %v671 = vpack.c.b16 %v639, %v639
      %v672 = vpack.c.b16 %v640, %v640
      %v673 = vpack.c.b16 %v641, %v641
      %v674 = vpack.c.b16 %v642, %v642
      %v675 = vpack.c.b16 %v643, %v643
      %v676 = vpack.c.b16 %v644, %v644
      %v677 = vpack.c.b16 %v645, %v645
      %v678 = vpack.c.b16 %v646, %v646
      %v679 = vpack.c.b16 %v647, %v647
      %v680 = vpack.c.b16 %v648, %v648
      %v681 = vpack.c.b16 %v649, %v649
      %v682 = vpack.c.b16 %v650, %v650
      %v683 = vpack.c.b16 %v651, %v651
      %v684 = vpack.c.b16 %v652, %v652
      %v685 = vpack.c.b16 %v653, %v653
      %v686 = vpack.c.b16 %v654, %v654
      %v687 = vpack.c.b16 %v655, %v655
      %v688 = vpack.c.b16 %v656, %v656
      %v689 = vpack.c.b16 %v657, %v657
      %v690 = vpack.c.b16 %v658, %v658
      %v691 = vpack.c.b16 %v659, %v659
      %v692 = vpack.c.b16 %v660, %v660
      %v693 = vpack.c.b16 %v661, %v661
      %v694 = vpack.c.b16 %v662, %v662
      %727 = vst.msk [vmem:[%s351 + $0x8] sm:$0xf] %vm453, %v663
      %728 = vst.msk [vmem:[%s351 + $0xc] sm:$0xf] %vm453, %v664
      %729 = vst.msk [vmem:[%s351 + $0x1c] sm:$0xf] %vm453, %v665
      %730 = vst.msk [vmem:[%s351 + $0x20] sm:$0xf] %vm453, %v666
      %731 = vst.msk [vmem:[%s351 + $0x30] sm:$0xf] %vm453, %v667
      %732 = vst.msk [vmem:[%s351 + $0x34] sm:$0xf] %vm453, %v668
      %733 = vst.msk [vmem:[%s351 + $0x44] sm:$0xf] %vm453, %v669
      %734 = vst.msk [vmem:[%s351 + $0x48] sm:$0xf] %vm453, %v670
      %735 = vst.msk [vmem:[%s351 + $0x58] sm:$0xf] %vm453, %v671
      %736 = vst.msk [vmem:[%s351 + $0x5c] sm:$0xf] %vm453, %v672
      %737 = vst.msk [vmem:[%s351 + $0x6c] sm:$0xf] %vm453, %v673
      %738 = vst.msk [vmem:[%s351 + $0x70] sm:$0xf] %vm453, %v674
      %739 = vst.msk [vmem:[%s351 + $0x80] sm:$0xf] %vm453, %v675
      %740 = vst.msk [vmem:[%s351 + $0x84] sm:$0xf] %vm453, %v676
      %741 = vst.msk [vmem:[%s351 + $0x94] sm:$0xf] %vm453, %v677
      %742 = vst.msk [vmem:[%s351 + $0x98] sm:$0xf] %vm453, %v678
      %743 = vst.msk [vmem:[%s351 + $0xa8] sm:$0xf] %vm453, %v679
      %744 = vst.msk [vmem:[%s351 + $0xac] sm:$0xf] %vm453, %v680
      %745 = vst.msk [vmem:[%s351 + $0xbc] sm:$0xf] %vm453, %v681
      %746 = vst.msk [vmem:[%s351 + $0xc0] sm:$0xf] %vm453, %v682
      %747 = vst.msk [vmem:[%s351 + $0xd0] sm:$0xf] %vm453, %v683
      %748 = vst.msk [vmem:[%s351 + $0xd4] sm:$0xf] %vm453, %v684
      %749 = vst.msk [vmem:[%s351 + $0xe4] sm:$0xf] %vm453, %v685
      %750 = vst.msk [vmem:[%s351 + $0xe8] sm:$0xf] %vm453, %v686
      %751 = vst.msk [vmem:[%s351 + $0xf8] sm:$0xf] %vm453, %v687
      %752 = vst.msk [vmem:[%s351 + $0xfc] sm:$0xf] %vm453, %v688
      %753 = vst.msk [vmem:[%s351 + $0x10c] sm:$0xf] %vm453, %v689
      %754 = vst.msk [vmem:[%s351 + $0x110] sm:$0xf] %vm453, %v690
      %755 = vst.msk [vmem:[%s351 + $0x120] sm:$0xf] %vm453, %v691
      %756 = vst.msk [vmem:[%s351 + $0x124] sm:$0xf] %vm453, %v692
      %757 = vst.msk [vmem:[%s351 + $0x134] sm:$0xf] %vm453, %v693
      %758 = vst.msk [vmem:[%s351 + $0x138] sm:$0xf] %vm453, %v694
      %v759 = vld [vmem:[%s320] sm:$0xf]
      %v760 = vld [vmem:[%s320 + $0x4] sm:$0xf]
      %v761 = vld [vmem:[%s320 + $0x8] sm:$0xf]
      %v762 = vld [vmem:[%s320 + $0xc] sm:$0xf]
      %v763 = vld [vmem:[%s320 + $0x10] sm:$0xf]
      %v764 = vld [vmem:[%s320 + $0x14] sm:$0xf]
      %v765 = vld [vmem:[%s320 + $0x18] sm:$0xf]
      %v766 = vld [vmem:[%s320 + $0x1c] sm:$0xf]
      %v767 = vld [vmem:[%s320 + $0x20] sm:$0xf]
      %v768 = vld [vmem:[%s320 + $0x24] sm:$0xf]
      %v769 = vld [vmem:[%s320 + $0x28] sm:$0xf]
      %v770 = vld [vmem:[%s320 + $0x2c] sm:$0xf]
      %v771 = vld [vmem:[%s320 + $0x30] sm:$0xf]
      %v772 = vld [vmem:[%s320 + $0x34] sm:$0xf]
      %v773 = vld [vmem:[%s320 + $0x38] sm:$0xf]
      %v774 = vld [vmem:[%s320 + $0x3c] sm:$0xf]
      %v775 = vld [vmem:[%s320 + $0x40] sm:$0xf]
      %v776 = vld [vmem:[%s320 + $0x44] sm:$0xf]
      %v777 = vld [vmem:[%s320 + $0x48] sm:$0xf]
      %v778 = vld [vmem:[%s320 + $0x4c] sm:$0xf]
      %v779 = vld [vmem:[%s320 + $0x50] sm:$0xf]
      %v780 = vld [vmem:[%s320 + $0x54] sm:$0xf]
      %v781 = vld [vmem:[%s320 + $0x58] sm:$0xf]
      %v782 = vld [vmem:[%s320 + $0x5c] sm:$0xf]
      %v783 = vld [vmem:[%s320 + $0x60] sm:$0xf]
      %v784 = vld [vmem:[%s320 + $0x64] sm:$0xf]
      %v785 = vld [vmem:[%s320 + $0x68] sm:$0xf]
      %v786 = vld [vmem:[%s320 + $0x6c] sm:$0xf]
      %v787 = vld [vmem:[%s320 + $0x70] sm:$0xf]
      %v788 = vld [vmem:[%s320 + $0x74] sm:$0xf]
      %v789 = vld [vmem:[%s320 + $0x78] sm:$0xf]
      %v790 = vld [vmem:[%s320 + $0x7c] sm:$0xf]
      %823 = vrot.lane.b32.xlu0 %v759, 4
      %v824 = vpop.permute.xlu0 %823
      %825 = vrot.lane.b32.xlu0 %v760, 4
      %v826 = vpop.permute.xlu0 %825
      %827 = vrot.lane.b32.xlu0 %v761, 4
      %v828 = vpop.permute.xlu0 %827
      %829 = vrot.lane.b32.xlu0 %v762, 4
      %v830 = vpop.permute.xlu0 %829
      %831 = vrot.lane.b32.xlu0 %v763, 4
      %v832 = vpop.permute.xlu0 %831
      %833 = vrot.lane.b32.xlu0 %v764, 4
      %v834 = vpop.permute.xlu0 %833
      %835 = vrot.lane.b32.xlu0 %v765, 4
      %v836 = vpop.permute.xlu0 %835
      %837 = vrot.lane.b32.xlu0 %v766, 4
      %v838 = vpop.permute.xlu0 %837
      %839 = vrot.lane.b32.xlu0 %v767, 4
      %v840 = vpop.permute.xlu0 %839
      %841 = vrot.lane.b32.xlu0 %v768, 4
      %v842 = vpop.permute.xlu0 %841
      %843 = vrot.lane.b32.xlu0 %v769, 4
      %v844 = vpop.permute.xlu0 %843
      %845 = vrot.lane.b32.xlu0 %v770, 4
      %v846 = vpop.permute.xlu0 %845
      %847 = vrot.lane.b32.xlu0 %v771, 4
      %v848 = vpop.permute.xlu0 %847
      %849 = vrot.lane.b32.xlu0 %v772, 4
      %v850 = vpop.permute.xlu0 %849
      %851 = vrot.lane.b32.xlu0 %v773, 4
      %v852 = vpop.permute.xlu0 %851
      %853 = vrot.lane.b32.xlu0 %v774, 4
      %v854 = vpop.permute.xlu0 %853
      %855 = vrot.lane.b32.xlu0 %v775, 4
      %v856 = vpop.permute.xlu0 %855
      %857 = vrot.lane.b32.xlu0 %v776, 4
      %v858 = vpop.permute.xlu0 %857
      %859 = vrot.lane.b32.xlu0 %v777, 4
      %v860 = vpop.permute.xlu0 %859
      %861 = vrot.lane.b32.xlu0 %v778, 4
      %v862 = vpop.permute.xlu0 %861
      %863 = vrot.lane.b32.xlu0 %v779, 4
      %v864 = vpop.permute.xlu0 %863
      %865 = vrot.lane.b32.xlu0 %v780, 4
      %v866 = vpop.permute.xlu0 %865
      %867 = vrot.lane.b32.xlu0 %v781, 4
      %v868 = vpop.permute.xlu0 %867
      %869 = vrot.lane.b32.xlu0 %v782, 4
      %v870 = vpop.permute.xlu0 %869
      %871 = vrot.lane.b32.xlu0 %v783, 4
      %v872 = vpop.permute.xlu0 %871
      %873 = vrot.lane.b32.xlu0 %v784, 4
      %v874 = vpop.permute.xlu0 %873
      %875 = vrot.lane.b32.xlu0 %v785, 4
      %v876 = vpop.permute.xlu0 %875
      %877 = vrot.lane.b32.xlu0 %v786, 4
      %v878 = vpop.permute.xlu0 %877
      %879 = vrot.lane.b32.xlu0 %v787, 4
      %v880 = vpop.permute.xlu0 %879
      %881 = vrot.lane.b32.xlu0 %v788, 4
      %v882 = vpop.permute.xlu0 %881
      %883 = vrot.lane.b32.xlu0 %v789, 4
      %v884 = vpop.permute.xlu0 %883
      %885 = vrot.lane.b32.xlu0 %v790, 4
      %v886 = vpop.permute.xlu0 %885
      %vm919 = vcmask 60448
      %920 = vst.msk [vmem:[%s351 + $0x8] sm:$0xf] %vm919, %v824
      %921 = vst.msk [vmem:[%s351 + $0xc] sm:$0xf] %vm919, %v826
      %922 = vst.msk [vmem:[%s351 + $0x1c] sm:$0xf] %vm919, %v828
      %923 = vst.msk [vmem:[%s351 + $0x20] sm:$0xf] %vm919, %v830
      %924 = vst.msk [vmem:[%s351 + $0x30] sm:$0xf] %vm919, %v832
      %925 = vst.msk [vmem:[%s351 + $0x34] sm:$0xf] %vm919, %v834
      %926 = vst.msk [vmem:[%s351 + $0x44] sm:$0xf] %vm919, %v836
      %927 = vst.msk [vmem:[%s351 + $0x48] sm:$0xf] %vm919, %v838
      %928 = vst.msk [vmem:[%s351 + $0x58] sm:$0xf] %vm919, %v840
      %929 = vst.msk [vmem:[%s351 + $0x5c] sm:$0xf] %vm919, %v842
      %930 = vst.msk [vmem:[%s351 + $0x6c] sm:$0xf] %vm919, %v844
      %931 = vst.msk [vmem:[%s351 + $0x70] sm:$0xf] %vm919, %v846
      %932 = vst.msk [vmem:[%s351 + $0x80] sm:$0xf] %vm919, %v848
      %933 = vst.msk [vmem:[%s351 + $0x84] sm:$0xf] %vm919, %v850
      %934 = vst.msk [vmem:[%s351 + $0x94] sm:$0xf] %vm919, %v852
      %935 = vst.msk [vmem:[%s351 + $0x98] sm:$0xf] %vm919, %v854
      %936 = vst.msk [vmem:[%s351 + $0xa8] sm:$0xf] %vm919, %v856
      %937 = vst.msk [vmem:[%s351 + $0xac] sm:$0xf] %vm919, %v858
      %938 = vst.msk [vmem:[%s351 + $0xbc] sm:$0xf] %vm919, %v860
      %939 = vst.msk [vmem:[%s351 + $0xc0] sm:$0xf] %vm919, %v862
      %940 = vst.msk [vmem:[%s351 + $0xd0] sm:$0xf] %vm919, %v864
      %941 = vst.msk [vmem:[%s351 + $0xd4] sm:$0xf] %vm919, %v866
      %942 = vst.msk [vmem:[%s351 + $0xe4] sm:$0xf] %vm919, %v868
      %943 = vst.msk [vmem:[%s351 + $0xe8] sm:$0xf] %vm919, %v870
      %944 = vst.msk [vmem:[%s351 + $0xf8] sm:$0xf] %vm919, %v872
      %945 = vst.msk [vmem:[%s351 + $0xfc] sm:$0xf] %vm919, %v874
      %946 = vst.msk [vmem:[%s351 + $0x10c] sm:$0xf] %vm919, %v876
      %947 = vst.msk [vmem:[%s351 + $0x110] sm:$0xf] %vm919, %v878
      %948 = vst.msk [vmem:[%s351 + $0x120] sm:$0xf] %vm919, %v880
      %949 = vst.msk [vmem:[%s351 + $0x124] sm:$0xf] %vm919, %v882
      %950 = vst.msk [vmem:[%s351 + $0x134] sm:$0xf] %vm919, %v884
      %951 = vst.msk [vmem:[%s351 + $0x138] sm:$0xf] %vm919, %v886
      %v952 = vld [vmem:[#allocation2 + $0x4] sm:$0x8]
      %v953 = vld [vmem:[#allocation2 + $0x8] sm:$0xf]
      %v954 = vld [vmem:[#allocation2 + $0xc] sm:$0xf]
      %v955 = vld [vmem:[#allocation2 + $0x18] sm:$0x8]
      %v956 = vld [vmem:[#allocation2 + $0x1c] sm:$0xf]
      %v957 = vld [vmem:[#allocation2 + $0x20] sm:$0xf]
      %v958 = vld [vmem:[#allocation2 + $0x2c] sm:$0x8]
      %v959 = vld [vmem:[#allocation2 + $0x30] sm:$0xf]
      %v960 = vld [vmem:[#allocation2 + $0x34] sm:$0xf]
      %v961 = vld [vmem:[#allocation2 + $0x40] sm:$0x8]
      %v962 = vld [vmem:[#allocation2 + $0x44] sm:$0xf]
      %v963 = vld [vmem:[#allocation2 + $0x48] sm:$0xf]
      %v964 = vld [vmem:[#allocation2 + $0x54] sm:$0x8]
      %v965 = vld [vmem:[#allocation2 + $0x58] sm:$0xf]
      %v966 = vld [vmem:[#allocation2 + $0x5c] sm:$0xf]
      %v967 = vld [vmem:[#allocation2 + $0x68] sm:$0x8]
      %v968 = vld [vmem:[#allocation2 + $0x6c] sm:$0xf]
      %v969 = vld [vmem:[#allocation2 + $0x70] sm:$0xf]
      %v970 = vld [vmem:[#allocation2 + $0x7c] sm:$0x8]
      %v971 = vld [vmem:[#allocation2 + $0x80] sm:$0xf]
      %v972 = vld [vmem:[#allocation2 + $0x84] sm:$0xf]
      %v973 = vld [vmem:[#allocation2 + $0x90] sm:$0x8]
      %v974 = vld [vmem:[#allocation2 + $0x94] sm:$0xf]
      %v975 = vld [vmem:[#allocation2 + $0x98] sm:$0xf]
      %v976 = vld [vmem:[#allocation2 + $0xa4] sm:$0x8]
      %v977 = vld [vmem:[#allocation2 + $0xa8] sm:$0xf]
      %v978 = vld [vmem:[#allocation2 + $0xac] sm:$0xf]
      %v979 = vld [vmem:[#allocation2 + $0xb8] sm:$0x8]
      %v980 = vld [vmem:[#allocation2 + $0xbc] sm:$0xf]
      %v981 = vld [vmem:[#allocation2 + $0xc0] sm:$0xf]
      %v982 = vld [vmem:[#allocation2 + $0xcc] sm:$0x8]
      %v983 = vld [vmem:[#allocation2 + $0xd0] sm:$0xf]
      %v984 = vld [vmem:[#allocation2 + $0xd4] sm:$0xf]
      %v985 = vld [vmem:[#allocation2 + $0xe0] sm:$0x8]
      %v986 = vld [vmem:[#allocation2 + $0xe4] sm:$0xf]
      %v987 = vld [vmem:[#allocation2 + $0xe8] sm:$0xf]
      %v988 = vld [vmem:[#allocation2 + $0xf4] sm:$0x8]
      %v989 = vld [vmem:[#allocation2 + $0xf8] sm:$0xf]
      %v990 = vld [vmem:[#allocation2 + $0xfc] sm:$0xf]
      %v991 = vld [vmem:[#allocation2 + $0x108] sm:$0x8]
      %v992 = vld [vmem:[#allocation2 + $0x10c] sm:$0xf]
      %v993 = vld [vmem:[#allocation2 + $0x110] sm:$0xf]
      %v994 = vld [vmem:[#allocation2 + $0x11c] sm:$0x8]
      %v995 = vld [vmem:[#allocation2 + $0x120] sm:$0xf]
      %v996 = vld [vmem:[#allocation2 + $0x124] sm:$0xf]
      %v997 = vld [vmem:[#allocation2 + $0x130] sm:$0x8]
      %v998 = vld [vmem:[#allocation2 + $0x134] sm:$0xf]
      %v999 = vld [vmem:[#allocation2 + $0x138] sm:$0xf]
      %vm1000 = vsmask.f32 4368
      %vm1001 = vmor %vm337, %vm1000
      %v1003 = vshrl.u32 %v952, 16
      %v1005 = vrot.slane %v1003, 7
      %v1006 = vrot.slane %v1005, 4
      %v1008 = vshrl.u32 %v953, 16
      %v1010 = vrot.slane %v1008, 7
      %v1011 = vshll.u32 %v953, 16
      %v1013 = vor.u32 %v1010, %v1011
      %v1014 = vsel %vm1001, %v1006, %v1013
      %v1015 = vrot.slane %v1010, 4
      %v1017 = vshrl.u32 %v954, 16
      %v1019 = vrot.slane %v1017, 7
      %v1020 = vshll.u32 %v954, 16
      %v1022 = vor.u32 %v1019, %v1020
      %v1023 = vsel %vm1001, %v1015, %v1022
      %v1025 = vshrl.u32 %v955, 16
      %v1027 = vrot.slane %v1025, 7
      %v1028 = vrot.slane %v1027, 4
      %v1030 = vshrl.u32 %v956, 16
      %v1032 = vrot.slane %v1030, 7
      %v1033 = vshll.u32 %v956, 16
      %v1035 = vor.u32 %v1032, %v1033
      %v1036 = vsel %vm1001, %v1028, %v1035
      %v1037 = vrot.slane %v1032, 4
      %v1039 = vshrl.u32 %v957, 16
      %v1041 = vrot.slane %v1039, 7
      %v1042 = vshll.u32 %v957, 16
      %v1044 = vor.u32 %v1041, %v1042
      %v1045 = vsel %vm1001, %v1037, %v1044
      %v1047 = vshrl.u32 %v958, 16
      %v1049 = vrot.slane %v1047, 7
      %v1050 = vrot.slane %v1049, 4
      %v1052 = vshrl.u32 %v959, 16
      %v1054 = vrot.slane %v1052, 7
      %v1055 = vshll.u32 %v959, 16
      %v1057 = vor.u32 %v1054, %v1055
      %v1058 = vsel %vm1001, %v1050, %v1057
      %v1059 = vrot.slane %v1054, 4
      %v1061 = vshrl.u32 %v960, 16
      %v1063 = vrot.slane %v1061, 7
      %v1064 = vshll.u32 %v960, 16
      %v1066 = vor.u32 %v1063, %v1064
      %v1067 = vsel %vm1001, %v1059, %v1066
      %v1069 = vshrl.u32 %v961, 16
      %v1071 = vrot.slane %v1069, 7
      %v1072 = vrot.slane %v1071, 4
      %v1074 = vshrl.u32 %v962, 16
      %v1076 = vrot.slane %v1074, 7
      %v1077 = vshll.u32 %v962, 16
      %v1079 = vor.u32 %v1076, %v1077
      %v1080 = vsel %vm1001, %v1072, %v1079
      %v1081 = vrot.slane %v1076, 4
      %v1083 = vshrl.u32 %v963, 16
      %v1085 = vrot.slane %v1083, 7
      %v1086 = vshll.u32 %v963, 16
      %v1088 = vor.u32 %v1085, %v1086
      %v1089 = vsel %vm1001, %v1081, %v1088
      %v1091 = vshrl.u32 %v964, 16
      %v1093 = vrot.slane %v1091, 7
      %v1094 = vrot.slane %v1093, 4
      %v1096 = vshrl.u32 %v965, 16
      %v1098 = vrot.slane %v1096, 7
      %v1099 = vshll.u32 %v965, 16
      %v1101 = vor.u32 %v1098, %v1099
      %v1102 = vsel %vm1001, %v1094, %v1101
      %v1103 = vrot.slane %v1098, 4
      %v1105 = vshrl.u32 %v966, 16
      %v1107 = vrot.slane %v1105, 7
      %v1108 = vshll.u32 %v966, 16
      %v1110 = vor.u32 %v1107, %v1108
      %v1111 = vsel %vm1001, %v1103, %v1110
      %v1113 = vshrl.u32 %v967, 16
      %v1115 = vrot.slane %v1113, 7
      %v1116 = vrot.slane %v1115, 4
      %v1118 = vshrl.u32 %v968, 16
      %v1120 = vrot.slane %v1118, 7
      %v1121 = vshll.u32 %v968, 16
      %v1123 = vor.u32 %v1120, %v1121
      %v1124 = vsel %vm1001, %v1116, %v1123
      %v1125 = vrot.slane %v1120, 4
      %v1127 = vshrl.u32 %v969, 16
      %v1129 = vrot.slane %v1127, 7
      %v1130 = vshll.u32 %v969, 16
      %v1132 = vor.u32 %v1129, %v1130
      %v1133 = vsel %vm1001, %v1125, %v1132
      %v1135 = vshrl.u32 %v970, 16
      %v1137 = vrot.slane %v1135, 7
      %v1138 = vrot.slane %v1137, 4
      %v1140 = vshrl.u32 %v971, 16
      %v1142 = vrot.slane %v1140, 7
      %v1143 = vshll.u32 %v971, 16
      %v1145 = vor.u32 %v1142, %v1143
      %v1146 = vsel %vm1001, %v1138, %v1145
      %v1147 = vrot.slane %v1142, 4
      %v1149 = vshrl.u32 %v972, 16
      %v1151 = vrot.slane %v1149, 7
      %v1152 = vshll.u32 %v972, 16
      %v1154 = vor.u32 %v1151, %v1152
      %v1155 = vsel %vm1001, %v1147, %v1154
      %v1157 = vshrl.u32 %v973, 16
      %v1159 = vrot.slane %v1157, 7
      %v1160 = vrot.slane %v1159, 4
      %v1162 = vshrl.u32 %v974, 16
      %v1164 = vrot.slane %v1162, 7
      %v1165 = vshll.u32 %v974, 16
      %v1167 = vor.u32 %v1164, %v1165
      %v1168 = vsel %vm1001, %v1160, %v1167
      %v1169 = vrot.slane %v1164, 4
      %v1171 = vshrl.u32 %v975, 16
      %v1173 = vrot.slane %v1171, 7
      %v1174 = vshll.u32 %v975, 16
      %v1176 = vor.u32 %v1173, %v1174
      %v1177 = vsel %vm1001, %v1169, %v1176
      %v1179 = vshrl.u32 %v976, 16
      %v1181 = vrot.slane %v1179, 7
      %v1182 = vrot.slane %v1181, 4
      %v1184 = vshrl.u32 %v977, 16
      %v1186 = vrot.slane %v1184, 7
      %v1187 = vshll.u32 %v977, 16
      %v1189 = vor.u32 %v1186, %v1187
      %v1190 = vsel %vm1001, %v1182, %v1189
      %v1191 = vrot.slane %v1186, 4
      %v1193 = vshrl.u32 %v978, 16
      %v1195 = vrot.slane %v1193, 7
      %v1196 = vshll.u32 %v978, 16
      %v1198 = vor.u32 %v1195, %v1196
      %v1199 = vsel %vm1001, %v1191, %v1198
      %v1201 = vshrl.u32 %v979, 16
      %v1203 = vrot.slane %v1201, 7
      %v1204 = vrot.slane %v1203, 4
      %v1206 = vshrl.u32 %v980, 16
      %v1208 = vrot.slane %v1206, 7
      %v1209 = vshll.u32 %v980, 16
      %v1211 = vor.u32 %v1208, %v1209
      %v1212 = vsel %vm1001, %v1204, %v1211
      %v1213 = vrot.slane %v1208, 4
      %v1215 = vshrl.u32 %v981, 16
      %v1217 = vrot.slane %v1215, 7
      %v1218 = vshll.u32 %v981, 16
      %v1220 = vor.u32 %v1217, %v1218
      %v1221 = vsel %vm1001, %v1213, %v1220
      %v1223 = vshrl.u32 %v982, 16
      %v1225 = vrot.slane %v1223, 7
      %v1226 = vrot.slane %v1225, 4
      %v1228 = vshrl.u32 %v983, 16
      %v1230 = vrot.slane %v1228, 7
      %v1231 = vshll.u32 %v983, 16
      %v1233 = vor.u32 %v1230, %v1231
      %v1234 = vsel %vm1001, %v1226, %v1233
      %v1235 = vrot.slane %v1230, 4
      %v1237 = vshrl.u32 %v984, 16
      %v1239 = vrot.slane %v1237, 7
      %v1240 = vshll.u32 %v984, 16
      %v1242 = vor.u32 %v1239, %v1240
      %v1243 = vsel %vm1001, %v1235, %v1242
      %v1245 = vshrl.u32 %v985, 16
      %v1247 = vrot.slane %v1245, 7
      %v1248 = vrot.slane %v1247, 4
      %v1250 = vshrl.u32 %v986, 16
      %v1252 = vrot.slane %v1250, 7
      %v1253 = vshll.u32 %v986, 16
      %v1255 = vor.u32 %v1252, %v1253
      %v1256 = vsel %vm1001, %v1248, %v1255
      %v1257 = vrot.slane %v1252, 4
      %v1259 = vshrl.u32 %v987, 16
      %v1261 = vrot.slane %v1259, 7
      %v1262 = vshll.u32 %v987, 16
      %v1264 = vor.u32 %v1261, %v1262
      %v1265 = vsel %vm1001, %v1257, %v1264
      %v1267 = vshrl.u32 %v988, 16
      %v1269 = vrot.slane %v1267, 7
      %v1270 = vrot.slane %v1269, 4
      %v1272 = vshrl.u32 %v989, 16
      %v1274 = vrot.slane %v1272, 7
      %v1275 = vshll.u32 %v989, 16
      %v1277 = vor.u32 %v1274, %v1275
      %v1278 = vsel %vm1001, %v1270, %v1277
      %v1279 = vrot.slane %v1274, 4
      %v1281 = vshrl.u32 %v990, 16
      %v1283 = vrot.slane %v1281, 7
      %v1284 = vshll.u32 %v990, 16
      %v1286 = vor.u32 %v1283, %v1284
      %v1287 = vsel %vm1001, %v1279, %v1286
      %v1289 = vshrl.u32 %v991, 16
      %v1291 = vrot.slane %v1289, 7
      %v1292 = vrot.slane %v1291, 4
      %v1294 = vshrl.u32 %v992, 16
      %v1296 = vrot.slane %v1294, 7
      %v1297 = vshll.u32 %v992, 16
      %v1299 = vor.u32 %v1296, %v1297
      %v1300 = vsel %vm1001, %v1292, %v1299
      %v1301 = vrot.slane %v1296, 4
      %v1303 = vshrl.u32 %v993, 16
      %v1305 = vrot.slane %v1303, 7
      %v1306 = vshll.u32 %v993, 16
      %v1308 = vor.u32 %v1305, %v1306
      %v1309 = vsel %vm1001, %v1301, %v1308
      %v1311 = vshrl.u32 %v994, 16
      %v1313 = vrot.slane %v1311, 7
      %v1314 = vrot.slane %v1313, 4
      %v1316 = vshrl.u32 %v995, 16
      %v1318 = vrot.slane %v1316, 7
      %v1319 = vshll.u32 %v995, 16
      %v1321 = vor.u32 %v1318, %v1319
      %v1322 = vsel %vm1001, %v1314, %v1321
      %v1323 = vrot.slane %v1318, 4
      %v1325 = vshrl.u32 %v996, 16
      %v1327 = vrot.slane %v1325, 7
      %v1328 = vshll.u32 %v996, 16
      %v1330 = vor.u32 %v1327, %v1328
      %v1331 = vsel %vm1001, %v1323, %v1330
      %v1333 = vshrl.u32 %v997, 16
      %v1335 = vrot.slane %v1333, 7
      %v1336 = vrot.slane %v1335, 4
      %v1338 = vshrl.u32 %v998, 16
      %v1340 = vrot.slane %v1338, 7
      %v1341 = vshll.u32 %v998, 16
      %v1343 = vor.u32 %v1340, %v1341
      %v1344 = vsel %vm1001, %v1336, %v1343
      %v1345 = vrot.slane %v1340, 4
      %v1347 = vshrl.u32 %v999, 16
      %v1349 = vrot.slane %v1347, 7
      %v1350 = vshll.u32 %v999, 16
      %v1352 = vor.u32 %v1349, %v1350
      %v1353 = vsel %vm1001, %v1345, %v1352
      %v1354 = vld [vmem:[%s2] sm:$0xf]
      %s1355 = scalar_lea.vmem %s2, 4
      %v1356 = vld [vmem:[%s1355] sm:$0xf]
      %v1389 = vunpack.c.l.b16 %v953
      %v1390 = vunpack.c.l.b16 %v954
      %v1391 = vunpack.c.l.b16 %v956
      %v1392 = vunpack.c.l.b16 %v957
      %v1393 = vunpack.c.l.b16 %v959
      %v1394 = vunpack.c.l.b16 %v960
      %v1395 = vunpack.c.l.b16 %v962
      %v1396 = vunpack.c.l.b16 %v963
      %v1397 = vunpack.c.l.b16 %v965
      %v1398 = vunpack.c.l.b16 %v966
      %v1399 = vunpack.c.l.b16 %v968
      %v1400 = vunpack.c.l.b16 %v969
      %v1401 = vunpack.c.l.b16 %v971
      %v1402 = vunpack.c.l.b16 %v972
      %v1403 = vunpack.c.l.b16 %v974
      %v1404 = vunpack.c.l.b16 %v975
      %v1405 = vunpack.c.l.b16 %v977
      %v1406 = vunpack.c.l.b16 %v978
      %v1407 = vunpack.c.l.b16 %v980
      %v1408 = vunpack.c.l.b16 %v981
      %v1409 = vunpack.c.l.b16 %v983
      %v1410 = vunpack.c.l.b16 %v984
      %v1411 = vunpack.c.l.b16 %v986
      %v1412 = vunpack.c.l.b16 %v987
      %v1413 = vunpack.c.l.b16 %v989
      %v1414 = vunpack.c.l.b16 %v990
      %v1415 = vunpack.c.l.b16 %v992
      %v1416 = vunpack.c.l.b16 %v993
      %v1417 = vunpack.c.l.b16 %v995
      %v1418 = vunpack.c.l.b16 %v996
      %v1419 = vunpack.c.l.b16 %v998
      %v1420 = vunpack.c.l.b16 %v999
      %v1421 = vpack.c.b16 %v1390, %v1389
      %v1422 = vpack.c.b16 %v1392, %v1391
      %v1423 = vpack.c.b16 %v1394, %v1393
      %v1424 = vpack.c.b16 %v1396, %v1395
      %v1425 = vpack.c.b16 %v1398, %v1397
      %v1426 = vpack.c.b16 %v1400, %v1399
      %v1427 = vpack.c.b16 %v1402, %v1401
      %v1428 = vpack.c.b16 %v1404, %v1403
      %v1429 = vpack.c.b16 %v1406, %v1405
      %v1430 = vpack.c.b16 %v1408, %v1407
      %v1431 = vpack.c.b16 %v1410, %v1409
      %v1432 = vpack.c.b16 %v1412, %v1411
      %v1433 = vpack.c.b16 %v1414, %v1413
      %v1434 = vpack.c.b16 %v1416, %v1415
      %v1435 = vpack.c.b16 %v1418, %v1417
      %v1436 = vpack.c.b16 %v1420, %v1419
      %vm1437 = vcmask 64512
      %v1439 = vsel %vm1437, %v1421, 0
      %v1442 = vsel %vm1437, %v1422, 0
      %v1445 = vsel %vm1437, %v1423, 0
      %v1448 = vsel %vm1437, %v1424, 0
      %v1451 = vsel %vm1437, %v1425, 0
      %v1454 = vsel %vm1437, %v1426, 0
      %v1457 = vsel %vm1437, %v1427, 0
      %v1460 = vsel %vm1437, %v1428, 0
      %v1463 = vsel %vm1437, %v1429, 0
      %v1466 = vsel %vm1437, %v1430, 0
      %v1469 = vsel %vm1437, %v1431, 0
      %v1472 = vsel %vm1437, %v1432, 0
      %v1475 = vsel %vm1437, %v1433, 0
      %v1478 = vsel %vm1437, %v1434, 0
      %v1481 = vsel %vm1437, %v1435, 0
      %v1484 = vsel %vm1437, %v1436, 0
      %vm1486 = vcmask 1043456
      %v1488 = vsel %vm1486, %v1356, 0
      %1490 = vmatprep.subr.bf16.mxu0 0
      %1491 = vmatpush1.bf16.msra.mxu0 0
      %1492 = vmatprep.subr.bf16.mxu0 0
      %1493 = vmatpush1.bf16.msra.mxu0 0
      %1494 = vmatprep.subr.bf16.mxu0 0
      %1495 = vmatpush1.bf16.msra.mxu0 0
      %1496 = vmatprep.subr.bf16.mxu0 0
      %1497 = vmatpush1.bf16.msra.mxu0 0
      %1498 = vmatprep.subr.bf16.mxu0 0
      %1499 = vmatpush1.bf16.msra.mxu0 0
      %1500 = vmatprep.subr.bf16.mxu0 0
      %1501 = vmatpush1.bf16.msra.mxu0 0
      %1502 = vmatprep.subr.bf16.mxu0 0
      %1503 = vmatpush1.bf16.msra.mxu0 0
      %1504 = vmatprep.subr.bf16.mxu0 0
      %1505 = vmatpush1.bf16.msra.mxu0 %v1488
      %1506 = vmatprep.subr.bf16.mxu0 0
      %1507 = vmatpush2.bf16.msra.mxu0 0
      %1508 = vmatprep.subr.bf16.mxu0 0
      %1509 = vmatpush2.bf16.msra.mxu0 0
      %1510 = vmatprep.subr.bf16.mxu0 0
      %1511 = vmatpush2.bf16.msra.mxu0 0
      %1512 = vmatprep.subr.bf16.mxu0 0
      %1513 = vmatpush2.bf16.msra.mxu0 0
      %1514 = vmatprep.subr.bf16.mxu0 0
      %1515 = vmatpush2.bf16.msra.mxu0 0
      %1516 = vmatprep.subr.bf16.mxu0 0
      %1517 = vmatpush2.bf16.msra.mxu0 0
      %1518 = vmatprep.subr.bf16.mxu0 0
      %1519 = vmatpush2.bf16.msra.mxu0 0
      %1520 = vmatprep.subr.bf16.mxu0 0
      %1521 = vmatpush2.bf16.msra.mxu0 0
      %1522 = vmatprep.mubr.bf16.mxu0 0
      %1523 = vmatmul.mubr.bf16.gmra.mxu0 %v1439
      %v1524 = vpop.f32.mrf.mxu0
      %v1525 = vadd.f32 0.0, %v1524
      %v1526 = vpop.f32.mrf.mxu0
      %v1527 = vpop.f32.mrf.mxu0
      %v1528 = vadd.f32 0.0, %v1527
      %v1529 = vpop.f32.mrf.mxu0
      %1530 = vmatprep.mubr.bf16.mxu0 0
      %1531 = vmatmul.mubr.bf16.gmra.mxu0 %v1442
      %v1532 = vpop.f32.mrf.mxu0
      %v1533 = vadd.f32 0.0, %v1532
      %v1534 = vpop.f32.mrf.mxu0
      %v1535 = vpop.f32.mrf.mxu0
      %v1536 = vadd.f32 0.0, %v1535
      %v1537 = vpop.f32.mrf.mxu0
      %1538 = vmatprep.mubr.bf16.mxu0 0
      %1539 = vmatmul.mubr.bf16.gmra.mxu0 %v1445
      %v1540 = vpop.f32.mrf.mxu0
      %v1541 = vadd.f32 0.0, %v1540
      %v1542 = vpop.f32.mrf.mxu0
      %v1543 = vpop.f32.mrf.mxu0
      %v1544 = vadd.f32 0.0, %v1543
      %v1545 = vpop.f32.mrf.mxu0
      %1546 = vmatprep.mubr.bf16.mxu0 0
      %1547 = vmatmul.mubr.bf16.gmra.mxu0 %v1448
      %v1548 = vpop.f32.mrf.mxu0
      %v1549 = vadd.f32 0.0, %v1548
      %v1550 = vpop.f32.mrf.mxu0
      %v1551 = vpop.f32.mrf.mxu0
      %v1552 = vadd.f32 0.0, %v1551
      %v1553 = vpop.f32.mrf.mxu0
      %1554 = vmatprep.mubr.bf16.mxu0 0
      %1555 = vmatmul.mubr.bf16.gmra.mxu0 %v1451
      %v1556 = vpop.f32.mrf.mxu0
      %v1557 = vadd.f32 0.0, %v1556
      %v1558 = vpop.f32.mrf.mxu0
      %v1559 = vpop.f32.mrf.mxu0
      %v1560 = vadd.f32 0.0, %v1559
      %v1561 = vpop.f32.mrf.mxu0
      %1562 = vmatprep.mubr.bf16.mxu0 0
      %1563 = vmatmul.mubr.bf16.gmra.mxu0 %v1454
      %v1564 = vpop.f32.mrf.mxu0
      %v1565 = vadd.f32 0.0, %v1564
      %v1566 = vpop.f32.mrf.mxu0
      %v1567 = vpop.f32.mrf.mxu0
      %v1568 = vadd.f32 0.0, %v1567
      %v1569 = vpop.f32.mrf.mxu0
      %1570 = vmatprep.mubr.bf16.mxu0 0
      %1571 = vmatmul.mubr.bf16.gmra.mxu0 %v1457
      %v1572 = vpop.f32.mrf.mxu0
      %v1573 = vadd.f32 0.0, %v1572
      %v1574 = vpop.f32.mrf.mxu0
      %v1575 = vpop.f32.mrf.mxu0
      %v1576 = vadd.f32 0.0, %v1575
      %v1577 = vpop.f32.mrf.mxu0
      %1578 = vmatprep.mubr.bf16.mxu0 0
      %1579 = vmatmul.mubr.bf16.gmra.mxu0 %v1460
      %v1580 = vpop.f32.mrf.mxu0
      %v1581 = vadd.f32 0.0, %v1580
      %v1582 = vpop.f32.mrf.mxu0
      %v1583 = vpop.f32.mrf.mxu0
      %v1584 = vadd.f32 0.0, %v1583
      %v1585 = vpop.f32.mrf.mxu0
      %1586 = vmatprep.mubr.bf16.mxu0 0
      %1587 = vmatmul.mubr.bf16.gmra.mxu0 %v1463
      %v1588 = vpop.f32.mrf.mxu0
      %v1589 = vadd.f32 0.0, %v1588
      %v1590 = vpop.f32.mrf.mxu0
      %v1591 = vpop.f32.mrf.mxu0
      %v1592 = vadd.f32 0.0, %v1591
      %v1593 = vpop.f32.mrf.mxu0
      %1594 = vmatprep.mubr.bf16.mxu0 0
      %1595 = vmatmul.mubr.bf16.gmra.mxu0 %v1466
      %v1596 = vpop.f32.mrf.mxu0
      %v1597 = vadd.f32 0.0, %v1596
      %v1598 = vpop.f32.mrf.mxu0
      %v1599 = vpop.f32.mrf.mxu0
      %v1600 = vadd.f32 0.0, %v1599
      %v1601 = vpop.f32.mrf.mxu0
      %1602 = vmatprep.mubr.bf16.mxu0 0
      %1603 = vmatmul.mubr.bf16.gmra.mxu0 %v1469
      %v1604 = vpop.f32.mrf.mxu0
      %v1605 = vadd.f32 0.0, %v1604
      %v1606 = vpop.f32.mrf.mxu0
      %v1607 = vpop.f32.mrf.mxu0
      %v1608 = vadd.f32 0.0, %v1607
      %v1609 = vpop.f32.mrf.mxu0
      %1610 = vmatprep.mubr.bf16.mxu0 0
      %1611 = vmatmul.mubr.bf16.gmra.mxu0 %v1472
      %v1612 = vpop.f32.mrf.mxu0
      %v1613 = vadd.f32 0.0, %v1612
      %v1614 = vpop.f32.mrf.mxu0
      %v1615 = vpop.f32.mrf.mxu0
      %v1616 = vadd.f32 0.0, %v1615
      %v1617 = vpop.f32.mrf.mxu0
      %1618 = vmatprep.mubr.bf16.mxu0 0
      %1619 = vmatmul.mubr.bf16.gmra.mxu0 %v1475
      %v1620 = vpop.f32.mrf.mxu0
      %v1621 = vadd.f32 0.0, %v1620
      %v1622 = vpop.f32.mrf.mxu0
      %v1623 = vpop.f32.mrf.mxu0
      %v1624 = vadd.f32 0.0, %v1623
      %v1625 = vpop.f32.mrf.mxu0
      %1626 = vmatprep.mubr.bf16.mxu0 0
      %1627 = vmatmul.mubr.bf16.gmra.mxu0 %v1478
      %v1628 = vpop.f32.mrf.mxu0
      %v1629 = vadd.f32 0.0, %v1628
      %v1630 = vpop.f32.mrf.mxu0
      %v1631 = vpop.f32.mrf.mxu0
      %v1632 = vadd.f32 0.0, %v1631
      %v1633 = vpop.f32.mrf.mxu0
      %1634 = vmatprep.mubr.bf16.mxu0 0
      %1635 = vmatmul.mubr.bf16.gmra.mxu0 %v1481
      %v1636 = vpop.f32.mrf.mxu0
      %v1637 = vadd.f32 0.0, %v1636
      %v1638 = vpop.f32.mrf.mxu0
      %v1639 = vpop.f32.mrf.mxu0
      %v1640 = vadd.f32 0.0, %v1639
      %v1641 = vpop.f32.mrf.mxu0
      %1642 = vmatprep.mubr.bf16.mxu0 0
      %1643 = vmatmul.mubr.bf16.gmra.mxu0 %v1484
      %v1644 = vpop.f32.mrf.mxu0
      %v1645 = vadd.f32 0.0, %v1644
      %v1646 = vpop.f32.mrf.mxu0
      %v1647 = vpop.f32.mrf.mxu0
      %v1648 = vadd.f32 0.0, %v1647
      %v1649 = vpop.f32.mrf.mxu0
      %1650 = vdwg.mxu0
      %v1651 = vunpack.c.l.b16 %v1014
      %v1652 = vunpack.c.l.b16 %v1023
      %v1653 = vunpack.c.l.b16 %v1036
      %v1654 = vunpack.c.l.b16 %v1045
      %v1655 = vunpack.c.l.b16 %v1058
      %v1656 = vunpack.c.l.b16 %v1067
      %v1657 = vunpack.c.l.b16 %v1080
      %v1658 = vunpack.c.l.b16 %v1089
      %v1659 = vunpack.c.l.b16 %v1102
      %v1660 = vunpack.c.l.b16 %v1111
      %v1661 = vunpack.c.l.b16 %v1124
      %v1662 = vunpack.c.l.b16 %v1133
      %v1663 = vunpack.c.l.b16 %v1146
      %v1664 = vunpack.c.l.b16 %v1155
      %v1665 = vunpack.c.l.b16 %v1168
      %v1666 = vunpack.c.l.b16 %v1177
      %v1667 = vunpack.c.l.b16 %v1190
      %v1668 = vunpack.c.l.b16 %v1199
      %v1669 = vunpack.c.l.b16 %v1212
      %v1670 = vunpack.c.l.b16 %v1221
      %v1671 = vunpack.c.l.b16 %v1234
      %v1672 = vunpack.c.l.b16 %v1243
      %v1673 = vunpack.c.l.b16 %v1256
      %v1674 = vunpack.c.l.b16 %v1265
      %v1675 = vunpack.c.l.b16 %v1278
      %v1676 = vunpack.c.l.b16 %v1287
      %v1677 = vunpack.c.l.b16 %v1300
      %v1678 = vunpack.c.l.b16 %v1309
      %v1679 = vunpack.c.l.b16 %v1322
      %v1680 = vunpack.c.l.b16 %v1331
      %v1681 = vunpack.c.l.b16 %v1344
      %v1682 = vunpack.c.l.b16 %v1353
      %v1683 = vpack.c.b16 %v1652, %v1651
      %v1684 = vpack.c.b16 %v1654, %v1653
      %v1685 = vpack.c.b16 %v1656, %v1655
      %v1686 = vpack.c.b16 %v1658, %v1657
      %v1687 = vpack.c.b16 %v1660, %v1659
      %v1688 = vpack.c.b16 %v1662, %v1661
      %v1689 = vpack.c.b16 %v1664, %v1663
      %v1690 = vpack.c.b16 %v1666, %v1665
      %v1691 = vpack.c.b16 %v1668, %v1667
      %v1692 = vpack.c.b16 %v1670, %v1669
      %v1693 = vpack.c.b16 %v1672, %v1671
      %v1694 = vpack.c.b16 %v1674, %v1673
      %v1695 = vpack.c.b16 %v1676, %v1675
      %v1696 = vpack.c.b16 %v1678, %v1677
      %v1697 = vpack.c.b16 %v1680, %v1679
      %v1698 = vpack.c.b16 %v1682, %v1681
      %v1700 = vsel %vm1437, %v1683, 0
      %v1703 = vsel %vm1437, %v1684, 0
      %v1706 = vsel %vm1437, %v1685, 0
      %v1709 = vsel %vm1437, %v1686, 0
      %v1712 = vsel %vm1437, %v1687, 0
      %v1715 = vsel %vm1437, %v1688, 0
      %v1718 = vsel %vm1437, %v1689, 0
      %v1721 = vsel %vm1437, %v1690, 0
      %v1724 = vsel %vm1437, %v1691, 0
      %v1727 = vsel %vm1437, %v1692, 0
      %v1730 = vsel %vm1437, %v1693, 0
      %v1733 = vsel %vm1437, %v1694, 0
      %v1736 = vsel %vm1437, %v1695, 0
      %v1739 = vsel %vm1437, %v1696, 0
      %v1742 = vsel %vm1437, %v1697, 0
      %v1745 = vsel %vm1437, %v1698, 0
      %v1748 = vsel %vm1486, %v1354, 0
      %1750 = vmatprep.subr.bf16.mxu0 0
      %1751 = vmatpush1.bf16.msra.mxu0 0
      %1752 = vmatprep.subr.bf16.mxu0 0
      %1753 = vmatpush1.bf16.msra.mxu0 0
      %1754 = vmatprep.subr.bf16.mxu0 0
      %1755 = vmatpush1.bf16.msra.mxu0 0
      %1756 = vmatprep.subr.bf16.mxu0 0
      %1757 = vmatpush1.bf16.msra.mxu0 0
      %1758 = vmatprep.subr.bf16.mxu0 0
      %1759 = vmatpush1.bf16.msra.mxu0 0
      %1760 = vmatprep.subr.bf16.mxu0 0
      %1761 = vmatpush1.bf16.msra.mxu0 0
      %1762 = vmatprep.subr.bf16.mxu0 0
      %1763 = vmatpush1.bf16.msra.mxu0 0
      %1764 = vmatprep.subr.bf16.mxu0 0
      %1765 = vmatpush1.bf16.msra.mxu0 %v1748
      %1766 = vmatprep.subr.bf16.mxu0 0
      %1767 = vmatpush2.bf16.msra.mxu0 0
      %1768 = vmatprep.subr.bf16.mxu0 0
      %1769 = vmatpush2.bf16.msra.mxu0 0
      %1770 = vmatprep.subr.bf16.mxu0 0
      %1771 = vmatpush2.bf16.msra.mxu0 0
      %1772 = vmatprep.subr.bf16.mxu0 0
      %1773 = vmatpush2.bf16.msra.mxu0 0
      %1774 = vmatprep.subr.bf16.mxu0 0
      %1775 = vmatpush2.bf16.msra.mxu0 0
      %1776 = vmatprep.subr.bf16.mxu0 0
      %1777 = vmatpush2.bf16.msra.mxu0 0
      %1778 = vmatprep.subr.bf16.mxu0 0
      %1779 = vmatpush2.bf16.msra.mxu0 0
      %1780 = vmatprep.subr.bf16.mxu0 0
      %1781 = vmatpush2.bf16.msra.mxu0 0
      %1782 = vmatprep.mubr.bf16.mxu0 0
      %1783 = vmatmul.mubr.bf16.gmra.mxu0 %v1700
      %v1784 = vpop.f32.mrf.mxu0
      %v1785 = vadd.f32 %v1525, %v1784
      %v1786 = vpop.f32.mrf.mxu0
      %v1787 = vpop.f32.mrf.mxu0
      %v1788 = vadd.f32 %v1528, %v1787
      %v1789 = vpop.f32.mrf.mxu0
      %1790 = vmatprep.mubr.bf16.mxu0 0
      %1791 = vmatmul.mubr.bf16.gmra.mxu0 %v1703
      %v1792 = vpop.f32.mrf.mxu0
      %v1793 = vadd.f32 %v1533, %v1792
      %v1794 = vpop.f32.mrf.mxu0
      %v1795 = vpop.f32.mrf.mxu0
      %v1796 = vadd.f32 %v1536, %v1795
      %v1797 = vpop.f32.mrf.mxu0
      %1798 = vmatprep.mubr.bf16.mxu0 0
      %1799 = vmatmul.mubr.bf16.gmra.mxu0 %v1706
      %v1800 = vpop.f32.mrf.mxu0
      %v1801 = vadd.f32 %v1541, %v1800
      %v1802 = vpop.f32.mrf.mxu0
      %v1803 = vpop.f32.mrf.mxu0
      %v1804 = vadd.f32 %v1544, %v1803
      %v1805 = vpop.f32.mrf.mxu0
      %1806 = vmatprep.mubr.bf16.mxu0 0
      %1807 = vmatmul.mubr.bf16.gmra.mxu0 %v1709
      %v1808 = vpop.f32.mrf.mxu0
      %v1809 = vadd.f32 %v1549, %v1808
      %v1810 = vpop.f32.mrf.mxu0
      %v1811 = vpop.f32.mrf.mxu0
      %v1812 = vadd.f32 %v1552, %v1811
      %v1813 = vpop.f32.mrf.mxu0
      %1814 = vmatprep.mubr.bf16.mxu0 0
      %1815 = vmatmul.mubr.bf16.gmra.mxu0 %v1712
      %v1816 = vpop.f32.mrf.mxu0
      %v1817 = vadd.f32 %v1557, %v1816
      %v1818 = vpop.f32.mrf.mxu0
      %v1819 = vpop.f32.mrf.mxu0
      %v1820 = vadd.f32 %v1560, %v1819
      %v1821 = vpop.f32.mrf.mxu0
      %1822 = vmatprep.mubr.bf16.mxu0 0
      %1823 = vmatmul.mubr.bf16.gmra.mxu0 %v1715
      %v1824 = vpop.f32.mrf.mxu0
      %v1825 = vadd.f32 %v1565, %v1824
      %v1826 = vpop.f32.mrf.mxu0
      %v1827 = vpop.f32.mrf.mxu0
      %v1828 = vadd.f32 %v1568, %v1827
      %v1829 = vpop.f32.mrf.mxu0
      %1830 = vmatprep.mubr.bf16.mxu0 0
      %1831 = vmatmul.mubr.bf16.gmra.mxu0 %v1718
      %v1832 = vpop.f32.mrf.mxu0
      %v1833 = vadd.f32 %v1573, %v1832
      %v1834 = vpop.f32.mrf.mxu0
      %v1835 = vpop.f32.mrf.mxu0
      %v1836 = vadd.f32 %v1576, %v1835
      %v1837 = vpop.f32.mrf.mxu0
      %1838 = vmatprep.mubr.bf16.mxu0 0
      %1839 = vmatmul.mubr.bf16.gmra.mxu0 %v1721
      %v1840 = vpop.f32.mrf.mxu0
      %v1841 = vadd.f32 %v1581, %v1840
      %v1842 = vpop.f32.mrf.mxu0
      %v1843 = vpop.f32.mrf.mxu0
      %v1844 = vadd.f32 %v1584, %v1843
      %v1845 = vpop.f32.mrf.mxu0
      %1846 = vmatprep.mubr.bf16.mxu0 0
      %1847 = vmatmul.mubr.bf16.gmra.mxu0 %v1724
      %v1848 = vpop.f32.mrf.mxu0
      %v1849 = vadd.f32 %v1589, %v1848
      %v1850 = vpop.f32.mrf.mxu0
      %v1851 = vpop.f32.mrf.mxu0
      %v1852 = vadd.f32 %v1592, %v1851
      %v1853 = vpop.f32.mrf.mxu0
      %1854 = vmatprep.mubr.bf16.mxu0 0
      %1855 = vmatmul.mubr.bf16.gmra.mxu0 %v1727
      %v1856 = vpop.f32.mrf.mxu0
      %v1857 = vadd.f32 %v1597, %v1856
      %v1858 = vpop.f32.mrf.mxu0
      %v1859 = vpop.f32.mrf.mxu0
      %v1860 = vadd.f32 %v1600, %v1859
      %v1861 = vpop.f32.mrf.mxu0
      %1862 = vmatprep.mubr.bf16.mxu0 0
      %1863 = vmatmul.mubr.bf16.gmra.mxu0 %v1730
      %v1864 = vpop.f32.mrf.mxu0
      %v1865 = vadd.f32 %v1605, %v1864
      %v1866 = vpop.f32.mrf.mxu0
      %v1867 = vpop.f32.mrf.mxu0
      %v1868 = vadd.f32 %v1608, %v1867
      %v1869 = vpop.f32.mrf.mxu0
      %1870 = vmatprep.mubr.bf16.mxu0 0
      %1871 = vmatmul.mubr.bf16.gmra.mxu0 %v1733
      %v1872 = vpop.f32.mrf.mxu0
      %v1873 = vadd.f32 %v1613, %v1872
      %v1874 = vpop.f32.mrf.mxu0
      %v1875 = vpop.f32.mrf.mxu0
      %v1876 = vadd.f32 %v1616, %v1875
      %v1877 = vpop.f32.mrf.mxu0
      %1878 = vmatprep.mubr.bf16.mxu0 0
      %1879 = vmatmul.mubr.bf16.gmra.mxu0 %v1736
      %v1880 = vpop.f32.mrf.mxu0
      %v1881 = vadd.f32 %v1621, %v1880
      %v1882 = vpop.f32.mrf.mxu0
      %v1883 = vpop.f32.mrf.mxu0
      %v1884 = vadd.f32 %v1624, %v1883
      %v1885 = vpop.f32.mrf.mxu0
      %1886 = vmatprep.mubr.bf16.mxu0 0
      %1887 = vmatmul.mubr.bf16.gmra.mxu0 %v1739
      %v1888 = vpop.f32.mrf.mxu0
      %v1889 = vadd.f32 %v1629, %v1888
      %v1890 = vpop.f32.mrf.mxu0
      %v1891 = vpop.f32.mrf.mxu0
      %v1892 = vadd.f32 %v1632, %v1891
      %v1893 = vpop.f32.mrf.mxu0
      %1894 = vmatprep.mubr.bf16.mxu0 0
      %1895 = vmatmul.mubr.bf16.gmra.mxu0 %v1742
      %v1896 = vpop.f32.mrf.mxu0
      %v1897 = vadd.f32 %v1637, %v1896
      %v1898 = vpop.f32.mrf.mxu0
      %v1899 = vpop.f32.mrf.mxu0
      %v1900 = vadd.f32 %v1640, %v1899
      %v1901 = vpop.f32.mrf.mxu0
      %1902 = vmatprep.mubr.bf16.mxu0 0
      %1903 = vmatmul.mubr.bf16.gmra.mxu0 %v1745
      %v1904 = vpop.f32.mrf.mxu0
      %v1905 = vadd.f32 %v1645, %v1904
      %v1906 = vpop.f32.mrf.mxu0
      %v1907 = vpop.f32.mrf.mxu0
      %v1908 = vadd.f32 %v1648, %v1907
      %v1909 = vpop.f32.mrf.mxu0
      %1910 = vdwg.mxu0
      %v1911 = vld [vmem:[#allocation2 + $0x8] sm:$0xf]
      %v1912 = vld [vmem:[#allocation2 + $0xc] sm:$0xf]
      %v1913 = vld [vmem:[#allocation2 + $0x10] sm:$0x1]
      %v1914 = vld [vmem:[#allocation2 + $0x1c] sm:$0xf]
      %v1915 = vld [vmem:[#allocation2 + $0x20] sm:$0xf]
      %v1916 = vld [vmem:[#allocation2 + $0x24] sm:$0x1]
      %v1917 = vld [vmem:[#allocation2 + $0x30] sm:$0xf]
      %v1918 = vld [vmem:[#allocation2 + $0x34] sm:$0xf]
      %v1919 = vld [vmem:[#allocation2 + $0x38] sm:$0x1]
      %v1920 = vld [vmem:[#allocation2 + $0x44] sm:$0xf]
      %v1921 = vld [vmem:[#allocation2 + $0x48] sm:$0xf]
      %v1922 = vld [vmem:[#allocation2 + $0x4c] sm:$0x1]
      %v1923 = vld [vmem:[#allocation2 + $0x58] sm:$0xf]
      %v1924 = vld [vmem:[#allocation2 + $0x5c] sm:$0xf]
      %v1925 = vld [vmem:[#allocation2 + $0x60] sm:$0x1]
      %v1926 = vld [vmem:[#allocation2 + $0x6c] sm:$0xf]
      %v1927 = vld [vmem:[#allocation2 + $0x70] sm:$0xf]
      %v1928 = vld [vmem:[#allocation2 + $0x74] sm:$0x1]
      %v1929 = vld [vmem:[#allocation2 + $0x80] sm:$0xf]
      %v1930 = vld [vmem:[#allocation2 + $0x84] sm:$0xf]
      %v1931 = vld [vmem:[#allocation2 + $0x88] sm:$0x1]
      %v1932 = vld [vmem:[#allocation2 + $0x94] sm:$0xf]
      %v1933 = vld [vmem:[#allocation2 + $0x98] sm:$0xf]
      %v1934 = vld [vmem:[#allocation2 + $0x9c] sm:$0x1]
      %v1935 = vld [vmem:[#allocation2 + $0xa8] sm:$0xf]
      %v1936 = vld [vmem:[#allocation2 + $0xac] sm:$0xf]
      %v1937 = vld [vmem:[#allocation2 + $0xb0] sm:$0x1]
      %v1938 = vld [vmem:[#allocation2 + $0xbc] sm:$0xf]
      %v1939 = vld [vmem:[#allocation2 + $0xc0] sm:$0xf]
      %v1940 = vld [vmem:[#allocation2 + $0xc4] sm:$0x1]
      %v1941 = vld [vmem:[#allocation2 + $0xd0] sm:$0xf]
      %v1942 = vld [vmem:[#allocation2 + $0xd4] sm:$0xf]
      %v1943 = vld [vmem:[#allocation2 + $0xd8] sm:$0x1]
      %v1944 = vld [vmem:[#allocation2 + $0xe4] sm:$0xf]
      %v1945 = vld [vmem:[#allocation2 + $0xe8] sm:$0xf]
      %v1946 = vld [vmem:[#allocation2 + $0xec] sm:$0x1]
      %v1947 = vld [vmem:[#allocation2 + $0xf8] sm:$0xf]
      %v1948 = vld [vmem:[#allocation2 + $0xfc] sm:$0xf]
      %v1949 = vld [vmem:[#allocation2 + $0x100] sm:$0x1]
      %v1950 = vld [vmem:[#allocation2 + $0x10c] sm:$0xf]
      %v1951 = vld [vmem:[#allocation2 + $0x110] sm:$0xf]
      %v1952 = vld [vmem:[#allocation2 + $0x114] sm:$0x1]
      %v1953 = vld [vmem:[#allocation2 + $0x120] sm:$0xf]
      %v1954 = vld [vmem:[#allocation2 + $0x124] sm:$0xf]
      %v1955 = vld [vmem:[#allocation2 + $0x128] sm:$0x1]
      %v1956 = vld [vmem:[#allocation2 + $0x134] sm:$0xf]
      %v1957 = vld [vmem:[#allocation2 + $0x138] sm:$0xf]
      %v1958 = vld [vmem:[#allocation2 + $0x13c] sm:$0x1]
      %vm1959 = vsmask.f32 3328
      %vm1960 = vsmask.f32 7440
      %vm1961 = vmor %vm1959, %vm1960
      %v1963 = vshrl.u32 %v1911, 16
      %v1965 = vrot.slane %v1963, 4
      %v1966 = vshll.u32 %v1911, 16
      %v1968 = vrot.slane %v1966, 5
      %v1969 = vor.u32 %v1965, %v1968
      %v1970 = vrot.slane %v1969, 4
      %v1972 = vshll.u32 %v1912, 16
      %v1974 = vrot.slane %v1972, 5
      %v1975 = vsel %vm1961, %v1970, %v1974
      %v1976 = vshrl.u32 %v1912, 16
      %v1978 = vrot.slane %v1976, 4
      %v1979 = vor.u32 %v1978, %v1974
      %v1980 = vrot.slane %v1979, 4
      %v1982 = vshll.u32 %v1913, 16
      %v1984 = vrot.slane %v1982, 5
      %v1985 = vsel %vm1961, %v1980, %v1984
      %v1987 = vshrl.u32 %v1914, 16
      %v1989 = vrot.slane %v1987, 4
      %v1990 = vshll.u32 %v1914, 16
      %v1992 = vrot.slane %v1990, 5
      %v1993 = vor.u32 %v1989, %v1992
      %v1994 = vrot.slane %v1993, 4
      %v1996 = vshll.u32 %v1915, 16
      %v1998 = vrot.slane %v1996, 5
      %v1999 = vsel %vm1961, %v1994, %v1998
      %v2000 = vshrl.u32 %v1915, 16
      %v2002 = vrot.slane %v2000, 4
      %v2003 = vor.u32 %v2002, %v1998
      %v2004 = vrot.slane %v2003, 4
      %v2006 = vshll.u32 %v1916, 16
      %v2008 = vrot.slane %v2006, 5
      %v2009 = vsel %vm1961, %v2004, %v2008
      %v2011 = vshrl.u32 %v1917, 16
      %v2013 = vrot.slane %v2011, 4
      %v2014 = vshll.u32 %v1917, 16
      %v2016 = vrot.slane %v2014, 5
      %v2017 = vor.u32 %v2013, %v2016
      %v2018 = vrot.slane %v2017, 4
      %v2020 = vshll.u32 %v1918, 16
      %v2022 = vrot.slane %v2020, 5
      %v2023 = vsel %vm1961, %v2018, %v2022
      %v2024 = vshrl.u32 %v1918, 16
      %v2026 = vrot.slane %v2024, 4
      %v2027 = vor.u32 %v2026, %v2022
      %v2028 = vrot.slane %v2027, 4
      %v2030 = vshll.u32 %v1919, 16
      %v2032 = vrot.slane %v2030, 5
      %v2033 = vsel %vm1961, %v2028, %v2032
      %v2035 = vshrl.u32 %v1920, 16
      %v2037 = vrot.slane %v2035, 4
      %v2038 = vshll.u32 %v1920, 16
      %v2040 = vrot.slane %v2038, 5
      %v2041 = vor.u32 %v2037, %v2040
      %v2042 = vrot.slane %v2041, 4
      %v2044 = vshll.u32 %v1921, 16
      %v2046 = vrot.slane %v2044, 5
      %v2047 = vsel %vm1961, %v2042, %v2046
      %v2048 = vshrl.u32 %v1921, 16
      %v2050 = vrot.slane %v2048, 4
      %v2051 = vor.u32 %v2050, %v2046
      %v2052 = vrot.slane %v2051, 4
      %v2054 = vshll.u32 %v1922, 16
      %v2056 = vrot.slane %v2054, 5
      %v2057 = vsel %vm1961, %v2052, %v2056
      %v2059 = vshrl.u32 %v1923, 16
      %v2061 = vrot.slane %v2059, 4
      %v2062 = vshll.u32 %v1923, 16
      %v2064 = vrot.slane %v2062, 5
      %v2065 = vor.u32 %v2061, %v2064
      %v2066 = vrot.slane %v2065, 4
      %v2068 = vshll.u32 %v1924, 16
      %v2070 = vrot.slane %v2068, 5
      %v2071 = vsel %vm1961, %v2066, %v2070
      %v2072 = vshrl.u32 %v1924, 16
      %v2074 = vrot.slane %v2072, 4
      %v2075 = vor.u32 %v2074, %v2070
      %v2076 = vrot.slane %v2075, 4
      %v2078 = vshll.u32 %v1925, 16
      %v2080 = vrot.slane %v2078, 5
      %v2081 = vsel %vm1961, %v2076, %v2080
      %v2083 = vshrl.u32 %v1926, 16
      %v2085 = vrot.slane %v2083, 4
      %v2086 = vshll.u32 %v1926, 16
      %v2088 = vrot.slane %v2086, 5
      %v2089 = vor.u32 %v2085, %v2088
      %v2090 = vrot.slane %v2089, 4
      %v2092 = vshll.u32 %v1927, 16
      %v2094 = vrot.slane %v2092, 5
      %v2095 = vsel %vm1961, %v2090, %v2094
      %v2096 = vshrl.u32 %v1927, 16
      %v2098 = vrot.slane %v2096, 4
      %v2099 = vor.u32 %v2098, %v2094
      %v2100 = vrot.slane %v2099, 4
      %v2102 = vshll.u32 %v1928, 16
      %v2104 = vrot.slane %v2102, 5
      %v2105 = vsel %vm1961, %v2100, %v2104
      %v2107 = vshrl.u32 %v1929, 16
      %v2109 = vrot.slane %v2107, 4
      %v2110 = vshll.u32 %v1929, 16
      %v2112 = vrot.slane %v2110, 5
      %v2113 = vor.u32 %v2109, %v2112
      %v2114 = vrot.slane %v2113, 4
      %v2116 = vshll.u32 %v1930, 16
      %v2118 = vrot.slane %v2116, 5
      %v2119 = vsel %vm1961, %v2114, %v2118
      %v2120 = vshrl.u32 %v1930, 16
      %v2122 = vrot.slane %v2120, 4
      %v2123 = vor.u32 %v2122, %v2118
      %v2124 = vrot.slane %v2123, 4
      %v2126 = vshll.u32 %v1931, 16
      %v2128 = vrot.slane %v2126, 5
      %v2129 = vsel %vm1961, %v2124, %v2128
      %v2131 = vshrl.u32 %v1932, 16
      %v2133 = vrot.slane %v2131, 4
      %v2134 = vshll.u32 %v1932, 16
      %v2136 = vrot.slane %v2134, 5
      %v2137 = vor.u32 %v2133, %v2136
      %v2138 = vrot.slane %v2137, 4
      %v2140 = vshll.u32 %v1933, 16
      %v2142 = vrot.slane %v2140, 5
      %v2143 = vsel %vm1961, %v2138, %v2142
      %v2144 = vshrl.u32 %v1933, 16
      %v2146 = vrot.slane %v2144, 4
      %v2147 = vor.u32 %v2146, %v2142
      %v2148 = vrot.slane %v2147, 4
      %v2150 = vshll.u32 %v1934, 16
      %v2152 = vrot.slane %v2150, 5
      %v2153 = vsel %vm1961, %v2148, %v2152
      %v2155 = vshrl.u32 %v1935, 16
      %v2157 = vrot.slane %v2155, 4
      %v2158 = vshll.u32 %v1935, 16
      %v2160 = vrot.slane %v2158, 5
      %v2161 = vor.u32 %v2157, %v2160
      %v2162 = vrot.slane %v2161, 4
      %v2164 = vshll.u32 %v1936, 16
      %v2166 = vrot.slane %v2164, 5
      %v2167 = vsel %vm1961, %v2162, %v2166
      %v2168 = vshrl.u32 %v1936, 16
      %v2170 = vrot.slane %v2168, 4
      %v2171 = vor.u32 %v2170, %v2166
      %v2172 = vrot.slane %v2171, 4
      %v2174 = vshll.u32 %v1937, 16
      %v2176 = vrot.slane %v2174, 5
      %v2177 = vsel %vm1961, %v2172, %v2176
      %v2179 = vshrl.u32 %v1938, 16
      %v2181 = vrot.slane %v2179, 4
      %v2182 = vshll.u32 %v1938, 16
      %v2184 = vrot.slane %v2182, 5
      %v2185 = vor.u32 %v2181, %v2184
      %v2186 = vrot.slane %v2185, 4
      %v2188 = vshll.u32 %v1939, 16
      %v2190 = vrot.slane %v2188, 5
      %v2191 = vsel %vm1961, %v2186, %v2190
      %v2192 = vshrl.u32 %v1939, 16
      %v2194 = vrot.slane %v2192, 4
      %v2195 = vor.u32 %v2194, %v2190
      %v2196 = vrot.slane %v2195, 4
      %v2198 = vshll.u32 %v1940, 16
      %v2200 = vrot.slane %v2198, 5
      %v2201 = vsel %vm1961, %v2196, %v2200
      %v2203 = vshrl.u32 %v1941, 16
      %v2205 = vrot.slane %v2203, 4
      %v2206 = vshll.u32 %v1941, 16
      %v2208 = vrot.slane %v2206, 5
      %v2209 = vor.u32 %v2205, %v2208
      %v2210 = vrot.slane %v2209, 4
      %v2212 = vshll.u32 %v1942, 16
      %v2214 = vrot.slane %v2212, 5
      %v2215 = vsel %vm1961, %v2210, %v2214
      %v2216 = vshrl.u32 %v1942, 16
      %v2218 = vrot.slane %v2216, 4
      %v2219 = vor.u32 %v2218, %v2214
      %v2220 = vrot.slane %v2219, 4
      %v2222 = vshll.u32 %v1943, 16
      %v2224 = vrot.slane %v2222, 5
      %v2225 = vsel %vm1961, %v2220, %v2224
      %v2227 = vshrl.u32 %v1944, 16
      %v2229 = vrot.slane %v2227, 4
      %v2230 = vshll.u32 %v1944, 16
      %v2232 = vrot.slane %v2230, 5
      %v2233 = vor.u32 %v2229, %v2232
      %v2234 = vrot.slane %v2233, 4
      %v2236 = vshll.u32 %v1945, 16
      %v2238 = vrot.slane %v2236, 5
      %v2239 = vsel %vm1961, %v2234, %v2238
      %v2240 = vshrl.u32 %v1945, 16
      %v2242 = vrot.slane %v2240, 4
      %v2243 = vor.u32 %v2242, %v2238
      %v2244 = vrot.slane %v2243, 4
      %v2246 = vshll.u32 %v1946, 16
      %v2248 = vrot.slane %v2246, 5
      %v2249 = vsel %vm1961, %v2244, %v2248
      %v2251 = vshrl.u32 %v1947, 16
      %v2253 = vrot.slane %v2251, 4
      %v2254 = vshll.u32 %v1947, 16
      %v2256 = vrot.slane %v2254, 5
      %v2257 = vor.u32 %v2253, %v2256
      %v2258 = vrot.slane %v2257, 4
      %v2260 = vshll.u32 %v1948, 16
      %v2262 = vrot.slane %v2260, 5
      %v2263 = vsel %vm1961, %v2258, %v2262
      %v2264 = vshrl.u32 %v1948, 16
      %v2266 = vrot.slane %v2264, 4
      %v2267 = vor.u32 %v2266, %v2262
      %v2268 = vrot.slane %v2267, 4
      %v2270 = vshll.u32 %v1949, 16
      %v2272 = vrot.slane %v2270, 5
      %v2273 = vsel %vm1961, %v2268, %v2272
      %v2275 = vshrl.u32 %v1950, 16
      %v2277 = vrot.slane %v2275, 4
      %v2278 = vshll.u32 %v1950, 16
      %v2280 = vrot.slane %v2278, 5
      %v2281 = vor.u32 %v2277, %v2280
      %v2282 = vrot.slane %v2281, 4
      %v2284 = vshll.u32 %v1951, 16
      %v2286 = vrot.slane %v2284, 5
      %v2287 = vsel %vm1961, %v2282, %v2286
      %v2288 = vshrl.u32 %v1951, 16
      %v2290 = vrot.slane %v2288, 4
      %v2291 = vor.u32 %v2290, %v2286
      %v2292 = vrot.slane %v2291, 4
      %v2294 = vshll.u32 %v1952, 16
      %v2296 = vrot.slane %v2294, 5
      %v2297 = vsel %vm1961, %v2292, %v2296
      %v2299 = vshrl.u32 %v1953, 16
      %v2301 = vrot.slane %v2299, 4
      %v2302 = vshll.u32 %v1953, 16
      %v2304 = vrot.slane %v2302, 5
      %v2305 = vor.u32 %v2301, %v2304
      %v2306 = vrot.slane %v2305, 4
      %v2308 = vshll.u32 %v1954, 16
      %v2310 = vrot.slane %v2308, 5
      %v2311 = vsel %vm1961, %v2306, %v2310
      %v2312 = vshrl.u32 %v1954, 16
      %v2314 = vrot.slane %v2312, 4
      %v2315 = vor.u32 %v2314, %v2310
      %v2316 = vrot.slane %v2315, 4
      %v2318 = vshll.u32 %v1955, 16
      %v2320 = vrot.slane %v2318, 5
      %v2321 = vsel %vm1961, %v2316, %v2320
      %v2323 = vshrl.u32 %v1956, 16
      %v2325 = vrot.slane %v2323, 4
      %v2326 = vshll.u32 %v1956, 16
      %v2328 = vrot.slane %v2326, 5
      %v2329 = vor.u32 %v2325, %v2328
      %v2330 = vrot.slane %v2329, 4
      %v2332 = vshll.u32 %v1957, 16
      %v2334 = vrot.slane %v2332, 5
      %v2335 = vsel %vm1961, %v2330, %v2334
      %v2336 = vshrl.u32 %v1957, 16
      %v2338 = vrot.slane %v2336, 4
      %v2339 = vor.u32 %v2338, %v2334
      %v2340 = vrot.slane %v2339, 4
      %v2342 = vshll.u32 %v1958, 16
      %v2344 = vrot.slane %v2342, 5
      %v2345 = vsel %vm1961, %v2340, %v2344
      %s2346 = scalar_lea.vmem %s2, 8
      %v2347 = vld [vmem:[%s2346] sm:$0xf]
      %v2348 = vunpack.c.l.b16 %v1975
      %v2349 = vunpack.c.l.b16 %v1985
      %v2350 = vunpack.c.l.b16 %v1999
      %v2351 = vunpack.c.l.b16 %v2009
      %v2352 = vunpack.c.l.b16 %v2023
      %v2353 = vunpack.c.l.b16 %v2033
      %v2354 = vunpack.c.l.b16 %v2047
      %v2355 = vunpack.c.l.b16 %v2057
      %v2356 = vunpack.c.l.b16 %v2071
      %v2357 = vunpack.c.l.b16 %v2081
      %v2358 = vunpack.c.l.b16 %v2095
      %v2359 = vunpack.c.l.b16 %v2105
      %v2360 = vunpack.c.l.b16 %v2119
      %v2361 = vunpack.c.l.b16 %v2129
      %v2362 = vunpack.c.l.b16 %v2143
      %v2363 = vunpack.c.l.b16 %v2153
      %v2364 = vunpack.c.l.b16 %v2167
      %v2365 = vunpack.c.l.b16 %v2177
      %v2366 = vunpack.c.l.b16 %v2191
      %v2367 = vunpack.c.l.b16 %v2201
      %v2368 = vunpack.c.l.b16 %v2215
      %v2369 = vunpack.c.l.b16 %v2225
      %v2370 = vunpack.c.l.b16 %v2239
      %v2371 = vunpack.c.l.b16 %v2249
      %v2372 = vunpack.c.l.b16 %v2263
      %v2373 = vunpack.c.l.b16 %v2273
      %v2374 = vunpack.c.l.b16 %v2287
      %v2375 = vunpack.c.l.b16 %v2297
      %v2376 = vunpack.c.l.b16 %v2311
      %v2377 = vunpack.c.l.b16 %v2321
      %v2378 = vunpack.c.l.b16 %v2335
      %v2379 = vunpack.c.l.b16 %v2345
      %v2380 = vpack.c.b16 %v2349, %v2348
      %v2381 = vpack.c.b16 %v2351, %v2350
      %v2382 = vpack.c.b16 %v2353, %v2352
      %v2383 = vpack.c.b16 %v2355, %v2354
      %v2384 = vpack.c.b16 %v2357, %v2356
      %v2385 = vpack.c.b16 %v2359, %v2358
      %v2386 = vpack.c.b16 %v2361, %v2360
      %v2387 = vpack.c.b16 %v2363, %v2362
      %v2388 = vpack.c.b16 %v2365, %v2364
      %v2389 = vpack.c.b16 %v2367, %v2366
      %v2390 = vpack.c.b16 %v2369, %v2368
      %v2391 = vpack.c.b16 %v2371, %v2370
      %v2392 = vpack.c.b16 %v2373, %v2372
      %v2393 = vpack.c.b16 %v2375, %v2374
      %v2394 = vpack.c.b16 %v2377, %v2376
      %v2395 = vpack.c.b16 %v2379, %v2378
      %v2397 = vsel %vm1437, %v2380, 0
      %v2400 = vsel %vm1437, %v2381, 0
      %v2403 = vsel %vm1437, %v2382, 0
      %v2406 = vsel %vm1437, %v2383, 0
      %v2409 = vsel %vm1437, %v2384, 0
      %v2412 = vsel %vm1437, %v2385, 0
      %v2415 = vsel %vm1437, %v2386, 0
      %v2418 = vsel %vm1437, %v2387, 0
      %v2421 = vsel %vm1437, %v2388, 0
      %v2424 = vsel %vm1437, %v2389, 0
      %v2427 = vsel %vm1437, %v2390, 0
      %v2430 = vsel %vm1437, %v2391, 0
      %v2433 = vsel %vm1437, %v2392, 0
      %v2436 = vsel %vm1437, %v2393, 0
      %v2439 = vsel %vm1437, %v2394, 0
      %v2442 = vsel %vm1437, %v2395, 0
      %v2445 = vsel %vm1486, %v2347, 0
      %2447 = vmatprep.subr.bf16.mxu0 0
      %2448 = vmatpush1.bf16.msra.mxu0 0
      %2449 = vmatprep.subr.bf16.mxu0 0
      %2450 = vmatpush1.bf16.msra.mxu0 0
      %2451 = vmatprep.subr.bf16.mxu0 0
      %2452 = vmatpush1.bf16.msra.mxu0 0
      %2453 = vmatprep.subr.bf16.mxu0 0
      %2454 = vmatpush1.bf16.msra.mxu0 0
      %2455 = vmatprep.subr.bf16.mxu0 0
      %2456 = vmatpush1.bf16.msra.mxu0 0
      %2457 = vmatprep.subr.bf16.mxu0 0
      %2458 = vmatpush1.bf16.msra.mxu0 0
      %2459 = vmatprep.subr.bf16.mxu0 0
      %2460 = vmatpush1.bf16.msra.mxu0 0
      %2461 = vmatprep.subr.bf16.mxu0 0
      %2462 = vmatpush1.bf16.msra.mxu0 %v2445
      %2463 = vmatprep.subr.bf16.mxu0 0
      %2464 = vmatpush2.bf16.msra.mxu0 0
      %2465 = vmatprep.subr.bf16.mxu0 0
      %2466 = vmatpush2.bf16.msra.mxu0 0
      %2467 = vmatprep.subr.bf16.mxu0 0
      %2468 = vmatpush2.bf16.msra.mxu0 0
      %2469 = vmatprep.subr.bf16.mxu0 0
      %2470 = vmatpush2.bf16.msra.mxu0 0
      %2471 = vmatprep.subr.bf16.mxu0 0
      %2472 = vmatpush2.bf16.msra.mxu0 0
      %2473 = vmatprep.subr.bf16.mxu0 0
      %2474 = vmatpush2.bf16.msra.mxu0 0
      %2475 = vmatprep.subr.bf16.mxu0 0
      %2476 = vmatpush2.bf16.msra.mxu0 0
      %2477 = vmatprep.subr.bf16.mxu0 0
      %2478 = vmatpush2.bf16.msra.mxu0 0
      %2479 = vmatprep.mubr.bf16.mxu0 0
      %2480 = vmatmul.mubr.bf16.gmra.mxu0 %v2397
      %v2481 = vpop.f32.mrf.mxu0
      %v2482 = vadd.f32 0.0, %v2481
      %v2483 = vpop.f32.mrf.mxu0
      %v2484 = vpop.f32.mrf.mxu0
      %v2485 = vadd.f32 0.0, %v2484
      %v2486 = vpop.f32.mrf.mxu0
      %2487 = vmatprep.mubr.bf16.mxu0 0
      %2488 = vmatmul.mubr.bf16.gmra.mxu0 %v2400
      %v2489 = vpop.f32.mrf.mxu0
      %v2490 = vadd.f32 0.0, %v2489
      %v2491 = vpop.f32.mrf.mxu0
      %v2492 = vpop.f32.mrf.mxu0
      %v2493 = vadd.f32 0.0, %v2492
      %v2494 = vpop.f32.mrf.mxu0
      %2495 = vmatprep.mubr.bf16.mxu0 0
      %2496 = vmatmul.mubr.bf16.gmra.mxu0 %v2403
      %v2497 = vpop.f32.mrf.mxu0
      %v2498 = vadd.f32 0.0, %v2497
      %v2499 = vpop.f32.mrf.mxu0
      %v2500 = vpop.f32.mrf.mxu0
      %v2501 = vadd.f32 0.0, %v2500
      %v2502 = vpop.f32.mrf.mxu0
      %2503 = vmatprep.mubr.bf16.mxu0 0
      %2504 = vmatmul.mubr.bf16.gmra.mxu0 %v2406
      %v2505 = vpop.f32.mrf.mxu0
      %v2506 = vadd.f32 0.0, %v2505
      %v2507 = vpop.f32.mrf.mxu0
      %v2508 = vpop.f32.mrf.mxu0
      %v2509 = vadd.f32 0.0, %v2508
      %v2510 = vpop.f32.mrf.mxu0
      %2511 = vmatprep.mubr.bf16.mxu0 0
      %2512 = vmatmul.mubr.bf16.gmra.mxu0 %v2409
      %v2513 = vpop.f32.mrf.mxu0
      %v2514 = vadd.f32 0.0, %v2513
      %v2515 = vpop.f32.mrf.mxu0
      %v2516 = vpop.f32.mrf.mxu0
      %v2517 = vadd.f32 0.0, %v2516
      %v2518 = vpop.f32.mrf.mxu0
      %2519 = vmatprep.mubr.bf16.mxu0 0
      %2520 = vmatmul.mubr.bf16.gmra.mxu0 %v2412
      %v2521 = vpop.f32.mrf.mxu0
      %v2522 = vadd.f32 0.0, %v2521
      %v2523 = vpop.f32.mrf.mxu0
      %v2524 = vpop.f32.mrf.mxu0
      %v2525 = vadd.f32 0.0, %v2524
      %v2526 = vpop.f32.mrf.mxu0
      %2527 = vmatprep.mubr.bf16.mxu0 0
      %2528 = vmatmul.mubr.bf16.gmra.mxu0 %v2415
      %v2529 = vpop.f32.mrf.mxu0
      %v2530 = vadd.f32 0.0, %v2529
      %v2531 = vpop.f32.mrf.mxu0
      %v2532 = vpop.f32.mrf.mxu0
      %v2533 = vadd.f32 0.0, %v2532
      %v2534 = vpop.f32.mrf.mxu0
      %2535 = vmatprep.mubr.bf16.mxu0 0
      %2536 = vmatmul.mubr.bf16.gmra.mxu0 %v2418
      %v2537 = vpop.f32.mrf.mxu0
      %v2538 = vadd.f32 0.0, %v2537
      %v2539 = vpop.f32.mrf.mxu0
      %v2540 = vpop.f32.mrf.mxu0
      %v2541 = vadd.f32 0.0, %v2540
      %v2542 = vpop.f32.mrf.mxu0
      %2543 = vmatprep.mubr.bf16.mxu0 0
      %2544 = vmatmul.mubr.bf16.gmra.mxu0 %v2421
      %v2545 = vpop.f32.mrf.mxu0
      %v2546 = vadd.f32 0.0, %v2545
      %v2547 = vpop.f32.mrf.mxu0
      %v2548 = vpop.f32.mrf.mxu0
      %v2549 = vadd.f32 0.0, %v2548
      %v2550 = vpop.f32.mrf.mxu0
      %2551 = vmatprep.mubr.bf16.mxu0 0
      %2552 = vmatmul.mubr.bf16.gmra.mxu0 %v2424
      %v2553 = vpop.f32.mrf.mxu0
      %v2554 = vadd.f32 0.0, %v2553
      %v2555 = vpop.f32.mrf.mxu0
      %v2556 = vpop.f32.mrf.mxu0
      %v2557 = vadd.f32 0.0, %v2556
      %v2558 = vpop.f32.mrf.mxu0
      %2559 = vmatprep.mubr.bf16.mxu0 0
      %2560 = vmatmul.mubr.bf16.gmra.mxu0 %v2427
      %v2561 = vpop.f32.mrf.mxu0
      %v2562 = vadd.f32 0.0, %v2561
      %v2563 = vpop.f32.mrf.mxu0
      %v2564 = vpop.f32.mrf.mxu0
      %v2565 = vadd.f32 0.0, %v2564
      %v2566 = vpop.f32.mrf.mxu0
      %2567 = vmatprep.mubr.bf16.mxu0 0
      %2568 = vmatmul.mubr.bf16.gmra.mxu0 %v2430
      %v2569 = vpop.f32.mrf.mxu0
      %v2570 = vadd.f32 0.0, %v2569
      %v2571 = vpop.f32.mrf.mxu0
      %v2572 = vpop.f32.mrf.mxu0
      %v2573 = vadd.f32 0.0, %v2572
      %v2574 = vpop.f32.mrf.mxu0
      %2575 = vmatprep.mubr.bf16.mxu0 0
      %2576 = vmatmul.mubr.bf16.gmra.mxu0 %v2433
      %v2577 = vpop.f32.mrf.mxu0
      %v2578 = vadd.f32 0.0, %v2577
      %v2579 = vpop.f32.mrf.mxu0
      %v2580 = vpop.f32.mrf.mxu0
      %v2581 = vadd.f32 0.0, %v2580
      %v2582 = vpop.f32.mrf.mxu0
      %2583 = vmatprep.mubr.bf16.mxu0 0
      %2584 = vmatmul.mubr.bf16.gmra.mxu0 %v2436
      %v2585 = vpop.f32.mrf.mxu0
      %v2586 = vadd.f32 0.0, %v2585
      %v2587 = vpop.f32.mrf.mxu0
      %v2588 = vpop.f32.mrf.mxu0
      %v2589 = vadd.f32 0.0, %v2588
      %v2590 = vpop.f32.mrf.mxu0
      %2591 = vmatprep.mubr.bf16.mxu0 0
      %2592 = vmatmul.mubr.bf16.gmra.mxu0 %v2439
      %v2593 = vpop.f32.mrf.mxu0
      %v2594 = vadd.f32 0.0, %v2593
      %v2595 = vpop.f32.mrf.mxu0
      %v2596 = vpop.f32.mrf.mxu0
      %v2597 = vadd.f32 0.0, %v2596
      %v2598 = vpop.f32.mrf.mxu0
      %2599 = vmatprep.mubr.bf16.mxu0 0
      %2600 = vmatmul.mubr.bf16.gmra.mxu0 %v2442
      %v2601 = vpop.f32.mrf.mxu0
      %v2602 = vadd.f32 0.0, %v2601
      %v2603 = vpop.f32.mrf.mxu0
      %v2604 = vpop.f32.mrf.mxu0
      %v2605 = vadd.f32 0.0, %v2604
      %v2606 = vpop.f32.mrf.mxu0
      %2607 = vdwg.mxu0
      %v2608 = vadd.f32 %v1785, %v2482
      %v2609 = vadd.f32 %v1788, %v2485
      %v2610 = vadd.f32 %v1793, %v2490
      %v2611 = vadd.f32 %v1796, %v2493
      %v2612 = vadd.f32 %v1801, %v2498
      %v2613 = vadd.f32 %v1804, %v2501
      %v2614 = vadd.f32 %v1809, %v2506
      %v2615 = vadd.f32 %v1812, %v2509
      %v2616 = vadd.f32 %v1817, %v2514
      %v2617 = vadd.f32 %v1820, %v2517
      %v2618 = vadd.f32 %v1825, %v2522
      %v2619 = vadd.f32 %v1828, %v2525
      %v2620 = vadd.f32 %v1833, %v2530
      %v2621 = vadd.f32 %v1836, %v2533
      %v2622 = vadd.f32 %v1841, %v2538
      %v2623 = vadd.f32 %v1844, %v2541
      %v2624 = vadd.f32 %v1849, %v2546
      %v2625 = vadd.f32 %v1852, %v2549
      %v2626 = vadd.f32 %v1857, %v2554
      %v2627 = vadd.f32 %v1860, %v2557
      %v2628 = vadd.f32 %v1865, %v2562
      %v2629 = vadd.f32 %v1868, %v2565
      %v2630 = vadd.f32 %v1873, %v2570
      %v2631 = vadd.f32 %v1876, %v2573
      %v2632 = vadd.f32 %v1881, %v2578
      %v2633 = vadd.f32 %v1884, %v2581
      %v2634 = vadd.f32 %v1889, %v2586
      %v2635 = vadd.f32 %v1892, %v2589
      %v2636 = vadd.f32 %v1897, %v2594
      %v2637 = vadd.f32 %v1900, %v2597
      %v2638 = vadd.f32 %v1905, %v2602
      %v2639 = vadd.f32 %v1908, %v2605
      %v2640 = vadd.f32 %v2608, 0.0
      %v2641 = vadd.f32 %v2609, 0.0
      %v2642 = vadd.f32 %v2610, 0.0
      %v2643 = vadd.f32 %v2611, 0.0
      %v2644 = vadd.f32 %v2612, 0.0
      %v2645 = vadd.f32 %v2613, 0.0
      %v2646 = vadd.f32 %v2614, 0.0
      %v2647 = vadd.f32 %v2615, 0.0
      %v2648 = vadd.f32 %v2616, 0.0
      %v2649 = vadd.f32 %v2617, 0.0
      %v2650 = vadd.f32 %v2618, 0.0
      %v2651 = vadd.f32 %v2619, 0.0
      %v2652 = vadd.f32 %v2620, 0.0
      %v2653 = vadd.f32 %v2621, 0.0
      %v2654 = vadd.f32 %v2622, 0.0
      %v2655 = vadd.f32 %v2623, 0.0
      %v2656 = vadd.f32 %v2624, 0.0
      %v2657 = vadd.f32 %v2625, 0.0
      %v2658 = vadd.f32 %v2626, 0.0
      %v2659 = vadd.f32 %v2627, 0.0
      %v2660 = vadd.f32 %v2628, 0.0
      %v2661 = vadd.f32 %v2629, 0.0
      %v2662 = vadd.f32 %v2630, 0.0
      %v2663 = vadd.f32 %v2631, 0.0
      %v2664 = vadd.f32 %v2632, 0.0
      %v2665 = vadd.f32 %v2633, 0.0
      %v2666 = vadd.f32 %v2634, 0.0
      %v2667 = vadd.f32 %v2635, 0.0
      %v2668 = vadd.f32 %v2636, 0.0
      %v2669 = vadd.f32 %v2637, 0.0
      %v2670 = vadd.f32 %v2638, 0.0
      %v2671 = vadd.f32 %v2639, 0.0
      %v2672 = vld [vmem:[%s351 + $0x4] sm:$0x8]
      %v2673 = vld [vmem:[%s351 + $0x8] sm:$0xf]
      %v2674 = vld [vmem:[%s351 + $0xc] sm:$0xf]
      %v2675 = vld [vmem:[%s351 + $0x18] sm:$0x8]
      %v2676 = vld [vmem:[%s351 + $0x1c] sm:$0xf]
      %v2677 = vld [vmem:[%s351 + $0x20] sm:$0xf]
      %v2678 = vld [vmem:[%s351 + $0x2c] sm:$0x8]
      %v2679 = vld [vmem:[%s351 + $0x30] sm:$0xf]
      %v2680 = vld [vmem:[%s351 + $0x34] sm:$0xf]
      %v2681 = vld [vmem:[%s351 + $0x40] sm:$0x8]
      %v2682 = vld [vmem:[%s351 + $0x44] sm:$0xf]
      %v2683 = vld [vmem:[%s351 + $0x48] sm:$0xf]
      %v2684 = vld [vmem:[%s351 + $0x54] sm:$0x8]
      %v2685 = vld [vmem:[%s351 + $0x58] sm:$0xf]
      %v2686 = vld [vmem:[%s351 + $0x5c] sm:$0xf]
      %v2687 = vld [vmem:[%s351 + $0x68] sm:$0x8]
      %v2688 = vld [vmem:[%s351 + $0x6c] sm:$0xf]
      %v2689 = vld [vmem:[%s351 + $0x70] sm:$0xf]
      %v2690 = vld [vmem:[%s351 + $0x7c] sm:$0x8]
      %v2691 = vld [vmem:[%s351 + $0x80] sm:$0xf]
      %v2692 = vld [vmem:[%s351 + $0x84] sm:$0xf]
      %v2693 = vld [vmem:[%s351 + $0x90] sm:$0x8]
      %v2694 = vld [vmem:[%s351 + $0x94] sm:$0xf]
      %v2695 = vld [vmem:[%s351 + $0x98] sm:$0xf]
      %v2696 = vld [vmem:[%s351 + $0xa4] sm:$0x8]
      %v2697 = vld [vmem:[%s351 + $0xa8] sm:$0xf]
      %v2698 = vld [vmem:[%s351 + $0xac] sm:$0xf]
      %v2699 = vld [vmem:[%s351 + $0xb8] sm:$0x8]
      %v2700 = vld [vmem:[%s351 + $0xbc] sm:$0xf]
      %v2701 = vld [vmem:[%s351 + $0xc0] sm:$0xf]
      %v2702 = vld [vmem:[%s351 + $0xcc] sm:$0x8]
      %v2703 = vld [vmem:[%s351 + $0xd0] sm:$0xf]
      %v2704 = vld [vmem:[%s351 + $0xd4] sm:$0xf]
      %v2705 = vld [vmem:[%s351 + $0xe0] sm:$0x8]
      %v2706 = vld [vmem:[%s351 + $0xe4] sm:$0xf]
      %v2707 = vld [vmem:[%s351 + $0xe8] sm:$0xf]
      %v2708 = vld [vmem:[%s351 + $0xf4] sm:$0x8]
      %v2709 = vld [vmem:[%s351 + $0xf8] sm:$0xf]
      %v2710 = vld [vmem:[%s351 + $0xfc] sm:$0xf]
      %v2711 = vld [vmem:[%s351 + $0x108] sm:$0x8]
      %v2712 = vld [vmem:[%s351 + $0x10c] sm:$0xf]
      %v2713 = vld [vmem:[%s351 + $0x110] sm:$0xf]
      %v2714 = vld [vmem:[%s351 + $0x11c] sm:$0x8]
      %v2715 = vld [vmem:[%s351 + $0x120] sm:$0xf]
      %v2716 = vld [vmem:[%s351 + $0x124] sm:$0xf]
      %v2717 = vld [vmem:[%s351 + $0x130] sm:$0x8]
      %v2718 = vld [vmem:[%s351 + $0x134] sm:$0xf]
      %v2719 = vld [vmem:[%s351 + $0x138] sm:$0xf]
      %v2721 = vshrl.u32 %v2672, 16
      %v2723 = vrot.slane %v2721, 7
      %v2724 = vrot.slane %v2723, 4
      %v2726 = vshrl.u32 %v2673, 16
      %v2728 = vrot.slane %v2726, 7
      %v2729 = vshll.u32 %v2673, 16
      %v2731 = vor.u32 %v2728, %v2729
      %v2732 = vsel %vm1001, %v2724, %v2731
      %v2733 = vrot.slane %v2728, 4
      %v2735 = vshrl.u32 %v2674, 16
      %v2737 = vrot.slane %v2735, 7
      %v2738 = vshll.u32 %v2674, 16
      %v2740 = vor.u32 %v2737, %v2738
      %v2741 = vsel %vm1001, %v2733, %v2740
      %v2743 = vshrl.u32 %v2675, 16
      %v2745 = vrot.slane %v2743, 7
      %v2746 = vrot.slane %v2745, 4
      %v2748 = vshrl.u32 %v2676, 16
      %v2750 = vrot.slane %v2748, 7
      %v2751 = vshll.u32 %v2676, 16
      %v2753 = vor.u32 %v2750, %v2751
      %v2754 = vsel %vm1001, %v2746, %v2753
      %v2755 = vrot.slane %v2750, 4
      %v2757 = vshrl.u32 %v2677, 16
      %v2759 = vrot.slane %v2757, 7
      %v2760 = vshll.u32 %v2677, 16
      %v2762 = vor.u32 %v2759, %v2760
      %v2763 = vsel %vm1001, %v2755, %v2762
      %v2765 = vshrl.u32 %v2678, 16
      %v2767 = vrot.slane %v2765, 7
      %v2768 = vrot.slane %v2767, 4
      %v2770 = vshrl.u32 %v2679, 16
      %v2772 = vrot.slane %v2770, 7
      %v2773 = vshll.u32 %v2679, 16
      %v2775 = vor.u32 %v2772, %v2773
      %v2776 = vsel %vm1001, %v2768, %v2775
      %v2777 = vrot.slane %v2772, 4
      %v2779 = vshrl.u32 %v2680, 16
      %v2781 = vrot.slane %v2779, 7
      %v2782 = vshll.u32 %v2680, 16
      %v2784 = vor.u32 %v2781, %v2782
      %v2785 = vsel %vm1001, %v2777, %v2784
      %v2787 = vshrl.u32 %v2681, 16
      %v2789 = vrot.slane %v2787, 7
      %v2790 = vrot.slane %v2789, 4
      %v2792 = vshrl.u32 %v2682, 16
      %v2794 = vrot.slane %v2792, 7
      %v2795 = vshll.u32 %v2682, 16
      %v2797 = vor.u32 %v2794, %v2795
      %v2798 = vsel %vm1001, %v2790, %v2797
      %v2799 = vrot.slane %v2794, 4
      %v2801 = vshrl.u32 %v2683, 16
      %v2803 = vrot.slane %v2801, 7
      %v2804 = vshll.u32 %v2683, 16
      %v2806 = vor.u32 %v2803, %v2804
      %v2807 = vsel %vm1001, %v2799, %v2806
      %v2809 = vshrl.u32 %v2684, 16
      %v2811 = vrot.slane %v2809, 7
      %v2812 = vrot.slane %v2811, 4
      %v2814 = vshrl.u32 %v2685, 16
      %v2816 = vrot.slane %v2814, 7
      %v2817 = vshll.u32 %v2685, 16
      %v2819 = vor.u32 %v2816, %v2817
      %v2820 = vsel %vm1001, %v2812, %v2819
      %v2821 = vrot.slane %v2816, 4
      %v2823 = vshrl.u32 %v2686, 16
      %v2825 = vrot.slane %v2823, 7
      %v2826 = vshll.u32 %v2686, 16
      %v2828 = vor.u32 %v2825, %v2826
      %v2829 = vsel %vm1001, %v2821, %v2828
      %v2831 = vshrl.u32 %v2687, 16
      %v2833 = vrot.slane %v2831, 7
      %v2834 = vrot.slane %v2833, 4
      %v2836 = vshrl.u32 %v2688, 16
      %v2838 = vrot.slane %v2836, 7
      %v2839 = vshll.u32 %v2688, 16
      %v2841 = vor.u32 %v2838, %v2839
      %v2842 = vsel %vm1001, %v2834, %v2841
      %v2843 = vrot.slane %v2838, 4
      %v2845 = vshrl.u32 %v2689, 16
      %v2847 = vrot.slane %v2845, 7
      %v2848 = vshll.u32 %v2689, 16
      %v2850 = vor.u32 %v2847, %v2848
      %v2851 = vsel %vm1001, %v2843, %v2850
      %v2853 = vshrl.u32 %v2690, 16
      %v2855 = vrot.slane %v2853, 7
      %v2856 = vrot.slane %v2855, 4
      %v2858 = vshrl.u32 %v2691, 16
      %v2860 = vrot.slane %v2858, 7
      %v2861 = vshll.u32 %v2691, 16
      %v2863 = vor.u32 %v2860, %v2861
      %v2864 = vsel %vm1001, %v2856, %v2863
      %v2865 = vrot.slane %v2860, 4
      %v2867 = vshrl.u32 %v2692, 16
      %v2869 = vrot.slane %v2867, 7
      %v2870 = vshll.u32 %v2692, 16
      %v2872 = vor.u32 %v2869, %v2870
      %v2873 = vsel %vm1001, %v2865, %v2872
      %v2875 = vshrl.u32 %v2693, 16
      %v2877 = vrot.slane %v2875, 7
      %v2878 = vrot.slane %v2877, 4
      %v2880 = vshrl.u32 %v2694, 16
      %v2882 = vrot.slane %v2880, 7
      %v2883 = vshll.u32 %v2694, 16
      %v2885 = vor.u32 %v2882, %v2883
      %v2886 = vsel %vm1001, %v2878, %v2885
      %v2887 = vrot.slane %v2882, 4
      %v2889 = vshrl.u32 %v2695, 16
      %v2891 = vrot.slane %v2889, 7
      %v2892 = vshll.u32 %v2695, 16
      %v2894 = vor.u32 %v2891, %v2892
      %v2895 = vsel %vm1001, %v2887, %v2894
      %v2897 = vshrl.u32 %v2696, 16
      %v2899 = vrot.slane %v2897, 7
      %v2900 = vrot.slane %v2899, 4
      %v2902 = vshrl.u32 %v2697, 16
      %v2904 = vrot.slane %v2902, 7
      %v2905 = vshll.u32 %v2697, 16
      %v2907 = vor.u32 %v2904, %v2905
      %v2908 = vsel %vm1001, %v2900, %v2907
      %v2909 = vrot.slane %v2904, 4
      %v2911 = vshrl.u32 %v2698, 16
      %v2913 = vrot.slane %v2911, 7
      %v2914 = vshll.u32 %v2698, 16
      %v2916 = vor.u32 %v2913, %v2914
      %v2917 = vsel %vm1001, %v2909, %v2916
      %v2919 = vshrl.u32 %v2699, 16
      %v2921 = vrot.slane %v2919, 7
      %v2922 = vrot.slane %v2921, 4
      %v2924 = vshrl.u32 %v2700, 16
      %v2926 = vrot.slane %v2924, 7
      %v2927 = vshll.u32 %v2700, 16
      %v2929 = vor.u32 %v2926, %v2927
      %v2930 = vsel %vm1001, %v2922, %v2929
      %v2931 = vrot.slane %v2926, 4
      %v2933 = vshrl.u32 %v2701, 16
      %v2935 = vrot.slane %v2933, 7
      %v2936 = vshll.u32 %v2701, 16
      %v2938 = vor.u32 %v2935, %v2936
      %v2939 = vsel %vm1001, %v2931, %v2938
      %v2941 = vshrl.u32 %v2702, 16
      %v2943 = vrot.slane %v2941, 7
      %v2944 = vrot.slane %v2943, 4
      %v2946 = vshrl.u32 %v2703, 16
      %v2948 = vrot.slane %v2946, 7
      %v2949 = vshll.u32 %v2703, 16
      %v2951 = vor.u32 %v2948, %v2949
      %v2952 = vsel %vm1001, %v2944, %v2951
      %v2953 = vrot.slane %v2948, 4
      %v2955 = vshrl.u32 %v2704, 16
      %v2957 = vrot.slane %v2955, 7
      %v2958 = vshll.u32 %v2704, 16
      %v2960 = vor.u32 %v2957, %v2958
      %v2961 = vsel %vm1001, %v2953, %v2960
      %v2963 = vshrl.u32 %v2705, 16
      %v2965 = vrot.slane %v2963, 7
      %v2966 = vrot.slane %v2965, 4
      %v2968 = vshrl.u32 %v2706, 16
      %v2970 = vrot.slane %v2968, 7
      %v2971 = vshll.u32 %v2706, 16
      %v2973 = vor.u32 %v2970, %v2971
      %v2974 = vsel %vm1001, %v2966, %v2973
      %v2975 = vrot.slane %v2970, 4
      %v2977 = vshrl.u32 %v2707, 16
      %v2979 = vrot.slane %v2977, 7
      %v2980 = vshll.u32 %v2707, 16
      %v2982 = vor.u32 %v2979, %v2980
      %v2983 = vsel %vm1001, %v2975, %v2982
      %v2985 = vshrl.u32 %v2708, 16
      %v2987 = vrot.slane %v2985, 7
      %v2988 = vrot.slane %v2987, 4
      %v2990 = vshrl.u32 %v2709, 16
      %v2992 = vrot.slane %v2990, 7
      %v2993 = vshll.u32 %v2709, 16
      %v2995 = vor.u32 %v2992, %v2993
      %v2996 = vsel %vm1001, %v2988, %v2995
      %v2997 = vrot.slane %v2992, 4
      %v2999 = vshrl.u32 %v2710, 16
      %v3001 = vrot.slane %v2999, 7
      %v3002 = vshll.u32 %v2710, 16
      %v3004 = vor.u32 %v3001, %v3002
      %v3005 = vsel %vm1001, %v2997, %v3004
      %v3007 = vshrl.u32 %v2711, 16
      %v3009 = vrot.slane %v3007, 7
      %v3010 = vrot.slane %v3009, 4
      %v3012 = vshrl.u32 %v2712, 16
      %v3014 = vrot.slane %v3012, 7
      %v3015 = vshll.u32 %v2712, 16
      %v3017 = vor.u32 %v3014, %v3015
      %v3018 = vsel %vm1001, %v3010, %v3017
      %v3019 = vrot.slane %v3014, 4
      %v3021 = vshrl.u32 %v2713, 16
      %v3023 = vrot.slane %v3021, 7
      %v3024 = vshll.u32 %v2713, 16
      %v3026 = vor.u32 %v3023, %v3024
      %v3027 = vsel %vm1001, %v3019, %v3026
      %v3029 = vshrl.u32 %v2714, 16
      %v3031 = vrot.slane %v3029, 7
      %v3032 = vrot.slane %v3031, 4
      %v3034 = vshrl.u32 %v2715, 16
      %v3036 = vrot.slane %v3034, 7
      %v3037 = vshll.u32 %v2715, 16
      %v3039 = vor.u32 %v3036, %v3037
      %v3040 = vsel %vm1001, %v3032, %v3039
      %v3041 = vrot.slane %v3036, 4
      %v3043 = vshrl.u32 %v2716, 16
      %v3045 = vrot.slane %v3043, 7
      %v3046 = vshll.u32 %v2716, 16
      %v3048 = vor.u32 %v3045, %v3046
      %v3049 = vsel %vm1001, %v3041, %v3048
      %v3051 = vshrl.u32 %v2717, 16
      %v3053 = vrot.slane %v3051, 7
      %v3054 = vrot.slane %v3053, 4
      %v3056 = vshrl.u32 %v2718, 16
      %v3058 = vrot.slane %v3056, 7
      %v3059 = vshll.u32 %v2718, 16
      %v3061 = vor.u32 %v3058, %v3059
      %v3062 = vsel %vm1001, %v3054, %v3061
      %v3063 = vrot.slane %v3058, 4
      %v3065 = vshrl.u32 %v2719, 16
      %v3067 = vrot.slane %v3065, 7
      %v3068 = vshll.u32 %v2719, 16
      %v3070 = vor.u32 %v3067, %v3068
      %v3071 = vsel %vm1001, %v3063, %v3070
      %s3072 = scalar_lea.vmem %s2, 12
      %v3073 = vld [vmem:[%s3072] sm:$0xf]
      %s3074 = scalar_lea.vmem %s2, 16
      %v3075 = vld [vmem:[%s3074] sm:$0xf]
      %v3108 = vunpack.c.l.b16 %v2673
      %v3109 = vunpack.c.l.b16 %v2674
      %v3110 = vunpack.c.l.b16 %v2676
      %v3111 = vunpack.c.l.b16 %v2677
      %v3112 = vunpack.c.l.b16 %v2679
      %v3113 = vunpack.c.l.b16 %v2680
      %v3114 = vunpack.c.l.b16 %v2682
      %v3115 = vunpack.c.l.b16 %v2683
      %v3116 = vunpack.c.l.b16 %v2685
      %v3117 = vunpack.c.l.b16 %v2686
      %v3118 = vunpack.c.l.b16 %v2688
      %v3119 = vunpack.c.l.b16 %v2689
      %v3120 = vunpack.c.l.b16 %v2691
      %v3121 = vunpack.c.l.b16 %v2692
      %v3122 = vunpack.c.l.b16 %v2694
      %v3123 = vunpack.c.l.b16 %v2695
      %v3124 = vunpack.c.l.b16 %v2697
      %v3125 = vunpack.c.l.b16 %v2698
      %v3126 = vunpack.c.l.b16 %v2700
      %v3127 = vunpack.c.l.b16 %v2701
      %v3128 = vunpack.c.l.b16 %v2703
      %v3129 = vunpack.c.l.b16 %v2704
      %v3130 = vunpack.c.l.b16 %v2706
      %v3131 = vunpack.c.l.b16 %v2707
      %v3132 = vunpack.c.l.b16 %v2709
      %v3133 = vunpack.c.l.b16 %v2710
      %v3134 = vunpack.c.l.b16 %v2712
      %v3135 = vunpack.c.l.b16 %v2713
      %v3136 = vunpack.c.l.b16 %v2715
      %v3137 = vunpack.c.l.b16 %v2716
      %v3138 = vunpack.c.l.b16 %v2718
      %v3139 = vunpack.c.l.b16 %v2719
      %v3140 = vpack.c.b16 %v3109, %v3108
      %v3141 = vpack.c.b16 %v3111, %v3110
      %v3142 = vpack.c.b16 %v3113, %v3112
      %v3143 = vpack.c.b16 %v3115, %v3114
      %v3144 = vpack.c.b16 %v3117, %v3116
      %v3145 = vpack.c.b16 %v3119, %v3118
      %v3146 = vpack.c.b16 %v3121, %v3120
      %v3147 = vpack.c.b16 %v3123, %v3122
      %v3148 = vpack.c.b16 %v3125, %v3124
      %v3149 = vpack.c.b16 %v3127, %v3126
      %v3150 = vpack.c.b16 %v3129, %v3128
      %v3151 = vpack.c.b16 %v3131, %v3130
      %v3152 = vpack.c.b16 %v3133, %v3132
      %v3153 = vpack.c.b16 %v3135, %v3134
      %v3154 = vpack.c.b16 %v3137, %v3136
      %v3155 = vpack.c.b16 %v3139, %v3138
      %v3157 = vsel %vm1437, %v3140, 0
      %v3160 = vsel %vm1437, %v3141, 0
      %v3163 = vsel %vm1437, %v3142, 0
      %v3166 = vsel %vm1437, %v3143, 0
      %v3169 = vsel %vm1437, %v3144, 0
      %v3172 = vsel %vm1437, %v3145, 0
      %v3175 = vsel %vm1437, %v3146, 0
      %v3178 = vsel %vm1437, %v3147, 0
      %v3181 = vsel %vm1437, %v3148, 0
      %v3184 = vsel %vm1437, %v3149, 0
      %v3187 = vsel %vm1437, %v3150, 0
      %v3190 = vsel %vm1437, %v3151, 0
      %v3193 = vsel %vm1437, %v3152, 0
      %v3196 = vsel %vm1437, %v3153, 0
      %v3199 = vsel %vm1437, %v3154, 0
      %v3202 = vsel %vm1437, %v3155, 0
      %v3205 = vsel %vm1486, %v3075, 0
      %3207 = vmatprep.subr.bf16.mxu0 0
      %3208 = vmatpush1.bf16.msra.mxu0 0
      %3209 = vmatprep.subr.bf16.mxu0 0
      %3210 = vmatpush1.bf16.msra.mxu0 0
      %3211 = vmatprep.subr.bf16.mxu0 0
      %3212 = vmatpush1.bf16.msra.mxu0 0
      %3213 = vmatprep.subr.bf16.mxu0 0
      %3214 = vmatpush1.bf16.msra.mxu0 0
      %3215 = vmatprep.subr.bf16.mxu0 0
      %3216 = vmatpush1.bf16.msra.mxu0 0
      %3217 = vmatprep.subr.bf16.mxu0 0
      %3218 = vmatpush1.bf16.msra.mxu0 0
      %3219 = vmatprep.subr.bf16.mxu0 0
      %3220 = vmatpush1.bf16.msra.mxu0 0
      %3221 = vmatprep.subr.bf16.mxu0 0
      %3222 = vmatpush1.bf16.msra.mxu0 %v3205
      %3223 = vmatprep.subr.bf16.mxu0 0
      %3224 = vmatpush2.bf16.msra.mxu0 0
      %3225 = vmatprep.subr.bf16.mxu0 0
      %3226 = vmatpush2.bf16.msra.mxu0 0
      %3227 = vmatprep.subr.bf16.mxu0 0
      %3228 = vmatpush2.bf16.msra.mxu0 0
      %3229 = vmatprep.subr.bf16.mxu0 0
      %3230 = vmatpush2.bf16.msra.mxu0 0
      %3231 = vmatprep.subr.bf16.mxu0 0
      %3232 = vmatpush2.bf16.msra.mxu0 0
      %3233 = vmatprep.subr.bf16.mxu0 0
      %3234 = vmatpush2.bf16.msra.mxu0 0
      %3235 = vmatprep.subr.bf16.mxu0 0
      %3236 = vmatpush2.bf16.msra.mxu0 0
      %3237 = vmatprep.subr.bf16.mxu0 0
      %3238 = vmatpush2.bf16.msra.mxu0 0
      %3239 = vmatprep.mubr.bf16.mxu0 0
      %3240 = vmatmul.mubr.bf16.gmra.mxu0 %v3157
      %v3241 = vpop.f32.mrf.mxu0
      %v3242 = vadd.f32 0.0, %v3241
      %v3243 = vpop.f32.mrf.mxu0
      %v3244 = vpop.f32.mrf.mxu0
      %v3245 = vadd.f32 0.0, %v3244
      %v3246 = vpop.f32.mrf.mxu0
      %3247 = vmatprep.mubr.bf16.mxu0 0
      %3248 = vmatmul.mubr.bf16.gmra.mxu0 %v3160
      %v3249 = vpop.f32.mrf.mxu0
      %v3250 = vadd.f32 0.0, %v3249
      %v3251 = vpop.f32.mrf.mxu0
      %v3252 = vpop.f32.mrf.mxu0
      %v3253 = vadd.f32 0.0, %v3252
      %v3254 = vpop.f32.mrf.mxu0
      %3255 = vmatprep.mubr.bf16.mxu0 0
      %3256 = vmatmul.mubr.bf16.gmra.mxu0 %v3163
      %v3257 = vpop.f32.mrf.mxu0
      %v3258 = vadd.f32 0.0, %v3257
      %v3259 = vpop.f32.mrf.mxu0
      %v3260 = vpop.f32.mrf.mxu0
      %v3261 = vadd.f32 0.0, %v3260
      %v3262 = vpop.f32.mrf.mxu0
      %3263 = vmatprep.mubr.bf16.mxu0 0
      %3264 = vmatmul.mubr.bf16.gmra.mxu0 %v3166
      %v3265 = vpop.f32.mrf.mxu0
      %v3266 = vadd.f32 0.0, %v3265
      %v3267 = vpop.f32.mrf.mxu0
      %v3268 = vpop.f32.mrf.mxu0
      %v3269 = vadd.f32 0.0, %v3268
      %v3270 = vpop.f32.mrf.mxu0
      %3271 = vmatprep.mubr.bf16.mxu0 0
      %3272 = vmatmul.mubr.bf16.gmra.mxu0 %v3169
      %v3273 = vpop.f32.mrf.mxu0
      %v3274 = vadd.f32 0.0, %v3273
      %v3275 = vpop.f32.mrf.mxu0
      %v3276 = vpop.f32.mrf.mxu0
      %v3277 = vadd.f32 0.0, %v3276
      %v3278 = vpop.f32.mrf.mxu0
      %3279 = vmatprep.mubr.bf16.mxu0 0
      %3280 = vmatmul.mubr.bf16.gmra.mxu0 %v3172
      %v3281 = vpop.f32.mrf.mxu0
      %v3282 = vadd.f32 0.0, %v3281
      %v3283 = vpop.f32.mrf.mxu0
      %v3284 = vpop.f32.mrf.mxu0
      %v3285 = vadd.f32 0.0, %v3284
      %v3286 = vpop.f32.mrf.mxu0
      %3287 = vmatprep.mubr.bf16.mxu0 0
      %3288 = vmatmul.mubr.bf16.gmra.mxu0 %v3175
      %v3289 = vpop.f32.mrf.mxu0
      %v3290 = vadd.f32 0.0, %v3289
      %v3291 = vpop.f32.mrf.mxu0
      %v3292 = vpop.f32.mrf.mxu0
      %v3293 = vadd.f32 0.0, %v3292
      %v3294 = vpop.f32.mrf.mxu0
      %3295 = vmatprep.mubr.bf16.mxu0 0
      %3296 = vmatmul.mubr.bf16.gmra.mxu0 %v3178
      %v3297 = vpop.f32.mrf.mxu0
      %v3298 = vadd.f32 0.0, %v3297
      %v3299 = vpop.f32.mrf.mxu0
      %v3300 = vpop.f32.mrf.mxu0
      %v3301 = vadd.f32 0.0, %v3300
      %v3302 = vpop.f32.mrf.mxu0
      %3303 = vmatprep.mubr.bf16.mxu0 0
      %3304 = vmatmul.mubr.bf16.gmra.mxu0 %v3181
      %v3305 = vpop.f32.mrf.mxu0
      %v3306 = vadd.f32 0.0, %v3305
      %v3307 = vpop.f32.mrf.mxu0
      %v3308 = vpop.f32.mrf.mxu0
      %v3309 = vadd.f32 0.0, %v3308
      %v3310 = vpop.f32.mrf.mxu0
      %3311 = vmatprep.mubr.bf16.mxu0 0
      %3312 = vmatmul.mubr.bf16.gmra.mxu0 %v3184
      %v3313 = vpop.f32.mrf.mxu0
      %v3314 = vadd.f32 0.0, %v3313
      %v3315 = vpop.f32.mrf.mxu0
      %v3316 = vpop.f32.mrf.mxu0
      %v3317 = vadd.f32 0.0, %v3316
      %v3318 = vpop.f32.mrf.mxu0
      %3319 = vmatprep.mubr.bf16.mxu0 0
      %3320 = vmatmul.mubr.bf16.gmra.mxu0 %v3187
      %v3321 = vpop.f32.mrf.mxu0
      %v3322 = vadd.f32 0.0, %v3321
      %v3323 = vpop.f32.mrf.mxu0
      %v3324 = vpop.f32.mrf.mxu0
      %v3325 = vadd.f32 0.0, %v3324
      %v3326 = vpop.f32.mrf.mxu0
      %3327 = vmatprep.mubr.bf16.mxu0 0
      %3328 = vmatmul.mubr.bf16.gmra.mxu0 %v3190
      %v3329 = vpop.f32.mrf.mxu0
      %v3330 = vadd.f32 0.0, %v3329
      %v3331 = vpop.f32.mrf.mxu0
      %v3332 = vpop.f32.mrf.mxu0
      %v3333 = vadd.f32 0.0, %v3332
      %v3334 = vpop.f32.mrf.mxu0
      %3335 = vmatprep.mubr.bf16.mxu0 0
      %3336 = vmatmul.mubr.bf16.gmra.mxu0 %v3193
      %v3337 = vpop.f32.mrf.mxu0
      %v3338 = vadd.f32 0.0, %v3337
      %v3339 = vpop.f32.mrf.mxu0
      %v3340 = vpop.f32.mrf.mxu0
      %v3341 = vadd.f32 0.0, %v3340
      %v3342 = vpop.f32.mrf.mxu0
      %3343 = vmatprep.mubr.bf16.mxu0 0
      %3344 = vmatmul.mubr.bf16.gmra.mxu0 %v3196
      %v3345 = vpop.f32.mrf.mxu0
      %v3346 = vadd.f32 0.0, %v3345
      %v3347 = vpop.f32.mrf.mxu0
      %v3348 = vpop.f32.mrf.mxu0
      %v3349 = vadd.f32 0.0, %v3348
      %v3350 = vpop.f32.mrf.mxu0
      %3351 = vmatprep.mubr.bf16.mxu0 0
      %3352 = vmatmul.mubr.bf16.gmra.mxu0 %v3199
      %v3353 = vpop.f32.mrf.mxu0
      %v3354 = vadd.f32 0.0, %v3353
      %v3355 = vpop.f32.mrf.mxu0
      %v3356 = vpop.f32.mrf.mxu0
      %v3357 = vadd.f32 0.0, %v3356
      %v3358 = vpop.f32.mrf.mxu0
      %3359 = vmatprep.mubr.bf16.mxu0 0
      %3360 = vmatmul.mubr.bf16.gmra.mxu0 %v3202
      %v3361 = vpop.f32.mrf.mxu0
      %v3362 = vadd.f32 0.0, %v3361
      %v3363 = vpop.f32.mrf.mxu0
      %v3364 = vpop.f32.mrf.mxu0
      %v3365 = vadd.f32 0.0, %v3364
      %v3366 = vpop.f32.mrf.mxu0
      %3367 = vdwg.mxu0
      %v3368 = vunpack.c.l.b16 %v2732
      %v3369 = vunpack.c.l.b16 %v2741
      %v3370 = vunpack.c.l.b16 %v2754
      %v3371 = vunpack.c.l.b16 %v2763
      %v3372 = vunpack.c.l.b16 %v2776
      %v3373 = vunpack.c.l.b16 %v2785
      %v3374 = vunpack.c.l.b16 %v2798
      %v3375 = vunpack.c.l.b16 %v2807
      %v3376 = vunpack.c.l.b16 %v2820
      %v3377 = vunpack.c.l.b16 %v2829
      %v3378 = vunpack.c.l.b16 %v2842
      %v3379 = vunpack.c.l.b16 %v2851
      %v3380 = vunpack.c.l.b16 %v2864
      %v3381 = vunpack.c.l.b16 %v2873
      %v3382 = vunpack.c.l.b16 %v2886
      %v3383 = vunpack.c.l.b16 %v2895
      %v3384 = vunpack.c.l.b16 %v2908
      %v3385 = vunpack.c.l.b16 %v2917
      %v3386 = vunpack.c.l.b16 %v2930
      %v3387 = vunpack.c.l.b16 %v2939
      %v3388 = vunpack.c.l.b16 %v2952
      %v3389 = vunpack.c.l.b16 %v2961
      %v3390 = vunpack.c.l.b16 %v2974
      %v3391 = vunpack.c.l.b16 %v2983
      %v3392 = vunpack.c.l.b16 %v2996
      %v3393 = vunpack.c.l.b16 %v3005
      %v3394 = vunpack.c.l.b16 %v3018
      %v3395 = vunpack.c.l.b16 %v3027
      %v3396 = vunpack.c.l.b16 %v3040
      %v3397 = vunpack.c.l.b16 %v3049
      %v3398 = vunpack.c.l.b16 %v3062
      %v3399 = vunpack.c.l.b16 %v3071
      %v3400 = vpack.c.b16 %v3369, %v3368
      %v3401 = vpack.c.b16 %v3371, %v3370
      %v3402 = vpack.c.b16 %v3373, %v3372
      %v3403 = vpack.c.b16 %v3375, %v3374
      %v3404 = vpack.c.b16 %v3377, %v3376
      %v3405 = vpack.c.b16 %v3379, %v3378
      %v3406 = vpack.c.b16 %v3381, %v3380
      %v3407 = vpack.c.b16 %v3383, %v3382
      %v3408 = vpack.c.b16 %v3385, %v3384
      %v3409 = vpack.c.b16 %v3387, %v3386
      %v3410 = vpack.c.b16 %v3389, %v3388
      %v3411 = vpack.c.b16 %v3391, %v3390
      %v3412 = vpack.c.b16 %v3393, %v3392
      %v3413 = vpack.c.b16 %v3395, %v3394
      %v3414 = vpack.c.b16 %v3397, %v3396
      %v3415 = vpack.c.b16 %v3399, %v3398
      %v3417 = vsel %vm1437, %v3400, 0
      %v3420 = vsel %vm1437, %v3401, 0
      %v3423 = vsel %vm1437, %v3402, 0
      %v3426 = vsel %vm1437, %v3403, 0
      %v3429 = vsel %vm1437, %v3404, 0
      %v3432 = vsel %vm1437, %v3405, 0
      %v3435 = vsel %vm1437, %v3406, 0
      %v3438 = vsel %vm1437, %v3407, 0
      %v3441 = vsel %vm1437, %v3408, 0
      %v3444 = vsel %vm1437, %v3409, 0
      %v3447 = vsel %vm1437, %v3410, 0
      %v3450 = vsel %vm1437, %v3411, 0
      %v3453 = vsel %vm1437, %v3412, 0
      %v3456 = vsel %vm1437, %v3413, 0
      %v3459 = vsel %vm1437, %v3414, 0
      %v3462 = vsel %vm1437, %v3415, 0
      %v3465 = vsel %vm1486, %v3073, 0
      %3467 = vmatprep.subr.bf16.mxu0 0
      %3468 = vmatpush1.bf16.msra.mxu0 0
      %3469 = vmatprep.subr.bf16.mxu0 0
      %3470 = vmatpush1.bf16.msra.mxu0 0
      %3471 = vmatprep.subr.bf16.mxu0 0
      %3472 = vmatpush1.bf16.msra.mxu0 0
      %3473 = vmatprep.subr.bf16.mxu0 0
      %3474 = vmatpush1.bf16.msra.mxu0 0
      %3475 = vmatprep.subr.bf16.mxu0 0
      %3476 = vmatpush1.bf16.msra.mxu0 0
      %3477 = vmatprep.subr.bf16.mxu0 0
      %3478 = vmatpush1.bf16.msra.mxu0 0
      %3479 = vmatprep.subr.bf16.mxu0 0
      %3480 = vmatpush1.bf16.msra.mxu0 0
      %3481 = vmatprep.subr.bf16.mxu0 0
      %3482 = vmatpush1.bf16.msra.mxu0 %v3465
      %3483 = vmatprep.subr.bf16.mxu0 0
      %3484 = vmatpush2.bf16.msra.mxu0 0
      %3485 = vmatprep.subr.bf16.mxu0 0
      %3486 = vmatpush2.bf16.msra.mxu0 0
      %3487 = vmatprep.subr.bf16.mxu0 0
      %3488 = vmatpush2.bf16.msra.mxu0 0
      %3489 = vmatprep.subr.bf16.mxu0 0
      %3490 = vmatpush2.bf16.msra.mxu0 0
      %3491 = vmatprep.subr.bf16.mxu0 0
      %3492 = vmatpush2.bf16.msra.mxu0 0
      %3493 = vmatprep.subr.bf16.mxu0 0
      %3494 = vmatpush2.bf16.msra.mxu0 0
      %3495 = vmatprep.subr.bf16.mxu0 0
      %3496 = vmatpush2.bf16.msra.mxu0 0
      %3497 = vmatprep.subr.bf16.mxu0 0
      %3498 = vmatpush2.bf16.msra.mxu0 0
      %3499 = vmatprep.mubr.bf16.mxu0 0
      %3500 = vmatmul.mubr.bf16.gmra.mxu0 %v3417
      %v3501 = vpop.f32.mrf.mxu0
      %v3502 = vadd.f32 %v3242, %v3501
      %v3503 = vpop.f32.mrf.mxu0
      %v3504 = vpop.f32.mrf.mxu0
      %v3505 = vadd.f32 %v3245, %v3504
      %v3506 = vpop.f32.mrf.mxu0
      %3507 = vmatprep.mubr.bf16.mxu0 0
      %3508 = vmatmul.mubr.bf16.gmra.mxu0 %v3420
      %v3509 = vpop.f32.mrf.mxu0
      %v3510 = vadd.f32 %v3250, %v3509
      %v3511 = vpop.f32.mrf.mxu0
      %v3512 = vpop.f32.mrf.mxu0
      %v3513 = vadd.f32 %v3253, %v3512
      %v3514 = vpop.f32.mrf.mxu0
      %3515 = vmatprep.mubr.bf16.mxu0 0
      %3516 = vmatmul.mubr.bf16.gmra.mxu0 %v3423
      %v3517 = vpop.f32.mrf.mxu0
      %v3518 = vadd.f32 %v3258, %v3517
      %v3519 = vpop.f32.mrf.mxu0
      %v3520 = vpop.f32.mrf.mxu0
      %v3521 = vadd.f32 %v3261, %v3520
      %v3522 = vpop.f32.mrf.mxu0
      %3523 = vmatprep.mubr.bf16.mxu0 0
      %3524 = vmatmul.mubr.bf16.gmra.mxu0 %v3426
      %v3525 = vpop.f32.mrf.mxu0
      %v3526 = vadd.f32 %v3266, %v3525
      %v3527 = vpop.f32.mrf.mxu0
      %v3528 = vpop.f32.mrf.mxu0
      %v3529 = vadd.f32 %v3269, %v3528
      %v3530 = vpop.f32.mrf.mxu0
      %3531 = vmatprep.mubr.bf16.mxu0 0
      %3532 = vmatmul.mubr.bf16.gmra.mxu0 %v3429
      %v3533 = vpop.f32.mrf.mxu0
      %v3534 = vadd.f32 %v3274, %v3533
      %v3535 = vpop.f32.mrf.mxu0
      %v3536 = vpop.f32.mrf.mxu0
      %v3537 = vadd.f32 %v3277, %v3536
      %v3538 = vpop.f32.mrf.mxu0
      %3539 = vmatprep.mubr.bf16.mxu0 0
      %3540 = vmatmul.mubr.bf16.gmra.mxu0 %v3432
      %v3541 = vpop.f32.mrf.mxu0
      %v3542 = vadd.f32 %v3282, %v3541
      %v3543 = vpop.f32.mrf.mxu0
      %v3544 = vpop.f32.mrf.mxu0
      %v3545 = vadd.f32 %v3285, %v3544
      %v3546 = vpop.f32.mrf.mxu0
      %3547 = vmatprep.mubr.bf16.mxu0 0
      %3548 = vmatmul.mubr.bf16.gmra.mxu0 %v3435
      %v3549 = vpop.f32.mrf.mxu0
      %v3550 = vadd.f32 %v3290, %v3549
      %v3551 = vpop.f32.mrf.mxu0
      %v3552 = vpop.f32.mrf.mxu0
      %v3553 = vadd.f32 %v3293, %v3552
      %v3554 = vpop.f32.mrf.mxu0
      %3555 = vmatprep.mubr.bf16.mxu0 0
      %3556 = vmatmul.mubr.bf16.gmra.mxu0 %v3438
      %v3557 = vpop.f32.mrf.mxu0
      %v3558 = vadd.f32 %v3298, %v3557
      %v3559 = vpop.f32.mrf.mxu0
      %v3560 = vpop.f32.mrf.mxu0
      %v3561 = vadd.f32 %v3301, %v3560
      %v3562 = vpop.f32.mrf.mxu0
      %3563 = vmatprep.mubr.bf16.mxu0 0
      %3564 = vmatmul.mubr.bf16.gmra.mxu0 %v3441
      %v3565 = vpop.f32.mrf.mxu0
      %v3566 = vadd.f32 %v3306, %v3565
      %v3567 = vpop.f32.mrf.mxu0
      %v3568 = vpop.f32.mrf.mxu0
      %v3569 = vadd.f32 %v3309, %v3568
      %v3570 = vpop.f32.mrf.mxu0
      %3571 = vmatprep.mubr.bf16.mxu0 0
      %3572 = vmatmul.mubr.bf16.gmra.mxu0 %v3444
      %v3573 = vpop.f32.mrf.mxu0
      %v3574 = vadd.f32 %v3314, %v3573
      %v3575 = vpop.f32.mrf.mxu0
      %v3576 = vpop.f32.mrf.mxu0
      %v3577 = vadd.f32 %v3317, %v3576
      %v3578 = vpop.f32.mrf.mxu0
      %3579 = vmatprep.mubr.bf16.mxu0 0
      %3580 = vmatmul.mubr.bf16.gmra.mxu0 %v3447
      %v3581 = vpop.f32.mrf.mxu0
      %v3582 = vadd.f32 %v3322, %v3581
      %v3583 = vpop.f32.mrf.mxu0
      %v3584 = vpop.f32.mrf.mxu0
      %v3585 = vadd.f32 %v3325, %v3584
      %v3586 = vpop.f32.mrf.mxu0
      %3587 = vmatprep.mubr.bf16.mxu0 0
      %3588 = vmatmul.mubr.bf16.gmra.mxu0 %v3450
      %v3589 = vpop.f32.mrf.mxu0
      %v3590 = vadd.f32 %v3330, %v3589
      %v3591 = vpop.f32.mrf.mxu0
      %v3592 = vpop.f32.mrf.mxu0
      %v3593 = vadd.f32 %v3333, %v3592
      %v3594 = vpop.f32.mrf.mxu0
      %3595 = vmatprep.mubr.bf16.mxu0 0
      %3596 = vmatmul.mubr.bf16.gmra.mxu0 %v3453
      %v3597 = vpop.f32.mrf.mxu0
      %v3598 = vadd.f32 %v3338, %v3597
      %v3599 = vpop.f32.mrf.mxu0
      %v3600 = vpop.f32.mrf.mxu0
      %v3601 = vadd.f32 %v3341, %v3600
      %v3602 = vpop.f32.mrf.mxu0
      %3603 = vmatprep.mubr.bf16.mxu0 0
      %3604 = vmatmul.mubr.bf16.gmra.mxu0 %v3456
      %v3605 = vpop.f32.mrf.mxu0
      %v3606 = vadd.f32 %v3346, %v3605
      %v3607 = vpop.f32.mrf.mxu0
      %v3608 = vpop.f32.mrf.mxu0
      %v3609 = vadd.f32 %v3349, %v3608
      %v3610 = vpop.f32.mrf.mxu0
      %3611 = vmatprep.mubr.bf16.mxu0 0
      %3612 = vmatmul.mubr.bf16.gmra.mxu0 %v3459
      %v3613 = vpop.f32.mrf.mxu0
      %v3614 = vadd.f32 %v3354, %v3613
      %v3615 = vpop.f32.mrf.mxu0
      %v3616 = vpop.f32.mrf.mxu0
      %v3617 = vadd.f32 %v3357, %v3616
      %v3618 = vpop.f32.mrf.mxu0
      %3619 = vmatprep.mubr.bf16.mxu0 0
      %3620 = vmatmul.mubr.bf16.gmra.mxu0 %v3462
      %v3621 = vpop.f32.mrf.mxu0
      %v3622 = vadd.f32 %v3362, %v3621
      %v3623 = vpop.f32.mrf.mxu0
      %v3624 = vpop.f32.mrf.mxu0
      %v3625 = vadd.f32 %v3365, %v3624
      %v3626 = vpop.f32.mrf.mxu0
      %3627 = vdwg.mxu0
      %v3628 = vld [vmem:[%s351 + $0x8] sm:$0xf]
      %v3629 = vld [vmem:[%s351 + $0xc] sm:$0xf]
      %v3630 = vld [vmem:[%s351 + $0x10] sm:$0x1]
      %v3631 = vld [vmem:[%s351 + $0x1c] sm:$0xf]
      %v3632 = vld [vmem:[%s351 + $0x20] sm:$0xf]
      %v3633 = vld [vmem:[%s351 + $0x24] sm:$0x1]
      %v3634 = vld [vmem:[%s351 + $0x30] sm:$0xf]
      %v3635 = vld [vmem:[%s351 + $0x34] sm:$0xf]
      %v3636 = vld [vmem:[%s351 + $0x38] sm:$0x1]
      %v3637 = vld [vmem:[%s351 + $0x44] sm:$0xf]
      %v3638 = vld [vmem:[%s351 + $0x48] sm:$0xf]
      %v3639 = vld [vmem:[%s351 + $0x4c] sm:$0x1]
      %v3640 = vld [vmem:[%s351 + $0x58] sm:$0xf]
      %v3641 = vld [vmem:[%s351 + $0x5c] sm:$0xf]
      %v3642 = vld [vmem:[%s351 + $0x60] sm:$0x1]
      %v3643 = vld [vmem:[%s351 + $0x6c] sm:$0xf]
      %v3644 = vld [vmem:[%s351 + $0x70] sm:$0xf]
      %v3645 = vld [vmem:[%s351 + $0x74] sm:$0x1]
      %v3646 = vld [vmem:[%s351 + $0x80] sm:$0xf]
      %v3647 = vld [vmem:[%s351 + $0x84] sm:$0xf]
      %v3648 = vld [vmem:[%s351 + $0x88] sm:$0x1]
      %v3649 = vld [vmem:[%s351 + $0x94] sm:$0xf]
      %v3650 = vld [vmem:[%s351 + $0x98] sm:$0xf]
      %v3651 = vld [vmem:[%s351 + $0x9c] sm:$0x1]
      %v3652 = vld [vmem:[%s351 + $0xa8] sm:$0xf]
      %v3653 = vld [vmem:[%s351 + $0xac] sm:$0xf]
      %v3654 = vld [vmem:[%s351 + $0xb0] sm:$0x1]
      %v3655 = vld [vmem:[%s351 + $0xbc] sm:$0xf]
      %v3656 = vld [vmem:[%s351 + $0xc0] sm:$0xf]
      %v3657 = vld [vmem:[%s351 + $0xc4] sm:$0x1]
      %v3658 = vld [vmem:[%s351 + $0xd0] sm:$0xf]
      %v3659 = vld [vmem:[%s351 + $0xd4] sm:$0xf]
      %v3660 = vld [vmem:[%s351 + $0xd8] sm:$0x1]
      %v3661 = vld [vmem:[%s351 + $0xe4] sm:$0xf]
      %v3662 = vld [vmem:[%s351 + $0xe8] sm:$0xf]
      %v3663 = vld [vmem:[%s351 + $0xec] sm:$0x1]
      %v3664 = vld [vmem:[%s351 + $0xf8] sm:$0xf]
      %v3665 = vld [vmem:[%s351 + $0xfc] sm:$0xf]
      %v3666 = vld [vmem:[%s351 + $0x100] sm:$0x1]
      %v3667 = vld [vmem:[%s351 + $0x10c] sm:$0xf]
      %v3668 = vld [vmem:[%s351 + $0x110] sm:$0xf]
      %v3669 = vld [vmem:[%s351 + $0x114] sm:$0x1]
      %v3670 = vld [vmem:[%s351 + $0x120] sm:$0xf]
      %v3671 = vld [vmem:[%s351 + $0x124] sm:$0xf]
      %v3672 = vld [vmem:[%s351 + $0x128] sm:$0x1]
      %v3673 = vld [vmem:[%s351 + $0x134] sm:$0xf]
      %v3674 = vld [vmem:[%s351 + $0x138] sm:$0xf]
      %v3675 = vld [vmem:[%s351 + $0x13c] sm:$0x1]
      %v3677 = vshrl.u32 %v3628, 16
      %v3679 = vrot.slane %v3677, 4
      %v3680 = vshll.u32 %v3628, 16
      %v3682 = vrot.slane %v3680, 5
      %v3683 = vor.u32 %v3679, %v3682
      %v3684 = vrot.slane %v3683, 4
      %v3686 = vshll.u32 %v3629, 16
      %v3688 = vrot.slane %v3686, 5
      %v3689 = vsel %vm1961, %v3684, %v3688
      %v3690 = vshrl.u32 %v3629, 16
      %v3692 = vrot.slane %v3690, 4
      %v3693 = vor.u32 %v3692, %v3688
      %v3694 = vrot.slane %v3693, 4
      %v3696 = vshll.u32 %v3630, 16
      %v3698 = vrot.slane %v3696, 5
      %v3699 = vsel %vm1961, %v3694, %v3698
      %v3701 = vshrl.u32 %v3631, 16
      %v3703 = vrot.slane %v3701, 4
      %v3704 = vshll.u32 %v3631, 16
      %v3706 = vrot.slane %v3704, 5
      %v3707 = vor.u32 %v3703, %v3706
      %v3708 = vrot.slane %v3707, 4
      %v3710 = vshll.u32 %v3632, 16
      %v3712 = vrot.slane %v3710, 5
      %v3713 = vsel %vm1961, %v3708, %v3712
      %v3714 = vshrl.u32 %v3632, 16
      %v3716 = vrot.slane %v3714, 4
      %v3717 = vor.u32 %v3716, %v3712
      %v3718 = vrot.slane %v3717, 4
      %v3720 = vshll.u32 %v3633, 16
      %v3722 = vrot.slane %v3720, 5
      %v3723 = vsel %vm1961, %v3718, %v3722
      %v3725 = vshrl.u32 %v3634, 16
      %v3727 = vrot.slane %v3725, 4
      %v3728 = vshll.u32 %v3634, 16
      %v3730 = vrot.slane %v3728, 5
      %v3731 = vor.u32 %v3727, %v3730
      %v3732 = vrot.slane %v3731, 4
      %v3734 = vshll.u32 %v3635, 16
      %v3736 = vrot.slane %v3734, 5
      %v3737 = vsel %vm1961, %v3732, %v3736
      %v3738 = vshrl.u32 %v3635, 16
      %v3740 = vrot.slane %v3738, 4
      %v3741 = vor.u32 %v3740, %v3736
      %v3742 = vrot.slane %v3741, 4
      %v3744 = vshll.u32 %v3636, 16
      %v3746 = vrot.slane %v3744, 5
      %v3747 = vsel %vm1961, %v3742, %v3746
      %v3749 = vshrl.u32 %v3637, 16
      %v3751 = vrot.slane %v3749, 4
      %v3752 = vshll.u32 %v3637, 16
      %v3754 = vrot.slane %v3752, 5
      %v3755 = vor.u32 %v3751, %v3754
      %v3756 = vrot.slane %v3755, 4
      %v3758 = vshll.u32 %v3638, 16
      %v3760 = vrot.slane %v3758, 5
      %v3761 = vsel %vm1961, %v3756, %v3760
      %v3762 = vshrl.u32 %v3638, 16
      %v3764 = vrot.slane %v3762, 4
      %v3765 = vor.u32 %v3764, %v3760
      %v3766 = vrot.slane %v3765, 4
      %v3768 = vshll.u32 %v3639, 16
      %v3770 = vrot.slane %v3768, 5
      %v3771 = vsel %vm1961, %v3766, %v3770
      %v3773 = vshrl.u32 %v3640, 16
      %v3775 = vrot.slane %v3773, 4
      %v3776 = vshll.u32 %v3640, 16
      %v3778 = vrot.slane %v3776, 5
      %v3779 = vor.u32 %v3775, %v3778
      %v3780 = vrot.slane %v3779, 4
      %v3782 = vshll.u32 %v3641, 16
      %v3784 = vrot.slane %v3782, 5
      %v3785 = vsel %vm1961, %v3780, %v3784
      %v3786 = vshrl.u32 %v3641, 16
      %v3788 = vrot.slane %v3786, 4
      %v3789 = vor.u32 %v3788, %v3784
      %v3790 = vrot.slane %v3789, 4
      %v3792 = vshll.u32 %v3642, 16
      %v3794 = vrot.slane %v3792, 5
      %v3795 = vsel %vm1961, %v3790, %v3794
      %v3797 = vshrl.u32 %v3643, 16
      %v3799 = vrot.slane %v3797, 4
      %v3800 = vshll.u32 %v3643, 16
      %v3802 = vrot.slane %v3800, 5
      %v3803 = vor.u32 %v3799, %v3802
      %v3804 = vrot.slane %v3803, 4
      %v3806 = vshll.u32 %v3644, 16
      %v3808 = vrot.slane %v3806, 5
      %v3809 = vsel %vm1961, %v3804, %v3808
      %v3810 = vshrl.u32 %v3644, 16
      %v3812 = vrot.slane %v3810, 4
      %v3813 = vor.u32 %v3812, %v3808
      %v3814 = vrot.slane %v3813, 4
      %v3816 = vshll.u32 %v3645, 16
      %v3818 = vrot.slane %v3816, 5
      %v3819 = vsel %vm1961, %v3814, %v3818
      %v3821 = vshrl.u32 %v3646, 16
      %v3823 = vrot.slane %v3821, 4
      %v3824 = vshll.u32 %v3646, 16
      %v3826 = vrot.slane %v3824, 5
      %v3827 = vor.u32 %v3823, %v3826
      %v3828 = vrot.slane %v3827, 4
      %v3830 = vshll.u32 %v3647, 16
      %v3832 = vrot.slane %v3830, 5
      %v3833 = vsel %vm1961, %v3828, %v3832
      %v3834 = vshrl.u32 %v3647, 16
      %v3836 = vrot.slane %v3834, 4
      %v3837 = vor.u32 %v3836, %v3832
      %v3838 = vrot.slane %v3837, 4
      %v3840 = vshll.u32 %v3648, 16
      %v3842 = vrot.slane %v3840, 5
      %v3843 = vsel %vm1961, %v3838, %v3842
      %v3845 = vshrl.u32 %v3649, 16
      %v3847 = vrot.slane %v3845, 4
      %v3848 = vshll.u32 %v3649, 16
      %v3850 = vrot.slane %v3848, 5
      %v3851 = vor.u32 %v3847, %v3850
      %v3852 = vrot.slane %v3851, 4
      %v3854 = vshll.u32 %v3650, 16
      %v3856 = vrot.slane %v3854, 5
      %v3857 = vsel %vm1961, %v3852, %v3856
      %v3858 = vshrl.u32 %v3650, 16
      %v3860 = vrot.slane %v3858, 4
      %v3861 = vor.u32 %v3860, %v3856
      %v3862 = vrot.slane %v3861, 4
      %v3864 = vshll.u32 %v3651, 16
      %v3866 = vrot.slane %v3864, 5
      %v3867 = vsel %vm1961, %v3862, %v3866
      %v3869 = vshrl.u32 %v3652, 16
      %v3871 = vrot.slane %v3869, 4
      %v3872 = vshll.u32 %v3652, 16
      %v3874 = vrot.slane %v3872, 5
      %v3875 = vor.u32 %v3871, %v3874
      %v3876 = vrot.slane %v3875, 4
      %v3878 = vshll.u32 %v3653, 16
      %v3880 = vrot.slane %v3878, 5
      %v3881 = vsel %vm1961, %v3876, %v3880
      %v3882 = vshrl.u32 %v3653, 16
      %v3884 = vrot.slane %v3882, 4
      %v3885 = vor.u32 %v3884, %v3880
      %v3886 = vrot.slane %v3885, 4
      %v3888 = vshll.u32 %v3654, 16
      %v3890 = vrot.slane %v3888, 5
      %v3891 = vsel %vm1961, %v3886, %v3890
      %v3893 = vshrl.u32 %v3655, 16
      %v3895 = vrot.slane %v3893, 4
      %v3896 = vshll.u32 %v3655, 16
      %v3898 = vrot.slane %v3896, 5
      %v3899 = vor.u32 %v3895, %v3898
      %v3900 = vrot.slane %v3899, 4
      %v3902 = vshll.u32 %v3656, 16
      %v3904 = vrot.slane %v3902, 5
      %v3905 = vsel %vm1961, %v3900, %v3904
      %v3906 = vshrl.u32 %v3656, 16
      %v3908 = vrot.slane %v3906, 4
      %v3909 = vor.u32 %v3908, %v3904
      %v3910 = vrot.slane %v3909, 4
      %v3912 = vshll.u32 %v3657, 16
      %v3914 = vrot.slane %v3912, 5
      %v3915 = vsel %vm1961, %v3910, %v3914
      %v3917 = vshrl.u32 %v3658, 16
      %v3919 = vrot.slane %v3917, 4
      %v3920 = vshll.u32 %v3658, 16
      %v3922 = vrot.slane %v3920, 5
      %v3923 = vor.u32 %v3919, %v3922
      %v3924 = vrot.slane %v3923, 4
      %v3926 = vshll.u32 %v3659, 16
      %v3928 = vrot.slane %v3926, 5
      %v3929 = vsel %vm1961, %v3924, %v3928
      %v3930 = vshrl.u32 %v3659, 16
      %v3932 = vrot.slane %v3930, 4
      %v3933 = vor.u32 %v3932, %v3928
      %v3934 = vrot.slane %v3933, 4
      %v3936 = vshll.u32 %v3660, 16
      %v3938 = vrot.slane %v3936, 5
      %v3939 = vsel %vm1961, %v3934, %v3938
      %v3941 = vshrl.u32 %v3661, 16
      %v3943 = vrot.slane %v3941, 4
      %v3944 = vshll.u32 %v3661, 16
      %v3946 = vrot.slane %v3944, 5
      %v3947 = vor.u32 %v3943, %v3946
      %v3948 = vrot.slane %v3947, 4
      %v3950 = vshll.u32 %v3662, 16
      %v3952 = vrot.slane %v3950, 5
      %v3953 = vsel %vm1961, %v3948, %v3952
      %v3954 = vshrl.u32 %v3662, 16
      %v3956 = vrot.slane %v3954, 4
      %v3957 = vor.u32 %v3956, %v3952
      %v3958 = vrot.slane %v3957, 4
      %v3960 = vshll.u32 %v3663, 16
      %v3962 = vrot.slane %v3960, 5
      %v3963 = vsel %vm1961, %v3958, %v3962
      %v3965 = vshrl.u32 %v3664, 16
      %v3967 = vrot.slane %v3965, 4
      %v3968 = vshll.u32 %v3664, 16
      %v3970 = vrot.slane %v3968, 5
      %v3971 = vor.u32 %v3967, %v3970
      %v3972 = vrot.slane %v3971, 4
      %v3974 = vshll.u32 %v3665, 16
      %v3976 = vrot.slane %v3974, 5
      %v3977 = vsel %vm1961, %v3972, %v3976
      %v3978 = vshrl.u32 %v3665, 16
      %v3980 = vrot.slane %v3978, 4
      %v3981 = vor.u32 %v3980, %v3976
      %v3982 = vrot.slane %v3981, 4
      %v3984 = vshll.u32 %v3666, 16
      %v3986 = vrot.slane %v3984, 5
      %v3987 = vsel %vm1961, %v3982, %v3986
      %v3989 = vshrl.u32 %v3667, 16
      %v3991 = vrot.slane %v3989, 4
      %v3992 = vshll.u32 %v3667, 16
      %v3994 = vrot.slane %v3992, 5
      %v3995 = vor.u32 %v3991, %v3994
      %v3996 = vrot.slane %v3995, 4
      %v3998 = vshll.u32 %v3668, 16
      %v4000 = vrot.slane %v3998, 5
      %v4001 = vsel %vm1961, %v3996, %v4000
      %v4002 = vshrl.u32 %v3668, 16
      %v4004 = vrot.slane %v4002, 4
      %v4005 = vor.u32 %v4004, %v4000
      %v4006 = vrot.slane %v4005, 4
      %v4008 = vshll.u32 %v3669, 16
      %v4010 = vrot.slane %v4008, 5
      %v4011 = vsel %vm1961, %v4006, %v4010
      %v4013 = vshrl.u32 %v3670, 16
      %v4015 = vrot.slane %v4013, 4
      %v4016 = vshll.u32 %v3670, 16
      %v4018 = vrot.slane %v4016, 5
      %v4019 = vor.u32 %v4015, %v4018
      %v4020 = vrot.slane %v4019, 4
      %v4022 = vshll.u32 %v3671, 16
      %v4024 = vrot.slane %v4022, 5
      %v4025 = vsel %vm1961, %v4020, %v4024
      %v4026 = vshrl.u32 %v3671, 16
      %v4028 = vrot.slane %v4026, 4
      %v4029 = vor.u32 %v4028, %v4024
      %v4030 = vrot.slane %v4029, 4
      %v4032 = vshll.u32 %v3672, 16
      %v4034 = vrot.slane %v4032, 5
      %v4035 = vsel %vm1961, %v4030, %v4034
      %v4037 = vshrl.u32 %v3673, 16
      %v4039 = vrot.slane %v4037, 4
      %v4040 = vshll.u32 %v3673, 16
      %v4042 = vrot.slane %v4040, 5
      %v4043 = vor.u32 %v4039, %v4042
      %v4044 = vrot.slane %v4043, 4
      %v4046 = vshll.u32 %v3674, 16
      %v4048 = vrot.slane %v4046, 5
      %v4049 = vsel %vm1961, %v4044, %v4048
      %v4050 = vshrl.u32 %v3674, 16
      %v4052 = vrot.slane %v4050, 4
      %v4053 = vor.u32 %v4052, %v4048
      %v4054 = vrot.slane %v4053, 4
      %v4056 = vshll.u32 %v3675, 16
      %v4058 = vrot.slane %v4056, 5
      %v4059 = vsel %vm1961, %v4054, %v4058
      %s4060 = scalar_lea.vmem %s2, 20
      %v4061 = vld [vmem:[%s4060] sm:$0xf]
      %v4062 = vunpack.c.l.b16 %v3689
      %v4063 = vunpack.c.l.b16 %v3699
      %v4064 = vunpack.c.l.b16 %v3713
      %v4065 = vunpack.c.l.b16 %v3723
      %v4066 = vunpack.c.l.b16 %v3737
      %v4067 = vunpack.c.l.b16 %v3747
      %v4068 = vunpack.c.l.b16 %v3761
      %v4069 = vunpack.c.l.b16 %v3771
      %v4070 = vunpack.c.l.b16 %v3785
      %v4071 = vunpack.c.l.b16 %v3795
      %v4072 = vunpack.c.l.b16 %v3809
      %v4073 = vunpack.c.l.b16 %v3819
      %v4074 = vunpack.c.l.b16 %v3833
      %v4075 = vunpack.c.l.b16 %v3843
      %v4076 = vunpack.c.l.b16 %v3857
      %v4077 = vunpack.c.l.b16 %v3867
      %v4078 = vunpack.c.l.b16 %v3881
      %v4079 = vunpack.c.l.b16 %v3891
      %v4080 = vunpack.c.l.b16 %v3905
      %v4081 = vunpack.c.l.b16 %v3915
      %v4082 = vunpack.c.l.b16 %v3929
      %v4083 = vunpack.c.l.b16 %v3939
      %v4084 = vunpack.c.l.b16 %v3953
      %v4085 = vunpack.c.l.b16 %v3963
      %v4086 = vunpack.c.l.b16 %v3977
      %v4087 = vunpack.c.l.b16 %v3987
      %v4088 = vunpack.c.l.b16 %v4001
      %v4089 = vunpack.c.l.b16 %v4011
      %v4090 = vunpack.c.l.b16 %v4025
      %v4091 = vunpack.c.l.b16 %v4035
      %v4092 = vunpack.c.l.b16 %v4049
      %v4093 = vunpack.c.l.b16 %v4059
      %v4094 = vpack.c.b16 %v4063, %v4062
      %v4095 = vpack.c.b16 %v4065, %v4064
      %v4096 = vpack.c.b16 %v4067, %v4066
      %v4097 = vpack.c.b16 %v4069, %v4068
      %v4098 = vpack.c.b16 %v4071, %v4070
      %v4099 = vpack.c.b16 %v4073, %v4072
      %v4100 = vpack.c.b16 %v4075, %v4074
      %v4101 = vpack.c.b16 %v4077, %v4076
      %v4102 = vpack.c.b16 %v4079, %v4078
      %v4103 = vpack.c.b16 %v4081, %v4080
      %v4104 = vpack.c.b16 %v4083, %v4082
      %v4105 = vpack.c.b16 %v4085, %v4084
      %v4106 = vpack.c.b16 %v4087, %v4086
      %v4107 = vpack.c.b16 %v4089, %v4088
      %v4108 = vpack.c.b16 %v4091, %v4090
      %v4109 = vpack.c.b16 %v4093, %v4092
      %v4111 = vsel %vm1437, %v4094, 0
      %v4114 = vsel %vm1437, %v4095, 0
      %v4117 = vsel %vm1437, %v4096, 0
      %v4120 = vsel %vm1437, %v4097, 0
      %v4123 = vsel %vm1437, %v4098, 0
      %v4126 = vsel %vm1437, %v4099, 0
      %v4129 = vsel %vm1437, %v4100, 0
      %v4132 = vsel %vm1437, %v4101, 0
      %v4135 = vsel %vm1437, %v4102, 0
      %v4138 = vsel %vm1437, %v4103, 0
      %v4141 = vsel %vm1437, %v4104, 0
      %v4144 = vsel %vm1437, %v4105, 0
      %v4147 = vsel %vm1437, %v4106, 0
      %v4150 = vsel %vm1437, %v4107, 0
      %v4153 = vsel %vm1437, %v4108, 0
      %v4156 = vsel %vm1437, %v4109, 0
      %v4159 = vsel %vm1486, %v4061, 0
      %4161 = vmatprep.subr.bf16.mxu0 0
      %4162 = vmatpush1.bf16.msra.mxu0 0
      %4163 = vmatprep.subr.bf16.mxu0 0
      %4164 = vmatpush1.bf16.msra.mxu0 0
      %4165 = vmatprep.subr.bf16.mxu0 0
      %4166 = vmatpush1.bf16.msra.mxu0 0
      %4167 = vmatprep.subr.bf16.mxu0 0
      %4168 = vmatpush1.bf16.msra.mxu0 0
      %4169 = vmatprep.subr.bf16.mxu0 0
      %4170 = vmatpush1.bf16.msra.mxu0 0
      %4171 = vmatprep.subr.bf16.mxu0 0
      %4172 = vmatpush1.bf16.msra.mxu0 0
      %4173 = vmatprep.subr.bf16.mxu0 0
      %4174 = vmatpush1.bf16.msra.mxu0 0
      %4175 = vmatprep.subr.bf16.mxu0 0
      %4176 = vmatpush1.bf16.msra.mxu0 %v4159
      %4177 = vmatprep.subr.bf16.mxu0 0
      %4178 = vmatpush2.bf16.msra.mxu0 0
      %4179 = vmatprep.subr.bf16.mxu0 0
      %4180 = vmatpush2.bf16.msra.mxu0 0
      %4181 = vmatprep.subr.bf16.mxu0 0
      %4182 = vmatpush2.bf16.msra.mxu0 0
      %4183 = vmatprep.subr.bf16.mxu0 0
      %4184 = vmatpush2.bf16.msra.mxu0 0
      %4185 = vmatprep.subr.bf16.mxu0 0
      %4186 = vmatpush2.bf16.msra.mxu0 0
      %4187 = vmatprep.subr.bf16.mxu0 0
      %4188 = vmatpush2.bf16.msra.mxu0 0
      %4189 = vmatprep.subr.bf16.mxu0 0
      %4190 = vmatpush2.bf16.msra.mxu0 0
      %4191 = vmatprep.subr.bf16.mxu0 0
      %4192 = vmatpush2.bf16.msra.mxu0 0
      %4193 = vmatprep.mubr.bf16.mxu0 0
      %4194 = vmatmul.mubr.bf16.gmra.mxu0 %v4111
      %v4195 = vpop.f32.mrf.mxu0
      %v4196 = vadd.f32 0.0, %v4195
      %v4197 = vpop.f32.mrf.mxu0
      %v4198 = vpop.f32.mrf.mxu0
      %v4199 = vadd.f32 0.0, %v4198
      %v4200 = vpop.f32.mrf.mxu0
      %4201 = vmatprep.mubr.bf16.mxu0 0
      %4202 = vmatmul.mubr.bf16.gmra.mxu0 %v4114
      %v4203 = vpop.f32.mrf.mxu0
      %v4204 = vadd.f32 0.0, %v4203
      %v4205 = vpop.f32.mrf.mxu0
      %v4206 = vpop.f32.mrf.mxu0
      %v4207 = vadd.f32 0.0, %v4206
      %v4208 = vpop.f32.mrf.mxu0
      %4209 = vmatprep.mubr.bf16.mxu0 0
      %4210 = vmatmul.mubr.bf16.gmra.mxu0 %v4117
      %v4211 = vpop.f32.mrf.mxu0
      %v4212 = vadd.f32 0.0, %v4211
      %v4213 = vpop.f32.mrf.mxu0
      %v4214 = vpop.f32.mrf.mxu0
      %v4215 = vadd.f32 0.0, %v4214
      %v4216 = vpop.f32.mrf.mxu0
      %4217 = vmatprep.mubr.bf16.mxu0 0
      %4218 = vmatmul.mubr.bf16.gmra.mxu0 %v4120
      %v4219 = vpop.f32.mrf.mxu0
      %v4220 = vadd.f32 0.0, %v4219
      %v4221 = vpop.f32.mrf.mxu0
      %v4222 = vpop.f32.mrf.mxu0
      %v4223 = vadd.f32 0.0, %v4222
      %v4224 = vpop.f32.mrf.mxu0
      %4225 = vmatprep.mubr.bf16.mxu0 0
      %4226 = vmatmul.mubr.bf16.gmra.mxu0 %v4123
      %v4227 = vpop.f32.mrf.mxu0
      %v4228 = vadd.f32 0.0, %v4227
      %v4229 = vpop.f32.mrf.mxu0
      %v4230 = vpop.f32.mrf.mxu0
      %v4231 = vadd.f32 0.0, %v4230
      %v4232 = vpop.f32.mrf.mxu0
      %4233 = vmatprep.mubr.bf16.mxu0 0
      %4234 = vmatmul.mubr.bf16.gmra.mxu0 %v4126
      %v4235 = vpop.f32.mrf.mxu0
      %v4236 = vadd.f32 0.0, %v4235
      %v4237 = vpop.f32.mrf.mxu0
      %v4238 = vpop.f32.mrf.mxu0
      %v4239 = vadd.f32 0.0, %v4238
      %v4240 = vpop.f32.mrf.mxu0
      %4241 = vmatprep.mubr.bf16.mxu0 0
      %4242 = vmatmul.mubr.bf16.gmra.mxu0 %v4129
      %v4243 = vpop.f32.mrf.mxu0
      %v4244 = vadd.f32 0.0, %v4243
      %v4245 = vpop.f32.mrf.mxu0
      %v4246 = vpop.f32.mrf.mxu0
      %v4247 = vadd.f32 0.0, %v4246
      %v4248 = vpop.f32.mrf.mxu0
      %4249 = vmatprep.mubr.bf16.mxu0 0
      %4250 = vmatmul.mubr.bf16.gmra.mxu0 %v4132
      %v4251 = vpop.f32.mrf.mxu0
      %v4252 = vadd.f32 0.0, %v4251
      %v4253 = vpop.f32.mrf.mxu0
      %v4254 = vpop.f32.mrf.mxu0
      %v4255 = vadd.f32 0.0, %v4254
      %v4256 = vpop.f32.mrf.mxu0
      %4257 = vmatprep.mubr.bf16.mxu0 0
      %4258 = vmatmul.mubr.bf16.gmra.mxu0 %v4135
      %v4259 = vpop.f32.mrf.mxu0
      %v4260 = vadd.f32 0.0, %v4259
      %v4261 = vpop.f32.mrf.mxu0
      %v4262 = vpop.f32.mrf.mxu0
      %v4263 = vadd.f32 0.0, %v4262
      %v4264 = vpop.f32.mrf.mxu0
      %4265 = vmatprep.mubr.bf16.mxu0 0
      %4266 = vmatmul.mubr.bf16.gmra.mxu0 %v4138
      %v4267 = vpop.f32.mrf.mxu0
      %v4268 = vadd.f32 0.0, %v4267
      %v4269 = vpop.f32.mrf.mxu0
      %v4270 = vpop.f32.mrf.mxu0
      %v4271 = vadd.f32 0.0, %v4270
      %v4272 = vpop.f32.mrf.mxu0
      %4273 = vmatprep.mubr.bf16.mxu0 0
      %4274 = vmatmul.mubr.bf16.gmra.mxu0 %v4141
      %v4275 = vpop.f32.mrf.mxu0
      %v4276 = vadd.f32 0.0, %v4275
      %v4277 = vpop.f32.mrf.mxu0
      %v4278 = vpop.f32.mrf.mxu0
      %v4279 = vadd.f32 0.0, %v4278
      %v4280 = vpop.f32.mrf.mxu0
      %4281 = vmatprep.mubr.bf16.mxu0 0
      %4282 = vmatmul.mubr.bf16.gmra.mxu0 %v4144
      %v4283 = vpop.f32.mrf.mxu0
      %v4284 = vadd.f32 0.0, %v4283
      %v4285 = vpop.f32.mrf.mxu0
      %v4286 = vpop.f32.mrf.mxu0
      %v4287 = vadd.f32 0.0, %v4286
      %v4288 = vpop.f32.mrf.mxu0
      %4289 = vmatprep.mubr.bf16.mxu0 0
      %4290 = vmatmul.mubr.bf16.gmra.mxu0 %v4147
      %v4291 = vpop.f32.mrf.mxu0
      %v4292 = vadd.f32 0.0, %v4291
      %v4293 = vpop.f32.mrf.mxu0
      %v4294 = vpop.f32.mrf.mxu0
      %v4295 = vadd.f32 0.0, %v4294
      %v4296 = vpop.f32.mrf.mxu0
      %4297 = vmatprep.mubr.bf16.mxu0 0
      %4298 = vmatmul.mubr.bf16.gmra.mxu0 %v4150
      %v4299 = vpop.f32.mrf.mxu0
      %v4300 = vadd.f32 0.0, %v4299
      %v4301 = vpop.f32.mrf.mxu0
      %v4302 = vpop.f32.mrf.mxu0
      %v4303 = vadd.f32 0.0, %v4302
      %v4304 = vpop.f32.mrf.mxu0
      %4305 = vmatprep.mubr.bf16.mxu0 0
      %4306 = vmatmul.mubr.bf16.gmra.mxu0 %v4153
      %v4307 = vpop.f32.mrf.mxu0
      %v4308 = vadd.f32 0.0, %v4307
      %v4309 = vpop.f32.mrf.mxu0
      %v4310 = vpop.f32.mrf.mxu0
      %v4311 = vadd.f32 0.0, %v4310
      %v4312 = vpop.f32.mrf.mxu0
      %4313 = vmatprep.mubr.bf16.mxu0 0
      %4314 = vmatmul.mubr.bf16.gmra.mxu0 %v4156
      %v4315 = vpop.f32.mrf.mxu0
      %v4316 = vadd.f32 0.0, %v4315
      %v4317 = vpop.f32.mrf.mxu0
      %v4318 = vpop.f32.mrf.mxu0
      %v4319 = vadd.f32 0.0, %v4318
      %v4320 = vpop.f32.mrf.mxu0
      %4321 = vdwg.mxu0
      %v4322 = vadd.f32 %v3502, %v4196
      %v4323 = vadd.f32 %v3505, %v4199
      %v4324 = vadd.f32 %v3510, %v4204
      %v4325 = vadd.f32 %v3513, %v4207
      %v4326 = vadd.f32 %v3518, %v4212
      %v4327 = vadd.f32 %v3521, %v4215
      %v4328 = vadd.f32 %v3526, %v4220
      %v4329 = vadd.f32 %v3529, %v4223
      %v4330 = vadd.f32 %v3534, %v4228
      %v4331 = vadd.f32 %v3537, %v4231
      %v4332 = vadd.f32 %v3542, %v4236
      %v4333 = vadd.f32 %v3545, %v4239
      %v4334 = vadd.f32 %v3550, %v4244
      %v4335 = vadd.f32 %v3553, %v4247
      %v4336 = vadd.f32 %v3558, %v4252
      %v4337 = vadd.f32 %v3561, %v4255
      %v4338 = vadd.f32 %v3566, %v4260
      %v4339 = vadd.f32 %v3569, %v4263
      %v4340 = vadd.f32 %v3574, %v4268
      %v4341 = vadd.f32 %v3577, %v4271
      %v4342 = vadd.f32 %v3582, %v4276
      %v4343 = vadd.f32 %v3585, %v4279
      %v4344 = vadd.f32 %v3590, %v4284
      %v4345 = vadd.f32 %v3593, %v4287
      %v4346 = vadd.f32 %v3598, %v4292
      %v4347 = vadd.f32 %v3601, %v4295
      %v4348 = vadd.f32 %v3606, %v4300
      %v4349 = vadd.f32 %v3609, %v4303
      %v4350 = vadd.f32 %v3614, %v4308
      %v4351 = vadd.f32 %v3617, %v4311
      %v4352 = vadd.f32 %v3622, %v4316
      %v4353 = vadd.f32 %v3625, %v4319
      %v4354 = vadd.f32 %v2640, %v4322
      %v4355 = vadd.f32 %v2641, %v4323
      %v4356 = vadd.f32 %v2642, %v4324
      %v4357 = vadd.f32 %v2643, %v4325
      %v4358 = vadd.f32 %v2644, %v4326
      %v4359 = vadd.f32 %v2645, %v4327
      %v4360 = vadd.f32 %v2646, %v4328
      %v4361 = vadd.f32 %v2647, %v4329
      %v4362 = vadd.f32 %v2648, %v4330
      %v4363 = vadd.f32 %v2649, %v4331
      %v4364 = vadd.f32 %v2650, %v4332
      %v4365 = vadd.f32 %v2651, %v4333
      %v4366 = vadd.f32 %v2652, %v4334
      %v4367 = vadd.f32 %v2653, %v4335
      %v4368 = vadd.f32 %v2654, %v4336
      %v4369 = vadd.f32 %v2655, %v4337
      %v4370 = vadd.f32 %v2656, %v4338
      %v4371 = vadd.f32 %v2657, %v4339
      %v4372 = vadd.f32 %v2658, %v4340
      %v4373 = vadd.f32 %v2659, %v4341
      %v4374 = vadd.f32 %v2660, %v4342
      %v4375 = vadd.f32 %v2661, %v4343
      %v4376 = vadd.f32 %v2662, %v4344
      %v4377 = vadd.f32 %v2663, %v4345
      %v4378 = vadd.f32 %v2664, %v4346
      %v4379 = vadd.f32 %v2665, %v4347
      %v4380 = vadd.f32 %v2666, %v4348
      %v4381 = vadd.f32 %v2667, %v4349
      %v4382 = vadd.f32 %v2668, %v4350
      %v4383 = vadd.f32 %v2669, %v4351
      %v4384 = vadd.f32 %v2670, %v4352
      %v4385 = vadd.f32 %v2671, %v4353
      %s4386 = scalar_lea.vmem [#allocation2], 40
      %v4387 = vld [vmem:[%s4386 + $0x4] sm:$0x8]
      %v4388 = vld [vmem:[%s4386 + $0x8] sm:$0xf]
      %v4389 = vld [vmem:[%s4386 + $0xc] sm:$0xf]
      %v4390 = vld [vmem:[%s4386 + $0x18] sm:$0x8]
      %v4391 = vld [vmem:[%s4386 + $0x1c] sm:$0xf]
      %v4392 = vld [vmem:[%s4386 + $0x20] sm:$0xf]
      %v4393 = vld [vmem:[%s4386 + $0x2c] sm:$0x8]
      %v4394 = vld [vmem:[%s4386 + $0x30] sm:$0xf]
      %v4395 = vld [vmem:[%s4386 + $0x34] sm:$0xf]
      %v4396 = vld [vmem:[%s4386 + $0x40] sm:$0x8]
      %v4397 = vld [vmem:[%s4386 + $0x44] sm:$0xf]
      %v4398 = vld [vmem:[%s4386 + $0x48] sm:$0xf]
      %v4399 = vld [vmem:[%s4386 + $0x54] sm:$0x8]
      %v4400 = vld [vmem:[%s4386 + $0x58] sm:$0xf]
      %v4401 = vld [vmem:[%s4386 + $0x5c] sm:$0xf]
      %v4402 = vld [vmem:[%s4386 + $0x68] sm:$0x8]
      %v4403 = vld [vmem:[%s4386 + $0x6c] sm:$0xf]
      %v4404 = vld [vmem:[%s4386 + $0x70] sm:$0xf]
      %v4405 = vld [vmem:[%s4386 + $0x7c] sm:$0x8]
      %v4406 = vld [vmem:[%s4386 + $0x80] sm:$0xf]
      %v4407 = vld [vmem:[%s4386 + $0x84] sm:$0xf]
      %v4408 = vld [vmem:[%s4386 + $0x90] sm:$0x8]
      %v4409 = vld [vmem:[%s4386 + $0x94] sm:$0xf]
      %v4410 = vld [vmem:[%s4386 + $0x98] sm:$0xf]
      %v4411 = vld [vmem:[%s4386 + $0xa4] sm:$0x8]
      %v4412 = vld [vmem:[%s4386 + $0xa8] sm:$0xf]
      %v4413 = vld [vmem:[%s4386 + $0xac] sm:$0xf]
      %v4414 = vld [vmem:[%s4386 + $0xb8] sm:$0x8]
      %v4415 = vld [vmem:[%s4386 + $0xbc] sm:$0xf]
      %v4416 = vld [vmem:[%s4386 + $0xc0] sm:$0xf]
      %v4417 = vld [vmem:[%s4386 + $0xcc] sm:$0x8]
      %v4418 = vld [vmem:[%s4386 + $0xd0] sm:$0xf]
      %v4419 = vld [vmem:[%s4386 + $0xd4] sm:$0xf]
      %v4420 = vld [vmem:[%s4386 + $0xe0] sm:$0x8]
      %v4421 = vld [vmem:[%s4386 + $0xe4] sm:$0xf]
      %v4422 = vld [vmem:[%s4386 + $0xe8] sm:$0xf]
      %v4423 = vld [vmem:[%s4386 + $0xf4] sm:$0x8]
      %v4424 = vld [vmem:[%s4386 + $0xf8] sm:$0xf]
      %v4425 = vld [vmem:[%s4386 + $0xfc] sm:$0xf]
      %v4426 = vld [vmem:[%s4386 + $0x108] sm:$0x8]
      %v4427 = vld [vmem:[%s4386 + $0x10c] sm:$0xf]
      %v4428 = vld [vmem:[%s4386 + $0x110] sm:$0xf]
      %v4429 = vld [vmem:[%s4386 + $0x11c] sm:$0x8]
      %v4430 = vld [vmem:[%s4386 + $0x120] sm:$0xf]
      %v4431 = vld [vmem:[%s4386 + $0x124] sm:$0xf]
      %v4432 = vld [vmem:[%s4386 + $0x130] sm:$0x8]
      %v4433 = vld [vmem:[%s4386 + $0x134] sm:$0xf]
      %v4434 = vld [vmem:[%s4386 + $0x138] sm:$0xf]
      %v4436 = vshrl.u32 %v4387, 16
      %v4438 = vrot.slane %v4436, 7
      %v4439 = vrot.slane %v4438, 4
      %v4441 = vshrl.u32 %v4388, 16
      %v4443 = vrot.slane %v4441, 7
      %v4444 = vshll.u32 %v4388, 16
      %v4446 = vor.u32 %v4443, %v4444
      %v4447 = vsel %vm1001, %v4439, %v4446
      %v4448 = vrot.slane %v4443, 4
      %v4450 = vshrl.u32 %v4389, 16
      %v4452 = vrot.slane %v4450, 7
      %v4453 = vshll.u32 %v4389, 16
      %v4455 = vor.u32 %v4452, %v4453
      %v4456 = vsel %vm1001, %v4448, %v4455
      %v4458 = vshrl.u32 %v4390, 16
      %v4460 = vrot.slane %v4458, 7
      %v4461 = vrot.slane %v4460, 4
      %v4463 = vshrl.u32 %v4391, 16
      %v4465 = vrot.slane %v4463, 7
      %v4466 = vshll.u32 %v4391, 16
      %v4468 = vor.u32 %v4465, %v4466
      %v4469 = vsel %vm1001, %v4461, %v4468
      %v4470 = vrot.slane %v4465, 4
      %v4472 = vshrl.u32 %v4392, 16
      %v4474 = vrot.slane %v4472, 7
      %v4475 = vshll.u32 %v4392, 16
      %v4477 = vor.u32 %v4474, %v4475
      %v4478 = vsel %vm1001, %v4470, %v4477
      %v4480 = vshrl.u32 %v4393, 16
      %v4482 = vrot.slane %v4480, 7
      %v4483 = vrot.slane %v4482, 4
      %v4485 = vshrl.u32 %v4394, 16
      %v4487 = vrot.slane %v4485, 7
      %v4488 = vshll.u32 %v4394, 16
      %v4490 = vor.u32 %v4487, %v4488
      %v4491 = vsel %vm1001, %v4483, %v4490
      %v4492 = vrot.slane %v4487, 4
      %v4494 = vshrl.u32 %v4395, 16
      %v4496 = vrot.slane %v4494, 7
      %v4497 = vshll.u32 %v4395, 16
      %v4499 = vor.u32 %v4496, %v4497
      %v4500 = vsel %vm1001, %v4492, %v4499
      %v4502 = vshrl.u32 %v4396, 16
      %v4504 = vrot.slane %v4502, 7
      %v4505 = vrot.slane %v4504, 4
      %v4507 = vshrl.u32 %v4397, 16
      %v4509 = vrot.slane %v4507, 7
      %v4510 = vshll.u32 %v4397, 16
      %v4512 = vor.u32 %v4509, %v4510
      %v4513 = vsel %vm1001, %v4505, %v4512
      %v4514 = vrot.slane %v4509, 4
      %v4516 = vshrl.u32 %v4398, 16
      %v4518 = vrot.slane %v4516, 7
      %v4519 = vshll.u32 %v4398, 16
      %v4521 = vor.u32 %v4518, %v4519
      %v4522 = vsel %vm1001, %v4514, %v4521
      %v4524 = vshrl.u32 %v4399, 16
      %v4526 = vrot.slane %v4524, 7
      %v4527 = vrot.slane %v4526, 4
      %v4529 = vshrl.u32 %v4400, 16
      %v4531 = vrot.slane %v4529, 7
      %v4532 = vshll.u32 %v4400, 16
      %v4534 = vor.u32 %v4531, %v4532
      %v4535 = vsel %vm1001, %v4527, %v4534
      %v4536 = vrot.slane %v4531, 4
      %v4538 = vshrl.u32 %v4401, 16
      %v4540 = vrot.slane %v4538, 7
      %v4541 = vshll.u32 %v4401, 16
      %v4543 = vor.u32 %v4540, %v4541
      %v4544 = vsel %vm1001, %v4536, %v4543
      %v4546 = vshrl.u32 %v4402, 16
      %v4548 = vrot.slane %v4546, 7
      %v4549 = vrot.slane %v4548, 4
      %v4551 = vshrl.u32 %v4403, 16
      %v4553 = vrot.slane %v4551, 7
      %v4554 = vshll.u32 %v4403, 16
      %v4556 = vor.u32 %v4553, %v4554
      %v4557 = vsel %vm1001, %v4549, %v4556
      %v4558 = vrot.slane %v4553, 4
      %v4560 = vshrl.u32 %v4404, 16
      %v4562 = vrot.slane %v4560, 7
      %v4563 = vshll.u32 %v4404, 16
      %v4565 = vor.u32 %v4562, %v4563
      %v4566 = vsel %vm1001, %v4558, %v4565
      %v4568 = vshrl.u32 %v4405, 16
      %v4570 = vrot.slane %v4568, 7
      %v4571 = vrot.slane %v4570, 4
      %v4573 = vshrl.u32 %v4406, 16
      %v4575 = vrot.slane %v4573, 7
      %v4576 = vshll.u32 %v4406, 16
      %v4578 = vor.u32 %v4575, %v4576
      %v4579 = vsel %vm1001, %v4571, %v4578
      %v4580 = vrot.slane %v4575, 4
      %v4582 = vshrl.u32 %v4407, 16
      %v4584 = vrot.slane %v4582, 7
      %v4585 = vshll.u32 %v4407, 16
      %v4587 = vor.u32 %v4584, %v4585
      %v4588 = vsel %vm1001, %v4580, %v4587
      %v4590 = vshrl.u32 %v4408, 16
      %v4592 = vrot.slane %v4590, 7
      %v4593 = vrot.slane %v4592, 4
      %v4595 = vshrl.u32 %v4409, 16
      %v4597 = vrot.slane %v4595, 7
      %v4598 = vshll.u32 %v4409, 16
      %v4600 = vor.u32 %v4597, %v4598
      %v4601 = vsel %vm1001, %v4593, %v4600
      %v4602 = vrot.slane %v4597, 4
      %v4604 = vshrl.u32 %v4410, 16
      %v4606 = vrot.slane %v4604, 7
      %v4607 = vshll.u32 %v4410, 16
      %v4609 = vor.u32 %v4606, %v4607
      %v4610 = vsel %vm1001, %v4602, %v4609
      %v4612 = vshrl.u32 %v4411, 16
      %v4614 = vrot.slane %v4612, 7
      %v4615 = vrot.slane %v4614, 4
      %v4617 = vshrl.u32 %v4412, 16
      %v4619 = vrot.slane %v4617, 7
      %v4620 = vshll.u32 %v4412, 16
      %v4622 = vor.u32 %v4619, %v4620
      %v4623 = vsel %vm1001, %v4615, %v4622
      %v4624 = vrot.slane %v4619, 4
      %v4626 = vshrl.u32 %v4413, 16
      %v4628 = vrot.slane %v4626, 7
      %v4629 = vshll.u32 %v4413, 16
      %v4631 = vor.u32 %v4628, %v4629
      %v4632 = vsel %vm1001, %v4624, %v4631
      %v4634 = vshrl.u32 %v4414, 16
      %v4636 = vrot.slane %v4634, 7
      %v4637 = vrot.slane %v4636, 4
      %v4639 = vshrl.u32 %v4415, 16
      %v4641 = vrot.slane %v4639, 7
      %v4642 = vshll.u32 %v4415, 16
      %v4644 = vor.u32 %v4641, %v4642
      %v4645 = vsel %vm1001, %v4637, %v4644
      %v4646 = vrot.slane %v4641, 4
      %v4648 = vshrl.u32 %v4416, 16
      %v4650 = vrot.slane %v4648, 7
      %v4651 = vshll.u32 %v4416, 16
      %v4653 = vor.u32 %v4650, %v4651
      %v4654 = vsel %vm1001, %v4646, %v4653
      %v4656 = vshrl.u32 %v4417, 16
      %v4658 = vrot.slane %v4656, 7
      %v4659 = vrot.slane %v4658, 4
      %v4661 = vshrl.u32 %v4418, 16
      %v4663 = vrot.slane %v4661, 7
      %v4664 = vshll.u32 %v4418, 16
      %v4666 = vor.u32 %v4663, %v4664
      %v4667 = vsel %vm1001, %v4659, %v4666
      %v4668 = vrot.slane %v4663, 4
      %v4670 = vshrl.u32 %v4419, 16
      %v4672 = vrot.slane %v4670, 7
      %v4673 = vshll.u32 %v4419, 16
      %v4675 = vor.u32 %v4672, %v4673
      %v4676 = vsel %vm1001, %v4668, %v4675
      %v4678 = vshrl.u32 %v4420, 16
      %v4680 = vrot.slane %v4678, 7
      %v4681 = vrot.slane %v4680, 4
      %v4683 = vshrl.u32 %v4421, 16
      %v4685 = vrot.slane %v4683, 7
      %v4686 = vshll.u32 %v4421, 16
      %v4688 = vor.u32 %v4685, %v4686
      %v4689 = vsel %vm1001, %v4681, %v4688
      %v4690 = vrot.slane %v4685, 4
      %v4692 = vshrl.u32 %v4422, 16
      %v4694 = vrot.slane %v4692, 7
      %v4695 = vshll.u32 %v4422, 16
      %v4697 = vor.u32 %v4694, %v4695
      %v4698 = vsel %vm1001, %v4690, %v4697
      %v4700 = vshrl.u32 %v4423, 16
      %v4702 = vrot.slane %v4700, 7
      %v4703 = vrot.slane %v4702, 4
      %v4705 = vshrl.u32 %v4424, 16
      %v4707 = vrot.slane %v4705, 7
      %v4708 = vshll.u32 %v4424, 16
      %v4710 = vor.u32 %v4707, %v4708
      %v4711 = vsel %vm1001, %v4703, %v4710
      %v4712 = vrot.slane %v4707, 4
      %v4714 = vshrl.u32 %v4425, 16
      %v4716 = vrot.slane %v4714, 7
      %v4717 = vshll.u32 %v4425, 16
      %v4719 = vor.u32 %v4716, %v4717
      %v4720 = vsel %vm1001, %v4712, %v4719
      %v4722 = vshrl.u32 %v4426, 16
      %v4724 = vrot.slane %v4722, 7
      %v4725 = vrot.slane %v4724, 4
      %v4727 = vshrl.u32 %v4427, 16
      %v4729 = vrot.slane %v4727, 7
      %v4730 = vshll.u32 %v4427, 16
      %v4732 = vor.u32 %v4729, %v4730
      %v4733 = vsel %vm1001, %v4725, %v4732
      %v4734 = vrot.slane %v4729, 4
      %v4736 = vshrl.u32 %v4428, 16
      %v4738 = vrot.slane %v4736, 7
      %v4739 = vshll.u32 %v4428, 16
      %v4741 = vor.u32 %v4738, %v4739
      %v4742 = vsel %vm1001, %v4734, %v4741
      %v4744 = vshrl.u32 %v4429, 16
      %v4746 = vrot.slane %v4744, 7
      %v4747 = vrot.slane %v4746, 4
      %v4749 = vshrl.u32 %v4430, 16
      %v4751 = vrot.slane %v4749, 7
      %v4752 = vshll.u32 %v4430, 16
      %v4754 = vor.u32 %v4751, %v4752
      %v4755 = vsel %vm1001, %v4747, %v4754
      %v4756 = vrot.slane %v4751, 4
      %v4758 = vshrl.u32 %v4431, 16
      %v4760 = vrot.slane %v4758, 7
      %v4761 = vshll.u32 %v4431, 16
      %v4763 = vor.u32 %v4760, %v4761
      %v4764 = vsel %vm1001, %v4756, %v4763
      %v4766 = vshrl.u32 %v4432, 16
      %v4768 = vrot.slane %v4766, 7
      %v4769 = vrot.slane %v4768, 4
      %v4771 = vshrl.u32 %v4433, 16
      %v4773 = vrot.slane %v4771, 7
      %v4774 = vshll.u32 %v4433, 16
      %v4776 = vor.u32 %v4773, %v4774
      %v4777 = vsel %vm1001, %v4769, %v4776
      %v4778 = vrot.slane %v4773, 4
      %v4780 = vshrl.u32 %v4434, 16
      %v4782 = vrot.slane %v4780, 7
      %v4783 = vshll.u32 %v4434, 16
      %v4785 = vor.u32 %v4782, %v4783
      %v4786 = vsel %vm1001, %v4778, %v4785
      %s4787 = scalar_lea.vmem %s2, 24
      %v4788 = vld [vmem:[%s4787] sm:$0xf]
      %s4789 = scalar_lea.vmem %s2, 28
      %v4790 = vld [vmem:[%s4789] sm:$0xf]
      %v4823 = vunpack.c.l.b16 %v4388
      %v4824 = vunpack.c.l.b16 %v4389
      %v4825 = vunpack.c.l.b16 %v4391
      %v4826 = vunpack.c.l.b16 %v4392
      %v4827 = vunpack.c.l.b16 %v4394
      %v4828 = vunpack.c.l.b16 %v4395
      %v4829 = vunpack.c.l.b16 %v4397
      %v4830 = vunpack.c.l.b16 %v4398
      %v4831 = vunpack.c.l.b16 %v4400
      %v4832 = vunpack.c.l.b16 %v4401
      %v4833 = vunpack.c.l.b16 %v4403
      %v4834 = vunpack.c.l.b16 %v4404
      %v4835 = vunpack.c.l.b16 %v4406
      %v4836 = vunpack.c.l.b16 %v4407
      %v4837 = vunpack.c.l.b16 %v4409
      %v4838 = vunpack.c.l.b16 %v4410
      %v4839 = vunpack.c.l.b16 %v4412
      %v4840 = vunpack.c.l.b16 %v4413
      %v4841 = vunpack.c.l.b16 %v4415
      %v4842 = vunpack.c.l.b16 %v4416
      %v4843 = vunpack.c.l.b16 %v4418
      %v4844 = vunpack.c.l.b16 %v4419
      %v4845 = vunpack.c.l.b16 %v4421
      %v4846 = vunpack.c.l.b16 %v4422
      %v4847 = vunpack.c.l.b16 %v4424
      %v4848 = vunpack.c.l.b16 %v4425
      %v4849 = vunpack.c.l.b16 %v4427
      %v4850 = vunpack.c.l.b16 %v4428
      %v4851 = vunpack.c.l.b16 %v4430
      %v4852 = vunpack.c.l.b16 %v4431
      %v4853 = vunpack.c.l.b16 %v4433
      %v4854 = vunpack.c.l.b16 %v4434
      %v4855 = vpack.c.b16 %v4824, %v4823
      %v4856 = vpack.c.b16 %v4826, %v4825
      %v4857 = vpack.c.b16 %v4828, %v4827
      %v4858 = vpack.c.b16 %v4830, %v4829
      %v4859 = vpack.c.b16 %v4832, %v4831
      %v4860 = vpack.c.b16 %v4834, %v4833
      %v4861 = vpack.c.b16 %v4836, %v4835
      %v4862 = vpack.c.b16 %v4838, %v4837
      %v4863 = vpack.c.b16 %v4840, %v4839
      %v4864 = vpack.c.b16 %v4842, %v4841
      %v4865 = vpack.c.b16 %v4844, %v4843
      %v4866 = vpack.c.b16 %v4846, %v4845
      %v4867 = vpack.c.b16 %v4848, %v4847
      %v4868 = vpack.c.b16 %v4850, %v4849
      %v4869 = vpack.c.b16 %v4852, %v4851
      %v4870 = vpack.c.b16 %v4854, %v4853
      %v4872 = vsel %vm1437, %v4855, 0
      %v4875 = vsel %vm1437, %v4856, 0
      %v4878 = vsel %vm1437, %v4857, 0
      %v4881 = vsel %vm1437, %v4858, 0
      %v4884 = vsel %vm1437, %v4859, 0
      %v4887 = vsel %vm1437, %v4860, 0
      %v4890 = vsel %vm1437, %v4861, 0
      %v4893 = vsel %vm1437, %v4862, 0
      %v4896 = vsel %vm1437, %v4863, 0
      %v4899 = vsel %vm1437, %v4864, 0
      %v4902 = vsel %vm1437, %v4865, 0
      %v4905 = vsel %vm1437, %v4866, 0
      %v4908 = vsel %vm1437, %v4867, 0
      %v4911 = vsel %vm1437, %v4868, 0
      %v4914 = vsel %vm1437, %v4869, 0
      %v4917 = vsel %vm1437, %v4870, 0
      %v4920 = vsel %vm1486, %v4790, 0
      %4922 = vmatprep.subr.bf16.mxu0 0
      %4923 = vmatpush1.bf16.msra.mxu0 0
      %4924 = vmatprep.subr.bf16.mxu0 0
      %4925 = vmatpush1.bf16.msra.mxu0 0
      %4926 = vmatprep.subr.bf16.mxu0 0
      %4927 = vmatpush1.bf16.msra.mxu0 0
      %4928 = vmatprep.subr.bf16.mxu0 0
      %4929 = vmatpush1.bf16.msra.mxu0 0
      %4930 = vmatprep.subr.bf16.mxu0 0
      %4931 = vmatpush1.bf16.msra.mxu0 0
      %4932 = vmatprep.subr.bf16.mxu0 0
      %4933 = vmatpush1.bf16.msra.mxu0 0
      %4934 = vmatprep.subr.bf16.mxu0 0
      %4935 = vmatpush1.bf16.msra.mxu0 0
      %4936 = vmatprep.subr.bf16.mxu0 0
      %4937 = vmatpush1.bf16.msra.mxu0 %v4920
      %4938 = vmatprep.subr.bf16.mxu0 0
      %4939 = vmatpush2.bf16.msra.mxu0 0
      %4940 = vmatprep.subr.bf16.mxu0 0
      %4941 = vmatpush2.bf16.msra.mxu0 0
      %4942 = vmatprep.subr.bf16.mxu0 0
      %4943 = vmatpush2.bf16.msra.mxu0 0
      %4944 = vmatprep.subr.bf16.mxu0 0
      %4945 = vmatpush2.bf16.msra.mxu0 0
      %4946 = vmatprep.subr.bf16.mxu0 0
      %4947 = vmatpush2.bf16.msra.mxu0 0
      %4948 = vmatprep.subr.bf16.mxu0 0
      %4949 = vmatpush2.bf16.msra.mxu0 0
      %4950 = vmatprep.subr.bf16.mxu0 0
      %4951 = vmatpush2.bf16.msra.mxu0 0
      %4952 = vmatprep.subr.bf16.mxu0 0
      %4953 = vmatpush2.bf16.msra.mxu0 0
      %4954 = vmatprep.mubr.bf16.mxu0 0
      %4955 = vmatmul.mubr.bf16.gmra.mxu0 %v4872
      %v4956 = vpop.f32.mrf.mxu0
      %v4957 = vadd.f32 0.0, %v4956
      %v4958 = vpop.f32.mrf.mxu0
      %v4959 = vpop.f32.mrf.mxu0
      %v4960 = vadd.f32 0.0, %v4959
      %v4961 = vpop.f32.mrf.mxu0
      %4962 = vmatprep.mubr.bf16.mxu0 0
      %4963 = vmatmul.mubr.bf16.gmra.mxu0 %v4875
      %v4964 = vpop.f32.mrf.mxu0
      %v4965 = vadd.f32 0.0, %v4964
      %v4966 = vpop.f32.mrf.mxu0
      %v4967 = vpop.f32.mrf.mxu0
      %v4968 = vadd.f32 0.0, %v4967
      %v4969 = vpop.f32.mrf.mxu0
      %4970 = vmatprep.mubr.bf16.mxu0 0
      %4971 = vmatmul.mubr.bf16.gmra.mxu0 %v4878
      %v4972 = vpop.f32.mrf.mxu0
      %v4973 = vadd.f32 0.0, %v4972
      %v4974 = vpop.f32.mrf.mxu0
      %v4975 = vpop.f32.mrf.mxu0
      %v4976 = vadd.f32 0.0, %v4975
      %v4977 = vpop.f32.mrf.mxu0
      %4978 = vmatprep.mubr.bf16.mxu0 0
      %4979 = vmatmul.mubr.bf16.gmra.mxu0 %v4881
      %v4980 = vpop.f32.mrf.mxu0
      %v4981 = vadd.f32 0.0, %v4980
      %v4982 = vpop.f32.mrf.mxu0
      %v4983 = vpop.f32.mrf.mxu0
      %v4984 = vadd.f32 0.0, %v4983
      %v4985 = vpop.f32.mrf.mxu0
      %4986 = vmatprep.mubr.bf16.mxu0 0
      %4987 = vmatmul.mubr.bf16.gmra.mxu0 %v4884
      %v4988 = vpop.f32.mrf.mxu0
      %v4989 = vadd.f32 0.0, %v4988
      %v4990 = vpop.f32.mrf.mxu0
      %v4991 = vpop.f32.mrf.mxu0
      %v4992 = vadd.f32 0.0, %v4991
      %v4993 = vpop.f32.mrf.mxu0
      %4994 = vmatprep.mubr.bf16.mxu0 0
      %4995 = vmatmul.mubr.bf16.gmra.mxu0 %v4887
      %v4996 = vpop.f32.mrf.mxu0
      %v4997 = vadd.f32 0.0, %v4996
      %v4998 = vpop.f32.mrf.mxu0
      %v4999 = vpop.f32.mrf.mxu0
      %v5000 = vadd.f32 0.0, %v4999
      %v5001 = vpop.f32.mrf.mxu0
      %5002 = vmatprep.mubr.bf16.mxu0 0
      %5003 = vmatmul.mubr.bf16.gmra.mxu0 %v4890
      %v5004 = vpop.f32.mrf.mxu0
      %v5005 = vadd.f32 0.0, %v5004
      %v5006 = vpop.f32.mrf.mxu0
      %v5007 = vpop.f32.mrf.mxu0
      %v5008 = vadd.f32 0.0, %v5007
      %v5009 = vpop.f32.mrf.mxu0
      %5010 = vmatprep.mubr.bf16.mxu0 0
      %5011 = vmatmul.mubr.bf16.gmra.mxu0 %v4893
      %v5012 = vpop.f32.mrf.mxu0
      %v5013 = vadd.f32 0.0, %v5012
      %v5014 = vpop.f32.mrf.mxu0
      %v5015 = vpop.f32.mrf.mxu0
      %v5016 = vadd.f32 0.0, %v5015
      %v5017 = vpop.f32.mrf.mxu0
      %5018 = vmatprep.mubr.bf16.mxu0 0
      %5019 = vmatmul.mubr.bf16.gmra.mxu0 %v4896
      %v5020 = vpop.f32.mrf.mxu0
      %v5021 = vadd.f32 0.0, %v5020
      %v5022 = vpop.f32.mrf.mxu0
      %v5023 = vpop.f32.mrf.mxu0
      %v5024 = vadd.f32 0.0, %v5023
      %v5025 = vpop.f32.mrf.mxu0
      %5026 = vmatprep.mubr.bf16.mxu0 0
      %5027 = vmatmul.mubr.bf16.gmra.mxu0 %v4899
      %v5028 = vpop.f32.mrf.mxu0
      %v5029 = vadd.f32 0.0, %v5028
      %v5030 = vpop.f32.mrf.mxu0
      %v5031 = vpop.f32.mrf.mxu0
      %v5032 = vadd.f32 0.0, %v5031
      %v5033 = vpop.f32.mrf.mxu0
      %5034 = vmatprep.mubr.bf16.mxu0 0
      %5035 = vmatmul.mubr.bf16.gmra.mxu0 %v4902
      %v5036 = vpop.f32.mrf.mxu0
      %v5037 = vadd.f32 0.0, %v5036
      %v5038 = vpop.f32.mrf.mxu0
      %v5039 = vpop.f32.mrf.mxu0
      %v5040 = vadd.f32 0.0, %v5039
      %v5041 = vpop.f32.mrf.mxu0
      %5042 = vmatprep.mubr.bf16.mxu0 0
      %5043 = vmatmul.mubr.bf16.gmra.mxu0 %v4905
      %v5044 = vpop.f32.mrf.mxu0
      %v5045 = vadd.f32 0.0, %v5044
      %v5046 = vpop.f32.mrf.mxu0
      %v5047 = vpop.f32.mrf.mxu0
      %v5048 = vadd.f32 0.0, %v5047
      %v5049 = vpop.f32.mrf.mxu0
      %5050 = vmatprep.mubr.bf16.mxu0 0
      %5051 = vmatmul.mubr.bf16.gmra.mxu0 %v4908
      %v5052 = vpop.f32.mrf.mxu0
      %v5053 = vadd.f32 0.0, %v5052
      %v5054 = vpop.f32.mrf.mxu0
      %v5055 = vpop.f32.mrf.mxu0
      %v5056 = vadd.f32 0.0, %v5055
      %v5057 = vpop.f32.mrf.mxu0
      %5058 = vmatprep.mubr.bf16.mxu0 0
      %5059 = vmatmul.mubr.bf16.gmra.mxu0 %v4911
      %v5060 = vpop.f32.mrf.mxu0
      %v5061 = vadd.f32 0.0, %v5060
      %v5062 = vpop.f32.mrf.mxu0
      %v5063 = vpop.f32.mrf.mxu0
      %v5064 = vadd.f32 0.0, %v5063
      %v5065 = vpop.f32.mrf.mxu0
      %5066 = vmatprep.mubr.bf16.mxu0 0
      %5067 = vmatmul.mubr.bf16.gmra.mxu0 %v4914
      %v5068 = vpop.f32.mrf.mxu0
      %v5069 = vadd.f32 0.0, %v5068
      %v5070 = vpop.f32.mrf.mxu0
      %v5071 = vpop.f32.mrf.mxu0
      %v5072 = vadd.f32 0.0, %v5071
      %v5073 = vpop.f32.mrf.mxu0
      %5074 = vmatprep.mubr.bf16.mxu0 0
      %5075 = vmatmul.mubr.bf16.gmra.mxu0 %v4917
      %v5076 = vpop.f32.mrf.mxu0
      %v5077 = vadd.f32 0.0, %v5076
      %v5078 = vpop.f32.mrf.mxu0
      %v5079 = vpop.f32.mrf.mxu0
      %v5080 = vadd.f32 0.0, %v5079
      %v5081 = vpop.f32.mrf.mxu0
      %5082 = vdwg.mxu0
      %v5083 = vunpack.c.l.b16 %v4447
      %v5084 = vunpack.c.l.b16 %v4456
      %v5085 = vunpack.c.l.b16 %v4469
      %v5086 = vunpack.c.l.b16 %v4478
      %v5087 = vunpack.c.l.b16 %v4491
      %v5088 = vunpack.c.l.b16 %v4500
      %v5089 = vunpack.c.l.b16 %v4513
      %v5090 = vunpack.c.l.b16 %v4522
      %v5091 = vunpack.c.l.b16 %v4535
      %v5092 = vunpack.c.l.b16 %v4544
      %v5093 = vunpack.c.l.b16 %v4557
      %v5094 = vunpack.c.l.b16 %v4566
      %v5095 = vunpack.c.l.b16 %v4579
      %v5096 = vunpack.c.l.b16 %v4588
      %v5097 = vunpack.c.l.b16 %v4601
      %v5098 = vunpack.c.l.b16 %v4610
      %v5099 = vunpack.c.l.b16 %v4623
      %v5100 = vunpack.c.l.b16 %v4632
      %v5101 = vunpack.c.l.b16 %v4645
      %v5102 = vunpack.c.l.b16 %v4654
      %v5103 = vunpack.c.l.b16 %v4667
      %v5104 = vunpack.c.l.b16 %v4676
      %v5105 = vunpack.c.l.b16 %v4689
      %v5106 = vunpack.c.l.b16 %v4698
      %v5107 = vunpack.c.l.b16 %v4711
      %v5108 = vunpack.c.l.b16 %v4720
      %v5109 = vunpack.c.l.b16 %v4733
      %v5110 = vunpack.c.l.b16 %v4742
      %v5111 = vunpack.c.l.b16 %v4755
      %v5112 = vunpack.c.l.b16 %v4764
      %v5113 = vunpack.c.l.b16 %v4777
      %v5114 = vunpack.c.l.b16 %v4786
      %v5115 = vpack.c.b16 %v5084, %v5083
      %v5116 = vpack.c.b16 %v5086, %v5085
      %v5117 = vpack.c.b16 %v5088, %v5087
      %v5118 = vpack.c.b16 %v5090, %v5089
      %v5119 = vpack.c.b16 %v5092, %v5091
      %v5120 = vpack.c.b16 %v5094, %v5093
      %v5121 = vpack.c.b16 %v5096, %v5095
      %v5122 = vpack.c.b16 %v5098, %v5097
      %v5123 = vpack.c.b16 %v5100, %v5099
      %v5124 = vpack.c.b16 %v5102, %v5101
      %v5125 = vpack.c.b16 %v5104, %v5103
      %v5126 = vpack.c.b16 %v5106, %v5105
      %v5127 = vpack.c.b16 %v5108, %v5107
      %v5128 = vpack.c.b16 %v5110, %v5109
      %v5129 = vpack.c.b16 %v5112, %v5111
      %v5130 = vpack.c.b16 %v5114, %v5113
      %v5132 = vsel %vm1437, %v5115, 0
      %v5135 = vsel %vm1437, %v5116, 0
      %v5138 = vsel %vm1437, %v5117, 0
      %v5141 = vsel %vm1437, %v5118, 0
      %v5144 = vsel %vm1437, %v5119, 0
      %v5147 = vsel %vm1437, %v5120, 0
      %v5150 = vsel %vm1437, %v5121, 0
      %v5153 = vsel %vm1437, %v5122, 0
      %v5156 = vsel %vm1437, %v5123, 0
      %v5159 = vsel %vm1437, %v5124, 0
      %v5162 = vsel %vm1437, %v5125, 0
      %v5165 = vsel %vm1437, %v5126, 0
      %v5168 = vsel %vm1437, %v5127, 0
      %v5171 = vsel %vm1437, %v5128, 0
      %v5174 = vsel %vm1437, %v5129, 0
      %v5177 = vsel %vm1437, %v5130, 0
      %v5180 = vsel %vm1486, %v4788, 0
      %5182 = vmatprep.subr.bf16.mxu0 0
      %5183 = vmatpush1.bf16.msra.mxu0 0
      %5184 = vmatprep.subr.bf16.mxu0 0
      %5185 = vmatpush1.bf16.msra.mxu0 0
      %5186 = vmatprep.subr.bf16.mxu0 0
      %5187 = vmatpush1.bf16.msra.mxu0 0
      %5188 = vmatprep.subr.bf16.mxu0 0
      %5189 = vmatpush1.bf16.msra.mxu0 0
      %5190 = vmatprep.subr.bf16.mxu0 0
      %5191 = vmatpush1.bf16.msra.mxu0 0
      %5192 = vmatprep.subr.bf16.mxu0 0
      %5193 = vmatpush1.bf16.msra.mxu0 0
      %5194 = vmatprep.subr.bf16.mxu0 0
      %5195 = vmatpush1.bf16.msra.mxu0 0
      %5196 = vmatprep.subr.bf16.mxu0 0
      %5197 = vmatpush1.bf16.msra.mxu0 %v5180
      %5198 = vmatprep.subr.bf16.mxu0 0
      %5199 = vmatpush2.bf16.msra.mxu0 0
      %5200 = vmatprep.subr.bf16.mxu0 0
      %5201 = vmatpush2.bf16.msra.mxu0 0
      %5202 = vmatprep.subr.bf16.mxu0 0
      %5203 = vmatpush2.bf16.msra.mxu0 0
      %5204 = vmatprep.subr.bf16.mxu0 0
      %5205 = vmatpush2.bf16.msra.mxu0 0
      %5206 = vmatprep.subr.bf16.mxu0 0
      %5207 = vmatpush2.bf16.msra.mxu0 0
      %5208 = vmatprep.subr.bf16.mxu0 0
      %5209 = vmatpush2.bf16.msra.mxu0 0
      %5210 = vmatprep.subr.bf16.mxu0 0
      %5211 = vmatpush2.bf16.msra.mxu0 0
      %5212 = vmatprep.subr.bf16.mxu0 0
      %5213 = vmatpush2.bf16.msra.mxu0 0
      %5214 = vmatprep.mubr.bf16.mxu0 0
      %5215 = vmatmul.mubr.bf16.gmra.mxu0 %v5132
      %v5216 = vpop.f32.mrf.mxu0
      %v5217 = vadd.f32 %v4957, %v5216
      %v5218 = vpop.f32.mrf.mxu0
      %v5219 = vpop.f32.mrf.mxu0
      %v5220 = vadd.f32 %v4960, %v5219
      %v5221 = vpop.f32.mrf.mxu0
      %5222 = vmatprep.mubr.bf16.mxu0 0
      %5223 = vmatmul.mubr.bf16.gmra.mxu0 %v5135
      %v5224 = vpop.f32.mrf.mxu0
      %v5225 = vadd.f32 %v4965, %v5224
      %v5226 = vpop.f32.mrf.mxu0
      %v5227 = vpop.f32.mrf.mxu0
      %v5228 = vadd.f32 %v4968, %v5227
      %v5229 = vpop.f32.mrf.mxu0
      %5230 = vmatprep.mubr.bf16.mxu0 0
      %5231 = vmatmul.mubr.bf16.gmra.mxu0 %v5138
      %v5232 = vpop.f32.mrf.mxu0
      %v5233 = vadd.f32 %v4973, %v5232
      %v5234 = vpop.f32.mrf.mxu0
      %v5235 = vpop.f32.mrf.mxu0
      %v5236 = vadd.f32 %v4976, %v5235
      %v5237 = vpop.f32.mrf.mxu0
      %5238 = vmatprep.mubr.bf16.mxu0 0
      %5239 = vmatmul.mubr.bf16.gmra.mxu0 %v5141
      %v5240 = vpop.f32.mrf.mxu0
      %v5241 = vadd.f32 %v4981, %v5240
      %v5242 = vpop.f32.mrf.mxu0
      %v5243 = vpop.f32.mrf.mxu0
      %v5244 = vadd.f32 %v4984, %v5243
      %v5245 = vpop.f32.mrf.mxu0
      %5246 = vmatprep.mubr.bf16.mxu0 0
      %5247 = vmatmul.mubr.bf16.gmra.mxu0 %v5144
      %v5248 = vpop.f32.mrf.mxu0
      %v5249 = vadd.f32 %v4989, %v5248
      %v5250 = vpop.f32.mrf.mxu0
      %v5251 = vpop.f32.mrf.mxu0
      %v5252 = vadd.f32 %v4992, %v5251
      %v5253 = vpop.f32.mrf.mxu0
      %5254 = vmatprep.mubr.bf16.mxu0 0
      %5255 = vmatmul.mubr.bf16.gmra.mxu0 %v5147
      %v5256 = vpop.f32.mrf.mxu0
      %v5257 = vadd.f32 %v4997, %v5256
      %v5258 = vpop.f32.mrf.mxu0
      %v5259 = vpop.f32.mrf.mxu0
      %v5260 = vadd.f32 %v5000, %v5259
      %v5261 = vpop.f32.mrf.mxu0
      %5262 = vmatprep.mubr.bf16.mxu0 0
      %5263 = vmatmul.mubr.bf16.gmra.mxu0 %v5150
      %v5264 = vpop.f32.mrf.mxu0
      %v5265 = vadd.f32 %v5005, %v5264
      %v5266 = vpop.f32.mrf.mxu0
      %v5267 = vpop.f32.mrf.mxu0
      %v5268 = vadd.f32 %v5008, %v5267
      %v5269 = vpop.f32.mrf.mxu0
      %5270 = vmatprep.mubr.bf16.mxu0 0
      %5271 = vmatmul.mubr.bf16.gmra.mxu0 %v5153
      %v5272 = vpop.f32.mrf.mxu0
      %v5273 = vadd.f32 %v5013, %v5272
      %v5274 = vpop.f32.mrf.mxu0
      %v5275 = vpop.f32.mrf.mxu0
      %v5276 = vadd.f32 %v5016, %v5275
      %v5277 = vpop.f32.mrf.mxu0
      %5278 = vmatprep.mubr.bf16.mxu0 0
      %5279 = vmatmul.mubr.bf16.gmra.mxu0 %v5156
      %v5280 = vpop.f32.mrf.mxu0
      %v5281 = vadd.f32 %v5021, %v5280
      %v5282 = vpop.f32.mrf.mxu0
      %v5283 = vpop.f32.mrf.mxu0
      %v5284 = vadd.f32 %v5024, %v5283
      %v5285 = vpop.f32.mrf.mxu0
      %5286 = vmatprep.mubr.bf16.mxu0 0
      %5287 = vmatmul.mubr.bf16.gmra.mxu0 %v5159
      %v5288 = vpop.f32.mrf.mxu0
      %v5289 = vadd.f32 %v5029, %v5288
      %v5290 = vpop.f32.mrf.mxu0
      %v5291 = vpop.f32.mrf.mxu0
      %v5292 = vadd.f32 %v5032, %v5291
      %v5293 = vpop.f32.mrf.mxu0
      %5294 = vmatprep.mubr.bf16.mxu0 0
      %5295 = vmatmul.mubr.bf16.gmra.mxu0 %v5162
      %v5296 = vpop.f32.mrf.mxu0
      %v5297 = vadd.f32 %v5037, %v5296
      %v5298 = vpop.f32.mrf.mxu0
      %v5299 = vpop.f32.mrf.mxu0
      %v5300 = vadd.f32 %v5040, %v5299
      %v5301 = vpop.f32.mrf.mxu0
      %5302 = vmatprep.mubr.bf16.mxu0 0
      %5303 = vmatmul.mubr.bf16.gmra.mxu0 %v5165
      %v5304 = vpop.f32.mrf.mxu0
      %v5305 = vadd.f32 %v5045, %v5304
      %v5306 = vpop.f32.mrf.mxu0
      %v5307 = vpop.f32.mrf.mxu0
      %v5308 = vadd.f32 %v5048, %v5307
      %v5309 = vpop.f32.mrf.mxu0
      %5310 = vmatprep.mubr.bf16.mxu0 0
      %5311 = vmatmul.mubr.bf16.gmra.mxu0 %v5168
      %v5312 = vpop.f32.mrf.mxu0
      %v5313 = vadd.f32 %v5053, %v5312
      %v5314 = vpop.f32.mrf.mxu0
      %v5315 = vpop.f32.mrf.mxu0
      %v5316 = vadd.f32 %v5056, %v5315
      %v5317 = vpop.f32.mrf.mxu0
      %5318 = vmatprep.mubr.bf16.mxu0 0
      %5319 = vmatmul.mubr.bf16.gmra.mxu0 %v5171
      %v5320 = vpop.f32.mrf.mxu0
      %v5321 = vadd.f32 %v5061, %v5320
      %v5322 = vpop.f32.mrf.mxu0
      %v5323 = vpop.f32.mrf.mxu0
      %v5324 = vadd.f32 %v5064, %v5323
      %v5325 = vpop.f32.mrf.mxu0
      %5326 = vmatprep.mubr.bf16.mxu0 0
      %5327 = vmatmul.mubr.bf16.gmra.mxu0 %v5174
      %v5328 = vpop.f32.mrf.mxu0
      %v5329 = vadd.f32 %v5069, %v5328
      %v5330 = vpop.f32.mrf.mxu0
      %v5331 = vpop.f32.mrf.mxu0
      %v5332 = vadd.f32 %v5072, %v5331
      %v5333 = vpop.f32.mrf.mxu0
      %5334 = vmatprep.mubr.bf16.mxu0 0
      %5335 = vmatmul.mubr.bf16.gmra.mxu0 %v5177
      %v5336 = vpop.f32.mrf.mxu0
      %v5337 = vadd.f32 %v5077, %v5336
      %v5338 = vpop.f32.mrf.mxu0
      %v5339 = vpop.f32.mrf.mxu0
      %v5340 = vadd.f32 %v5080, %v5339
      %v5341 = vpop.f32.mrf.mxu0
      %5342 = vdwg.mxu0
      %v5343 = vld [vmem:[%s4386 + $0x8] sm:$0xf]
      %v5344 = vld [vmem:[%s4386 + $0xc] sm:$0xf]
      %v5345 = vld [vmem:[%s4386 + $0x10] sm:$0x1]
      %v5346 = vld [vmem:[%s4386 + $0x1c] sm:$0xf]
      %v5347 = vld [vmem:[%s4386 + $0x20] sm:$0xf]
      %v5348 = vld [vmem:[%s4386 + $0x24] sm:$0x1]
      %v5349 = vld [vmem:[%s4386 + $0x30] sm:$0xf]
      %v5350 = vld [vmem:[%s4386 + $0x34] sm:$0xf]
      %v5351 = vld [vmem:[%s4386 + $0x38] sm:$0x1]
      %v5352 = vld [vmem:[%s4386 + $0x44] sm:$0xf]
      %v5353 = vld [vmem:[%s4386 + $0x48] sm:$0xf]
      %v5354 = vld [vmem:[%s4386 + $0x4c] sm:$0x1]
      %v5355 = vld [vmem:[%s4386 + $0x58] sm:$0xf]
      %v5356 = vld [vmem:[%s4386 + $0x5c] sm:$0xf]
      %v5357 = vld [vmem:[%s4386 + $0x60] sm:$0x1]
      %v5358 = vld [vmem:[%s4386 + $0x6c] sm:$0xf]
      %v5359 = vld [vmem:[%s4386 + $0x70] sm:$0xf]
      %v5360 = vld [vmem:[%s4386 + $0x74] sm:$0x1]
      %v5361 = vld [vmem:[%s4386 + $0x80] sm:$0xf]
      %v5362 = vld [vmem:[%s4386 + $0x84] sm:$0xf]
      %v5363 = vld [vmem:[%s4386 + $0x88] sm:$0x1]
      %v5364 = vld [vmem:[%s4386 + $0x94] sm:$0xf]
      %v5365 = vld [vmem:[%s4386 + $0x98] sm:$0xf]
      %v5366 = vld [vmem:[%s4386 + $0x9c] sm:$0x1]
      %v5367 = vld [vmem:[%s4386 + $0xa8] sm:$0xf]
      %v5368 = vld [vmem:[%s4386 + $0xac] sm:$0xf]
      %v5369 = vld [vmem:[%s4386 + $0xb0] sm:$0x1]
      %v5370 = vld [vmem:[%s4386 + $0xbc] sm:$0xf]
      %v5371 = vld [vmem:[%s4386 + $0xc0] sm:$0xf]
      %v5372 = vld [vmem:[%s4386 + $0xc4] sm:$0x1]
      %v5373 = vld [vmem:[%s4386 + $0xd0] sm:$0xf]
      %v5374 = vld [vmem:[%s4386 + $0xd4] sm:$0xf]
      %v5375 = vld [vmem:[%s4386 + $0xd8] sm:$0x1]
      %v5376 = vld [vmem:[%s4386 + $0xe4] sm:$0xf]
      %v5377 = vld [vmem:[%s4386 + $0xe8] sm:$0xf]
      %v5378 = vld [vmem:[%s4386 + $0xec] sm:$0x1]
      %v5379 = vld [vmem:[%s4386 + $0xf8] sm:$0xf]
      %v5380 = vld [vmem:[%s4386 + $0xfc] sm:$0xf]
      %v5381 = vld [vmem:[%s4386 + $0x100] sm:$0x1]
      %v5382 = vld [vmem:[%s4386 + $0x10c] sm:$0xf]
      %v5383 = vld [vmem:[%s4386 + $0x110] sm:$0xf]
      %v5384 = vld [vmem:[%s4386 + $0x114] sm:$0x1]
      %v5385 = vld [vmem:[%s4386 + $0x120] sm:$0xf]
      %v5386 = vld [vmem:[%s4386 + $0x124] sm:$0xf]
      %v5387 = vld [vmem:[%s4386 + $0x128] sm:$0x1]
      %v5388 = vld [vmem:[%s4386 + $0x134] sm:$0xf]
      %v5389 = vld [vmem:[%s4386 + $0x138] sm:$0xf]
      %v5390 = vld [vmem:[%s4386 + $0x13c] sm:$0x1]
      %v5392 = vshrl.u32 %v5343, 16
      %v5394 = vrot.slane %v5392, 4
      %v5395 = vshll.u32 %v5343, 16
      %v5397 = vrot.slane %v5395, 5
      %v5398 = vor.u32 %v5394, %v5397
      %v5399 = vrot.slane %v5398, 4
      %v5401 = vshll.u32 %v5344, 16
      %v5403 = vrot.slane %v5401, 5
      %v5404 = vsel %vm1961, %v5399, %v5403
      %v5405 = vshrl.u32 %v5344, 16
      %v5407 = vrot.slane %v5405, 4
      %v5408 = vor.u32 %v5407, %v5403
      %v5409 = vrot.slane %v5408, 4
      %v5411 = vshll.u32 %v5345, 16
      %v5413 = vrot.slane %v5411, 5
      %v5414 = vsel %vm1961, %v5409, %v5413
      %v5416 = vshrl.u32 %v5346, 16
      %v5418 = vrot.slane %v5416, 4
      %v5419 = vshll.u32 %v5346, 16
      %v5421 = vrot.slane %v5419, 5
      %v5422 = vor.u32 %v5418, %v5421
      %v5423 = vrot.slane %v5422, 4
      %v5425 = vshll.u32 %v5347, 16
      %v5427 = vrot.slane %v5425, 5
      %v5428 = vsel %vm1961, %v5423, %v5427
      %v5429 = vshrl.u32 %v5347, 16
      %v5431 = vrot.slane %v5429, 4
      %v5432 = vor.u32 %v5431, %v5427
      %v5433 = vrot.slane %v5432, 4
      %v5435 = vshll.u32 %v5348, 16
      %v5437 = vrot.slane %v5435, 5
      %v5438 = vsel %vm1961, %v5433, %v5437
      %v5440 = vshrl.u32 %v5349, 16
      %v5442 = vrot.slane %v5440, 4
      %v5443 = vshll.u32 %v5349, 16
      %v5445 = vrot.slane %v5443, 5
      %v5446 = vor.u32 %v5442, %v5445
      %v5447 = vrot.slane %v5446, 4
      %v5449 = vshll.u32 %v5350, 16
      %v5451 = vrot.slane %v5449, 5
      %v5452 = vsel %vm1961, %v5447, %v5451
      %v5453 = vshrl.u32 %v5350, 16
      %v5455 = vrot.slane %v5453, 4
      %v5456 = vor.u32 %v5455, %v5451
      %v5457 = vrot.slane %v5456, 4
      %v5459 = vshll.u32 %v5351, 16
      %v5461 = vrot.slane %v5459, 5
      %v5462 = vsel %vm1961, %v5457, %v5461
      %v5464 = vshrl.u32 %v5352, 16
      %v5466 = vrot.slane %v5464, 4
      %v5467 = vshll.u32 %v5352, 16
      %v5469 = vrot.slane %v5467, 5
      %v5470 = vor.u32 %v5466, %v5469
      %v5471 = vrot.slane %v5470, 4
      %v5473 = vshll.u32 %v5353, 16
      %v5475 = vrot.slane %v5473, 5
      %v5476 = vsel %vm1961, %v5471, %v5475
      %v5477 = vshrl.u32 %v5353, 16
      %v5479 = vrot.slane %v5477, 4
      %v5480 = vor.u32 %v5479, %v5475
      %v5481 = vrot.slane %v5480, 4
      %v5483 = vshll.u32 %v5354, 16
      %v5485 = vrot.slane %v5483, 5
      %v5486 = vsel %vm1961, %v5481, %v5485
      %v5488 = vshrl.u32 %v5355, 16
      %v5490 = vrot.slane %v5488, 4
      %v5491 = vshll.u32 %v5355, 16
      %v5493 = vrot.slane %v5491, 5
      %v5494 = vor.u32 %v5490, %v5493
      %v5495 = vrot.slane %v5494, 4
      %v5497 = vshll.u32 %v5356, 16
      %v5499 = vrot.slane %v5497, 5
      %v5500 = vsel %vm1961, %v5495, %v5499
      %v5501 = vshrl.u32 %v5356, 16
      %v5503 = vrot.slane %v5501, 4
      %v5504 = vor.u32 %v5503, %v5499
      %v5505 = vrot.slane %v5504, 4
      %v5507 = vshll.u32 %v5357, 16
      %v5509 = vrot.slane %v5507, 5
      %v5510 = vsel %vm1961, %v5505, %v5509
      %v5512 = vshrl.u32 %v5358, 16
      %v5514 = vrot.slane %v5512, 4
      %v5515 = vshll.u32 %v5358, 16
      %v5517 = vrot.slane %v5515, 5
      %v5518 = vor.u32 %v5514, %v5517
      %v5519 = vrot.slane %v5518, 4
      %v5521 = vshll.u32 %v5359, 16
      %v5523 = vrot.slane %v5521, 5
      %v5524 = vsel %vm1961, %v5519, %v5523
      %v5525 = vshrl.u32 %v5359, 16
      %v5527 = vrot.slane %v5525, 4
      %v5528 = vor.u32 %v5527, %v5523
      %v5529 = vrot.slane %v5528, 4
      %v5531 = vshll.u32 %v5360, 16
      %v5533 = vrot.slane %v5531, 5
      %v5534 = vsel %vm1961, %v5529, %v5533
      %v5536 = vshrl.u32 %v5361, 16
      %v5538 = vrot.slane %v5536, 4
      %v5539 = vshll.u32 %v5361, 16
      %v5541 = vrot.slane %v5539, 5
      %v5542 = vor.u32 %v5538, %v5541
      %v5543 = vrot.slane %v5542, 4
      %v5545 = vshll.u32 %v5362, 16
      %v5547 = vrot.slane %v5545, 5
      %v5548 = vsel %vm1961, %v5543, %v5547
      %v5549 = vshrl.u32 %v5362, 16
      %v5551 = vrot.slane %v5549, 4
      %v5552 = vor.u32 %v5551, %v5547
      %v5553 = vrot.slane %v5552, 4
      %v5555 = vshll.u32 %v5363, 16
      %v5557 = vrot.slane %v5555, 5
      %v5558 = vsel %vm1961, %v5553, %v5557
      %v5560 = vshrl.u32 %v5364, 16
      %v5562 = vrot.slane %v5560, 4
      %v5563 = vshll.u32 %v5364, 16
      %v5565 = vrot.slane %v5563, 5
      %v5566 = vor.u32 %v5562, %v5565
      %v5567 = vrot.slane %v5566, 4
      %v5569 = vshll.u32 %v5365, 16
      %v5571 = vrot.slane %v5569, 5
      %v5572 = vsel %vm1961, %v5567, %v5571
      %v5573 = vshrl.u32 %v5365, 16
      %v5575 = vrot.slane %v5573, 4
      %v5576 = vor.u32 %v5575, %v5571
      %v5577 = vrot.slane %v5576, 4
      %v5579 = vshll.u32 %v5366, 16
      %v5581 = vrot.slane %v5579, 5
      %v5582 = vsel %vm1961, %v5577, %v5581
      %v5584 = vshrl.u32 %v5367, 16
      %v5586 = vrot.slane %v5584, 4
      %v5587 = vshll.u32 %v5367, 16
      %v5589 = vrot.slane %v5587, 5
      %v5590 = vor.u32 %v5586, %v5589
      %v5591 = vrot.slane %v5590, 4
      %v5593 = vshll.u32 %v5368, 16
      %v5595 = vrot.slane %v5593, 5
      %v5596 = vsel %vm1961, %v5591, %v5595
      %v5597 = vshrl.u32 %v5368, 16
      %v5599 = vrot.slane %v5597, 4
      %v5600 = vor.u32 %v5599, %v5595
      %v5601 = vrot.slane %v5600, 4
      %v5603 = vshll.u32 %v5369, 16
      %v5605 = vrot.slane %v5603, 5
      %v5606 = vsel %vm1961, %v5601, %v5605
      %v5608 = vshrl.u32 %v5370, 16
      %v5610 = vrot.slane %v5608, 4
      %v5611 = vshll.u32 %v5370, 16
      %v5613 = vrot.slane %v5611, 5
      %v5614 = vor.u32 %v5610, %v5613
      %v5615 = vrot.slane %v5614, 4
      %v5617 = vshll.u32 %v5371, 16
      %v5619 = vrot.slane %v5617, 5
      %v5620 = vsel %vm1961, %v5615, %v5619
      %v5621 = vshrl.u32 %v5371, 16
      %v5623 = vrot.slane %v5621, 4
      %v5624 = vor.u32 %v5623, %v5619
      %v5625 = vrot.slane %v5624, 4
      %v5627 = vshll.u32 %v5372, 16
      %v5629 = vrot.slane %v5627, 5
      %v5630 = vsel %vm1961, %v5625, %v5629
      %v5632 = vshrl.u32 %v5373, 16
      %v5634 = vrot.slane %v5632, 4
      %v5635 = vshll.u32 %v5373, 16
      %v5637 = vrot.slane %v5635, 5
      %v5638 = vor.u32 %v5634, %v5637
      %v5639 = vrot.slane %v5638, 4
      %v5641 = vshll.u32 %v5374, 16
      %v5643 = vrot.slane %v5641, 5
      %v5644 = vsel %vm1961, %v5639, %v5643
      %v5645 = vshrl.u32 %v5374, 16
      %v5647 = vrot.slane %v5645, 4
      %v5648 = vor.u32 %v5647, %v5643
      %v5649 = vrot.slane %v5648, 4
      %v5651 = vshll.u32 %v5375, 16
      %v5653 = vrot.slane %v5651, 5
      %v5654 = vsel %vm1961, %v5649, %v5653
      %v5656 = vshrl.u32 %v5376, 16
      %v5658 = vrot.slane %v5656, 4
      %v5659 = vshll.u32 %v5376, 16
      %v5661 = vrot.slane %v5659, 5
      %v5662 = vor.u32 %v5658, %v5661
      %v5663 = vrot.slane %v5662, 4
      %v5665 = vshll.u32 %v5377, 16
      %v5667 = vrot.slane %v5665, 5
      %v5668 = vsel %vm1961, %v5663, %v5667
      %v5669 = vshrl.u32 %v5377, 16
      %v5671 = vrot.slane %v5669, 4
      %v5672 = vor.u32 %v5671, %v5667
      %v5673 = vrot.slane %v5672, 4
      %v5675 = vshll.u32 %v5378, 16
      %v5677 = vrot.slane %v5675, 5
      %v5678 = vsel %vm1961, %v5673, %v5677
      %v5680 = vshrl.u32 %v5379, 16
      %v5682 = vrot.slane %v5680, 4
      %v5683 = vshll.u32 %v5379, 16
      %v5685 = vrot.slane %v5683, 5
      %v5686 = vor.u32 %v5682, %v5685
      %v5687 = vrot.slane %v5686, 4
      %v5689 = vshll.u32 %v5380, 16
      %v5691 = vrot.slane %v5689, 5
      %v5692 = vsel %vm1961, %v5687, %v5691
      %v5693 = vshrl.u32 %v5380, 16
      %v5695 = vrot.slane %v5693, 4
      %v5696 = vor.u32 %v5695, %v5691
      %v5697 = vrot.slane %v5696, 4
      %v5699 = vshll.u32 %v5381, 16
      %v5701 = vrot.slane %v5699, 5
      %v5702 = vsel %vm1961, %v5697, %v5701
      %v5704 = vshrl.u32 %v5382, 16
      %v5706 = vrot.slane %v5704, 4
      %v5707 = vshll.u32 %v5382, 16
      %v5709 = vrot.slane %v5707, 5
      %v5710 = vor.u32 %v5706, %v5709
      %v5711 = vrot.slane %v5710, 4
      %v5713 = vshll.u32 %v5383, 16
      %v5715 = vrot.slane %v5713, 5
      %v5716 = vsel %vm1961, %v5711, %v5715
      %v5717 = vshrl.u32 %v5383, 16
      %v5719 = vrot.slane %v5717, 4
      %v5720 = vor.u32 %v5719, %v5715
      %v5721 = vrot.slane %v5720, 4
      %v5723 = vshll.u32 %v5384, 16
      %v5725 = vrot.slane %v5723, 5
      %v5726 = vsel %vm1961, %v5721, %v5725
      %v5728 = vshrl.u32 %v5385, 16
      %v5730 = vrot.slane %v5728, 4
      %v5731 = vshll.u32 %v5385, 16
      %v5733 = vrot.slane %v5731, 5
      %v5734 = vor.u32 %v5730, %v5733
      %v5735 = vrot.slane %v5734, 4
      %v5737 = vshll.u32 %v5386, 16
      %v5739 = vrot.slane %v5737, 5
      %v5740 = vsel %vm1961, %v5735, %v5739
      %v5741 = vshrl.u32 %v5386, 16
      %v5743 = vrot.slane %v5741, 4
      %v5744 = vor.u32 %v5743, %v5739
      %v5745 = vrot.slane %v5744, 4
      %v5747 = vshll.u32 %v5387, 16
      %v5749 = vrot.slane %v5747, 5
      %v5750 = vsel %vm1961, %v5745, %v5749
      %v5752 = vshrl.u32 %v5388, 16
      %v5754 = vrot.slane %v5752, 4
      %v5755 = vshll.u32 %v5388, 16
      %v5757 = vrot.slane %v5755, 5
      %v5758 = vor.u32 %v5754, %v5757
      %v5759 = vrot.slane %v5758, 4
      %v5761 = vshll.u32 %v5389, 16
      %v5763 = vrot.slane %v5761, 5
      %v5764 = vsel %vm1961, %v5759, %v5763
      %v5765 = vshrl.u32 %v5389, 16
      %v5767 = vrot.slane %v5765, 4
      %v5768 = vor.u32 %v5767, %v5763
      %v5769 = vrot.slane %v5768, 4
      %v5771 = vshll.u32 %v5390, 16
      %v5773 = vrot.slane %v5771, 5
      %v5774 = vsel %vm1961, %v5769, %v5773
      %s5775 = scalar_lea.vmem %s2, 32
      %v5776 = vld [vmem:[%s5775] sm:$0xf]
      %v5777 = vunpack.c.l.b16 %v5404
      %v5778 = vunpack.c.l.b16 %v5414
      %v5779 = vunpack.c.l.b16 %v5428
      %v5780 = vunpack.c.l.b16 %v5438
      %v5781 = vunpack.c.l.b16 %v5452
      %v5782 = vunpack.c.l.b16 %v5462
      %v5783 = vunpack.c.l.b16 %v5476
      %v5784 = vunpack.c.l.b16 %v5486
      %v5785 = vunpack.c.l.b16 %v5500
      %v5786 = vunpack.c.l.b16 %v5510
      %v5787 = vunpack.c.l.b16 %v5524
      %v5788 = vunpack.c.l.b16 %v5534
      %v5789 = vunpack.c.l.b16 %v5548
      %v5790 = vunpack.c.l.b16 %v5558
      %v5791 = vunpack.c.l.b16 %v5572
      %v5792 = vunpack.c.l.b16 %v5582
      %v5793 = vunpack.c.l.b16 %v5596
      %v5794 = vunpack.c.l.b16 %v5606
      %v5795 = vunpack.c.l.b16 %v5620
      %v5796 = vunpack.c.l.b16 %v5630
      %v5797 = vunpack.c.l.b16 %v5644
      %v5798 = vunpack.c.l.b16 %v5654
      %v5799 = vunpack.c.l.b16 %v5668
      %v5800 = vunpack.c.l.b16 %v5678
      %v5801 = vunpack.c.l.b16 %v5692
      %v5802 = vunpack.c.l.b16 %v5702
      %v5803 = vunpack.c.l.b16 %v5716
      %v5804 = vunpack.c.l.b16 %v5726
      %v5805 = vunpack.c.l.b16 %v5740
      %v5806 = vunpack.c.l.b16 %v5750
      %v5807 = vunpack.c.l.b16 %v5764
      %v5808 = vunpack.c.l.b16 %v5774
      %v5809 = vpack.c.b16 %v5778, %v5777
      %v5810 = vpack.c.b16 %v5780, %v5779
      %v5811 = vpack.c.b16 %v5782, %v5781
      %v5812 = vpack.c.b16 %v5784, %v5783
      %v5813 = vpack.c.b16 %v5786, %v5785
      %v5814 = vpack.c.b16 %v5788, %v5787
      %v5815 = vpack.c.b16 %v5790, %v5789
      %v5816 = vpack.c.b16 %v5792, %v5791
      %v5817 = vpack.c.b16 %v5794, %v5793
      %v5818 = vpack.c.b16 %v5796, %v5795
      %v5819 = vpack.c.b16 %v5798, %v5797
      %v5820 = vpack.c.b16 %v5800, %v5799
      %v5821 = vpack.c.b16 %v5802, %v5801
      %v5822 = vpack.c.b16 %v5804, %v5803
      %v5823 = vpack.c.b16 %v5806, %v5805
      %v5824 = vpack.c.b16 %v5808, %v5807
      %v5826 = vsel %vm1437, %v5809, 0
      %v5829 = vsel %vm1437, %v5810, 0
      %v5832 = vsel %vm1437, %v5811, 0
      %v5835 = vsel %vm1437, %v5812, 0
      %v5838 = vsel %vm1437, %v5813, 0
      %v5841 = vsel %vm1437, %v5814, 0
      %v5844 = vsel %vm1437, %v5815, 0
      %v5847 = vsel %vm1437, %v5816, 0
      %v5850 = vsel %vm1437, %v5817, 0
      %v5853 = vsel %vm1437, %v5818, 0
      %v5856 = vsel %vm1437, %v5819, 0
      %v5859 = vsel %vm1437, %v5820, 0
      %v5862 = vsel %vm1437, %v5821, 0
      %v5865 = vsel %vm1437, %v5822, 0
      %v5868 = vsel %vm1437, %v5823, 0
      %v5871 = vsel %vm1437, %v5824, 0
      %v5874 = vsel %vm1486, %v5776, 0
      %5876 = vmatprep.subr.bf16.mxu0 0
      %5877 = vmatpush1.bf16.msra.mxu0 0
      %5878 = vmatprep.subr.bf16.mxu0 0
      %5879 = vmatpush1.bf16.msra.mxu0 0
      %5880 = vmatprep.subr.bf16.mxu0 0
      %5881 = vmatpush1.bf16.msra.mxu0 0
      %5882 = vmatprep.subr.bf16.mxu0 0
      %5883 = vmatpush1.bf16.msra.mxu0 0
      %5884 = vmatprep.subr.bf16.mxu0 0
      %5885 = vmatpush1.bf16.msra.mxu0 0
      %5886 = vmatprep.subr.bf16.mxu0 0
      %5887 = vmatpush1.bf16.msra.mxu0 0
      %5888 = vmatprep.subr.bf16.mxu0 0
      %5889 = vmatpush1.bf16.msra.mxu0 0
      %5890 = vmatprep.subr.bf16.mxu0 0
      %5891 = vmatpush1.bf16.msra.mxu0 %v5874
      %5892 = vmatprep.subr.bf16.mxu0 0
      %5893 = vmatpush2.bf16.msra.mxu0 0
      %5894 = vmatprep.subr.bf16.mxu0 0
      %5895 = vmatpush2.bf16.msra.mxu0 0
      %5896 = vmatprep.subr.bf16.mxu0 0
      %5897 = vmatpush2.bf16.msra.mxu0 0
      %5898 = vmatprep.subr.bf16.mxu0 0
      %5899 = vmatpush2.bf16.msra.mxu0 0
      %5900 = vmatprep.subr.bf16.mxu0 0
      %5901 = vmatpush2.bf16.msra.mxu0 0
      %5902 = vmatprep.subr.bf16.mxu0 0
      %5903 = vmatpush2.bf16.msra.mxu0 0
      %5904 = vmatprep.subr.bf16.mxu0 0
      %5905 = vmatpush2.bf16.msra.mxu0 0
      %5906 = vmatprep.subr.bf16.mxu0 0
      %5907 = vmatpush2.bf16.msra.mxu0 0
      %5908 = vmatprep.mubr.bf16.mxu0 0
      %5909 = vmatmul.mubr.bf16.gmra.mxu0 %v5826
      %v5910 = vpop.f32.mrf.mxu0
      %v5911 = vadd.f32 0.0, %v5910
      %v5912 = vpop.f32.mrf.mxu0
      %v5913 = vpop.f32.mrf.mxu0
      %v5914 = vadd.f32 0.0, %v5913
      %v5915 = vpop.f32.mrf.mxu0
      %5916 = vmatprep.mubr.bf16.mxu0 0
      %5917 = vmatmul.mubr.bf16.gmra.mxu0 %v5829
      %v5918 = vpop.f32.mrf.mxu0
      %v5919 = vadd.f32 0.0, %v5918
      %v5920 = vpop.f32.mrf.mxu0
      %v5921 = vpop.f32.mrf.mxu0
      %v5922 = vadd.f32 0.0, %v5921
      %v5923 = vpop.f32.mrf.mxu0
      %5924 = vmatprep.mubr.bf16.mxu0 0
      %5925 = vmatmul.mubr.bf16.gmra.mxu0 %v5832
      %v5926 = vpop.f32.mrf.mxu0
      %v5927 = vadd.f32 0.0, %v5926
      %v5928 = vpop.f32.mrf.mxu0
      %v5929 = vpop.f32.mrf.mxu0
      %v5930 = vadd.f32 0.0, %v5929
      %v5931 = vpop.f32.mrf.mxu0
      %5932 = vmatprep.mubr.bf16.mxu0 0
      %5933 = vmatmul.mubr.bf16.gmra.mxu0 %v5835
      %v5934 = vpop.f32.mrf.mxu0
      %v5935 = vadd.f32 0.0, %v5934
      %v5936 = vpop.f32.mrf.mxu0
      %v5937 = vpop.f32.mrf.mxu0
      %v5938 = vadd.f32 0.0, %v5937
      %v5939 = vpop.f32.mrf.mxu0
      %5940 = vmatprep.mubr.bf16.mxu0 0
      %5941 = vmatmul.mubr.bf16.gmra.mxu0 %v5838
      %v5942 = vpop.f32.mrf.mxu0
      %v5943 = vadd.f32 0.0, %v5942
      %v5944 = vpop.f32.mrf.mxu0
      %v5945 = vpop.f32.mrf.mxu0
      %v5946 = vadd.f32 0.0, %v5945
      %v5947 = vpop.f32.mrf.mxu0
      %5948 = vmatprep.mubr.bf16.mxu0 0
      %5949 = vmatmul.mubr.bf16.gmra.mxu0 %v5841
      %v5950 = vpop.f32.mrf.mxu0
      %v5951 = vadd.f32 0.0, %v5950
      %v5952 = vpop.f32.mrf.mxu0
      %v5953 = vpop.f32.mrf.mxu0
      %v5954 = vadd.f32 0.0, %v5953
      %v5955 = vpop.f32.mrf.mxu0
      %5956 = vmatprep.mubr.bf16.mxu0 0
      %5957 = vmatmul.mubr.bf16.gmra.mxu0 %v5844
      %v5958 = vpop.f32.mrf.mxu0
      %v5959 = vadd.f32 0.0, %v5958
      %v5960 = vpop.f32.mrf.mxu0
      %v5961 = vpop.f32.mrf.mxu0
      %v5962 = vadd.f32 0.0, %v5961
      %v5963 = vpop.f32.mrf.mxu0
      %5964 = vmatprep.mubr.bf16.mxu0 0
      %5965 = vmatmul.mubr.bf16.gmra.mxu0 %v5847
      %v5966 = vpop.f32.mrf.mxu0
      %v5967 = vadd.f32 0.0, %v5966
      %v5968 = vpop.f32.mrf.mxu0
      %v5969 = vpop.f32.mrf.mxu0
      %v5970 = vadd.f32 0.0, %v5969
      %v5971 = vpop.f32.mrf.mxu0
      %5972 = vmatprep.mubr.bf16.mxu0 0
      %5973 = vmatmul.mubr.bf16.gmra.mxu0 %v5850
      %v5974 = vpop.f32.mrf.mxu0
      %v5975 = vadd.f32 0.0, %v5974
      %v5976 = vpop.f32.mrf.mxu0
      %v5977 = vpop.f32.mrf.mxu0
      %v5978 = vadd.f32 0.0, %v5977
      %v5979 = vpop.f32.mrf.mxu0
      %5980 = vmatprep.mubr.bf16.mxu0 0
      %5981 = vmatmul.mubr.bf16.gmra.mxu0 %v5853
      %v5982 = vpop.f32.mrf.mxu0
      %v5983 = vadd.f32 0.0, %v5982
      %v5984 = vpop.f32.mrf.mxu0
      %v5985 = vpop.f32.mrf.mxu0
      %v5986 = vadd.f32 0.0, %v5985
      %v5987 = vpop.f32.mrf.mxu0
      %5988 = vmatprep.mubr.bf16.mxu0 0
      %5989 = vmatmul.mubr.bf16.gmra.mxu0 %v5856
      %v5990 = vpop.f32.mrf.mxu0
      %v5991 = vadd.f32 0.0, %v5990
      %v5992 = vpop.f32.mrf.mxu0
      %v5993 = vpop.f32.mrf.mxu0
      %v5994 = vadd.f32 0.0, %v5993
      %v5995 = vpop.f32.mrf.mxu0
      %5996 = vmatprep.mubr.bf16.mxu0 0
      %5997 = vmatmul.mubr.bf16.gmra.mxu0 %v5859
      %v5998 = vpop.f32.mrf.mxu0
      %v5999 = vadd.f32 0.0, %v5998
      %v6000 = vpop.f32.mrf.mxu0
      %v6001 = vpop.f32.mrf.mxu0
      %v6002 = vadd.f32 0.0, %v6001
      %v6003 = vpop.f32.mrf.mxu0
      %6004 = vmatprep.mubr.bf16.mxu0 0
      %6005 = vmatmul.mubr.bf16.gmra.mxu0 %v5862
      %v6006 = vpop.f32.mrf.mxu0
      %v6007 = vadd.f32 0.0, %v6006
      %v6008 = vpop.f32.mrf.mxu0
      %v6009 = vpop.f32.mrf.mxu0
      %v6010 = vadd.f32 0.0, %v6009
      %v6011 = vpop.f32.mrf.mxu0
      %6012 = vmatprep.mubr.bf16.mxu0 0
      %6013 = vmatmul.mubr.bf16.gmra.mxu0 %v5865
      %v6014 = vpop.f32.mrf.mxu0
      %v6015 = vadd.f32 0.0, %v6014
      %v6016 = vpop.f32.mrf.mxu0
      %v6017 = vpop.f32.mrf.mxu0
      %v6018 = vadd.f32 0.0, %v6017
      %v6019 = vpop.f32.mrf.mxu0
      %6020 = vmatprep.mubr.bf16.mxu0 0
      %6021 = vmatmul.mubr.bf16.gmra.mxu0 %v5868
      %v6022 = vpop.f32.mrf.mxu0
      %v6023 = vadd.f32 0.0, %v6022
      %v6024 = vpop.f32.mrf.mxu0
      %v6025 = vpop.f32.mrf.mxu0
      %v6026 = vadd.f32 0.0, %v6025
      %v6027 = vpop.f32.mrf.mxu0
      %6028 = vmatprep.mubr.bf16.mxu0 0
      %6029 = vmatmul.mubr.bf16.gmra.mxu0 %v5871
      %v6030 = vpop.f32.mrf.mxu0
      %v6031 = vadd.f32 0.0, %v6030
      %v6032 = vpop.f32.mrf.mxu0
      %v6033 = vpop.f32.mrf.mxu0
      %v6034 = vadd.f32 0.0, %v6033
      %v6035 = vpop.f32.mrf.mxu0
      %6036 = vdwg.mxu0
      %v6037 = vadd.f32 %v5217, %v5911
      %v6038 = vadd.f32 %v5220, %v5914
      %v6039 = vadd.f32 %v5225, %v5919
      %v6040 = vadd.f32 %v5228, %v5922
      %v6041 = vadd.f32 %v5233, %v5927
      %v6042 = vadd.f32 %v5236, %v5930
      %v6043 = vadd.f32 %v5241, %v5935
      %v6044 = vadd.f32 %v5244, %v5938
      %v6045 = vadd.f32 %v5249, %v5943
      %v6046 = vadd.f32 %v5252, %v5946
      %v6047 = vadd.f32 %v5257, %v5951
      %v6048 = vadd.f32 %v5260, %v5954
      %v6049 = vadd.f32 %v5265, %v5959
      %v6050 = vadd.f32 %v5268, %v5962
      %v6051 = vadd.f32 %v5273, %v5967
      %v6052 = vadd.f32 %v5276, %v5970
      %v6053 = vadd.f32 %v5281, %v5975
      %v6054 = vadd.f32 %v5284, %v5978
      %v6055 = vadd.f32 %v5289, %v5983
      %v6056 = vadd.f32 %v5292, %v5986
      %v6057 = vadd.f32 %v5297, %v5991
      %v6058 = vadd.f32 %v5300, %v5994
      %v6059 = vadd.f32 %v5305, %v5999
      %v6060 = vadd.f32 %v5308, %v6002
      %v6061 = vadd.f32 %v5313, %v6007
      %v6062 = vadd.f32 %v5316, %v6010
      %v6063 = vadd.f32 %v5321, %v6015
      %v6064 = vadd.f32 %v5324, %v6018
      %v6065 = vadd.f32 %v5329, %v6023
      %v6066 = vadd.f32 %v5332, %v6026
      %v6067 = vadd.f32 %v5337, %v6031
      %v6068 = vadd.f32 %v5340, %v6034
      %v6069 = vadd.f32 %v4354, %v6037
      %v6070 = vadd.f32 %v4355, %v6038
      %v6071 = vadd.f32 %v4356, %v6039
      %v6072 = vadd.f32 %v4357, %v6040
      %v6073 = vadd.f32 %v4358, %v6041
      %v6074 = vadd.f32 %v4359, %v6042
      %v6075 = vadd.f32 %v4360, %v6043
      %v6076 = vadd.f32 %v4361, %v6044
      %v6077 = vadd.f32 %v4362, %v6045
      %v6078 = vadd.f32 %v4363, %v6046
      %v6079 = vadd.f32 %v4364, %v6047
      %v6080 = vadd.f32 %v4365, %v6048
      %v6081 = vadd.f32 %v4366, %v6049
      %v6082 = vadd.f32 %v4367, %v6050
      %v6083 = vadd.f32 %v4368, %v6051
      %v6084 = vadd.f32 %v4369, %v6052
      %v6085 = vadd.f32 %v4370, %v6053
      %v6086 = vadd.f32 %v4371, %v6054
      %v6087 = vadd.f32 %v4372, %v6055
      %v6088 = vadd.f32 %v4373, %v6056
      %v6089 = vadd.f32 %v4374, %v6057
      %v6090 = vadd.f32 %v4375, %v6058
      %v6091 = vadd.f32 %v4376, %v6059
      %v6092 = vadd.f32 %v4377, %v6060
      %v6093 = vadd.f32 %v4378, %v6061
      %v6094 = vadd.f32 %v4379, %v6062
      %v6095 = vadd.f32 %v4380, %v6063
      %v6096 = vadd.f32 %v4381, %v6064
      %v6097 = vadd.f32 %v4382, %v6065
      %v6098 = vadd.f32 %v4383, %v6066
      %v6099 = vadd.f32 %v4384, %v6067
      %v6100 = vadd.f32 %v4385, %v6068
      %v6101 = vld [vmem:[%s3] sm:$0x1]
      %v6103 = vlaneseq
      %v6104 = vshrl.u32 %v6103, 7
      %v6105 = vsub.s32 0, %v6104
      %v6106 = vrot.slane %v6101, %v6105
      %v6108 = vmul.f32 %v6069, %v6106
      %v6109 = vmul.f32 %v6070, %v6106
      %v6110 = vmul.f32 %v6071, %v6106
      %v6111 = vmul.f32 %v6072, %v6106
      %v6112 = vmul.f32 %v6073, %v6106
      %v6113 = vmul.f32 %v6074, %v6106
      %v6114 = vmul.f32 %v6075, %v6106
      %v6115 = vmul.f32 %v6076, %v6106
      %v6116 = vmul.f32 %v6077, %v6106
      %v6117 = vmul.f32 %v6078, %v6106
      %v6118 = vmul.f32 %v6079, %v6106
      %v6119 = vmul.f32 %v6080, %v6106
      %v6120 = vmul.f32 %v6081, %v6106
      %v6121 = vmul.f32 %v6082, %v6106
      %v6122 = vmul.f32 %v6083, %v6106
      %v6123 = vmul.f32 %v6084, %v6106
      %v6124 = vmul.f32 %v6085, %v6106
      %v6125 = vmul.f32 %v6086, %v6106
      %v6126 = vmul.f32 %v6087, %v6106
      %v6127 = vmul.f32 %v6088, %v6106
      %v6128 = vmul.f32 %v6089, %v6106
      %v6129 = vmul.f32 %v6090, %v6106
      %v6130 = vmul.f32 %v6091, %v6106
      %v6131 = vmul.f32 %v6092, %v6106
      %v6132 = vmul.f32 %v6093, %v6106
      %v6133 = vmul.f32 %v6094, %v6106
      %v6134 = vmul.f32 %v6095, %v6106
      %v6135 = vmul.f32 %v6096, %v6106
      %v6136 = vmul.f32 %v6097, %v6106
      %v6137 = vmul.f32 %v6098, %v6106
      %v6138 = vmul.f32 %v6099, %v6106
      %v6139 = vmul.f32 %v6100, %v6106
      %v6140 = vld [vmem:[%s4] sm:$0x1]
      %v6142 = vlaneseq
      %v6143 = vshrl.u32 %v6142, 7
      %v6144 = vsub.s32 0, %v6143
      %v6145 = vrot.slane %v6140, %v6144
      %v6147 = vadd.f32 %v6108, %v6145
      %v6148 = vadd.f32 %v6109, %v6145
      %v6149 = vadd.f32 %v6110, %v6145
      %v6150 = vadd.f32 %v6111, %v6145
      %v6151 = vadd.f32 %v6112, %v6145
      %v6152 = vadd.f32 %v6113, %v6145
      %v6153 = vadd.f32 %v6114, %v6145
      %v6154 = vadd.f32 %v6115, %v6145
      %v6155 = vadd.f32 %v6116, %v6145
      %v6156 = vadd.f32 %v6117, %v6145
      %v6157 = vadd.f32 %v6118, %v6145
      %v6158 = vadd.f32 %v6119, %v6145
      %v6159 = vadd.f32 %v6120, %v6145
      %v6160 = vadd.f32 %v6121, %v6145
      %v6161 = vadd.f32 %v6122, %v6145
      %v6162 = vadd.f32 %v6123, %v6145
      %v6163 = vadd.f32 %v6124, %v6145
      %v6164 = vadd.f32 %v6125, %v6145
      %v6165 = vadd.f32 %v6126, %v6145
      %v6166 = vadd.f32 %v6127, %v6145
      %v6167 = vadd.f32 %v6128, %v6145
      %v6168 = vadd.f32 %v6129, %v6145
      %v6169 = vadd.f32 %v6130, %v6145
      %v6170 = vadd.f32 %v6131, %v6145
      %v6171 = vadd.f32 %v6132, %v6145
      %v6172 = vadd.f32 %v6133, %v6145
      %v6173 = vadd.f32 %v6134, %v6145
      %v6174 = vadd.f32 %v6135, %v6145
      %v6175 = vadd.f32 %v6136, %v6145
      %v6176 = vadd.f32 %v6137, %v6145
      %v6177 = vadd.f32 %v6138, %v6145
      %v6178 = vadd.f32 %v6139, %v6145
      %v6179 = vmax.f32 %v6147, 0.0
      %v6180 = vmax.f32 %v6148, 0.0
      %v6181 = vmax.f32 %v6149, 0.0
      %v6182 = vmax.f32 %v6150, 0.0
      %v6183 = vmax.f32 %v6151, 0.0
      %v6184 = vmax.f32 %v6152, 0.0
      %v6185 = vmax.f32 %v6153, 0.0
      %v6186 = vmax.f32 %v6154, 0.0
      %v6187 = vmax.f32 %v6155, 0.0
      %v6188 = vmax.f32 %v6156, 0.0
      %v6189 = vmax.f32 %v6157, 0.0
      %v6190 = vmax.f32 %v6158, 0.0
      %v6191 = vmax.f32 %v6159, 0.0
      %v6192 = vmax.f32 %v6160, 0.0
      %v6193 = vmax.f32 %v6161, 0.0
      %v6194 = vmax.f32 %v6162, 0.0
      %v6195 = vmax.f32 %v6163, 0.0
      %v6196 = vmax.f32 %v6164, 0.0
      %v6197 = vmax.f32 %v6165, 0.0
      %v6198 = vmax.f32 %v6166, 0.0
      %v6199 = vmax.f32 %v6167, 0.0
      %v6200 = vmax.f32 %v6168, 0.0
      %v6201 = vmax.f32 %v6169, 0.0
      %v6202 = vmax.f32 %v6170, 0.0
      %v6203 = vmax.f32 %v6171, 0.0
      %v6204 = vmax.f32 %v6172, 0.0
      %v6205 = vmax.f32 %v6173, 0.0
      %v6206 = vmax.f32 %v6174, 0.0
      %v6207 = vmax.f32 %v6175, 0.0
      %v6208 = vmax.f32 %v6176, 0.0
      %v6209 = vmax.f32 %v6177, 0.0
      %v6210 = vmax.f32 %v6178, 0.0
      %v6211 = vpack.c.bf16 %v6180, %v6179
      %v6212 = vpack.c.bf16 %v6182, %v6181
      %v6213 = vpack.c.bf16 %v6184, %v6183
      %v6214 = vpack.c.bf16 %v6186, %v6185
      %v6215 = vpack.c.bf16 %v6188, %v6187
      %v6216 = vpack.c.bf16 %v6190, %v6189
      %v6217 = vpack.c.bf16 %v6192, %v6191
      %v6218 = vpack.c.bf16 %v6194, %v6193
      %v6219 = vpack.c.bf16 %v6196, %v6195
      %v6220 = vpack.c.bf16 %v6198, %v6197
      %v6221 = vpack.c.bf16 %v6200, %v6199
      %v6222 = vpack.c.bf16 %v6202, %v6201
      %v6223 = vpack.c.bf16 %v6204, %v6203
      %v6224 = vpack.c.bf16 %v6206, %v6205
      %v6225 = vpack.c.bf16 %v6208, %v6207
      %v6226 = vpack.c.bf16 %v6210, %v6209
      %v6243 = vunpack.c.l.b16 %v6211
      %v6244 = vunpack.c.h.b16 %v6211
      %v6245 = vunpack.c.l.b16 %v6212
      %v6246 = vunpack.c.h.b16 %v6212
      %v6247 = vunpack.c.l.b16 %v6213
      %v6248 = vunpack.c.h.b16 %v6213
      %v6249 = vunpack.c.l.b16 %v6214
      %v6250 = vunpack.c.h.b16 %v6214
      %v6251 = vunpack.c.l.b16 %v6215
      %v6252 = vunpack.c.h.b16 %v6215
      %v6253 = vunpack.c.l.b16 %v6216
      %v6254 = vunpack.c.h.b16 %v6216
      %v6255 = vunpack.c.l.b16 %v6217
      %v6256 = vunpack.c.h.b16 %v6217
      %v6257 = vunpack.c.l.b16 %v6218
      %v6258 = vunpack.c.h.b16 %v6218
      %v6259 = vunpack.c.l.b16 %v6219
      %v6260 = vunpack.c.h.b16 %v6219
      %v6261 = vunpack.c.l.b16 %v6220
      %v6262 = vunpack.c.h.b16 %v6220
      %v6263 = vunpack.c.l.b16 %v6221
      %v6264 = vunpack.c.h.b16 %v6221
      %v6265 = vunpack.c.l.b16 %v6222
      %v6266 = vunpack.c.h.b16 %v6222
      %v6267 = vunpack.c.l.b16 %v6223
      %v6268 = vunpack.c.h.b16 %v6223
      %v6269 = vunpack.c.l.b16 %v6224
      %v6270 = vunpack.c.h.b16 %v6224
      %v6271 = vunpack.c.l.b16 %v6225
      %v6272 = vunpack.c.h.b16 %v6225
      %v6273 = vunpack.c.l.b16 %v6226
      %v6274 = vunpack.c.h.b16 %v6226
      %v6275 = vpack.c.b16 %v6243, %v6243
      %v6276 = vpack.c.b16 %v6244, %v6244
      %v6277 = vpack.c.b16 %v6245, %v6245
      %v6278 = vpack.c.b16 %v6246, %v6246
      %v6279 = vpack.c.b16 %v6247, %v6247
      %v6280 = vpack.c.b16 %v6248, %v6248
      %v6281 = vpack.c.b16 %v6249, %v6249
      %v6282 = vpack.c.b16 %v6250, %v6250
      %v6283 = vpack.c.b16 %v6251, %v6251
      %v6284 = vpack.c.b16 %v6252, %v6252
      %v6285 = vpack.c.b16 %v6253, %v6253
      %v6286 = vpack.c.b16 %v6254, %v6254
      %v6287 = vpack.c.b16 %v6255, %v6255
      %v6288 = vpack.c.b16 %v6256, %v6256
      %v6289 = vpack.c.b16 %v6257, %v6257
      %v6290 = vpack.c.b16 %v6258, %v6258
      %v6291 = vpack.c.b16 %v6259, %v6259
      %v6292 = vpack.c.b16 %v6260, %v6260
      %v6293 = vpack.c.b16 %v6261, %v6261
      %v6294 = vpack.c.b16 %v6262, %v6262
      %v6295 = vpack.c.b16 %v6263, %v6263
      %v6296 = vpack.c.b16 %v6264, %v6264
      %v6297 = vpack.c.b16 %v6265, %v6265
      %v6298 = vpack.c.b16 %v6266, %v6266
      %v6299 = vpack.c.b16 %v6267, %v6267
      %v6300 = vpack.c.b16 %v6268, %v6268
      %v6301 = vpack.c.b16 %v6269, %v6269
      %v6302 = vpack.c.b16 %v6270, %v6270
      %v6303 = vpack.c.b16 %v6271, %v6271
      %v6304 = vpack.c.b16 %v6272, %v6272
      %v6305 = vpack.c.b16 %v6273, %v6273
      %v6306 = vpack.c.b16 %v6274, %v6274
      %6339 = vst.msk [vmem:[%s470 + $0x8] sm:$0xf] %vm453, %v6275
      %6340 = vst.msk [vmem:[%s470 + $0xc] sm:$0xf] %vm453, %v6276
      %6341 = vst.msk [vmem:[%s470 + $0x1c] sm:$0xf] %vm453, %v6277
      %6342 = vst.msk [vmem:[%s470 + $0x20] sm:$0xf] %vm453, %v6278
      %6343 = vst.msk [vmem:[%s470 + $0x30] sm:$0xf] %vm453, %v6279
      %6344 = vst.msk [vmem:[%s470 + $0x34] sm:$0xf] %vm453, %v6280
      %6345 = vst.msk [vmem:[%s470 + $0x44] sm:$0xf] %vm453, %v6281
      %6346 = vst.msk [vmem:[%s470 + $0x48] sm:$0xf] %vm453, %v6282
      %6347 = vst.msk [vmem:[%s470 + $0x58] sm:$0xf] %vm453, %v6283
      %6348 = vst.msk [vmem:[%s470 + $0x5c] sm:$0xf] %vm453, %v6284
      %6349 = vst.msk [vmem:[%s470 + $0x6c] sm:$0xf] %vm453, %v6285
      %6350 = vst.msk [vmem:[%s470 + $0x70] sm:$0xf] %vm453, %v6286
      %6351 = vst.msk [vmem:[%s470 + $0x80] sm:$0xf] %vm453, %v6287
      %6352 = vst.msk [vmem:[%s470 + $0x84] sm:$0xf] %vm453, %v6288
      %6353 = vst.msk [vmem:[%s470 + $0x94] sm:$0xf] %vm453, %v6289
      %6354 = vst.msk [vmem:[%s470 + $0x98] sm:$0xf] %vm453, %v6290
      %6355 = vst.msk [vmem:[%s470 + $0xa8] sm:$0xf] %vm453, %v6291
      %6356 = vst.msk [vmem:[%s470 + $0xac] sm:$0xf] %vm453, %v6292
      %6357 = vst.msk [vmem:[%s470 + $0xbc] sm:$0xf] %vm453, %v6293
      %6358 = vst.msk [vmem:[%s470 + $0xc0] sm:$0xf] %vm453, %v6294
      %6359 = vst.msk [vmem:[%s470 + $0xd0] sm:$0xf] %vm453, %v6295
      %6360 = vst.msk [vmem:[%s470 + $0xd4] sm:$0xf] %vm453, %v6296
      %6361 = vst.msk [vmem:[%s470 + $0xe4] sm:$0xf] %vm453, %v6297
      %6362 = vst.msk [vmem:[%s470 + $0xe8] sm:$0xf] %vm453, %v6298
      %6363 = vst.msk [vmem:[%s470 + $0xf8] sm:$0xf] %vm453, %v6299
      %6364 = vst.msk [vmem:[%s470 + $0xfc] sm:$0xf] %vm453, %v6300
      %6365 = vst.msk [vmem:[%s470 + $0x10c] sm:$0xf] %vm453, %v6301
      %6366 = vst.msk [vmem:[%s470 + $0x110] sm:$0xf] %vm453, %v6302
      %6367 = vst.msk [vmem:[%s470 + $0x120] sm:$0xf] %vm453, %v6303
      %6368 = vst.msk [vmem:[%s470 + $0x124] sm:$0xf] %vm453, %v6304
      %6369 = vst.msk [vmem:[%s470 + $0x134] sm:$0xf] %vm453, %v6305
      %6370 = vst.msk [vmem:[%s470 + $0x138] sm:$0xf] %vm453, %v6306
      %v6371 = vld [vmem:[#allocation3 + $0x4] sm:$0x8]
      %v6372 = vld [vmem:[#allocation3 + $0x8] sm:$0xf]
      %v6373 = vld [vmem:[#allocation3 + $0xc] sm:$0xf]
      %v6374 = vld [vmem:[#allocation3 + $0x18] sm:$0x8]
      %v6375 = vld [vmem:[#allocation3 + $0x1c] sm:$0xf]
      %v6376 = vld [vmem:[#allocation3 + $0x20] sm:$0xf]
      %v6377 = vld [vmem:[#allocation3 + $0x2c] sm:$0x8]
      %v6378 = vld [vmem:[#allocation3 + $0x30] sm:$0xf]
      %v6379 = vld [vmem:[#allocation3 + $0x34] sm:$0xf]
      %v6380 = vld [vmem:[#allocation3 + $0x40] sm:$0x8]
      %v6381 = vld [vmem:[#allocation3 + $0x44] sm:$0xf]
      %v6382 = vld [vmem:[#allocation3 + $0x48] sm:$0xf]
      %v6383 = vld [vmem:[#allocation3 + $0x54] sm:$0x8]
      %v6384 = vld [vmem:[#allocation3 + $0x58] sm:$0xf]
      %v6385 = vld [vmem:[#allocation3 + $0x5c] sm:$0xf]
      %v6386 = vld [vmem:[#allocation3 + $0x68] sm:$0x8]
      %v6387 = vld [vmem:[#allocation3 + $0x6c] sm:$0xf]
      %v6388 = vld [vmem:[#allocation3 + $0x70] sm:$0xf]
      %v6389 = vld [vmem:[#allocation3 + $0x7c] sm:$0x8]
      %v6390 = vld [vmem:[#allocation3 + $0x80] sm:$0xf]
      %v6391 = vld [vmem:[#allocation3 + $0x84] sm:$0xf]
      %v6392 = vld [vmem:[#allocation3 + $0x90] sm:$0x8]
      %v6393 = vld [vmem:[#allocation3 + $0x94] sm:$0xf]
      %v6394 = vld [vmem:[#allocation3 + $0x98] sm:$0xf]
      %v6395 = vld [vmem:[#allocation3 + $0xa4] sm:$0x8]
      %v6396 = vld [vmem:[#allocation3 + $0xa8] sm:$0xf]
      %v6397 = vld [vmem:[#allocation3 + $0xac] sm:$0xf]
      %v6398 = vld [vmem:[#allocation3 + $0xb8] sm:$0x8]
      %v6399 = vld [vmem:[#allocation3 + $0xbc] sm:$0xf]
      %v6400 = vld [vmem:[#allocation3 + $0xc0] sm:$0xf]
      %v6401 = vld [vmem:[#allocation3 + $0xcc] sm:$0x8]
      %v6402 = vld [vmem:[#allocation3 + $0xd0] sm:$0xf]
      %v6403 = vld [vmem:[#allocation3 + $0xd4] sm:$0xf]
      %v6404 = vld [vmem:[#allocation3 + $0xe0] sm:$0x8]
      %v6405 = vld [vmem:[#allocation3 + $0xe4] sm:$0xf]
      %v6406 = vld [vmem:[#allocation3 + $0xe8] sm:$0xf]
      %v6407 = vld [vmem:[#allocation3 + $0xf4] sm:$0x8]
      %v6408 = vld [vmem:[#allocation3 + $0xf8] sm:$0xf]
      %v6409 = vld [vmem:[#allocation3 + $0xfc] sm:$0xf]
      %v6410 = vld [vmem:[#allocation3 + $0x108] sm:$0x8]
      %v6411 = vld [vmem:[#allocation3 + $0x10c] sm:$0xf]
      %v6412 = vld [vmem:[#allocation3 + $0x110] sm:$0xf]
      %v6413 = vld [vmem:[#allocation3 + $0x11c] sm:$0x8]
      %v6414 = vld [vmem:[#allocation3 + $0x120] sm:$0xf]
      %v6415 = vld [vmem:[#allocation3 + $0x124] sm:$0xf]
      %v6416 = vld [vmem:[#allocation3 + $0x130] sm:$0x8]
      %v6417 = vld [vmem:[#allocation3 + $0x134] sm:$0xf]
      %v6418 = vld [vmem:[#allocation3 + $0x138] sm:$0xf]
      %v6420 = vshrl.u32 %v6371, 16
      %v6422 = vrot.slane %v6420, 7
      %v6423 = vrot.slane %v6422, 4
      %v6425 = vshrl.u32 %v6372, 16
      %v6427 = vrot.slane %v6425, 7
      %v6428 = vshll.u32 %v6372, 16
      %v6430 = vor.u32 %v6427, %v6428
      %v6431 = vsel %vm1001, %v6423, %v6430
      %v6432 = vrot.slane %v6427, 4
      %v6434 = vshrl.u32 %v6373, 16
      %v6436 = vrot.slane %v6434, 7
      %v6437 = vshll.u32 %v6373, 16
      %v6439 = vor.u32 %v6436, %v6437
      %v6440 = vsel %vm1001, %v6432, %v6439
      %v6442 = vshrl.u32 %v6374, 16
      %v6444 = vrot.slane %v6442, 7
      %v6445 = vrot.slane %v6444, 4
      %v6447 = vshrl.u32 %v6375, 16
      %v6449 = vrot.slane %v6447, 7
      %v6450 = vshll.u32 %v6375, 16
      %v6452 = vor.u32 %v6449, %v6450
      %v6453 = vsel %vm1001, %v6445, %v6452
      %v6454 = vrot.slane %v6449, 4
      %v6456 = vshrl.u32 %v6376, 16
      %v6458 = vrot.slane %v6456, 7
      %v6459 = vshll.u32 %v6376, 16
      %v6461 = vor.u32 %v6458, %v6459
      %v6462 = vsel %vm1001, %v6454, %v6461
      %v6464 = vshrl.u32 %v6377, 16
      %v6466 = vrot.slane %v6464, 7
      %v6467 = vrot.slane %v6466, 4
      %v6469 = vshrl.u32 %v6378, 16
      %v6471 = vrot.slane %v6469, 7
      %v6472 = vshll.u32 %v6378, 16
      %v6474 = vor.u32 %v6471, %v6472
      %v6475 = vsel %vm1001, %v6467, %v6474
      %v6476 = vrot.slane %v6471, 4
      %v6478 = vshrl.u32 %v6379, 16
      %v6480 = vrot.slane %v6478, 7
      %v6481 = vshll.u32 %v6379, 16
      %v6483 = vor.u32 %v6480, %v6481
      %v6484 = vsel %vm1001, %v6476, %v6483
      %v6486 = vshrl.u32 %v6380, 16
      %v6488 = vrot.slane %v6486, 7
      %v6489 = vrot.slane %v6488, 4
      %v6491 = vshrl.u32 %v6381, 16
      %v6493 = vrot.slane %v6491, 7
      %v6494 = vshll.u32 %v6381, 16
      %v6496 = vor.u32 %v6493, %v6494
      %v6497 = vsel %vm1001, %v6489, %v6496
      %v6498 = vrot.slane %v6493, 4
      %v6500 = vshrl.u32 %v6382, 16
      %v6502 = vrot.slane %v6500, 7
      %v6503 = vshll.u32 %v6382, 16
      %v6505 = vor.u32 %v6502, %v6503
      %v6506 = vsel %vm1001, %v6498, %v6505
      %v6508 = vshrl.u32 %v6383, 16
      %v6510 = vrot.slane %v6508, 7
      %v6511 = vrot.slane %v6510, 4
      %v6513 = vshrl.u32 %v6384, 16
      %v6515 = vrot.slane %v6513, 7
      %v6516 = vshll.u32 %v6384, 16
      %v6518 = vor.u32 %v6515, %v6516
      %v6519 = vsel %vm1001, %v6511, %v6518
      %v6520 = vrot.slane %v6515, 4
      %v6522 = vshrl.u32 %v6385, 16
      %v6524 = vrot.slane %v6522, 7
      %v6525 = vshll.u32 %v6385, 16
      %v6527 = vor.u32 %v6524, %v6525
      %v6528 = vsel %vm1001, %v6520, %v6527
      %v6530 = vshrl.u32 %v6386, 16
      %v6532 = vrot.slane %v6530, 7
      %v6533 = vrot.slane %v6532, 4
      %v6535 = vshrl.u32 %v6387, 16
      %v6537 = vrot.slane %v6535, 7
      %v6538 = vshll.u32 %v6387, 16
      %v6540 = vor.u32 %v6537, %v6538
      %v6541 = vsel %vm1001, %v6533, %v6540
      %v6542 = vrot.slane %v6537, 4
      %v6544 = vshrl.u32 %v6388, 16
      %v6546 = vrot.slane %v6544, 7
      %v6547 = vshll.u32 %v6388, 16
      %v6549 = vor.u32 %v6546, %v6547
      %v6550 = vsel %vm1001, %v6542, %v6549
      %v6552 = vshrl.u32 %v6389, 16
      %v6554 = vrot.slane %v6552, 7
      %v6555 = vrot.slane %v6554, 4
      %v6557 = vshrl.u32 %v6390, 16
      %v6559 = vrot.slane %v6557, 7
      %v6560 = vshll.u32 %v6390, 16
      %v6562 = vor.u32 %v6559, %v6560
      %v6563 = vsel %vm1001, %v6555, %v6562
      %v6564 = vrot.slane %v6559, 4
      %v6566 = vshrl.u32 %v6391, 16
      %v6568 = vrot.slane %v6566, 7
      %v6569 = vshll.u32 %v6391, 16
      %v6571 = vor.u32 %v6568, %v6569
      %v6572 = vsel %vm1001, %v6564, %v6571
      %v6574 = vshrl.u32 %v6392, 16
      %v6576 = vrot.slane %v6574, 7
      %v6577 = vrot.slane %v6576, 4
      %v6579 = vshrl.u32 %v6393, 16
      %v6581 = vrot.slane %v6579, 7
      %v6582 = vshll.u32 %v6393, 16
      %v6584 = vor.u32 %v6581, %v6582
      %v6585 = vsel %vm1001, %v6577, %v6584
      %v6586 = vrot.slane %v6581, 4
      %v6588 = vshrl.u32 %v6394, 16
      %v6590 = vrot.slane %v6588, 7
      %v6591 = vshll.u32 %v6394, 16
      %v6593 = vor.u32 %v6590, %v6591
      %v6594 = vsel %vm1001, %v6586, %v6593
      %v6596 = vshrl.u32 %v6395, 16
      %v6598 = vrot.slane %v6596, 7
      %v6599 = vrot.slane %v6598, 4
      %v6601 = vshrl.u32 %v6396, 16
      %v6603 = vrot.slane %v6601, 7
      %v6604 = vshll.u32 %v6396, 16
      %v6606 = vor.u32 %v6603, %v6604
      %v6607 = vsel %vm1001, %v6599, %v6606
      %v6608 = vrot.slane %v6603, 4
      %v6610 = vshrl.u32 %v6397, 16
      %v6612 = vrot.slane %v6610, 7
      %v6613 = vshll.u32 %v6397, 16
      %v6615 = vor.u32 %v6612, %v6613
      %v6616 = vsel %vm1001, %v6608, %v6615
      %v6618 = vshrl.u32 %v6398, 16
      %v6620 = vrot.slane %v6618, 7
      %v6621 = vrot.slane %v6620, 4
      %v6623 = vshrl.u32 %v6399, 16
      %v6625 = vrot.slane %v6623, 7
      %v6626 = vshll.u32 %v6399, 16
      %v6628 = vor.u32 %v6625, %v6626
      %v6629 = vsel %vm1001, %v6621, %v6628
      %v6630 = vrot.slane %v6625, 4
      %v6632 = vshrl.u32 %v6400, 16
      %v6634 = vrot.slane %v6632, 7
      %v6635 = vshll.u32 %v6400, 16
      %v6637 = vor.u32 %v6634, %v6635
      %v6638 = vsel %vm1001, %v6630, %v6637
      %v6640 = vshrl.u32 %v6401, 16
      %v6642 = vrot.slane %v6640, 7
      %v6643 = vrot.slane %v6642, 4
      %v6645 = vshrl.u32 %v6402, 16
      %v6647 = vrot.slane %v6645, 7
      %v6648 = vshll.u32 %v6402, 16
      %v6650 = vor.u32 %v6647, %v6648
      %v6651 = vsel %vm1001, %v6643, %v6650
      %v6652 = vrot.slane %v6647, 4
      %v6654 = vshrl.u32 %v6403, 16
      %v6656 = vrot.slane %v6654, 7
      %v6657 = vshll.u32 %v6403, 16
      %v6659 = vor.u32 %v6656, %v6657
      %v6660 = vsel %vm1001, %v6652, %v6659
      %v6662 = vshrl.u32 %v6404, 16
      %v6664 = vrot.slane %v6662, 7
      %v6665 = vrot.slane %v6664, 4
      %v6667 = vshrl.u32 %v6405, 16
      %v6669 = vrot.slane %v6667, 7
      %v6670 = vshll.u32 %v6405, 16
      %v6672 = vor.u32 %v6669, %v6670
      %v6673 = vsel %vm1001, %v6665, %v6672
      %v6674 = vrot.slane %v6669, 4
      %v6676 = vshrl.u32 %v6406, 16
      %v6678 = vrot.slane %v6676, 7
      %v6679 = vshll.u32 %v6406, 16
      %v6681 = vor.u32 %v6678, %v6679
      %v6682 = vsel %vm1001, %v6674, %v6681
      %v6684 = vshrl.u32 %v6407, 16
      %v6686 = vrot.slane %v6684, 7
      %v6687 = vrot.slane %v6686, 4
      %v6689 = vshrl.u32 %v6408, 16
      %v6691 = vrot.slane %v6689, 7
      %v6692 = vshll.u32 %v6408, 16
      %v6694 = vor.u32 %v6691, %v6692
      %v6695 = vsel %vm1001, %v6687, %v6694
      %v6696 = vrot.slane %v6691, 4
      %v6698 = vshrl.u32 %v6409, 16
      %v6700 = vrot.slane %v6698, 7
      %v6701 = vshll.u32 %v6409, 16
      %v6703 = vor.u32 %v6700, %v6701
      %v6704 = vsel %vm1001, %v6696, %v6703
      %v6706 = vshrl.u32 %v6410, 16
      %v6708 = vrot.slane %v6706, 7
      %v6709 = vrot.slane %v6708, 4
      %v6711 = vshrl.u32 %v6411, 16
      %v6713 = vrot.slane %v6711, 7
      %v6714 = vshll.u32 %v6411, 16
      %v6716 = vor.u32 %v6713, %v6714
      %v6717 = vsel %vm1001, %v6709, %v6716
      %v6718 = vrot.slane %v6713, 4
      %v6720 = vshrl.u32 %v6412, 16
      %v6722 = vrot.slane %v6720, 7
      %v6723 = vshll.u32 %v6412, 16
      %v6725 = vor.u32 %v6722, %v6723
      %v6726 = vsel %vm1001, %v6718, %v6725
      %v6728 = vshrl.u32 %v6413, 16
      %v6730 = vrot.slane %v6728, 7
      %v6731 = vrot.slane %v6730, 4
      %v6733 = vshrl.u32 %v6414, 16
      %v6735 = vrot.slane %v6733, 7
      %v6736 = vshll.u32 %v6414, 16
      %v6738 = vor.u32 %v6735, %v6736
      %v6739 = vsel %vm1001, %v6731, %v6738
      %v6740 = vrot.slane %v6735, 4
      %v6742 = vshrl.u32 %v6415, 16
      %v6744 = vrot.slane %v6742, 7
      %v6745 = vshll.u32 %v6415, 16
      %v6747 = vor.u32 %v6744, %v6745
      %v6748 = vsel %vm1001, %v6740, %v6747
      %v6750 = vshrl.u32 %v6416, 16
      %v6752 = vrot.slane %v6750, 7
      %v6753 = vrot.slane %v6752, 4
      %v6755 = vshrl.u32 %v6417, 16
      %v6757 = vrot.slane %v6755, 7
      %v6758 = vshll.u32 %v6417, 16
      %v6760 = vor.u32 %v6757, %v6758
      %v6761 = vsel %vm1001, %v6753, %v6760
      %v6762 = vrot.slane %v6757, 4
      %v6764 = vshrl.u32 %v6418, 16
      %v6766 = vrot.slane %v6764, 7
      %v6767 = vshll.u32 %v6418, 16
      %v6769 = vor.u32 %v6766, %v6767
      %v6770 = vsel %vm1001, %v6762, %v6769
      %v6771 = vld [vmem:[%s5] sm:$0x3]
      %s6772 = scalar_lea.vmem %s5, 2
      %v6773 = vld [vmem:[%s6772] sm:$0x3]
      %v6806 = vunpack.c.l.b16 %v6372
      %v6807 = vunpack.c.l.b16 %v6373
      %v6808 = vunpack.c.l.b16 %v6375
      %v6809 = vunpack.c.l.b16 %v6376
      %v6810 = vunpack.c.l.b16 %v6378
      %v6811 = vunpack.c.l.b16 %v6379
      %v6812 = vunpack.c.l.b16 %v6381
      %v6813 = vunpack.c.l.b16 %v6382
      %v6814 = vunpack.c.l.b16 %v6384
      %v6815 = vunpack.c.l.b16 %v6385
      %v6816 = vunpack.c.l.b16 %v6387
      %v6817 = vunpack.c.l.b16 %v6388
      %v6818 = vunpack.c.l.b16 %v6390
      %v6819 = vunpack.c.l.b16 %v6391
      %v6820 = vunpack.c.l.b16 %v6393
      %v6821 = vunpack.c.l.b16 %v6394
      %v6822 = vunpack.c.l.b16 %v6396
      %v6823 = vunpack.c.l.b16 %v6397
      %v6824 = vunpack.c.l.b16 %v6399
      %v6825 = vunpack.c.l.b16 %v6400
      %v6826 = vunpack.c.l.b16 %v6402
      %v6827 = vunpack.c.l.b16 %v6403
      %v6828 = vunpack.c.l.b16 %v6405
      %v6829 = vunpack.c.l.b16 %v6406
      %v6830 = vunpack.c.l.b16 %v6408
      %v6831 = vunpack.c.l.b16 %v6409
      %v6832 = vunpack.c.l.b16 %v6411
      %v6833 = vunpack.c.l.b16 %v6412
      %v6834 = vunpack.c.l.b16 %v6414
      %v6835 = vunpack.c.l.b16 %v6415
      %v6836 = vunpack.c.l.b16 %v6417
      %v6837 = vunpack.c.l.b16 %v6418
      %v6838 = vpack.c.b16 %v6807, %v6806
      %v6839 = vpack.c.b16 %v6809, %v6808
      %v6840 = vpack.c.b16 %v6811, %v6810
      %v6841 = vpack.c.b16 %v6813, %v6812
      %v6842 = vpack.c.b16 %v6815, %v6814
      %v6843 = vpack.c.b16 %v6817, %v6816
      %v6844 = vpack.c.b16 %v6819, %v6818
      %v6845 = vpack.c.b16 %v6821, %v6820
      %v6846 = vpack.c.b16 %v6823, %v6822
      %v6847 = vpack.c.b16 %v6825, %v6824
      %v6848 = vpack.c.b16 %v6827, %v6826
      %v6849 = vpack.c.b16 %v6829, %v6828
      %v6850 = vpack.c.b16 %v6831, %v6830
      %v6851 = vpack.c.b16 %v6833, %v6832
      %v6852 = vpack.c.b16 %v6835, %v6834
      %v6853 = vpack.c.b16 %v6837, %v6836
      %vm6854 = vcmask 31744
      %v6856 = vsel %vm6854, %v6838, 0
      %v6859 = vsel %vm6854, %v6839, 0
      %v6862 = vsel %vm6854, %v6840, 0
      %v6865 = vsel %vm6854, %v6841, 0
      %v6868 = vsel %vm6854, %v6842, 0
      %v6871 = vsel %vm6854, %v6843, 0
      %v6874 = vsel %vm6854, %v6844, 0
      %v6877 = vsel %vm6854, %v6845, 0
      %v6880 = vsel %vm6854, %v6846, 0
      %v6883 = vsel %vm6854, %v6847, 0
      %v6886 = vsel %vm6854, %v6848, 0
      %v6889 = vsel %vm6854, %v6849, 0
      %v6892 = vsel %vm6854, %v6850, 0
      %v6895 = vsel %vm6854, %v6851, 0
      %v6898 = vsel %vm6854, %v6852, 0
      %v6901 = vsel %vm6854, %v6853, 0
      %vm6903 = vcmask 1041408
      %v6905 = vsel %vm6903, %v6773, 0
      %6907 = vmatprep.subr.bf16.mxu0 0
      %6908 = vmatpush1.bf16.msra.mxu0 0
      %6909 = vmatprep.subr.bf16.mxu0 0
      %6910 = vmatpush1.bf16.msra.mxu0 0
      %6911 = vmatprep.subr.bf16.mxu0 0
      %6912 = vmatpush1.bf16.msra.mxu0 0
      %6913 = vmatprep.subr.bf16.mxu0 0
      %6914 = vmatpush1.bf16.msra.mxu0 0
      %6915 = vmatprep.subr.bf16.mxu0 0
      %6916 = vmatpush1.bf16.msra.mxu0 0
      %6917 = vmatprep.subr.bf16.mxu0 0
      %6918 = vmatpush1.bf16.msra.mxu0 0
      %6919 = vmatprep.subr.bf16.mxu0 0
      %6920 = vmatpush1.bf16.msra.mxu0 0
      %6921 = vmatprep.subr.bf16.mxu0 0
      %6922 = vmatpush1.bf16.msra.mxu0 %v6905
      %6923 = vmatprep.subr.bf16.mxu0 0
      %6924 = vmatpush2.bf16.msra.mxu0 0
      %6925 = vmatprep.subr.bf16.mxu0 0
      %6926 = vmatpush2.bf16.msra.mxu0 0
      %6927 = vmatprep.subr.bf16.mxu0 0
      %6928 = vmatpush2.bf16.msra.mxu0 0
      %6929 = vmatprep.subr.bf16.mxu0 0
      %6930 = vmatpush2.bf16.msra.mxu0 0
      %6931 = vmatprep.subr.bf16.mxu0 0
      %6932 = vmatpush2.bf16.msra.mxu0 0
      %6933 = vmatprep.subr.bf16.mxu0 0
      %6934 = vmatpush2.bf16.msra.mxu0 0
      %6935 = vmatprep.subr.bf16.mxu0 0
      %6936 = vmatpush2.bf16.msra.mxu0 0
      %6937 = vmatprep.subr.bf16.mxu0 0
      %6938 = vmatpush2.bf16.msra.mxu0 0
      %6939 = vmatprep.mubr.bf16.mxu0 0
      %6940 = vmatmul.mubr.bf16.gmra.mxu0 %v6856
      %v6941 = vpop.f32.mrf.mxu0
      %v6942 = vadd.f32 0.0, %v6941
      %v6943 = vpop.f32.mrf.mxu0
      %v6944 = vpop.f32.mrf.mxu0
      %v6945 = vadd.f32 0.0, %v6944
      %v6946 = vpop.f32.mrf.mxu0
      %6947 = vmatprep.mubr.bf16.mxu0 0
      %6948 = vmatmul.mubr.bf16.gmra.mxu0 %v6859
      %v6949 = vpop.f32.mrf.mxu0
      %v6950 = vadd.f32 0.0, %v6949
      %v6951 = vpop.f32.mrf.mxu0
      %v6952 = vpop.f32.mrf.mxu0
      %v6953 = vadd.f32 0.0, %v6952
      %v6954 = vpop.f32.mrf.mxu0
      %6955 = vmatprep.mubr.bf16.mxu0 0
      %6956 = vmatmul.mubr.bf16.gmra.mxu0 %v6862
      %v6957 = vpop.f32.mrf.mxu0
      %v6958 = vadd.f32 0.0, %v6957
      %v6959 = vpop.f32.mrf.mxu0
      %v6960 = vpop.f32.mrf.mxu0
      %v6961 = vadd.f32 0.0, %v6960
      %v6962 = vpop.f32.mrf.mxu0
      %6963 = vmatprep.mubr.bf16.mxu0 0
      %6964 = vmatmul.mubr.bf16.gmra.mxu0 %v6865
      %v6965 = vpop.f32.mrf.mxu0
      %v6966 = vadd.f32 0.0, %v6965
      %v6967 = vpop.f32.mrf.mxu0
      %v6968 = vpop.f32.mrf.mxu0
      %v6969 = vadd.f32 0.0, %v6968
      %v6970 = vpop.f32.mrf.mxu0
      %6971 = vmatprep.mubr.bf16.mxu0 0
      %6972 = vmatmul.mubr.bf16.gmra.mxu0 %v6868
      %v6973 = vpop.f32.mrf.mxu0
      %v6974 = vadd.f32 0.0, %v6973
      %v6975 = vpop.f32.mrf.mxu0
      %v6976 = vpop.f32.mrf.mxu0
      %v6977 = vadd.f32 0.0, %v6976
      %v6978 = vpop.f32.mrf.mxu0
      %6979 = vmatprep.mubr.bf16.mxu0 0
      %6980 = vmatmul.mubr.bf16.gmra.mxu0 %v6871
      %v6981 = vpop.f32.mrf.mxu0
      %v6982 = vadd.f32 0.0, %v6981
      %v6983 = vpop.f32.mrf.mxu0
      %v6984 = vpop.f32.mrf.mxu0
      %v6985 = vadd.f32 0.0, %v6984
      %v6986 = vpop.f32.mrf.mxu0
      %6987 = vmatprep.mubr.bf16.mxu0 0
      %6988 = vmatmul.mubr.bf16.gmra.mxu0 %v6874
      %v6989 = vpop.f32.mrf.mxu0
      %v6990 = vadd.f32 0.0, %v6989
      %v6991 = vpop.f32.mrf.mxu0
      %v6992 = vpop.f32.mrf.mxu0
      %v6993 = vadd.f32 0.0, %v6992
      %v6994 = vpop.f32.mrf.mxu0
      %6995 = vmatprep.mubr.bf16.mxu0 0
      %6996 = vmatmul.mubr.bf16.gmra.mxu0 %v6877
      %v6997 = vpop.f32.mrf.mxu0
      %v6998 = vadd.f32 0.0, %v6997
      %v6999 = vpop.f32.mrf.mxu0
      %v7000 = vpop.f32.mrf.mxu0
      %v7001 = vadd.f32 0.0, %v7000
      %v7002 = vpop.f32.mrf.mxu0
      %7003 = vmatprep.mubr.bf16.mxu0 0
      %7004 = vmatmul.mubr.bf16.gmra.mxu0 %v6880
      %v7005 = vpop.f32.mrf.mxu0
      %v7006 = vadd.f32 0.0, %v7005
      %v7007 = vpop.f32.mrf.mxu0
      %v7008 = vpop.f32.mrf.mxu0
      %v7009 = vadd.f32 0.0, %v7008
      %v7010 = vpop.f32.mrf.mxu0
      %7011 = vmatprep.mubr.bf16.mxu0 0
      %7012 = vmatmul.mubr.bf16.gmra.mxu0 %v6883
      %v7013 = vpop.f32.mrf.mxu0
      %v7014 = vadd.f32 0.0, %v7013
      %v7015 = vpop.f32.mrf.mxu0
      %v7016 = vpop.f32.mrf.mxu0
      %v7017 = vadd.f32 0.0, %v7016
      %v7018 = vpop.f32.mrf.mxu0
      %7019 = vmatprep.mubr.bf16.mxu0 0
      %7020 = vmatmul.mubr.bf16.gmra.mxu0 %v6886
      %v7021 = vpop.f32.mrf.mxu0
      %v7022 = vadd.f32 0.0, %v7021
      %v7023 = vpop.f32.mrf.mxu0
      %v7024 = vpop.f32.mrf.mxu0
      %v7025 = vadd.f32 0.0, %v7024
      %v7026 = vpop.f32.mrf.mxu0
      %7027 = vmatprep.mubr.bf16.mxu0 0
      %7028 = vmatmul.mubr.bf16.gmra.mxu0 %v6889
      %v7029 = vpop.f32.mrf.mxu0
      %v7030 = vadd.f32 0.0, %v7029
      %v7031 = vpop.f32.mrf.mxu0
      %v7032 = vpop.f32.mrf.mxu0
      %v7033 = vadd.f32 0.0, %v7032
      %v7034 = vpop.f32.mrf.mxu0
      %7035 = vmatprep.mubr.bf16.mxu0 0
      %7036 = vmatmul.mubr.bf16.gmra.mxu0 %v6892
      %v7037 = vpop.f32.mrf.mxu0
      %v7038 = vadd.f32 0.0, %v7037
      %v7039 = vpop.f32.mrf.mxu0
      %v7040 = vpop.f32.mrf.mxu0
      %v7041 = vadd.f32 0.0, %v7040
      %v7042 = vpop.f32.mrf.mxu0
      %7043 = vmatprep.mubr.bf16.mxu0 0
      %7044 = vmatmul.mubr.bf16.gmra.mxu0 %v6895
      %v7045 = vpop.f32.mrf.mxu0
      %v7046 = vadd.f32 0.0, %v7045
      %v7047 = vpop.f32.mrf.mxu0
      %v7048 = vpop.f32.mrf.mxu0
      %v7049 = vadd.f32 0.0, %v7048
      %v7050 = vpop.f32.mrf.mxu0
      %7051 = vmatprep.mubr.bf16.mxu0 0
      %7052 = vmatmul.mubr.bf16.gmra.mxu0 %v6898
      %v7053 = vpop.f32.mrf.mxu0
      %v7054 = vadd.f32 0.0, %v7053
      %v7055 = vpop.f32.mrf.mxu0
      %v7056 = vpop.f32.mrf.mxu0
      %v7057 = vadd.f32 0.0, %v7056
      %v7058 = vpop.f32.mrf.mxu0
      %7059 = vmatprep.mubr.bf16.mxu0 0
      %7060 = vmatmul.mubr.bf16.gmra.mxu0 %v6901
      %v7061 = vpop.f32.mrf.mxu0
      %v7062 = vadd.f32 0.0, %v7061
      %v7063 = vpop.f32.mrf.mxu0
      %v7064 = vpop.f32.mrf.mxu0
      %v7065 = vadd.f32 0.0, %v7064
      %v7066 = vpop.f32.mrf.mxu0
      %7067 = vdwg.mxu0
      %v7068 = vunpack.c.l.b16 %v6431
      %v7069 = vunpack.c.l.b16 %v6440
      %v7070 = vunpack.c.l.b16 %v6453
      %v7071 = vunpack.c.l.b16 %v6462
      %v7072 = vunpack.c.l.b16 %v6475
      %v7073 = vunpack.c.l.b16 %v6484
      %v7074 = vunpack.c.l.b16 %v6497
      %v7075 = vunpack.c.l.b16 %v6506
      %v7076 = vunpack.c.l.b16 %v6519
      %v7077 = vunpack.c.l.b16 %v6528
      %v7078 = vunpack.c.l.b16 %v6541
      %v7079 = vunpack.c.l.b16 %v6550
      %v7080 = vunpack.c.l.b16 %v6563
      %v7081 = vunpack.c.l.b16 %v6572
      %v7082 = vunpack.c.l.b16 %v6585
      %v7083 = vunpack.c.l.b16 %v6594
      %v7084 = vunpack.c.l.b16 %v6607
      %v7085 = vunpack.c.l.b16 %v6616
      %v7086 = vunpack.c.l.b16 %v6629
      %v7087 = vunpack.c.l.b16 %v6638
      %v7088 = vunpack.c.l.b16 %v6651
      %v7089 = vunpack.c.l.b16 %v6660
      %v7090 = vunpack.c.l.b16 %v6673
      %v7091 = vunpack.c.l.b16 %v6682
      %v7092 = vunpack.c.l.b16 %v6695
      %v7093 = vunpack.c.l.b16 %v6704
      %v7094 = vunpack.c.l.b16 %v6717
      %v7095 = vunpack.c.l.b16 %v6726
      %v7096 = vunpack.c.l.b16 %v6739
      %v7097 = vunpack.c.l.b16 %v6748
      %v7098 = vunpack.c.l.b16 %v6761
      %v7099 = vunpack.c.l.b16 %v6770
      %v7100 = vpack.c.b16 %v7069, %v7068
      %v7101 = vpack.c.b16 %v7071, %v7070
      %v7102 = vpack.c.b16 %v7073, %v7072
      %v7103 = vpack.c.b16 %v7075, %v7074
      %v7104 = vpack.c.b16 %v7077, %v7076
      %v7105 = vpack.c.b16 %v7079, %v7078
      %v7106 = vpack.c.b16 %v7081, %v7080
      %v7107 = vpack.c.b16 %v7083, %v7082
      %v7108 = vpack.c.b16 %v7085, %v7084
      %v7109 = vpack.c.b16 %v7087, %v7086
      %v7110 = vpack.c.b16 %v7089, %v7088
      %v7111 = vpack.c.b16 %v7091, %v7090
      %v7112 = vpack.c.b16 %v7093, %v7092
      %v7113 = vpack.c.b16 %v7095, %v7094
      %v7114 = vpack.c.b16 %v7097, %v7096
      %v7115 = vpack.c.b16 %v7099, %v7098
      %v7117 = vsel %vm6854, %v7100, 0
      %v7120 = vsel %vm6854, %v7101, 0
      %v7123 = vsel %vm6854, %v7102, 0
      %v7126 = vsel %vm6854, %v7103, 0
      %v7129 = vsel %vm6854, %v7104, 0
      %v7132 = vsel %vm6854, %v7105, 0
      %v7135 = vsel %vm6854, %v7106, 0
      %v7138 = vsel %vm6854, %v7107, 0
      %v7141 = vsel %vm6854, %v7108, 0
      %v7144 = vsel %vm6854, %v7109, 0
      %v7147 = vsel %vm6854, %v7110, 0
      %v7150 = vsel %vm6854, %v7111, 0
      %v7153 = vsel %vm6854, %v7112, 0
      %v7156 = vsel %vm6854, %v7113, 0
      %v7159 = vsel %vm6854, %v7114, 0
      %v7162 = vsel %vm6854, %v7115, 0
      %v7165 = vsel %vm6903, %v6771, 0
      %7167 = vmatprep.subr.bf16.mxu0 0
      %7168 = vmatpush1.bf16.msra.mxu0 0
      %7169 = vmatprep.subr.bf16.mxu0 0
      %7170 = vmatpush1.bf16.msra.mxu0 0
      %7171 = vmatprep.subr.bf16.mxu0 0
      %7172 = vmatpush1.bf16.msra.mxu0 0
      %7173 = vmatprep.subr.bf16.mxu0 0
      %7174 = vmatpush1.bf16.msra.mxu0 0
      %7175 = vmatprep.subr.bf16.mxu0 0
      %7176 = vmatpush1.bf16.msra.mxu0 0
      %7177 = vmatprep.subr.bf16.mxu0 0
      %7178 = vmatpush1.bf16.msra.mxu0 0
      %7179 = vmatprep.subr.bf16.mxu0 0
      %7180 = vmatpush1.bf16.msra.mxu0 0
      %7181 = vmatprep.subr.bf16.mxu0 0
      %7182 = vmatpush1.bf16.msra.mxu0 %v7165
      %7183 = vmatprep.subr.bf16.mxu0 0
      %7184 = vmatpush2.bf16.msra.mxu0 0
      %7185 = vmatprep.subr.bf16.mxu0 0
      %7186 = vmatpush2.bf16.msra.mxu0 0
      %7187 = vmatprep.subr.bf16.mxu0 0
      %7188 = vmatpush2.bf16.msra.mxu0 0
      %7189 = vmatprep.subr.bf16.mxu0 0
      %7190 = vmatpush2.bf16.msra.mxu0 0
      %7191 = vmatprep.subr.bf16.mxu0 0
      %7192 = vmatpush2.bf16.msra.mxu0 0
      %7193 = vmatprep.subr.bf16.mxu0 0
      %7194 = vmatpush2.bf16.msra.mxu0 0
      %7195 = vmatprep.subr.bf16.mxu0 0
      %7196 = vmatpush2.bf16.msra.mxu0 0
      %7197 = vmatprep.subr.bf16.mxu0 0
      %7198 = vmatpush2.bf16.msra.mxu0 0
      %7199 = vmatprep.mubr.bf16.mxu0 0
      %7200 = vmatmul.mubr.bf16.gmra.mxu0 %v7117
      %v7201 = vpop.f32.mrf.mxu0
      %v7202 = vadd.f32 %v6942, %v7201
      %v7203 = vpop.f32.mrf.mxu0
      %v7204 = vpop.f32.mrf.mxu0
      %v7205 = vadd.f32 %v6945, %v7204
      %v7206 = vpop.f32.mrf.mxu0
      %7207 = vmatprep.mubr.bf16.mxu0 0
      %7208 = vmatmul.mubr.bf16.gmra.mxu0 %v7120
      %v7209 = vpop.f32.mrf.mxu0
      %v7210 = vadd.f32 %v6950, %v7209
      %v7211 = vpop.f32.mrf.mxu0
      %v7212 = vpop.f32.mrf.mxu0
      %v7213 = vadd.f32 %v6953, %v7212
      %v7214 = vpop.f32.mrf.mxu0
      %7215 = vmatprep.mubr.bf16.mxu0 0
      %7216 = vmatmul.mubr.bf16.gmra.mxu0 %v7123
      %v7217 = vpop.f32.mrf.mxu0
      %v7218 = vadd.f32 %v6958, %v7217
      %v7219 = vpop.f32.mrf.mxu0
      %v7220 = vpop.f32.mrf.mxu0
      %v7221 = vadd.f32 %v6961, %v7220
      %v7222 = vpop.f32.mrf.mxu0
      %7223 = vmatprep.mubr.bf16.mxu0 0
      %7224 = vmatmul.mubr.bf16.gmra.mxu0 %v7126
      %v7225 = vpop.f32.mrf.mxu0
      %v7226 = vadd.f32 %v6966, %v7225
      %v7227 = vpop.f32.mrf.mxu0
      %v7228 = vpop.f32.mrf.mxu0
      %v7229 = vadd.f32 %v6969, %v7228
      %v7230 = vpop.f32.mrf.mxu0
      %7231 = vmatprep.mubr.bf16.mxu0 0
      %7232 = vmatmul.mubr.bf16.gmra.mxu0 %v7129
      %v7233 = vpop.f32.mrf.mxu0
      %v7234 = vadd.f32 %v6974, %v7233
      %v7235 = vpop.f32.mrf.mxu0
      %v7236 = vpop.f32.mrf.mxu0
      %v7237 = vadd.f32 %v6977, %v7236
      %v7238 = vpop.f32.mrf.mxu0
      %7239 = vmatprep.mubr.bf16.mxu0 0
      %7240 = vmatmul.mubr.bf16.gmra.mxu0 %v7132
      %v7241 = vpop.f32.mrf.mxu0
      %v7242 = vadd.f32 %v6982, %v7241
      %v7243 = vpop.f32.mrf.mxu0
      %v7244 = vpop.f32.mrf.mxu0
      %v7245 = vadd.f32 %v6985, %v7244
      %v7246 = vpop.f32.mrf.mxu0
      %7247 = vmatprep.mubr.bf16.mxu0 0
      %7248 = vmatmul.mubr.bf16.gmra.mxu0 %v7135
      %v7249 = vpop.f32.mrf.mxu0
      %v7250 = vadd.f32 %v6990, %v7249
      %v7251 = vpop.f32.mrf.mxu0
      %v7252 = vpop.f32.mrf.mxu0
      %v7253 = vadd.f32 %v6993, %v7252
      %v7254 = vpop.f32.mrf.mxu0
      %7255 = vmatprep.mubr.bf16.mxu0 0
      %7256 = vmatmul.mubr.bf16.gmra.mxu0 %v7138
      %v7257 = vpop.f32.mrf.mxu0
      %v7258 = vadd.f32 %v6998, %v7257
      %v7259 = vpop.f32.mrf.mxu0
      %v7260 = vpop.f32.mrf.mxu0
      %v7261 = vadd.f32 %v7001, %v7260
      %v7262 = vpop.f32.mrf.mxu0
      %7263 = vmatprep.mubr.bf16.mxu0 0
      %7264 = vmatmul.mubr.bf16.gmra.mxu0 %v7141
      %v7265 = vpop.f32.mrf.mxu0
      %v7266 = vadd.f32 %v7006, %v7265
      %v7267 = vpop.f32.mrf.mxu0
      %v7268 = vpop.f32.mrf.mxu0
      %v7269 = vadd.f32 %v7009, %v7268
      %v7270 = vpop.f32.mrf.mxu0
      %7271 = vmatprep.mubr.bf16.mxu0 0
      %7272 = vmatmul.mubr.bf16.gmra.mxu0 %v7144
      %v7273 = vpop.f32.mrf.mxu0
      %v7274 = vadd.f32 %v7014, %v7273
      %v7275 = vpop.f32.mrf.mxu0
      %v7276 = vpop.f32.mrf.mxu0
      %v7277 = vadd.f32 %v7017, %v7276
      %v7278 = vpop.f32.mrf.mxu0
      %7279 = vmatprep.mubr.bf16.mxu0 0
      %7280 = vmatmul.mubr.bf16.gmra.mxu0 %v7147
      %v7281 = vpop.f32.mrf.mxu0
      %v7282 = vadd.f32 %v7022, %v7281
      %v7283 = vpop.f32.mrf.mxu0
      %v7284 = vpop.f32.mrf.mxu0
      %v7285 = vadd.f32 %v7025, %v7284
      %v7286 = vpop.f32.mrf.mxu0
      %7287 = vmatprep.mubr.bf16.mxu0 0
      %7288 = vmatmul.mubr.bf16.gmra.mxu0 %v7150
      %v7289 = vpop.f32.mrf.mxu0
      %v7290 = vadd.f32 %v7030, %v7289
      %v7291 = vpop.f32.mrf.mxu0
      %v7292 = vpop.f32.mrf.mxu0
      %v7293 = vadd.f32 %v7033, %v7292
      %v7294 = vpop.f32.mrf.mxu0
      %7295 = vmatprep.mubr.bf16.mxu0 0
      %7296 = vmatmul.mubr.bf16.gmra.mxu0 %v7153
      %v7297 = vpop.f32.mrf.mxu0
      %v7298 = vadd.f32 %v7038, %v7297
      %v7299 = vpop.f32.mrf.mxu0
      %v7300 = vpop.f32.mrf.mxu0
      %v7301 = vadd.f32 %v7041, %v7300
      %v7302 = vpop.f32.mrf.mxu0
      %7303 = vmatprep.mubr.bf16.mxu0 0
      %7304 = vmatmul.mubr.bf16.gmra.mxu0 %v7156
      %v7305 = vpop.f32.mrf.mxu0
      %v7306 = vadd.f32 %v7046, %v7305
      %v7307 = vpop.f32.mrf.mxu0
      %v7308 = vpop.f32.mrf.mxu0
      %v7309 = vadd.f32 %v7049, %v7308
      %v7310 = vpop.f32.mrf.mxu0
      %7311 = vmatprep.mubr.bf16.mxu0 0
      %7312 = vmatmul.mubr.bf16.gmra.mxu0 %v7159
      %v7313 = vpop.f32.mrf.mxu0
      %v7314 = vadd.f32 %v7054, %v7313
      %v7315 = vpop.f32.mrf.mxu0
      %v7316 = vpop.f32.mrf.mxu0
      %v7317 = vadd.f32 %v7057, %v7316
      %v7318 = vpop.f32.mrf.mxu0
      %7319 = vmatprep.mubr.bf16.mxu0 0
      %7320 = vmatmul.mubr.bf16.gmra.mxu0 %v7162
      %v7321 = vpop.f32.mrf.mxu0
      %v7322 = vadd.f32 %v7062, %v7321
      %v7323 = vpop.f32.mrf.mxu0
      %v7324 = vpop.f32.mrf.mxu0
      %v7325 = vadd.f32 %v7065, %v7324
      %v7326 = vpop.f32.mrf.mxu0
      %7327 = vdwg.mxu0
      %v7328 = vld [vmem:[#allocation3 + $0x8] sm:$0xf]
      %v7329 = vld [vmem:[#allocation3 + $0xc] sm:$0xf]
      %v7330 = vld [vmem:[#allocation3 + $0x10] sm:$0x1]
      %v7331 = vld [vmem:[#allocation3 + $0x1c] sm:$0xf]
      %v7332 = vld [vmem:[#allocation3 + $0x20] sm:$0xf]
      %v7333 = vld [vmem:[#allocation3 + $0x24] sm:$0x1]
      %v7334 = vld [vmem:[#allocation3 + $0x30] sm:$0xf]
      %v7335 = vld [vmem:[#allocation3 + $0x34] sm:$0xf]
      %v7336 = vld [vmem:[#allocation3 + $0x38] sm:$0x1]
      %v7337 = vld [vmem:[#allocation3 + $0x44] sm:$0xf]
      %v7338 = vld [vmem:[#allocation3 + $0x48] sm:$0xf]
      %v7339 = vld [vmem:[#allocation3 + $0x4c] sm:$0x1]
      %v7340 = vld [vmem:[#allocation3 + $0x58] sm:$0xf]
      %v7341 = vld [vmem:[#allocation3 + $0x5c] sm:$0xf]
      %v7342 = vld [vmem:[#allocation3 + $0x60] sm:$0x1]
      %v7343 = vld [vmem:[#allocation3 + $0x6c] sm:$0xf]
      %v7344 = vld [vmem:[#allocation3 + $0x70] sm:$0xf]
      %v7345 = vld [vmem:[#allocation3 + $0x74] sm:$0x1]
      %v7346 = vld [vmem:[#allocation3 + $0x80] sm:$0xf]
      %v7347 = vld [vmem:[#allocation3 + $0x84] sm:$0xf]
      %v7348 = vld [vmem:[#allocation3 + $0x88] sm:$0x1]
      %v7349 = vld [vmem:[#allocation3 + $0x94] sm:$0xf]
      %v7350 = vld [vmem:[#allocation3 + $0x98] sm:$0xf]
      %v7351 = vld [vmem:[#allocation3 + $0x9c] sm:$0x1]
      %v7352 = vld [vmem:[#allocation3 + $0xa8] sm:$0xf]
      %v7353 = vld [vmem:[#allocation3 + $0xac] sm:$0xf]
      %v7354 = vld [vmem:[#allocation3 + $0xb0] sm:$0x1]
      %v7355 = vld [vmem:[#allocation3 + $0xbc] sm:$0xf]
      %v7356 = vld [vmem:[#allocation3 + $0xc0] sm:$0xf]
      %v7357 = vld [vmem:[#allocation3 + $0xc4] sm:$0x1]
      %v7358 = vld [vmem:[#allocation3 + $0xd0] sm:$0xf]
      %v7359 = vld [vmem:[#allocation3 + $0xd4] sm:$0xf]
      %v7360 = vld [vmem:[#allocation3 + $0xd8] sm:$0x1]
      %v7361 = vld [vmem:[#allocation3 + $0xe4] sm:$0xf]
      %v7362 = vld [vmem:[#allocation3 + $0xe8] sm:$0xf]
      %v7363 = vld [vmem:[#allocation3 + $0xec] sm:$0x1]
      %v7364 = vld [vmem:[#allocation3 + $0xf8] sm:$0xf]
      %v7365 = vld [vmem:[#allocation3 + $0xfc] sm:$0xf]
      %v7366 = vld [vmem:[#allocation3 + $0x100] sm:$0x1]
      %v7367 = vld [vmem:[#allocation3 + $0x10c] sm:$0xf]
      %v7368 = vld [vmem:[#allocation3 + $0x110] sm:$0xf]
      %v7369 = vld [vmem:[#allocation3 + $0x114] sm:$0x1]
      %v7370 = vld [vmem:[#allocation3 + $0x120] sm:$0xf]
      %v7371 = vld [vmem:[#allocation3 + $0x124] sm:$0xf]
      %v7372 = vld [vmem:[#allocation3 + $0x128] sm:$0x1]
      %v7373 = vld [vmem:[#allocation3 + $0x134] sm:$0xf]
      %v7374 = vld [vmem:[#allocation3 + $0x138] sm:$0xf]
      %v7375 = vld [vmem:[#allocation3 + $0x13c] sm:$0x1]
      %v7377 = vshrl.u32 %v7328, 16
      %v7379 = vrot.slane %v7377, 4
      %v7380 = vshll.u32 %v7328, 16
      %v7382 = vrot.slane %v7380, 5
      %v7383 = vor.u32 %v7379, %v7382
      %v7384 = vrot.slane %v7383, 4
      %v7386 = vshll.u32 %v7329, 16
      %v7388 = vrot.slane %v7386, 5
      %v7389 = vsel %vm1961, %v7384, %v7388
      %v7390 = vshrl.u32 %v7329, 16
      %v7392 = vrot.slane %v7390, 4
      %v7393 = vor.u32 %v7392, %v7388
      %v7394 = vrot.slane %v7393, 4
      %v7396 = vshll.u32 %v7330, 16
      %v7398 = vrot.slane %v7396, 5
      %v7399 = vsel %vm1961, %v7394, %v7398
      %v7401 = vshrl.u32 %v7331, 16
      %v7403 = vrot.slane %v7401, 4
      %v7404 = vshll.u32 %v7331, 16
      %v7406 = vrot.slane %v7404, 5
      %v7407 = vor.u32 %v7403, %v7406
      %v7408 = vrot.slane %v7407, 4
      %v7410 = vshll.u32 %v7332, 16
      %v7412 = vrot.slane %v7410, 5
      %v7413 = vsel %vm1961, %v7408, %v7412
      %v7414 = vshrl.u32 %v7332, 16
      %v7416 = vrot.slane %v7414, 4
      %v7417 = vor.u32 %v7416, %v7412
      %v7418 = vrot.slane %v7417, 4
      %v7420 = vshll.u32 %v7333, 16
      %v7422 = vrot.slane %v7420, 5
      %v7423 = vsel %vm1961, %v7418, %v7422
      %v7425 = vshrl.u32 %v7334, 16
      %v7427 = vrot.slane %v7425, 4
      %v7428 = vshll.u32 %v7334, 16
      %v7430 = vrot.slane %v7428, 5
      %v7431 = vor.u32 %v7427, %v7430
      %v7432 = vrot.slane %v7431, 4
      %v7434 = vshll.u32 %v7335, 16
      %v7436 = vrot.slane %v7434, 5
      %v7437 = vsel %vm1961, %v7432, %v7436
      %v7438 = vshrl.u32 %v7335, 16
      %v7440 = vrot.slane %v7438, 4
      %v7441 = vor.u32 %v7440, %v7436
      %v7442 = vrot.slane %v7441, 4
      %v7444 = vshll.u32 %v7336, 16
      %v7446 = vrot.slane %v7444, 5
      %v7447 = vsel %vm1961, %v7442, %v7446
      %v7449 = vshrl.u32 %v7337, 16
      %v7451 = vrot.slane %v7449, 4
      %v7452 = vshll.u32 %v7337, 16
      %v7454 = vrot.slane %v7452, 5
      %v7455 = vor.u32 %v7451, %v7454
      %v7456 = vrot.slane %v7455, 4
      %v7458 = vshll.u32 %v7338, 16
      %v7460 = vrot.slane %v7458, 5
      %v7461 = vsel %vm1961, %v7456, %v7460
      %v7462 = vshrl.u32 %v7338, 16
      %v7464 = vrot.slane %v7462, 4
      %v7465 = vor.u32 %v7464, %v7460
      %v7466 = vrot.slane %v7465, 4
      %v7468 = vshll.u32 %v7339, 16
      %v7470 = vrot.slane %v7468, 5
      %v7471 = vsel %vm1961, %v7466, %v7470
      %v7473 = vshrl.u32 %v7340, 16
      %v7475 = vrot.slane %v7473, 4
      %v7476 = vshll.u32 %v7340, 16
      %v7478 = vrot.slane %v7476, 5
      %v7479 = vor.u32 %v7475, %v7478
      %v7480 = vrot.slane %v7479, 4
      %v7482 = vshll.u32 %v7341, 16
      %v7484 = vrot.slane %v7482, 5
      %v7485 = vsel %vm1961, %v7480, %v7484
      %v7486 = vshrl.u32 %v7341, 16
      %v7488 = vrot.slane %v7486, 4
      %v7489 = vor.u32 %v7488, %v7484
      %v7490 = vrot.slane %v7489, 4
      %v7492 = vshll.u32 %v7342, 16
      %v7494 = vrot.slane %v7492, 5
      %v7495 = vsel %vm1961, %v7490, %v7494
      %v7497 = vshrl.u32 %v7343, 16
      %v7499 = vrot.slane %v7497, 4
      %v7500 = vshll.u32 %v7343, 16
      %v7502 = vrot.slane %v7500, 5
      %v7503 = vor.u32 %v7499, %v7502
      %v7504 = vrot.slane %v7503, 4
      %v7506 = vshll.u32 %v7344, 16
      %v7508 = vrot.slane %v7506, 5
      %v7509 = vsel %vm1961, %v7504, %v7508
      %v7510 = vshrl.u32 %v7344, 16
      %v7512 = vrot.slane %v7510, 4
      %v7513 = vor.u32 %v7512, %v7508
      %v7514 = vrot.slane %v7513, 4
      %v7516 = vshll.u32 %v7345, 16
      %v7518 = vrot.slane %v7516, 5
      %v7519 = vsel %vm1961, %v7514, %v7518
      %v7521 = vshrl.u32 %v7346, 16
      %v7523 = vrot.slane %v7521, 4
      %v7524 = vshll.u32 %v7346, 16
      %v7526 = vrot.slane %v7524, 5
      %v7527 = vor.u32 %v7523, %v7526
      %v7528 = vrot.slane %v7527, 4
      %v7530 = vshll.u32 %v7347, 16
      %v7532 = vrot.slane %v7530, 5
      %v7533 = vsel %vm1961, %v7528, %v7532
      %v7534 = vshrl.u32 %v7347, 16
      %v7536 = vrot.slane %v7534, 4
      %v7537 = vor.u32 %v7536, %v7532
      %v7538 = vrot.slane %v7537, 4
      %v7540 = vshll.u32 %v7348, 16
      %v7542 = vrot.slane %v7540, 5
      %v7543 = vsel %vm1961, %v7538, %v7542
      %v7545 = vshrl.u32 %v7349, 16
      %v7547 = vrot.slane %v7545, 4
      %v7548 = vshll.u32 %v7349, 16
      %v7550 = vrot.slane %v7548, 5
      %v7551 = vor.u32 %v7547, %v7550
      %v7552 = vrot.slane %v7551, 4
      %v7554 = vshll.u32 %v7350, 16
      %v7556 = vrot.slane %v7554, 5
      %v7557 = vsel %vm1961, %v7552, %v7556
      %v7558 = vshrl.u32 %v7350, 16
      %v7560 = vrot.slane %v7558, 4
      %v7561 = vor.u32 %v7560, %v7556
      %v7562 = vrot.slane %v7561, 4
      %v7564 = vshll.u32 %v7351, 16
      %v7566 = vrot.slane %v7564, 5
      %v7567 = vsel %vm1961, %v7562, %v7566
      %v7569 = vshrl.u32 %v7352, 16
      %v7571 = vrot.slane %v7569, 4
      %v7572 = vshll.u32 %v7352, 16
      %v7574 = vrot.slane %v7572, 5
      %v7575 = vor.u32 %v7571, %v7574
      %v7576 = vrot.slane %v7575, 4
      %v7578 = vshll.u32 %v7353, 16
      %v7580 = vrot.slane %v7578, 5
      %v7581 = vsel %vm1961, %v7576, %v7580
      %v7582 = vshrl.u32 %v7353, 16
      %v7584 = vrot.slane %v7582, 4
      %v7585 = vor.u32 %v7584, %v7580
      %v7586 = vrot.slane %v7585, 4
      %v7588 = vshll.u32 %v7354, 16
      %v7590 = vrot.slane %v7588, 5
      %v7591 = vsel %vm1961, %v7586, %v7590
      %v7593 = vshrl.u32 %v7355, 16
      %v7595 = vrot.slane %v7593, 4
      %v7596 = vshll.u32 %v7355, 16
      %v7598 = vrot.slane %v7596, 5
      %v7599 = vor.u32 %v7595, %v7598
      %v7600 = vrot.slane %v7599, 4
      %v7602 = vshll.u32 %v7356, 16
      %v7604 = vrot.slane %v7602, 5
      %v7605 = vsel %vm1961, %v7600, %v7604
      %v7606 = vshrl.u32 %v7356, 16
      %v7608 = vrot.slane %v7606, 4
      %v7609 = vor.u32 %v7608, %v7604
      %v7610 = vrot.slane %v7609, 4
      %v7612 = vshll.u32 %v7357, 16
      %v7614 = vrot.slane %v7612, 5
      %v7615 = vsel %vm1961, %v7610, %v7614
      %v7617 = vshrl.u32 %v7358, 16
      %v7619 = vrot.slane %v7617, 4
      %v7620 = vshll.u32 %v7358, 16
      %v7622 = vrot.slane %v7620, 5
      %v7623 = vor.u32 %v7619, %v7622
      %v7624 = vrot.slane %v7623, 4
      %v7626 = vshll.u32 %v7359, 16
      %v7628 = vrot.slane %v7626, 5
      %v7629 = vsel %vm1961, %v7624, %v7628
      %v7630 = vshrl.u32 %v7359, 16
      %v7632 = vrot.slane %v7630, 4
      %v7633 = vor.u32 %v7632, %v7628
      %v7634 = vrot.slane %v7633, 4
      %v7636 = vshll.u32 %v7360, 16
      %v7638 = vrot.slane %v7636, 5
      %v7639 = vsel %vm1961, %v7634, %v7638
      %v7641 = vshrl.u32 %v7361, 16
      %v7643 = vrot.slane %v7641, 4
      %v7644 = vshll.u32 %v7361, 16
      %v7646 = vrot.slane %v7644, 5
      %v7647 = vor.u32 %v7643, %v7646
      %v7648 = vrot.slane %v7647, 4
      %v7650 = vshll.u32 %v7362, 16
      %v7652 = vrot.slane %v7650, 5
      %v7653 = vsel %vm1961, %v7648, %v7652
      %v7654 = vshrl.u32 %v7362, 16
      %v7656 = vrot.slane %v7654, 4
      %v7657 = vor.u32 %v7656, %v7652
      %v7658 = vrot.slane %v7657, 4
      %v7660 = vshll.u32 %v7363, 16
      %v7662 = vrot.slane %v7660, 5
      %v7663 = vsel %vm1961, %v7658, %v7662
      %v7665 = vshrl.u32 %v7364, 16
      %v7667 = vrot.slane %v7665, 4
      %v7668 = vshll.u32 %v7364, 16
      %v7670 = vrot.slane %v7668, 5
      %v7671 = vor.u32 %v7667, %v7670
      %v7672 = vrot.slane %v7671, 4
      %v7674 = vshll.u32 %v7365, 16
      %v7676 = vrot.slane %v7674, 5
      %v7677 = vsel %vm1961, %v7672, %v7676
      %v7678 = vshrl.u32 %v7365, 16
      %v7680 = vrot.slane %v7678, 4
      %v7681 = vor.u32 %v7680, %v7676
      %v7682 = vrot.slane %v7681, 4
      %v7684 = vshll.u32 %v7366, 16
      %v7686 = vrot.slane %v7684, 5
      %v7687 = vsel %vm1961, %v7682, %v7686
      %v7689 = vshrl.u32 %v7367, 16
      %v7691 = vrot.slane %v7689, 4
      %v7692 = vshll.u32 %v7367, 16
      %v7694 = vrot.slane %v7692, 5
      %v7695 = vor.u32 %v7691, %v7694
      %v7696 = vrot.slane %v7695, 4
      %v7698 = vshll.u32 %v7368, 16
      %v7700 = vrot.slane %v7698, 5
      %v7701 = vsel %vm1961, %v7696, %v7700
      %v7702 = vshrl.u32 %v7368, 16
      %v7704 = vrot.slane %v7702, 4
      %v7705 = vor.u32 %v7704, %v7700
      %v7706 = vrot.slane %v7705, 4
      %v7708 = vshll.u32 %v7369, 16
      %v7710 = vrot.slane %v7708, 5
      %v7711 = vsel %vm1961, %v7706, %v7710
      %v7713 = vshrl.u32 %v7370, 16
      %v7715 = vrot.slane %v7713, 4
      %v7716 = vshll.u32 %v7370, 16
      %v7718 = vrot.slane %v7716, 5
      %v7719 = vor.u32 %v7715, %v7718
      %v7720 = vrot.slane %v7719, 4
      %v7722 = vshll.u32 %v7371, 16
      %v7724 = vrot.slane %v7722, 5
      %v7725 = vsel %vm1961, %v7720, %v7724
      %v7726 = vshrl.u32 %v7371, 16
      %v7728 = vrot.slane %v7726, 4
      %v7729 = vor.u32 %v7728, %v7724
      %v7730 = vrot.slane %v7729, 4
      %v7732 = vshll.u32 %v7372, 16
      %v7734 = vrot.slane %v7732, 5
      %v7735 = vsel %vm1961, %v7730, %v7734
      %v7737 = vshrl.u32 %v7373, 16
      %v7739 = vrot.slane %v7737, 4
      %v7740 = vshll.u32 %v7373, 16
      %v7742 = vrot.slane %v7740, 5
      %v7743 = vor.u32 %v7739, %v7742
      %v7744 = vrot.slane %v7743, 4
      %v7746 = vshll.u32 %v7374, 16
      %v7748 = vrot.slane %v7746, 5
      %v7749 = vsel %vm1961, %v7744, %v7748
      %v7750 = vshrl.u32 %v7374, 16
      %v7752 = vrot.slane %v7750, 4
      %v7753 = vor.u32 %v7752, %v7748
      %v7754 = vrot.slane %v7753, 4
      %v7756 = vshll.u32 %v7375, 16
      %v7758 = vrot.slane %v7756, 5
      %v7759 = vsel %vm1961, %v7754, %v7758
      %s7760 = scalar_lea.vmem %s5, 4
      %v7761 = vld [vmem:[%s7760] sm:$0x3]
      %v7762 = vunpack.c.l.b16 %v7389
      %v7763 = vunpack.c.l.b16 %v7399
      %v7764 = vunpack.c.l.b16 %v7413
      %v7765 = vunpack.c.l.b16 %v7423
      %v7766 = vunpack.c.l.b16 %v7437
      %v7767 = vunpack.c.l.b16 %v7447
      %v7768 = vunpack.c.l.b16 %v7461
      %v7769 = vunpack.c.l.b16 %v7471
      %v7770 = vunpack.c.l.b16 %v7485
      %v7771 = vunpack.c.l.b16 %v7495
      %v7772 = vunpack.c.l.b16 %v7509
      %v7773 = vunpack.c.l.b16 %v7519
      %v7774 = vunpack.c.l.b16 %v7533
      %v7775 = vunpack.c.l.b16 %v7543
      %v7776 = vunpack.c.l.b16 %v7557
      %v7777 = vunpack.c.l.b16 %v7567
      %v7778 = vunpack.c.l.b16 %v7581
      %v7779 = vunpack.c.l.b16 %v7591
      %v7780 = vunpack.c.l.b16 %v7605
      %v7781 = vunpack.c.l.b16 %v7615
      %v7782 = vunpack.c.l.b16 %v7629
      %v7783 = vunpack.c.l.b16 %v7639
      %v7784 = vunpack.c.l.b16 %v7653
      %v7785 = vunpack.c.l.b16 %v7663
      %v7786 = vunpack.c.l.b16 %v7677
      %v7787 = vunpack.c.l.b16 %v7687
      %v7788 = vunpack.c.l.b16 %v7701
      %v7789 = vunpack.c.l.b16 %v7711
      %v7790 = vunpack.c.l.b16 %v7725
      %v7791 = vunpack.c.l.b16 %v7735
      %v7792 = vunpack.c.l.b16 %v7749
      %v7793 = vunpack.c.l.b16 %v7759
      %v7794 = vpack.c.b16 %v7763, %v7762
      %v7795 = vpack.c.b16 %v7765, %v7764
      %v7796 = vpack.c.b16 %v7767, %v7766
      %v7797 = vpack.c.b16 %v7769, %v7768
      %v7798 = vpack.c.b16 %v7771, %v7770
      %v7799 = vpack.c.b16 %v7773, %v7772
      %v7800 = vpack.c.b16 %v7775, %v7774
      %v7801 = vpack.c.b16 %v7777, %v7776
      %v7802 = vpack.c.b16 %v7779, %v7778
      %v7803 = vpack.c.b16 %v7781, %v7780
      %v7804 = vpack.c.b16 %v7783, %v7782
      %v7805 = vpack.c.b16 %v7785, %v7784
      %v7806 = vpack.c.b16 %v7787, %v7786
      %v7807 = vpack.c.b16 %v7789, %v7788
      %v7808 = vpack.c.b16 %v7791, %v7790
      %v7809 = vpack.c.b16 %v7793, %v7792
      %v7811 = vsel %vm6854, %v7794, 0
      %v7814 = vsel %vm6854, %v7795, 0
      %v7817 = vsel %vm6854, %v7796, 0
      %v7820 = vsel %vm6854, %v7797, 0
      %v7823 = vsel %vm6854, %v7798, 0
      %v7826 = vsel %vm6854, %v7799, 0
      %v7829 = vsel %vm6854, %v7800, 0
      %v7832 = vsel %vm6854, %v7801, 0
      %v7835 = vsel %vm6854, %v7802, 0
      %v7838 = vsel %vm6854, %v7803, 0
      %v7841 = vsel %vm6854, %v7804, 0
      %v7844 = vsel %vm6854, %v7805, 0
      %v7847 = vsel %vm6854, %v7806, 0
      %v7850 = vsel %vm6854, %v7807, 0
      %v7853 = vsel %vm6854, %v7808, 0
      %v7856 = vsel %vm6854, %v7809, 0
      %v7859 = vsel %vm6903, %v7761, 0
      %7861 = vmatprep.subr.bf16.mxu0 0
      %7862 = vmatpush1.bf16.msra.mxu0 0
      %7863 = vmatprep.subr.bf16.mxu0 0
      %7864 = vmatpush1.bf16.msra.mxu0 0
      %7865 = vmatprep.subr.bf16.mxu0 0
      %7866 = vmatpush1.bf16.msra.mxu0 0
      %7867 = vmatprep.subr.bf16.mxu0 0
      %7868 = vmatpush1.bf16.msra.mxu0 0
      %7869 = vmatprep.subr.bf16.mxu0 0
      %7870 = vmatpush1.bf16.msra.mxu0 0
      %7871 = vmatprep.subr.bf16.mxu0 0
      %7872 = vmatpush1.bf16.msra.mxu0 0
      %7873 = vmatprep.subr.bf16.mxu0 0
      %7874 = vmatpush1.bf16.msra.mxu0 0
      %7875 = vmatprep.subr.bf16.mxu0 0
      %7876 = vmatpush1.bf16.msra.mxu0 %v7859
      %7877 = vmatprep.subr.bf16.mxu0 0
      %7878 = vmatpush2.bf16.msra.mxu0 0
      %7879 = vmatprep.subr.bf16.mxu0 0
      %7880 = vmatpush2.bf16.msra.mxu0 0
      %7881 = vmatprep.subr.bf16.mxu0 0
      %7882 = vmatpush2.bf16.msra.mxu0 0
      %7883 = vmatprep.subr.bf16.mxu0 0
      %7884 = vmatpush2.bf16.msra.mxu0 0
      %7885 = vmatprep.subr.bf16.mxu0 0
      %7886 = vmatpush2.bf16.msra.mxu0 0
      %7887 = vmatprep.subr.bf16.mxu0 0
      %7888 = vmatpush2.bf16.msra.mxu0 0
      %7889 = vmatprep.subr.bf16.mxu0 0
      %7890 = vmatpush2.bf16.msra.mxu0 0
      %7891 = vmatprep.subr.bf16.mxu0 0
      %7892 = vmatpush2.bf16.msra.mxu0 0
      %7893 = vmatprep.mubr.bf16.mxu0 0
      %7894 = vmatmul.mubr.bf16.gmra.mxu0 %v7811
      %v7895 = vpop.f32.mrf.mxu0
      %v7896 = vadd.f32 0.0, %v7895
      %v7897 = vpop.f32.mrf.mxu0
      %v7898 = vpop.f32.mrf.mxu0
      %v7899 = vadd.f32 0.0, %v7898
      %v7900 = vpop.f32.mrf.mxu0
      %7901 = vmatprep.mubr.bf16.mxu0 0
      %7902 = vmatmul.mubr.bf16.gmra.mxu0 %v7814
      %v7903 = vpop.f32.mrf.mxu0
      %v7904 = vadd.f32 0.0, %v7903
      %v7905 = vpop.f32.mrf.mxu0
      %v7906 = vpop.f32.mrf.mxu0
      %v7907 = vadd.f32 0.0, %v7906
      %v7908 = vpop.f32.mrf.mxu0
      %7909 = vmatprep.mubr.bf16.mxu0 0
      %7910 = vmatmul.mubr.bf16.gmra.mxu0 %v7817
      %v7911 = vpop.f32.mrf.mxu0
      %v7912 = vadd.f32 0.0, %v7911
      %v7913 = vpop.f32.mrf.mxu0
      %v7914 = vpop.f32.mrf.mxu0
      %v7915 = vadd.f32 0.0, %v7914
      %v7916 = vpop.f32.mrf.mxu0
      %7917 = vmatprep.mubr.bf16.mxu0 0
      %7918 = vmatmul.mubr.bf16.gmra.mxu0 %v7820
      %v7919 = vpop.f32.mrf.mxu0
      %v7920 = vadd.f32 0.0, %v7919
      %v7921 = vpop.f32.mrf.mxu0
      %v7922 = vpop.f32.mrf.mxu0
      %v7923 = vadd.f32 0.0, %v7922
      %v7924 = vpop.f32.mrf.mxu0
      %7925 = vmatprep.mubr.bf16.mxu0 0
      %7926 = vmatmul.mubr.bf16.gmra.mxu0 %v7823
      %v7927 = vpop.f32.mrf.mxu0
      %v7928 = vadd.f32 0.0, %v7927
      %v7929 = vpop.f32.mrf.mxu0
      %v7930 = vpop.f32.mrf.mxu0
      %v7931 = vadd.f32 0.0, %v7930
      %v7932 = vpop.f32.mrf.mxu0
      %7933 = vmatprep.mubr.bf16.mxu0 0
      %7934 = vmatmul.mubr.bf16.gmra.mxu0 %v7826
      %v7935 = vpop.f32.mrf.mxu0
      %v7936 = vadd.f32 0.0, %v7935
      %v7937 = vpop.f32.mrf.mxu0
      %v7938 = vpop.f32.mrf.mxu0
      %v7939 = vadd.f32 0.0, %v7938
      %v7940 = vpop.f32.mrf.mxu0
      %7941 = vmatprep.mubr.bf16.mxu0 0
      %7942 = vmatmul.mubr.bf16.gmra.mxu0 %v7829
      %v7943 = vpop.f32.mrf.mxu0
      %v7944 = vadd.f32 0.0, %v7943
      %v7945 = vpop.f32.mrf.mxu0
      %v7946 = vpop.f32.mrf.mxu0
      %v7947 = vadd.f32 0.0, %v7946
      %v7948 = vpop.f32.mrf.mxu0
      %7949 = vmatprep.mubr.bf16.mxu0 0
      %7950 = vmatmul.mubr.bf16.gmra.mxu0 %v7832
      %v7951 = vpop.f32.mrf.mxu0
      %v7952 = vadd.f32 0.0, %v7951
      %v7953 = vpop.f32.mrf.mxu0
      %v7954 = vpop.f32.mrf.mxu0
      %v7955 = vadd.f32 0.0, %v7954
      %v7956 = vpop.f32.mrf.mxu0
      %7957 = vmatprep.mubr.bf16.mxu0 0
      %7958 = vmatmul.mubr.bf16.gmra.mxu0 %v7835
      %v7959 = vpop.f32.mrf.mxu0
      %v7960 = vadd.f32 0.0, %v7959
      %v7961 = vpop.f32.mrf.mxu0
      %v7962 = vpop.f32.mrf.mxu0
      %v7963 = vadd.f32 0.0, %v7962
      %v7964 = vpop.f32.mrf.mxu0
      %7965 = vmatprep.mubr.bf16.mxu0 0
      %7966 = vmatmul.mubr.bf16.gmra.mxu0 %v7838
      %v7967 = vpop.f32.mrf.mxu0
      %v7968 = vadd.f32 0.0, %v7967
      %v7969 = vpop.f32.mrf.mxu0
      %v7970 = vpop.f32.mrf.mxu0
      %v7971 = vadd.f32 0.0, %v7970
      %v7972 = vpop.f32.mrf.mxu0
      %7973 = vmatprep.mubr.bf16.mxu0 0
      %7974 = vmatmul.mubr.bf16.gmra.mxu0 %v7841
      %v7975 = vpop.f32.mrf.mxu0
      %v7976 = vadd.f32 0.0, %v7975
      %v7977 = vpop.f32.mrf.mxu0
      %v7978 = vpop.f32.mrf.mxu0
      %v7979 = vadd.f32 0.0, %v7978
      %v7980 = vpop.f32.mrf.mxu0
      %7981 = vmatprep.mubr.bf16.mxu0 0
      %7982 = vmatmul.mubr.bf16.gmra.mxu0 %v7844
      %v7983 = vpop.f32.mrf.mxu0
      %v7984 = vadd.f32 0.0, %v7983
      %v7985 = vpop.f32.mrf.mxu0
      %v7986 = vpop.f32.mrf.mxu0
      %v7987 = vadd.f32 0.0, %v7986
      %v7988 = vpop.f32.mrf.mxu0
      %7989 = vmatprep.mubr.bf16.mxu0 0
      %7990 = vmatmul.mubr.bf16.gmra.mxu0 %v7847
      %v7991 = vpop.f32.mrf.mxu0
      %v7992 = vadd.f32 0.0, %v7991
      %v7993 = vpop.f32.mrf.mxu0
      %v7994 = vpop.f32.mrf.mxu0
      %v7995 = vadd.f32 0.0, %v7994
      %v7996 = vpop.f32.mrf.mxu0
      %7997 = vmatprep.mubr.bf16.mxu0 0
      %7998 = vmatmul.mubr.bf16.gmra.mxu0 %v7850
      %v7999 = vpop.f32.mrf.mxu0
      %v8000 = vadd.f32 0.0, %v7999
      %v8001 = vpop.f32.mrf.mxu0
      %v8002 = vpop.f32.mrf.mxu0
      %v8003 = vadd.f32 0.0, %v8002
      %v8004 = vpop.f32.mrf.mxu0
      %8005 = vmatprep.mubr.bf16.mxu0 0
      %8006 = vmatmul.mubr.bf16.gmra.mxu0 %v7853
      %v8007 = vpop.f32.mrf.mxu0
      %v8008 = vadd.f32 0.0, %v8007
      %v8009 = vpop.f32.mrf.mxu0
      %v8010 = vpop.f32.mrf.mxu0
      %v8011 = vadd.f32 0.0, %v8010
      %v8012 = vpop.f32.mrf.mxu0
      %8013 = vmatprep.mubr.bf16.mxu0 0
      %8014 = vmatmul.mubr.bf16.gmra.mxu0 %v7856
      %v8015 = vpop.f32.mrf.mxu0
      %v8016 = vadd.f32 0.0, %v8015
      %v8017 = vpop.f32.mrf.mxu0
      %v8018 = vpop.f32.mrf.mxu0
      %v8019 = vadd.f32 0.0, %v8018
      %v8020 = vpop.f32.mrf.mxu0
      %8021 = vdwg.mxu0
      %v8022 = vadd.f32 %v7202, %v7896
      %v8023 = vadd.f32 %v7205, %v7899
      %v8024 = vadd.f32 %v7210, %v7904
      %v8025 = vadd.f32 %v7213, %v7907
      %v8026 = vadd.f32 %v7218, %v7912
      %v8027 = vadd.f32 %v7221, %v7915
      %v8028 = vadd.f32 %v7226, %v7920
      %v8029 = vadd.f32 %v7229, %v7923
      %v8030 = vadd.f32 %v7234, %v7928
      %v8031 = vadd.f32 %v7237, %v7931
      %v8032 = vadd.f32 %v7242, %v7936
      %v8033 = vadd.f32 %v7245, %v7939
      %v8034 = vadd.f32 %v7250, %v7944
      %v8035 = vadd.f32 %v7253, %v7947
      %v8036 = vadd.f32 %v7258, %v7952
      %v8037 = vadd.f32 %v7261, %v7955
      %v8038 = vadd.f32 %v7266, %v7960
      %v8039 = vadd.f32 %v7269, %v7963
      %v8040 = vadd.f32 %v7274, %v7968
      %v8041 = vadd.f32 %v7277, %v7971
      %v8042 = vadd.f32 %v7282, %v7976
      %v8043 = vadd.f32 %v7285, %v7979
      %v8044 = vadd.f32 %v7290, %v7984
      %v8045 = vadd.f32 %v7293, %v7987
      %v8046 = vadd.f32 %v7298, %v7992
      %v8047 = vadd.f32 %v7301, %v7995
      %v8048 = vadd.f32 %v7306, %v8000
      %v8049 = vadd.f32 %v7309, %v8003
      %v8050 = vadd.f32 %v7314, %v8008
      %v8051 = vadd.f32 %v7317, %v8011
      %v8052 = vadd.f32 %v7322, %v8016
      %v8053 = vadd.f32 %v7325, %v8019
      %v8054 = vadd.f32 %v8022, 0.0
      %v8055 = vadd.f32 %v8023, 0.0
      %v8056 = vadd.f32 %v8024, 0.0
      %v8057 = vadd.f32 %v8025, 0.0
      %v8058 = vadd.f32 %v8026, 0.0
      %v8059 = vadd.f32 %v8027, 0.0
      %v8060 = vadd.f32 %v8028, 0.0
      %v8061 = vadd.f32 %v8029, 0.0
      %v8062 = vadd.f32 %v8030, 0.0
      %v8063 = vadd.f32 %v8031, 0.0
      %v8064 = vadd.f32 %v8032, 0.0
      %v8065 = vadd.f32 %v8033, 0.0
      %v8066 = vadd.f32 %v8034, 0.0
      %v8067 = vadd.f32 %v8035, 0.0
      %v8068 = vadd.f32 %v8036, 0.0
      %v8069 = vadd.f32 %v8037, 0.0
      %v8070 = vadd.f32 %v8038, 0.0
      %v8071 = vadd.f32 %v8039, 0.0
      %v8072 = vadd.f32 %v8040, 0.0
      %v8073 = vadd.f32 %v8041, 0.0
      %v8074 = vadd.f32 %v8042, 0.0
      %v8075 = vadd.f32 %v8043, 0.0
      %v8076 = vadd.f32 %v8044, 0.0
      %v8077 = vadd.f32 %v8045, 0.0
      %v8078 = vadd.f32 %v8046, 0.0
      %v8079 = vadd.f32 %v8047, 0.0
      %v8080 = vadd.f32 %v8048, 0.0
      %v8081 = vadd.f32 %v8049, 0.0
      %v8082 = vadd.f32 %v8050, 0.0
      %v8083 = vadd.f32 %v8051, 0.0
      %v8084 = vadd.f32 %v8052, 0.0
      %v8085 = vadd.f32 %v8053, 0.0
      %v8086 = vld [vmem:[%s470 + $0x4] sm:$0x8]
      %v8087 = vld [vmem:[%s470 + $0x8] sm:$0xf]
      %v8088 = vld [vmem:[%s470 + $0xc] sm:$0xf]
      %v8089 = vld [vmem:[%s470 + $0x18] sm:$0x8]
      %v8090 = vld [vmem:[%s470 + $0x1c] sm:$0xf]
      %v8091 = vld [vmem:[%s470 + $0x20] sm:$0xf]
      %v8092 = vld [vmem:[%s470 + $0x2c] sm:$0x8]
      %v8093 = vld [vmem:[%s470 + $0x30] sm:$0xf]
      %v8094 = vld [vmem:[%s470 + $0x34] sm:$0xf]
      %v8095 = vld [vmem:[%s470 + $0x40] sm:$0x8]
      %v8096 = vld [vmem:[%s470 + $0x44] sm:$0xf]
      %v8097 = vld [vmem:[%s470 + $0x48] sm:$0xf]
      %v8098 = vld [vmem:[%s470 + $0x54] sm:$0x8]
      %v8099 = vld [vmem:[%s470 + $0x58] sm:$0xf]
      %v8100 = vld [vmem:[%s470 + $0x5c] sm:$0xf]
      %v8101 = vld [vmem:[%s470 + $0x68] sm:$0x8]
      %v8102 = vld [vmem:[%s470 + $0x6c] sm:$0xf]
      %v8103 = vld [vmem:[%s470 + $0x70] sm:$0xf]
      %v8104 = vld [vmem:[%s470 + $0x7c] sm:$0x8]
      %v8105 = vld [vmem:[%s470 + $0x80] sm:$0xf]
      %v8106 = vld [vmem:[%s470 + $0x84] sm:$0xf]
      %v8107 = vld [vmem:[%s470 + $0x90] sm:$0x8]
      %v8108 = vld [vmem:[%s470 + $0x94] sm:$0xf]
      %v8109 = vld [vmem:[%s470 + $0x98] sm:$0xf]
      %v8110 = vld [vmem:[%s470 + $0xa4] sm:$0x8]
      %v8111 = vld [vmem:[%s470 + $0xa8] sm:$0xf]
      %v8112 = vld [vmem:[%s470 + $0xac] sm:$0xf]
      %v8113 = vld [vmem:[%s470 + $0xb8] sm:$0x8]
      %v8114 = vld [vmem:[%s470 + $0xbc] sm:$0xf]
      %v8115 = vld [vmem:[%s470 + $0xc0] sm:$0xf]
      %v8116 = vld [vmem:[%s470 + $0xcc] sm:$0x8]
      %v8117 = vld [vmem:[%s470 + $0xd0] sm:$0xf]
      %v8118 = vld [vmem:[%s470 + $0xd4] sm:$0xf]
      %v8119 = vld [vmem:[%s470 + $0xe0] sm:$0x8]
      %v8120 = vld [vmem:[%s470 + $0xe4] sm:$0xf]
      %v8121 = vld [vmem:[%s470 + $0xe8] sm:$0xf]
      %v8122 = vld [vmem:[%s470 + $0xf4] sm:$0x8]
      %v8123 = vld [vmem:[%s470 + $0xf8] sm:$0xf]
      %v8124 = vld [vmem:[%s470 + $0xfc] sm:$0xf]
      %v8125 = vld [vmem:[%s470 + $0x108] sm:$0x8]
      %v8126 = vld [vmem:[%s470 + $0x10c] sm:$0xf]
      %v8127 = vld [vmem:[%s470 + $0x110] sm:$0xf]
      %v8128 = vld [vmem:[%s470 + $0x11c] sm:$0x8]
      %v8129 = vld [vmem:[%s470 + $0x120] sm:$0xf]
      %v8130 = vld [vmem:[%s470 + $0x124] sm:$0xf]
      %v8131 = vld [vmem:[%s470 + $0x130] sm:$0x8]
      %v8132 = vld [vmem:[%s470 + $0x134] sm:$0xf]
      %v8133 = vld [vmem:[%s470 + $0x138] sm:$0xf]
      %v8135 = vshrl.u32 %v8086, 16
      %v8137 = vrot.slane %v8135, 7
      %v8138 = vrot.slane %v8137, 4
      %v8140 = vshrl.u32 %v8087, 16
      %v8142 = vrot.slane %v8140, 7
      %v8143 = vshll.u32 %v8087, 16
      %v8145 = vor.u32 %v8142, %v8143
      %v8146 = vsel %vm1001, %v8138, %v8145
      %v8147 = vrot.slane %v8142, 4
      %v8149 = vshrl.u32 %v8088, 16
      %v8151 = vrot.slane %v8149, 7
      %v8152 = vshll.u32 %v8088, 16
      %v8154 = vor.u32 %v8151, %v8152
      %v8155 = vsel %vm1001, %v8147, %v8154
      %v8157 = vshrl.u32 %v8089, 16
      %v8159 = vrot.slane %v8157, 7
      %v8160 = vrot.slane %v8159, 4
      %v8162 = vshrl.u32 %v8090, 16
      %v8164 = vrot.slane %v8162, 7
      %v8165 = vshll.u32 %v8090, 16
      %v8167 = vor.u32 %v8164, %v8165
      %v8168 = vsel %vm1001, %v8160, %v8167
      %v8169 = vrot.slane %v8164, 4
      %v8171 = vshrl.u32 %v8091, 16
      %v8173 = vrot.slane %v8171, 7
      %v8174 = vshll.u32 %v8091, 16
      %v8176 = vor.u32 %v8173, %v8174
      %v8177 = vsel %vm1001, %v8169, %v8176
      %v8179 = vshrl.u32 %v8092, 16
      %v8181 = vrot.slane %v8179, 7
      %v8182 = vrot.slane %v8181, 4
      %v8184 = vshrl.u32 %v8093, 16
      %v8186 = vrot.slane %v8184, 7
      %v8187 = vshll.u32 %v8093, 16
      %v8189 = vor.u32 %v8186, %v8187
      %v8190 = vsel %vm1001, %v8182, %v8189
      %v8191 = vrot.slane %v8186, 4
      %v8193 = vshrl.u32 %v8094, 16
      %v8195 = vrot.slane %v8193, 7
      %v8196 = vshll.u32 %v8094, 16
      %v8198 = vor.u32 %v8195, %v8196
      %v8199 = vsel %vm1001, %v8191, %v8198
      %v8201 = vshrl.u32 %v8095, 16
      %v8203 = vrot.slane %v8201, 7
      %v8204 = vrot.slane %v8203, 4
      %v8206 = vshrl.u32 %v8096, 16
      %v8208 = vrot.slane %v8206, 7
      %v8209 = vshll.u32 %v8096, 16
      %v8211 = vor.u32 %v8208, %v8209
      %v8212 = vsel %vm1001, %v8204, %v8211
      %v8213 = vrot.slane %v8208, 4
      %v8215 = vshrl.u32 %v8097, 16
      %v8217 = vrot.slane %v8215, 7
      %v8218 = vshll.u32 %v8097, 16
      %v8220 = vor.u32 %v8217, %v8218
      %v8221 = vsel %vm1001, %v8213, %v8220
      %v8223 = vshrl.u32 %v8098, 16
      %v8225 = vrot.slane %v8223, 7
      %v8226 = vrot.slane %v8225, 4
      %v8228 = vshrl.u32 %v8099, 16
      %v8230 = vrot.slane %v8228, 7
      %v8231 = vshll.u32 %v8099, 16
      %v8233 = vor.u32 %v8230, %v8231
      %v8234 = vsel %vm1001, %v8226, %v8233
      %v8235 = vrot.slane %v8230, 4
      %v8237 = vshrl.u32 %v8100, 16
      %v8239 = vrot.slane %v8237, 7
      %v8240 = vshll.u32 %v8100, 16
      %v8242 = vor.u32 %v8239, %v8240
      %v8243 = vsel %vm1001, %v8235, %v8242
      %v8245 = vshrl.u32 %v8101, 16
      %v8247 = vrot.slane %v8245, 7
      %v8248 = vrot.slane %v8247, 4
      %v8250 = vshrl.u32 %v8102, 16
      %v8252 = vrot.slane %v8250, 7
      %v8253 = vshll.u32 %v8102, 16
      %v8255 = vor.u32 %v8252, %v8253
      %v8256 = vsel %vm1001, %v8248, %v8255
      %v8257 = vrot.slane %v8252, 4
      %v8259 = vshrl.u32 %v8103, 16
      %v8261 = vrot.slane %v8259, 7
      %v8262 = vshll.u32 %v8103, 16
      %v8264 = vor.u32 %v8261, %v8262
      %v8265 = vsel %vm1001, %v8257, %v8264
      %v8267 = vshrl.u32 %v8104, 16
      %v8269 = vrot.slane %v8267, 7
      %v8270 = vrot.slane %v8269, 4
      %v8272 = vshrl.u32 %v8105, 16
      %v8274 = vrot.slane %v8272, 7
      %v8275 = vshll.u32 %v8105, 16
      %v8277 = vor.u32 %v8274, %v8275
      %v8278 = vsel %vm1001, %v8270, %v8277
      %v8279 = vrot.slane %v8274, 4
      %v8281 = vshrl.u32 %v8106, 16
      %v8283 = vrot.slane %v8281, 7
      %v8284 = vshll.u32 %v8106, 16
      %v8286 = vor.u32 %v8283, %v8284
      %v8287 = vsel %vm1001, %v8279, %v8286
      %v8289 = vshrl.u32 %v8107, 16
      %v8291 = vrot.slane %v8289, 7
      %v8292 = vrot.slane %v8291, 4
      %v8294 = vshrl.u32 %v8108, 16
      %v8296 = vrot.slane %v8294, 7
      %v8297 = vshll.u32 %v8108, 16
      %v8299 = vor.u32 %v8296, %v8297
      %v8300 = vsel %vm1001, %v8292, %v8299
      %v8301 = vrot.slane %v8296, 4
      %v8303 = vshrl.u32 %v8109, 16
      %v8305 = vrot.slane %v8303, 7
      %v8306 = vshll.u32 %v8109, 16
      %v8308 = vor.u32 %v8305, %v8306
      %v8309 = vsel %vm1001, %v8301, %v8308
      %v8311 = vshrl.u32 %v8110, 16
      %v8313 = vrot.slane %v8311, 7
      %v8314 = vrot.slane %v8313, 4
      %v8316 = vshrl.u32 %v8111, 16
      %v8318 = vrot.slane %v8316, 7
      %v8319 = vshll.u32 %v8111, 16
      %v8321 = vor.u32 %v8318, %v8319
      %v8322 = vsel %vm1001, %v8314, %v8321
      %v8323 = vrot.slane %v8318, 4
      %v8325 = vshrl.u32 %v8112, 16
      %v8327 = vrot.slane %v8325, 7
      %v8328 = vshll.u32 %v8112, 16
      %v8330 = vor.u32 %v8327, %v8328
      %v8331 = vsel %vm1001, %v8323, %v8330
      %v8333 = vshrl.u32 %v8113, 16
      %v8335 = vrot.slane %v8333, 7
      %v8336 = vrot.slane %v8335, 4
      %v8338 = vshrl.u32 %v8114, 16
      %v8340 = vrot.slane %v8338, 7
      %v8341 = vshll.u32 %v8114, 16
      %v8343 = vor.u32 %v8340, %v8341
      %v8344 = vsel %vm1001, %v8336, %v8343
      %v8345 = vrot.slane %v8340, 4
      %v8347 = vshrl.u32 %v8115, 16
      %v8349 = vrot.slane %v8347, 7
      %v8350 = vshll.u32 %v8115, 16
      %v8352 = vor.u32 %v8349, %v8350
      %v8353 = vsel %vm1001, %v8345, %v8352
      %v8355 = vshrl.u32 %v8116, 16
      %v8357 = vrot.slane %v8355, 7
      %v8358 = vrot.slane %v8357, 4
      %v8360 = vshrl.u32 %v8117, 16
      %v8362 = vrot.slane %v8360, 7
      %v8363 = vshll.u32 %v8117, 16
      %v8365 = vor.u32 %v8362, %v8363
      %v8366 = vsel %vm1001, %v8358, %v8365
      %v8367 = vrot.slane %v8362, 4
      %v8369 = vshrl.u32 %v8118, 16
      %v8371 = vrot.slane %v8369, 7
      %v8372 = vshll.u32 %v8118, 16
      %v8374 = vor.u32 %v8371, %v8372
      %v8375 = vsel %vm1001, %v8367, %v8374
      %v8377 = vshrl.u32 %v8119, 16
      %v8379 = vrot.slane %v8377, 7
      %v8380 = vrot.slane %v8379, 4
      %v8382 = vshrl.u32 %v8120, 16
      %v8384 = vrot.slane %v8382, 7
      %v8385 = vshll.u32 %v8120, 16
      %v8387 = vor.u32 %v8384, %v8385
      %v8388 = vsel %vm1001, %v8380, %v8387
      %v8389 = vrot.slane %v8384, 4
      %v8391 = vshrl.u32 %v8121, 16
      %v8393 = vrot.slane %v8391, 7
      %v8394 = vshll.u32 %v8121, 16
      %v8396 = vor.u32 %v8393, %v8394
      %v8397 = vsel %vm1001, %v8389, %v8396
      %v8399 = vshrl.u32 %v8122, 16
      %v8401 = vrot.slane %v8399, 7
      %v8402 = vrot.slane %v8401, 4
      %v8404 = vshrl.u32 %v8123, 16
      %v8406 = vrot.slane %v8404, 7
      %v8407 = vshll.u32 %v8123, 16
      %v8409 = vor.u32 %v8406, %v8407
      %v8410 = vsel %vm1001, %v8402, %v8409
      %v8411 = vrot.slane %v8406, 4
      %v8413 = vshrl.u32 %v8124, 16
      %v8415 = vrot.slane %v8413, 7
      %v8416 = vshll.u32 %v8124, 16
      %v8418 = vor.u32 %v8415, %v8416
      %v8419 = vsel %vm1001, %v8411, %v8418
      %v8421 = vshrl.u32 %v8125, 16
      %v8423 = vrot.slane %v8421, 7
      %v8424 = vrot.slane %v8423, 4
      %v8426 = vshrl.u32 %v8126, 16
      %v8428 = vrot.slane %v8426, 7
      %v8429 = vshll.u32 %v8126, 16
      %v8431 = vor.u32 %v8428, %v8429
      %v8432 = vsel %vm1001, %v8424, %v8431
      %v8433 = vrot.slane %v8428, 4
      %v8435 = vshrl.u32 %v8127, 16
      %v8437 = vrot.slane %v8435, 7
      %v8438 = vshll.u32 %v8127, 16
      %v8440 = vor.u32 %v8437, %v8438
      %v8441 = vsel %vm1001, %v8433, %v8440
      %v8443 = vshrl.u32 %v8128, 16
      %v8445 = vrot.slane %v8443, 7
      %v8446 = vrot.slane %v8445, 4
      %v8448 = vshrl.u32 %v8129, 16
      %v8450 = vrot.slane %v8448, 7
      %v8451 = vshll.u32 %v8129, 16
      %v8453 = vor.u32 %v8450, %v8451
      %v8454 = vsel %vm1001, %v8446, %v8453
      %v8455 = vrot.slane %v8450, 4
      %v8457 = vshrl.u32 %v8130, 16
      %v8459 = vrot.slane %v8457, 7
      %v8460 = vshll.u32 %v8130, 16
      %v8462 = vor.u32 %v8459, %v8460
      %v8463 = vsel %vm1001, %v8455, %v8462
      %v8465 = vshrl.u32 %v8131, 16
      %v8467 = vrot.slane %v8465, 7
      %v8468 = vrot.slane %v8467, 4
      %v8470 = vshrl.u32 %v8132, 16
      %v8472 = vrot.slane %v8470, 7
      %v8473 = vshll.u32 %v8132, 16
      %v8475 = vor.u32 %v8472, %v8473
      %v8476 = vsel %vm1001, %v8468, %v8475
      %v8477 = vrot.slane %v8472, 4
      %v8479 = vshrl.u32 %v8133, 16
      %v8481 = vrot.slane %v8479, 7
      %v8482 = vshll.u32 %v8133, 16
      %v8484 = vor.u32 %v8481, %v8482
      %v8485 = vsel %vm1001, %v8477, %v8484
      %s8486 = scalar_lea.vmem %s5, 6
      %v8487 = vld [vmem:[%s8486] sm:$0x3]
      %s8488 = scalar_lea.vmem %s5, 8
      %v8489 = vld [vmem:[%s8488] sm:$0x3]
      %v8522 = vunpack.c.l.b16 %v8087
      %v8523 = vunpack.c.l.b16 %v8088
      %v8524 = vunpack.c.l.b16 %v8090
      %v8525 = vunpack.c.l.b16 %v8091
      %v8526 = vunpack.c.l.b16 %v8093
      %v8527 = vunpack.c.l.b16 %v8094
      %v8528 = vunpack.c.l.b16 %v8096
      %v8529 = vunpack.c.l.b16 %v8097
      %v8530 = vunpack.c.l.b16 %v8099
      %v8531 = vunpack.c.l.b16 %v8100
      %v8532 = vunpack.c.l.b16 %v8102
      %v8533 = vunpack.c.l.b16 %v8103
      %v8534 = vunpack.c.l.b16 %v8105
      %v8535 = vunpack.c.l.b16 %v8106
      %v8536 = vunpack.c.l.b16 %v8108
      %v8537 = vunpack.c.l.b16 %v8109
      %v8538 = vunpack.c.l.b16 %v8111
      %v8539 = vunpack.c.l.b16 %v8112
      %v8540 = vunpack.c.l.b16 %v8114
      %v8541 = vunpack.c.l.b16 %v8115
      %v8542 = vunpack.c.l.b16 %v8117
      %v8543 = vunpack.c.l.b16 %v8118
      %v8544 = vunpack.c.l.b16 %v8120
      %v8545 = vunpack.c.l.b16 %v8121
      %v8546 = vunpack.c.l.b16 %v8123
      %v8547 = vunpack.c.l.b16 %v8124
      %v8548 = vunpack.c.l.b16 %v8126
      %v8549 = vunpack.c.l.b16 %v8127
      %v8550 = vunpack.c.l.b16 %v8129
      %v8551 = vunpack.c.l.b16 %v8130
      %v8552 = vunpack.c.l.b16 %v8132
      %v8553 = vunpack.c.l.b16 %v8133
      %v8554 = vpack.c.b16 %v8523, %v8522
      %v8555 = vpack.c.b16 %v8525, %v8524
      %v8556 = vpack.c.b16 %v8527, %v8526
      %v8557 = vpack.c.b16 %v8529, %v8528
      %v8558 = vpack.c.b16 %v8531, %v8530
      %v8559 = vpack.c.b16 %v8533, %v8532
      %v8560 = vpack.c.b16 %v8535, %v8534
      %v8561 = vpack.c.b16 %v8537, %v8536
      %v8562 = vpack.c.b16 %v8539, %v8538
      %v8563 = vpack.c.b16 %v8541, %v8540
      %v8564 = vpack.c.b16 %v8543, %v8542
      %v8565 = vpack.c.b16 %v8545, %v8544
      %v8566 = vpack.c.b16 %v8547, %v8546
      %v8567 = vpack.c.b16 %v8549, %v8548
      %v8568 = vpack.c.b16 %v8551, %v8550
      %v8569 = vpack.c.b16 %v8553, %v8552
      %v8571 = vsel %vm6854, %v8554, 0
      %v8574 = vsel %vm6854, %v8555, 0
      %v8577 = vsel %vm6854, %v8556, 0
      %v8580 = vsel %vm6854, %v8557, 0
      %v8583 = vsel %vm6854, %v8558, 0
      %v8586 = vsel %vm6854, %v8559, 0
      %v8589 = vsel %vm6854, %v8560, 0
      %v8592 = vsel %vm6854, %v8561, 0
      %v8595 = vsel %vm6854, %v8562, 0
      %v8598 = vsel %vm6854, %v8563, 0
      %v8601 = vsel %vm6854, %v8564, 0
      %v8604 = vsel %vm6854, %v8565, 0
      %v8607 = vsel %vm6854, %v8566, 0
      %v8610 = vsel %vm6854, %v8567, 0
      %v8613 = vsel %vm6854, %v8568, 0
      %v8616 = vsel %vm6854, %v8569, 0
      %v8619 = vsel %vm6903, %v8489, 0
      %8621 = vmatprep.subr.bf16.mxu0 0
      %8622 = vmatpush1.bf16.msra.mxu0 0
      %8623 = vmatprep.subr.bf16.mxu0 0
      %8624 = vmatpush1.bf16.msra.mxu0 0
      %8625 = vmatprep.subr.bf16.mxu0 0
      %8626 = vmatpush1.bf16.msra.mxu0 0
      %8627 = vmatprep.subr.bf16.mxu0 0
      %8628 = vmatpush1.bf16.msra.mxu0 0
      %8629 = vmatprep.subr.bf16.mxu0 0
      %8630 = vmatpush1.bf16.msra.mxu0 0
      %8631 = vmatprep.subr.bf16.mxu0 0
      %8632 = vmatpush1.bf16.msra.mxu0 0
      %8633 = vmatprep.subr.bf16.mxu0 0
      %8634 = vmatpush1.bf16.msra.mxu0 0
      %8635 = vmatprep.subr.bf16.mxu0 0
      %8636 = vmatpush1.bf16.msra.mxu0 %v8619
      %8637 = vmatprep.subr.bf16.mxu0 0
      %8638 = vmatpush2.bf16.msra.mxu0 0
      %8639 = vmatprep.subr.bf16.mxu0 0
      %8640 = vmatpush2.bf16.msra.mxu0 0
      %8641 = vmatprep.subr.bf16.mxu0 0
      %8642 = vmatpush2.bf16.msra.mxu0 0
      %8643 = vmatprep.subr.bf16.mxu0 0
      %8644 = vmatpush2.bf16.msra.mxu0 0
      %8645 = vmatprep.subr.bf16.mxu0 0
      %8646 = vmatpush2.bf16.msra.mxu0 0
      %8647 = vmatprep.subr.bf16.mxu0 0
      %8648 = vmatpush2.bf16.msra.mxu0 0
      %8649 = vmatprep.subr.bf16.mxu0 0
      %8650 = vmatpush2.bf16.msra.mxu0 0
      %8651 = vmatprep.subr.bf16.mxu0 0
      %8652 = vmatpush2.bf16.msra.mxu0 0
      %8653 = vmatprep.mubr.bf16.mxu0 0
      %8654 = vmatmul.mubr.bf16.gmra.mxu0 %v8571
      %v8655 = vpop.f32.mrf.mxu0
      %v8656 = vadd.f32 0.0, %v8655
      %v8657 = vpop.f32.mrf.mxu0
      %v8658 = vpop.f32.mrf.mxu0
      %v8659 = vadd.f32 0.0, %v8658
      %v8660 = vpop.f32.mrf.mxu0
      %8661 = vmatprep.mubr.bf16.mxu0 0
      %8662 = vmatmul.mubr.bf16.gmra.mxu0 %v8574
      %v8663 = vpop.f32.mrf.mxu0
      %v8664 = vadd.f32 0.0, %v8663
      %v8665 = vpop.f32.mrf.mxu0
      %v8666 = vpop.f32.mrf.mxu0
      %v8667 = vadd.f32 0.0, %v8666
      %v8668 = vpop.f32.mrf.mxu0
      %8669 = vmatprep.mubr.bf16.mxu0 0
      %8670 = vmatmul.mubr.bf16.gmra.mxu0 %v8577
      %v8671 = vpop.f32.mrf.mxu0
      %v8672 = vadd.f32 0.0, %v8671
      %v8673 = vpop.f32.mrf.mxu0
      %v8674 = vpop.f32.mrf.mxu0
      %v8675 = vadd.f32 0.0, %v8674
      %v8676 = vpop.f32.mrf.mxu0
      %8677 = vmatprep.mubr.bf16.mxu0 0
      %8678 = vmatmul.mubr.bf16.gmra.mxu0 %v8580
      %v8679 = vpop.f32.mrf.mxu0
      %v8680 = vadd.f32 0.0, %v8679
      %v8681 = vpop.f32.mrf.mxu0
      %v8682 = vpop.f32.mrf.mxu0
      %v8683 = vadd.f32 0.0, %v8682
      %v8684 = vpop.f32.mrf.mxu0
      %8685 = vmatprep.mubr.bf16.mxu0 0
      %8686 = vmatmul.mubr.bf16.gmra.mxu0 %v8583
      %v8687 = vpop.f32.mrf.mxu0
      %v8688 = vadd.f32 0.0, %v8687
      %v8689 = vpop.f32.mrf.mxu0
      %v8690 = vpop.f32.mrf.mxu0
      %v8691 = vadd.f32 0.0, %v8690
      %v8692 = vpop.f32.mrf.mxu0
      %8693 = vmatprep.mubr.bf16.mxu0 0
      %8694 = vmatmul.mubr.bf16.gmra.mxu0 %v8586
      %v8695 = vpop.f32.mrf.mxu0
      %v8696 = vadd.f32 0.0, %v8695
      %v8697 = vpop.f32.mrf.mxu0
      %v8698 = vpop.f32.mrf.mxu0
      %v8699 = vadd.f32 0.0, %v8698
      %v8700 = vpop.f32.mrf.mxu0
      %8701 = vmatprep.mubr.bf16.mxu0 0
      %8702 = vmatmul.mubr.bf16.gmra.mxu0 %v8589
      %v8703 = vpop.f32.mrf.mxu0
      %v8704 = vadd.f32 0.0, %v8703
      %v8705 = vpop.f32.mrf.mxu0
      %v8706 = vpop.f32.mrf.mxu0
      %v8707 = vadd.f32 0.0, %v8706
      %v8708 = vpop.f32.mrf.mxu0
      %8709 = vmatprep.mubr.bf16.mxu0 0
      %8710 = vmatmul.mubr.bf16.gmra.mxu0 %v8592
      %v8711 = vpop.f32.mrf.mxu0
      %v8712 = vadd.f32 0.0, %v8711
      %v8713 = vpop.f32.mrf.mxu0
      %v8714 = vpop.f32.mrf.mxu0
      %v8715 = vadd.f32 0.0, %v8714
      %v8716 = vpop.f32.mrf.mxu0
      %8717 = vmatprep.mubr.bf16.mxu0 0
      %8718 = vmatmul.mubr.bf16.gmra.mxu0 %v8595
      %v8719 = vpop.f32.mrf.mxu0
      %v8720 = vadd.f32 0.0, %v8719
      %v8721 = vpop.f32.mrf.mxu0
      %v8722 = vpop.f32.mrf.mxu0
      %v8723 = vadd.f32 0.0, %v8722
      %v8724 = vpop.f32.mrf.mxu0
      %8725 = vmatprep.mubr.bf16.mxu0 0
      %8726 = vmatmul.mubr.bf16.gmra.mxu0 %v8598
      %v8727 = vpop.f32.mrf.mxu0
      %v8728 = vadd.f32 0.0, %v8727
      %v8729 = vpop.f32.mrf.mxu0
      %v8730 = vpop.f32.mrf.mxu0
      %v8731 = vadd.f32 0.0, %v8730
      %v8732 = vpop.f32.mrf.mxu0
      %8733 = vmatprep.mubr.bf16.mxu0 0
      %8734 = vmatmul.mubr.bf16.gmra.mxu0 %v8601
      %v8735 = vpop.f32.mrf.mxu0
      %v8736 = vadd.f32 0.0, %v8735
      %v8737 = vpop.f32.mrf.mxu0
      %v8738 = vpop.f32.mrf.mxu0
      %v8739 = vadd.f32 0.0, %v8738
      %v8740 = vpop.f32.mrf.mxu0
      %8741 = vmatprep.mubr.bf16.mxu0 0
      %8742 = vmatmul.mubr.bf16.gmra.mxu0 %v8604
      %v8743 = vpop.f32.mrf.mxu0
      %v8744 = vadd.f32 0.0, %v8743
      %v8745 = vpop.f32.mrf.mxu0
      %v8746 = vpop.f32.mrf.mxu0
      %v8747 = vadd.f32 0.0, %v8746
      %v8748 = vpop.f32.mrf.mxu0
      %8749 = vmatprep.mubr.bf16.mxu0 0
      %8750 = vmatmul.mubr.bf16.gmra.mxu0 %v8607
      %v8751 = vpop.f32.mrf.mxu0
      %v8752 = vadd.f32 0.0, %v8751
      %v8753 = vpop.f32.mrf.mxu0
      %v8754 = vpop.f32.mrf.mxu0
      %v8755 = vadd.f32 0.0, %v8754
      %v8756 = vpop.f32.mrf.mxu0
      %8757 = vmatprep.mubr.bf16.mxu0 0
      %8758 = vmatmul.mubr.bf16.gmra.mxu0 %v8610
      %v8759 = vpop.f32.mrf.mxu0
      %v8760 = vadd.f32 0.0, %v8759
      %v8761 = vpop.f32.mrf.mxu0
      %v8762 = vpop.f32.mrf.mxu0
      %v8763 = vadd.f32 0.0, %v8762
      %v8764 = vpop.f32.mrf.mxu0
      %8765 = vmatprep.mubr.bf16.mxu0 0
      %8766 = vmatmul.mubr.bf16.gmra.mxu0 %v8613
      %v8767 = vpop.f32.mrf.mxu0
      %v8768 = vadd.f32 0.0, %v8767
      %v8769 = vpop.f32.mrf.mxu0
      %v8770 = vpop.f32.mrf.mxu0
      %v8771 = vadd.f32 0.0, %v8770
      %v8772 = vpop.f32.mrf.mxu0
      %8773 = vmatprep.mubr.bf16.mxu0 0
      %8774 = vmatmul.mubr.bf16.gmra.mxu0 %v8616
      %v8775 = vpop.f32.mrf.mxu0
      %v8776 = vadd.f32 0.0, %v8775
      %v8777 = vpop.f32.mrf.mxu0
      %v8778 = vpop.f32.mrf.mxu0
      %v8779 = vadd.f32 0.0, %v8778
      %v8780 = vpop.f32.mrf.mxu0
      %8781 = vdwg.mxu0
      %v8782 = vunpack.c.l.b16 %v8146
      %v8783 = vunpack.c.l.b16 %v8155
      %v8784 = vunpack.c.l.b16 %v8168
      %v8785 = vunpack.c.l.b16 %v8177
      %v8786 = vunpack.c.l.b16 %v8190
      %v8787 = vunpack.c.l.b16 %v8199
      %v8788 = vunpack.c.l.b16 %v8212
      %v8789 = vunpack.c.l.b16 %v8221
      %v8790 = vunpack.c.l.b16 %v8234
      %v8791 = vunpack.c.l.b16 %v8243
      %v8792 = vunpack.c.l.b16 %v8256
      %v8793 = vunpack.c.l.b16 %v8265
      %v8794 = vunpack.c.l.b16 %v8278
      %v8795 = vunpack.c.l.b16 %v8287
      %v8796 = vunpack.c.l.b16 %v8300
      %v8797 = vunpack.c.l.b16 %v8309
      %v8798 = vunpack.c.l.b16 %v8322
      %v8799 = vunpack.c.l.b16 %v8331
      %v8800 = vunpack.c.l.b16 %v8344
      %v8801 = vunpack.c.l.b16 %v8353
      %v8802 = vunpack.c.l.b16 %v8366
      %v8803 = vunpack.c.l.b16 %v8375
      %v8804 = vunpack.c.l.b16 %v8388
      %v8805 = vunpack.c.l.b16 %v8397
      %v8806 = vunpack.c.l.b16 %v8410
      %v8807 = vunpack.c.l.b16 %v8419
      %v8808 = vunpack.c.l.b16 %v8432
      %v8809 = vunpack.c.l.b16 %v8441
      %v8810 = vunpack.c.l.b16 %v8454
      %v8811 = vunpack.c.l.b16 %v8463
      %v8812 = vunpack.c.l.b16 %v8476
      %v8813 = vunpack.c.l.b16 %v8485
      %v8814 = vpack.c.b16 %v8783, %v8782
      %v8815 = vpack.c.b16 %v8785, %v8784
      %v8816 = vpack.c.b16 %v8787, %v8786
      %v8817 = vpack.c.b16 %v8789, %v8788
      %v8818 = vpack.c.b16 %v8791, %v8790
      %v8819 = vpack.c.b16 %v8793, %v8792
      %v8820 = vpack.c.b16 %v8795, %v8794
      %v8821 = vpack.c.b16 %v8797, %v8796
      %v8822 = vpack.c.b16 %v8799, %v8798
      %v8823 = vpack.c.b16 %v8801, %v8800
      %v8824 = vpack.c.b16 %v8803, %v8802
      %v8825 = vpack.c.b16 %v8805, %v8804
      %v8826 = vpack.c.b16 %v8807, %v8806
      %v8827 = vpack.c.b16 %v8809, %v8808
      %v8828 = vpack.c.b16 %v8811, %v8810
      %v8829 = vpack.c.b16 %v8813, %v8812
      %v8831 = vsel %vm6854, %v8814, 0
      %v8834 = vsel %vm6854, %v8815, 0
      %v8837 = vsel %vm6854, %v8816, 0
      %v8840 = vsel %vm6854, %v8817, 0
      %v8843 = vsel %vm6854, %v8818, 0
      %v8846 = vsel %vm6854, %v8819, 0
      %v8849 = vsel %vm6854, %v8820, 0
      %v8852 = vsel %vm6854, %v8821, 0
      %v8855 = vsel %vm6854, %v8822, 0
      %v8858 = vsel %vm6854, %v8823, 0
      %v8861 = vsel %vm6854, %v8824, 0
      %v8864 = vsel %vm6854, %v8825, 0
      %v8867 = vsel %vm6854, %v8826, 0
      %v8870 = vsel %vm6854, %v8827, 0
      %v8873 = vsel %vm6854, %v8828, 0
      %v8876 = vsel %vm6854, %v8829, 0
      %v8879 = vsel %vm6903, %v8487, 0
      %8881 = vmatprep.subr.bf16.mxu0 0
      %8882 = vmatpush1.bf16.msra.mxu0 0
      %8883 = vmatprep.subr.bf16.mxu0 0
      %8884 = vmatpush1.bf16.msra.mxu0 0
      %8885 = vmatprep.subr.bf16.mxu0 0
      %8886 = vmatpush1.bf16.msra.mxu0 0
      %8887 = vmatprep.subr.bf16.mxu0 0
      %8888 = vmatpush1.bf16.msra.mxu0 0
      %8889 = vmatprep.subr.bf16.mxu0 0
      %8890 = vmatpush1.bf16.msra.mxu0 0
      %8891 = vmatprep.subr.bf16.mxu0 0
      %8892 = vmatpush1.bf16.msra.mxu0 0
      %8893 = vmatprep.subr.bf16.mxu0 0
      %8894 = vmatpush1.bf16.msra.mxu0 0
      %8895 = vmatprep.subr.bf16.mxu0 0
      %8896 = vmatpush1.bf16.msra.mxu0 %v8879
      %8897 = vmatprep.subr.bf16.mxu0 0
      %8898 = vmatpush2.bf16.msra.mxu0 0
      %8899 = vmatprep.subr.bf16.mxu0 0
      %8900 = vmatpush2.bf16.msra.mxu0 0
      %8901 = vmatprep.subr.bf16.mxu0 0
      %8902 = vmatpush2.bf16.msra.mxu0 0
      %8903 = vmatprep.subr.bf16.mxu0 0
      %8904 = vmatpush2.bf16.msra.mxu0 0
      %8905 = vmatprep.subr.bf16.mxu0 0
      %8906 = vmatpush2.bf16.msra.mxu0 0
      %8907 = vmatprep.subr.bf16.mxu0 0
      %8908 = vmatpush2.bf16.msra.mxu0 0
      %8909 = vmatprep.subr.bf16.mxu0 0
      %8910 = vmatpush2.bf16.msra.mxu0 0
      %8911 = vmatprep.subr.bf16.mxu0 0
      %8912 = vmatpush2.bf16.msra.mxu0 0
      %8913 = vmatprep.mubr.bf16.mxu0 0
      %8914 = vmatmul.mubr.bf16.gmra.mxu0 %v8831
      %v8915 = vpop.f32.mrf.mxu0
      %v8916 = vadd.f32 %v8656, %v8915
      %v8917 = vpop.f32.mrf.mxu0
      %v8918 = vpop.f32.mrf.mxu0
      %v8919 = vadd.f32 %v8659, %v8918
      %v8920 = vpop.f32.mrf.mxu0
      %8921 = vmatprep.mubr.bf16.mxu0 0
      %8922 = vmatmul.mubr.bf16.gmra.mxu0 %v8834
      %v8923 = vpop.f32.mrf.mxu0
      %v8924 = vadd.f32 %v8664, %v8923
      %v8925 = vpop.f32.mrf.mxu0
      %v8926 = vpop.f32.mrf.mxu0
      %v8927 = vadd.f32 %v8667, %v8926
      %v8928 = vpop.f32.mrf.mxu0
      %8929 = vmatprep.mubr.bf16.mxu0 0
      %8930 = vmatmul.mubr.bf16.gmra.mxu0 %v8837
      %v8931 = vpop.f32.mrf.mxu0
      %v8932 = vadd.f32 %v8672, %v8931
      %v8933 = vpop.f32.mrf.mxu0
      %v8934 = vpop.f32.mrf.mxu0
      %v8935 = vadd.f32 %v8675, %v8934
      %v8936 = vpop.f32.mrf.mxu0
      %8937 = vmatprep.mubr.bf16.mxu0 0
      %8938 = vmatmul.mubr.bf16.gmra.mxu0 %v8840
      %v8939 = vpop.f32.mrf.mxu0
      %v8940 = vadd.f32 %v8680, %v8939
      %v8941 = vpop.f32.mrf.mxu0
      %v8942 = vpop.f32.mrf.mxu0
      %v8943 = vadd.f32 %v8683, %v8942
      %v8944 = vpop.f32.mrf.mxu0
      %8945 = vmatprep.mubr.bf16.mxu0 0
      %8946 = vmatmul.mubr.bf16.gmra.mxu0 %v8843
      %v8947 = vpop.f32.mrf.mxu0
      %v8948 = vadd.f32 %v8688, %v8947
      %v8949 = vpop.f32.mrf.mxu0
      %v8950 = vpop.f32.mrf.mxu0
      %v8951 = vadd.f32 %v8691, %v8950
      %v8952 = vpop.f32.mrf.mxu0
      %8953 = vmatprep.mubr.bf16.mxu0 0
      %8954 = vmatmul.mubr.bf16.gmra.mxu0 %v8846
      %v8955 = vpop.f32.mrf.mxu0
      %v8956 = vadd.f32 %v8696, %v8955
      %v8957 = vpop.f32.mrf.mxu0
      %v8958 = vpop.f32.mrf.mxu0
      %v8959 = vadd.f32 %v8699, %v8958
      %v8960 = vpop.f32.mrf.mxu0
      %8961 = vmatprep.mubr.bf16.mxu0 0
      %8962 = vmatmul.mubr.bf16.gmra.mxu0 %v8849
      %v8963 = vpop.f32.mrf.mxu0
      %v8964 = vadd.f32 %v8704, %v8963
      %v8965 = vpop.f32.mrf.mxu0
      %v8966 = vpop.f32.mrf.mxu0
      %v8967 = vadd.f32 %v8707, %v8966
      %v8968 = vpop.f32.mrf.mxu0
      %8969 = vmatprep.mubr.bf16.mxu0 0
      %8970 = vmatmul.mubr.bf16.gmra.mxu0 %v8852
      %v8971 = vpop.f32.mrf.mxu0
      %v8972 = vadd.f32 %v8712, %v8971
      %v8973 = vpop.f32.mrf.mxu0
      %v8974 = vpop.f32.mrf.mxu0
      %v8975 = vadd.f32 %v8715, %v8974
      %v8976 = vpop.f32.mrf.mxu0
      %8977 = vmatprep.mubr.bf16.mxu0 0
      %8978 = vmatmul.mubr.bf16.gmra.mxu0 %v8855
      %v8979 = vpop.f32.mrf.mxu0
      %v8980 = vadd.f32 %v8720, %v8979
      %v8981 = vpop.f32.mrf.mxu0
      %v8982 = vpop.f32.mrf.mxu0
      %v8983 = vadd.f32 %v8723, %v8982
      %v8984 = vpop.f32.mrf.mxu0
      %8985 = vmatprep.mubr.bf16.mxu0 0
      %8986 = vmatmul.mubr.bf16.gmra.mxu0 %v8858
      %v8987 = vpop.f32.mrf.mxu0
      %v8988 = vadd.f32 %v8728, %v8987
      %v8989 = vpop.f32.mrf.mxu0
      %v8990 = vpop.f32.mrf.mxu0
      %v8991 = vadd.f32 %v8731, %v8990
      %v8992 = vpop.f32.mrf.mxu0
      %8993 = vmatprep.mubr.bf16.mxu0 0
      %8994 = vmatmul.mubr.bf16.gmra.mxu0 %v8861
      %v8995 = vpop.f32.mrf.mxu0
      %v8996 = vadd.f32 %v8736, %v8995
      %v8997 = vpop.f32.mrf.mxu0
      %v8998 = vpop.f32.mrf.mxu0
      %v8999 = vadd.f32 %v8739, %v8998
      %v9000 = vpop.f32.mrf.mxu0
      %9001 = vmatprep.mubr.bf16.mxu0 0
      %9002 = vmatmul.mubr.bf16.gmra.mxu0 %v8864
      %v9003 = vpop.f32.mrf.mxu0
      %v9004 = vadd.f32 %v8744, %v9003
      %v9005 = vpop.f32.mrf.mxu0
      %v9006 = vpop.f32.mrf.mxu0
      %v9007 = vadd.f32 %v8747, %v9006
      %v9008 = vpop.f32.mrf.mxu0
      %9009 = vmatprep.mubr.bf16.mxu0 0
      %9010 = vmatmul.mubr.bf16.gmra.mxu0 %v8867
      %v9011 = vpop.f32.mrf.mxu0
      %v9012 = vadd.f32 %v8752, %v9011
      %v9013 = vpop.f32.mrf.mxu0
      %v9014 = vpop.f32.mrf.mxu0
      %v9015 = vadd.f32 %v8755, %v9014
      %v9016 = vpop.f32.mrf.mxu0
      %9017 = vmatprep.mubr.bf16.mxu0 0
      %9018 = vmatmul.mubr.bf16.gmra.mxu0 %v8870
      %v9019 = vpop.f32.mrf.mxu0
      %v9020 = vadd.f32 %v8760, %v9019
      %v9021 = vpop.f32.mrf.mxu0
      %v9022 = vpop.f32.mrf.mxu0
      %v9023 = vadd.f32 %v8763, %v9022
      %v9024 = vpop.f32.mrf.mxu0
      %9025 = vmatprep.mubr.bf16.mxu0 0
      %9026 = vmatmul.mubr.bf16.gmra.mxu0 %v8873
      %v9027 = vpop.f32.mrf.mxu0
      %v9028 = vadd.f32 %v8768, %v9027
      %v9029 = vpop.f32.mrf.mxu0
      %v9030 = vpop.f32.mrf.mxu0
      %v9031 = vadd.f32 %v8771, %v9030
      %v9032 = vpop.f32.mrf.mxu0
      %9033 = vmatprep.mubr.bf16.mxu0 0
      %9034 = vmatmul.mubr.bf16.gmra.mxu0 %v8876
      %v9035 = vpop.f32.mrf.mxu0
      %v9036 = vadd.f32 %v8776, %v9035
      %v9037 = vpop.f32.mrf.mxu0
      %v9038 = vpop.f32.mrf.mxu0
      %v9039 = vadd.f32 %v8779, %v9038
      %v9040 = vpop.f32.mrf.mxu0
      %9041 = vdwg.mxu0
      %v9042 = vld [vmem:[%s470 + $0x8] sm:$0xf]
      %v9043 = vld [vmem:[%s470 + $0xc] sm:$0xf]
      %v9044 = vld [vmem:[%s470 + $0x10] sm:$0x1]
      %v9045 = vld [vmem:[%s470 + $0x1c] sm:$0xf]
      %v9046 = vld [vmem:[%s470 + $0x20] sm:$0xf]
      %v9047 = vld [vmem:[%s470 + $0x24] sm:$0x1]
      %v9048 = vld [vmem:[%s470 + $0x30] sm:$0xf]
      %v9049 = vld [vmem:[%s470 + $0x34] sm:$0xf]
      %v9050 = vld [vmem:[%s470 + $0x38] sm:$0x1]
      %v9051 = vld [vmem:[%s470 + $0x44] sm:$0xf]
      %v9052 = vld [vmem:[%s470 + $0x48] sm:$0xf]
      %v9053 = vld [vmem:[%s470 + $0x4c] sm:$0x1]
      %v9054 = vld [vmem:[%s470 + $0x58] sm:$0xf]
      %v9055 = vld [vmem:[%s470 + $0x5c] sm:$0xf]
      %v9056 = vld [vmem:[%s470 + $0x60] sm:$0x1]
      %v9057 = vld [vmem:[%s470 + $0x6c] sm:$0xf]
      %v9058 = vld [vmem:[%s470 + $0x70] sm:$0xf]
      %v9059 = vld [vmem:[%s470 + $0x74] sm:$0x1]
      %v9060 = vld [vmem:[%s470 + $0x80] sm:$0xf]
      %v9061 = vld [vmem:[%s470 + $0x84] sm:$0xf]
      %v9062 = vld [vmem:[%s470 + $0x88] sm:$0x1]
      %v9063 = vld [vmem:[%s470 + $0x94] sm:$0xf]
      %v9064 = vld [vmem:[%s470 + $0x98] sm:$0xf]
      %v9065 = vld [vmem:[%s470 + $0x9c] sm:$0x1]
      %v9066 = vld [vmem:[%s470 + $0xa8] sm:$0xf]
      %v9067 = vld [vmem:[%s470 + $0xac] sm:$0xf]
      %v9068 = vld [vmem:[%s470 + $0xb0] sm:$0x1]
      %v9069 = vld [vmem:[%s470 + $0xbc] sm:$0xf]
      %v9070 = vld [vmem:[%s470 + $0xc0] sm:$0xf]
      %v9071 = vld [vmem:[%s470 + $0xc4] sm:$0x1]
      %v9072 = vld [vmem:[%s470 + $0xd0] sm:$0xf]
      %v9073 = vld [vmem:[%s470 + $0xd4] sm:$0xf]
      %v9074 = vld [vmem:[%s470 + $0xd8] sm:$0x1]
      %v9075 = vld [vmem:[%s470 + $0xe4] sm:$0xf]
      %v9076 = vld [vmem:[%s470 + $0xe8] sm:$0xf]
      %v9077 = vld [vmem:[%s470 + $0xec] sm:$0x1]
      %v9078 = vld [vmem:[%s470 + $0xf8] sm:$0xf]
      %v9079 = vld [vmem:[%s470 + $0xfc] sm:$0xf]
      %v9080 = vld [vmem:[%s470 + $0x100] sm:$0x1]
      %v9081 = vld [vmem:[%s470 + $0x10c] sm:$0xf]
      %v9082 = vld [vmem:[%s470 + $0x110] sm:$0xf]
      %v9083 = vld [vmem:[%s470 + $0x114] sm:$0x1]
      %v9084 = vld [vmem:[%s470 + $0x120] sm:$0xf]
      %v9085 = vld [vmem:[%s470 + $0x124] sm:$0xf]
      %v9086 = vld [vmem:[%s470 + $0x128] sm:$0x1]
      %v9087 = vld [vmem:[%s470 + $0x134] sm:$0xf]
      %v9088 = vld [vmem:[%s470 + $0x138] sm:$0xf]
      %v9089 = vld [vmem:[%s470 + $0x13c] sm:$0x1]
      %v9091 = vshrl.u32 %v9042, 16
      %v9093 = vrot.slane %v9091, 4
      %v9094 = vshll.u32 %v9042, 16
      %v9096 = vrot.slane %v9094, 5
      %v9097 = vor.u32 %v9093, %v9096
      %v9098 = vrot.slane %v9097, 4
      %v9100 = vshll.u32 %v9043, 16
      %v9102 = vrot.slane %v9100, 5
      %v9103 = vsel %vm1961, %v9098, %v9102
      %v9104 = vshrl.u32 %v9043, 16
      %v9106 = vrot.slane %v9104, 4
      %v9107 = vor.u32 %v9106, %v9102
      %v9108 = vrot.slane %v9107, 4
      %v9110 = vshll.u32 %v9044, 16
      %v9112 = vrot.slane %v9110, 5
      %v9113 = vsel %vm1961, %v9108, %v9112
      %v9115 = vshrl.u32 %v9045, 16
      %v9117 = vrot.slane %v9115, 4
      %v9118 = vshll.u32 %v9045, 16
      %v9120 = vrot.slane %v9118, 5
      %v9121 = vor.u32 %v9117, %v9120
      %v9122 = vrot.slane %v9121, 4
      %v9124 = vshll.u32 %v9046, 16
      %v9126 = vrot.slane %v9124, 5
      %v9127 = vsel %vm1961, %v9122, %v9126
      %v9128 = vshrl.u32 %v9046, 16
      %v9130 = vrot.slane %v9128, 4
      %v9131 = vor.u32 %v9130, %v9126
      %v9132 = vrot.slane %v9131, 4
      %v9134 = vshll.u32 %v9047, 16
      %v9136 = vrot.slane %v9134, 5
      %v9137 = vsel %vm1961, %v9132, %v9136
      %v9139 = vshrl.u32 %v9048, 16
      %v9141 = vrot.slane %v9139, 4
      %v9142 = vshll.u32 %v9048, 16
      %v9144 = vrot.slane %v9142, 5
      %v9145 = vor.u32 %v9141, %v9144
      %v9146 = vrot.slane %v9145, 4
      %v9148 = vshll.u32 %v9049, 16
      %v9150 = vrot.slane %v9148, 5
      %v9151 = vsel %vm1961, %v9146, %v9150
      %v9152 = vshrl.u32 %v9049, 16
      %v9154 = vrot.slane %v9152, 4
      %v9155 = vor.u32 %v9154, %v9150
      %v9156 = vrot.slane %v9155, 4
      %v9158 = vshll.u32 %v9050, 16
      %v9160 = vrot.slane %v9158, 5
      %v9161 = vsel %vm1961, %v9156, %v9160
      %v9163 = vshrl.u32 %v9051, 16
      %v9165 = vrot.slane %v9163, 4
      %v9166 = vshll.u32 %v9051, 16
      %v9168 = vrot.slane %v9166, 5
      %v9169 = vor.u32 %v9165, %v9168
      %v9170 = vrot.slane %v9169, 4
      %v9172 = vshll.u32 %v9052, 16
      %v9174 = vrot.slane %v9172, 5
      %v9175 = vsel %vm1961, %v9170, %v9174
      %v9176 = vshrl.u32 %v9052, 16
      %v9178 = vrot.slane %v9176, 4
      %v9179 = vor.u32 %v9178, %v9174
      %v9180 = vrot.slane %v9179, 4
      %v9182 = vshll.u32 %v9053, 16
      %v9184 = vrot.slane %v9182, 5
      %v9185 = vsel %vm1961, %v9180, %v9184
      %v9187 = vshrl.u32 %v9054, 16
      %v9189 = vrot.slane %v9187, 4
      %v9190 = vshll.u32 %v9054, 16
      %v9192 = vrot.slane %v9190, 5
      %v9193 = vor.u32 %v9189, %v9192
      %v9194 = vrot.slane %v9193, 4
      %v9196 = vshll.u32 %v9055, 16
      %v9198 = vrot.slane %v9196, 5
      %v9199 = vsel %vm1961, %v9194, %v9198
      %v9200 = vshrl.u32 %v9055, 16
      %v9202 = vrot.slane %v9200, 4
      %v9203 = vor.u32 %v9202, %v9198
      %v9204 = vrot.slane %v9203, 4
      %v9206 = vshll.u32 %v9056, 16
      %v9208 = vrot.slane %v9206, 5
      %v9209 = vsel %vm1961, %v9204, %v9208
      %v9211 = vshrl.u32 %v9057, 16
      %v9213 = vrot.slane %v9211, 4
      %v9214 = vshll.u32 %v9057, 16
      %v9216 = vrot.slane %v9214, 5
      %v9217 = vor.u32 %v9213, %v9216
      %v9218 = vrot.slane %v9217, 4
      %v9220 = vshll.u32 %v9058, 16
      %v9222 = vrot.slane %v9220, 5
      %v9223 = vsel %vm1961, %v9218, %v9222
      %v9224 = vshrl.u32 %v9058, 16
      %v9226 = vrot.slane %v9224, 4
      %v9227 = vor.u32 %v9226, %v9222
      %v9228 = vrot.slane %v9227, 4
      %v9230 = vshll.u32 %v9059, 16
      %v9232 = vrot.slane %v9230, 5
      %v9233 = vsel %vm1961, %v9228, %v9232
      %v9235 = vshrl.u32 %v9060, 16
      %v9237 = vrot.slane %v9235, 4
      %v9238 = vshll.u32 %v9060, 16
      %v9240 = vrot.slane %v9238, 5
      %v9241 = vor.u32 %v9237, %v9240
      %v9242 = vrot.slane %v9241, 4
      %v9244 = vshll.u32 %v9061, 16
      %v9246 = vrot.slane %v9244, 5
      %v9247 = vsel %vm1961, %v9242, %v9246
      %v9248 = vshrl.u32 %v9061, 16
      %v9250 = vrot.slane %v9248, 4
      %v9251 = vor.u32 %v9250, %v9246
      %v9252 = vrot.slane %v9251, 4
      %v9254 = vshll.u32 %v9062, 16
      %v9256 = vrot.slane %v9254, 5
      %v9257 = vsel %vm1961, %v9252, %v9256
      %v9259 = vshrl.u32 %v9063, 16
      %v9261 = vrot.slane %v9259, 4
      %v9262 = vshll.u32 %v9063, 16
      %v9264 = vrot.slane %v9262, 5
      %v9265 = vor.u32 %v9261, %v9264
      %v9266 = vrot.slane %v9265, 4
      %v9268 = vshll.u32 %v9064, 16
      %v9270 = vrot.slane %v9268, 5
      %v9271 = vsel %vm1961, %v9266, %v9270
      %v9272 = vshrl.u32 %v9064, 16
      %v9274 = vrot.slane %v9272, 4
      %v9275 = vor.u32 %v9274, %v9270
      %v9276 = vrot.slane %v9275, 4
      %v9278 = vshll.u32 %v9065, 16
      %v9280 = vrot.slane %v9278, 5
      %v9281 = vsel %vm1961, %v9276, %v9280
      %v9283 = vshrl.u32 %v9066, 16
      %v9285 = vrot.slane %v9283, 4
      %v9286 = vshll.u32 %v9066, 16
      %v9288 = vrot.slane %v9286, 5
      %v9289 = vor.u32 %v9285, %v9288
      %v9290 = vrot.slane %v9289, 4
      %v9292 = vshll.u32 %v9067, 16
      %v9294 = vrot.slane %v9292, 5
      %v9295 = vsel %vm1961, %v9290, %v9294
      %v9296 = vshrl.u32 %v9067, 16
      %v9298 = vrot.slane %v9296, 4
      %v9299 = vor.u32 %v9298, %v9294
      %v9300 = vrot.slane %v9299, 4
      %v9302 = vshll.u32 %v9068, 16
      %v9304 = vrot.slane %v9302, 5
      %v9305 = vsel %vm1961, %v9300, %v9304
      %v9307 = vshrl.u32 %v9069, 16
      %v9309 = vrot.slane %v9307, 4
      %v9310 = vshll.u32 %v9069, 16
      %v9312 = vrot.slane %v9310, 5
      %v9313 = vor.u32 %v9309, %v9312
      %v9314 = vrot.slane %v9313, 4
      %v9316 = vshll.u32 %v9070, 16
      %v9318 = vrot.slane %v9316, 5
      %v9319 = vsel %vm1961, %v9314, %v9318
      %v9320 = vshrl.u32 %v9070, 16
      %v9322 = vrot.slane %v9320, 4
      %v9323 = vor.u32 %v9322, %v9318
      %v9324 = vrot.slane %v9323, 4
      %v9326 = vshll.u32 %v9071, 16
      %v9328 = vrot.slane %v9326, 5
      %v9329 = vsel %vm1961, %v9324, %v9328
      %v9331 = vshrl.u32 %v9072, 16
      %v9333 = vrot.slane %v9331, 4
      %v9334 = vshll.u32 %v9072, 16
      %v9336 = vrot.slane %v9334, 5
      %v9337 = vor.u32 %v9333, %v9336
      %v9338 = vrot.slane %v9337, 4
      %v9340 = vshll.u32 %v9073, 16
      %v9342 = vrot.slane %v9340, 5
      %v9343 = vsel %vm1961, %v9338, %v9342
      %v9344 = vshrl.u32 %v9073, 16
      %v9346 = vrot.slane %v9344, 4
      %v9347 = vor.u32 %v9346, %v9342
      %v9348 = vrot.slane %v9347, 4
      %v9350 = vshll.u32 %v9074, 16
      %v9352 = vrot.slane %v9350, 5
      %v9353 = vsel %vm1961, %v9348, %v9352
      %v9355 = vshrl.u32 %v9075, 16
      %v9357 = vrot.slane %v9355, 4
      %v9358 = vshll.u32 %v9075, 16
      %v9360 = vrot.slane %v9358, 5
      %v9361 = vor.u32 %v9357, %v9360
      %v9362 = vrot.slane %v9361, 4
      %v9364 = vshll.u32 %v9076, 16
      %v9366 = vrot.slane %v9364, 5
      %v9367 = vsel %vm1961, %v9362, %v9366
      %v9368 = vshrl.u32 %v9076, 16
      %v9370 = vrot.slane %v9368, 4
      %v9371 = vor.u32 %v9370, %v9366
      %v9372 = vrot.slane %v9371, 4
      %v9374 = vshll.u32 %v9077, 16
      %v9376 = vrot.slane %v9374, 5
      %v9377 = vsel %vm1961, %v9372, %v9376
      %v9379 = vshrl.u32 %v9078, 16
      %v9381 = vrot.slane %v9379, 4
      %v9382 = vshll.u32 %v9078, 16
      %v9384 = vrot.slane %v9382, 5
      %v9385 = vor.u32 %v9381, %v9384
      %v9386 = vrot.slane %v9385, 4
      %v9388 = vshll.u32 %v9079, 16
      %v9390 = vrot.slane %v9388, 5
      %v9391 = vsel %vm1961, %v9386, %v9390
      %v9392 = vshrl.u32 %v9079, 16
      %v9394 = vrot.slane %v9392, 4
      %v9395 = vor.u32 %v9394, %v9390
      %v9396 = vrot.slane %v9395, 4
      %v9398 = vshll.u32 %v9080, 16
      %v9400 = vrot.slane %v9398, 5
      %v9401 = vsel %vm1961, %v9396, %v9400
      %v9403 = vshrl.u32 %v9081, 16
      %v9405 = vrot.slane %v9403, 4
      %v9406 = vshll.u32 %v9081, 16
      %v9408 = vrot.slane %v9406, 5
      %v9409 = vor.u32 %v9405, %v9408
      %v9410 = vrot.slane %v9409, 4
      %v9412 = vshll.u32 %v9082, 16
      %v9414 = vrot.slane %v9412, 5
      %v9415 = vsel %vm1961, %v9410, %v9414
      %v9416 = vshrl.u32 %v9082, 16
      %v9418 = vrot.slane %v9416, 4
      %v9419 = vor.u32 %v9418, %v9414
      %v9420 = vrot.slane %v9419, 4
      %v9422 = vshll.u32 %v9083, 16
      %v9424 = vrot.slane %v9422, 5
      %v9425 = vsel %vm1961, %v9420, %v9424
      %v9427 = vshrl.u32 %v9084, 16
      %v9429 = vrot.slane %v9427, 4
      %v9430 = vshll.u32 %v9084, 16
      %v9432 = vrot.slane %v9430, 5
      %v9433 = vor.u32 %v9429, %v9432
      %v9434 = vrot.slane %v9433, 4
      %v9436 = vshll.u32 %v9085, 16
      %v9438 = vrot.slane %v9436, 5
      %v9439 = vsel %vm1961, %v9434, %v9438
      %v9440 = vshrl.u32 %v9085, 16
      %v9442 = vrot.slane %v9440, 4
      %v9443 = vor.u32 %v9442, %v9438
      %v9444 = vrot.slane %v9443, 4
      %v9446 = vshll.u32 %v9086, 16
      %v9448 = vrot.slane %v9446, 5
      %v9449 = vsel %vm1961, %v9444, %v9448
      %v9451 = vshrl.u32 %v9087, 16
      %v9453 = vrot.slane %v9451, 4
      %v9454 = vshll.u32 %v9087, 16
      %v9456 = vrot.slane %v9454, 5
      %v9457 = vor.u32 %v9453, %v9456
      %v9458 = vrot.slane %v9457, 4
      %v9460 = vshll.u32 %v9088, 16
      %v9462 = vrot.slane %v9460, 5
      %v9463 = vsel %vm1961, %v9458, %v9462
      %v9464 = vshrl.u32 %v9088, 16
      %v9466 = vrot.slane %v9464, 4
      %v9467 = vor.u32 %v9466, %v9462
      %v9468 = vrot.slane %v9467, 4
      %v9470 = vshll.u32 %v9089, 16
      %v9472 = vrot.slane %v9470, 5
      %v9473 = vsel %vm1961, %v9468, %v9472
      %s9474 = scalar_lea.vmem %s5, 10
      %v9475 = vld [vmem:[%s9474] sm:$0x3]
      %v9476 = vunpack.c.l.b16 %v9103
      %v9477 = vunpack.c.l.b16 %v9113
      %v9478 = vunpack.c.l.b16 %v9127
      %v9479 = vunpack.c.l.b16 %v9137
      %v9480 = vunpack.c.l.b16 %v9151
      %v9481 = vunpack.c.l.b16 %v9161
      %v9482 = vunpack.c.l.b16 %v9175
      %v9483 = vunpack.c.l.b16 %v9185
      %v9484 = vunpack.c.l.b16 %v9199
      %v9485 = vunpack.c.l.b16 %v9209
      %v9486 = vunpack.c.l.b16 %v9223
      %v9487 = vunpack.c.l.b16 %v9233
      %v9488 = vunpack.c.l.b16 %v9247
      %v9489 = vunpack.c.l.b16 %v9257
      %v9490 = vunpack.c.l.b16 %v9271
      %v9491 = vunpack.c.l.b16 %v9281
      %v9492 = vunpack.c.l.b16 %v9295
      %v9493 = vunpack.c.l.b16 %v9305
      %v9494 = vunpack.c.l.b16 %v9319
      %v9495 = vunpack.c.l.b16 %v9329
      %v9496 = vunpack.c.l.b16 %v9343
      %v9497 = vunpack.c.l.b16 %v9353
      %v9498 = vunpack.c.l.b16 %v9367
      %v9499 = vunpack.c.l.b16 %v9377
      %v9500 = vunpack.c.l.b16 %v9391
      %v9501 = vunpack.c.l.b16 %v9401
      %v9502 = vunpack.c.l.b16 %v9415
      %v9503 = vunpack.c.l.b16 %v9425
      %v9504 = vunpack.c.l.b16 %v9439
      %v9505 = vunpack.c.l.b16 %v9449
      %v9506 = vunpack.c.l.b16 %v9463
      %v9507 = vunpack.c.l.b16 %v9473
      %v9508 = vpack.c.b16 %v9477, %v9476
      %v9509 = vpack.c.b16 %v9479, %v9478
      %v9510 = vpack.c.b16 %v9481, %v9480
      %v9511 = vpack.c.b16 %v9483, %v9482
      %v9512 = vpack.c.b16 %v9485, %v9484
      %v9513 = vpack.c.b16 %v9487, %v9486
      %v9514 = vpack.c.b16 %v9489, %v9488
      %v9515 = vpack.c.b16 %v9491, %v9490
      %v9516 = vpack.c.b16 %v9493, %v9492
      %v9517 = vpack.c.b16 %v9495, %v9494
      %v9518 = vpack.c.b16 %v9497, %v9496
      %v9519 = vpack.c.b16 %v9499, %v9498
      %v9520 = vpack.c.b16 %v9501, %v9500
      %v9521 = vpack.c.b16 %v9503, %v9502
      %v9522 = vpack.c.b16 %v9505, %v9504
      %v9523 = vpack.c.b16 %v9507, %v9506
      %v9525 = vsel %vm6854, %v9508, 0
      %v9528 = vsel %vm6854, %v9509, 0
      %v9531 = vsel %vm6854, %v9510, 0
      %v9534 = vsel %vm6854, %v9511, 0
      %v9537 = vsel %vm6854, %v9512, 0
      %v9540 = vsel %vm6854, %v9513, 0
      %v9543 = vsel %vm6854, %v9514, 0
      %v9546 = vsel %vm6854, %v9515, 0
      %v9549 = vsel %vm6854, %v9516, 0
      %v9552 = vsel %vm6854, %v9517, 0
      %v9555 = vsel %vm6854, %v9518, 0
      %v9558 = vsel %vm6854, %v9519, 0
      %v9561 = vsel %vm6854, %v9520, 0
      %v9564 = vsel %vm6854, %v9521, 0
      %v9567 = vsel %vm6854, %v9522, 0
      %v9570 = vsel %vm6854, %v9523, 0
      %v9573 = vsel %vm6903, %v9475, 0
      %9575 = vmatprep.subr.bf16.mxu0 0
      %9576 = vmatpush1.bf16.msra.mxu0 0
      %9577 = vmatprep.subr.bf16.mxu0 0
      %9578 = vmatpush1.bf16.msra.mxu0 0
      %9579 = vmatprep.subr.bf16.mxu0 0
      %9580 = vmatpush1.bf16.msra.mxu0 0
      %9581 = vmatprep.subr.bf16.mxu0 0
      %9582 = vmatpush1.bf16.msra.mxu0 0
      %9583 = vmatprep.subr.bf16.mxu0 0
      %9584 = vmatpush1.bf16.msra.mxu0 0
      %9585 = vmatprep.subr.bf16.mxu0 0
      %9586 = vmatpush1.bf16.msra.mxu0 0
      %9587 = vmatprep.subr.bf16.mxu0 0
      %9588 = vmatpush1.bf16.msra.mxu0 0
      %9589 = vmatprep.subr.bf16.mxu0 0
      %9590 = vmatpush1.bf16.msra.mxu0 %v9573
      %9591 = vmatprep.subr.bf16.mxu0 0
      %9592 = vmatpush2.bf16.msra.mxu0 0
      %9593 = vmatprep.subr.bf16.mxu0 0
      %9594 = vmatpush2.bf16.msra.mxu0 0
      %9595 = vmatprep.subr.bf16.mxu0 0
      %9596 = vmatpush2.bf16.msra.mxu0 0
      %9597 = vmatprep.subr.bf16.mxu0 0
      %9598 = vmatpush2.bf16.msra.mxu0 0
      %9599 = vmatprep.subr.bf16.mxu0 0
      %9600 = vmatpush2.bf16.msra.mxu0 0
      %9601 = vmatprep.subr.bf16.mxu0 0
      %9602 = vmatpush2.bf16.msra.mxu0 0
      %9603 = vmatprep.subr.bf16.mxu0 0
      %9604 = vmatpush2.bf16.msra.mxu0 0
      %9605 = vmatprep.subr.bf16.mxu0 0
      %9606 = vmatpush2.bf16.msra.mxu0 0
      %9607 = vmatprep.mubr.bf16.mxu0 0
      %9608 = vmatmul.mubr.bf16.gmra.mxu0 %v9525
      %v9609 = vpop.f32.mrf.mxu0
      %v9610 = vadd.f32 0.0, %v9609
      %v9611 = vpop.f32.mrf.mxu0
      %v9612 = vpop.f32.mrf.mxu0
      %v9613 = vadd.f32 0.0, %v9612
      %v9614 = vpop.f32.mrf.mxu0
      %9615 = vmatprep.mubr.bf16.mxu0 0
      %9616 = vmatmul.mubr.bf16.gmra.mxu0 %v9528
      %v9617 = vpop.f32.mrf.mxu0
      %v9618 = vadd.f32 0.0, %v9617
      %v9619 = vpop.f32.mrf.mxu0
      %v9620 = vpop.f32.mrf.mxu0
      %v9621 = vadd.f32 0.0, %v9620
      %v9622 = vpop.f32.mrf.mxu0
      %9623 = vmatprep.mubr.bf16.mxu0 0
      %9624 = vmatmul.mubr.bf16.gmra.mxu0 %v9531
      %v9625 = vpop.f32.mrf.mxu0
      %v9626 = vadd.f32 0.0, %v9625
      %v9627 = vpop.f32.mrf.mxu0
      %v9628 = vpop.f32.mrf.mxu0
      %v9629 = vadd.f32 0.0, %v9628
      %v9630 = vpop.f32.mrf.mxu0
      %9631 = vmatprep.mubr.bf16.mxu0 0
      %9632 = vmatmul.mubr.bf16.gmra.mxu0 %v9534
      %v9633 = vpop.f32.mrf.mxu0
      %v9634 = vadd.f32 0.0, %v9633
      %v9635 = vpop.f32.mrf.mxu0
      %v9636 = vpop.f32.mrf.mxu0
      %v9637 = vadd.f32 0.0, %v9636
      %v9638 = vpop.f32.mrf.mxu0
      %9639 = vmatprep.mubr.bf16.mxu0 0
      %9640 = vmatmul.mubr.bf16.gmra.mxu0 %v9537
      %v9641 = vpop.f32.mrf.mxu0
      %v9642 = vadd.f32 0.0, %v9641
      %v9643 = vpop.f32.mrf.mxu0
      %v9644 = vpop.f32.mrf.mxu0
      %v9645 = vadd.f32 0.0, %v9644
      %v9646 = vpop.f32.mrf.mxu0
      %9647 = vmatprep.mubr.bf16.mxu0 0
      %9648 = vmatmul.mubr.bf16.gmra.mxu0 %v9540
      %v9649 = vpop.f32.mrf.mxu0
      %v9650 = vadd.f32 0.0, %v9649
      %v9651 = vpop.f32.mrf.mxu0
      %v9652 = vpop.f32.mrf.mxu0
      %v9653 = vadd.f32 0.0, %v9652
      %v9654 = vpop.f32.mrf.mxu0
      %9655 = vmatprep.mubr.bf16.mxu0 0
      %9656 = vmatmul.mubr.bf16.gmra.mxu0 %v9543
      %v9657 = vpop.f32.mrf.mxu0
      %v9658 = vadd.f32 0.0, %v9657
      %v9659 = vpop.f32.mrf.mxu0
      %v9660 = vpop.f32.mrf.mxu0
      %v9661 = vadd.f32 0.0, %v9660
      %v9662 = vpop.f32.mrf.mxu0
      %9663 = vmatprep.mubr.bf16.mxu0 0
      %9664 = vmatmul.mubr.bf16.gmra.mxu0 %v9546
      %v9665 = vpop.f32.mrf.mxu0
      %v9666 = vadd.f32 0.0, %v9665
      %v9667 = vpop.f32.mrf.mxu0
      %v9668 = vpop.f32.mrf.mxu0
      %v9669 = vadd.f32 0.0, %v9668
      %v9670 = vpop.f32.mrf.mxu0
      %9671 = vmatprep.mubr.bf16.mxu0 0
      %9672 = vmatmul.mubr.bf16.gmra.mxu0 %v9549
      %v9673 = vpop.f32.mrf.mxu0
      %v9674 = vadd.f32 0.0, %v9673
      %v9675 = vpop.f32.mrf.mxu0
      %v9676 = vpop.f32.mrf.mxu0
      %v9677 = vadd.f32 0.0, %v9676
      %v9678 = vpop.f32.mrf.mxu0
      %9679 = vmatprep.mubr.bf16.mxu0 0
      %9680 = vmatmul.mubr.bf16.gmra.mxu0 %v9552
      %v9681 = vpop.f32.mrf.mxu0
      %v9682 = vadd.f32 0.0, %v9681
      %v9683 = vpop.f32.mrf.mxu0
      %v9684 = vpop.f32.mrf.mxu0
      %v9685 = vadd.f32 0.0, %v9684
      %v9686 = vpop.f32.mrf.mxu0
      %9687 = vmatprep.mubr.bf16.mxu0 0
      %9688 = vmatmul.mubr.bf16.gmra.mxu0 %v9555
      %v9689 = vpop.f32.mrf.mxu0
      %v9690 = vadd.f32 0.0, %v9689
      %v9691 = vpop.f32.mrf.mxu0
      %v9692 = vpop.f32.mrf.mxu0
      %v9693 = vadd.f32 0.0, %v9692
      %v9694 = vpop.f32.mrf.mxu0
      %9695 = vmatprep.mubr.bf16.mxu0 0
      %9696 = vmatmul.mubr.bf16.gmra.mxu0 %v9558
      %v9697 = vpop.f32.mrf.mxu0
      %v9698 = vadd.f32 0.0, %v9697
      %v9699 = vpop.f32.mrf.mxu0
      %v9700 = vpop.f32.mrf.mxu0
      %v9701 = vadd.f32 0.0, %v9700
      %v9702 = vpop.f32.mrf.mxu0
      %9703 = vmatprep.mubr.bf16.mxu0 0
      %9704 = vmatmul.mubr.bf16.gmra.mxu0 %v9561
      %v9705 = vpop.f32.mrf.mxu0
      %v9706 = vadd.f32 0.0, %v9705
      %v9707 = vpop.f32.mrf.mxu0
      %v9708 = vpop.f32.mrf.mxu0
      %v9709 = vadd.f32 0.0, %v9708
      %v9710 = vpop.f32.mrf.mxu0
      %9711 = vmatprep.mubr.bf16.mxu0 0
      %9712 = vmatmul.mubr.bf16.gmra.mxu0 %v9564
      %v9713 = vpop.f32.mrf.mxu0
      %v9714 = vadd.f32 0.0, %v9713
      %v9715 = vpop.f32.mrf.mxu0
      %v9716 = vpop.f32.mrf.mxu0
      %v9717 = vadd.f32 0.0, %v9716
      %v9718 = vpop.f32.mrf.mxu0
      %9719 = vmatprep.mubr.bf16.mxu0 0
      %9720 = vmatmul.mubr.bf16.gmra.mxu0 %v9567
      %v9721 = vpop.f32.mrf.mxu0
      %v9722 = vadd.f32 0.0, %v9721
      %v9723 = vpop.f32.mrf.mxu0
      %v9724 = vpop.f32.mrf.mxu0
      %v9725 = vadd.f32 0.0, %v9724
      %v9726 = vpop.f32.mrf.mxu0
      %9727 = vmatprep.mubr.bf16.mxu0 0
      %9728 = vmatmul.mubr.bf16.gmra.mxu0 %v9570
      %v9729 = vpop.f32.mrf.mxu0
      %v9730 = vadd.f32 0.0, %v9729
      %v9731 = vpop.f32.mrf.mxu0
      %v9732 = vpop.f32.mrf.mxu0
      %v9733 = vadd.f32 0.0, %v9732
      %v9734 = vpop.f32.mrf.mxu0
      %9735 = vdwg.mxu0
      %v9736 = vadd.f32 %v8916, %v9610
      %v9737 = vadd.f32 %v8919, %v9613
      %v9738 = vadd.f32 %v8924, %v9618
      %v9739 = vadd.f32 %v8927, %v9621
      %v9740 = vadd.f32 %v8932, %v9626
      %v9741 = vadd.f32 %v8935, %v9629
      %v9742 = vadd.f32 %v8940, %v9634
      %v9743 = vadd.f32 %v8943, %v9637
      %v9744 = vadd.f32 %v8948, %v9642
      %v9745 = vadd.f32 %v8951, %v9645
      %v9746 = vadd.f32 %v8956, %v9650
      %v9747 = vadd.f32 %v8959, %v9653
      %v9748 = vadd.f32 %v8964, %v9658
      %v9749 = vadd.f32 %v8967, %v9661
      %v9750 = vadd.f32 %v8972, %v9666
      %v9751 = vadd.f32 %v8975, %v9669
      %v9752 = vadd.f32 %v8980, %v9674
      %v9753 = vadd.f32 %v8983, %v9677
      %v9754 = vadd.f32 %v8988, %v9682
      %v9755 = vadd.f32 %v8991, %v9685
      %v9756 = vadd.f32 %v8996, %v9690
      %v9757 = vadd.f32 %v8999, %v9693
      %v9758 = vadd.f32 %v9004, %v9698
      %v9759 = vadd.f32 %v9007, %v9701
      %v9760 = vadd.f32 %v9012, %v9706
      %v9761 = vadd.f32 %v9015, %v9709
      %v9762 = vadd.f32 %v9020, %v9714
      %v9763 = vadd.f32 %v9023, %v9717
      %v9764 = vadd.f32 %v9028, %v9722
      %v9765 = vadd.f32 %v9031, %v9725
      %v9766 = vadd.f32 %v9036, %v9730
      %v9767 = vadd.f32 %v9039, %v9733
      %v9768 = vadd.f32 %v8054, %v9736
      %v9769 = vadd.f32 %v8055, %v9737
      %v9770 = vadd.f32 %v8056, %v9738
      %v9771 = vadd.f32 %v8057, %v9739
      %v9772 = vadd.f32 %v8058, %v9740
      %v9773 = vadd.f32 %v8059, %v9741
      %v9774 = vadd.f32 %v8060, %v9742
      %v9775 = vadd.f32 %v8061, %v9743
      %v9776 = vadd.f32 %v8062, %v9744
      %v9777 = vadd.f32 %v8063, %v9745
      %v9778 = vadd.f32 %v8064, %v9746
      %v9779 = vadd.f32 %v8065, %v9747
      %v9780 = vadd.f32 %v8066, %v9748
      %v9781 = vadd.f32 %v8067, %v9749
      %v9782 = vadd.f32 %v8068, %v9750
      %v9783 = vadd.f32 %v8069, %v9751
      %v9784 = vadd.f32 %v8070, %v9752
      %v9785 = vadd.f32 %v8071, %v9753
      %v9786 = vadd.f32 %v8072, %v9754
      %v9787 = vadd.f32 %v8073, %v9755
      %v9788 = vadd.f32 %v8074, %v9756
      %v9789 = vadd.f32 %v8075, %v9757
      %v9790 = vadd.f32 %v8076, %v9758
      %v9791 = vadd.f32 %v8077, %v9759
      %v9792 = vadd.f32 %v8078, %v9760
      %v9793 = vadd.f32 %v8079, %v9761
      %v9794 = vadd.f32 %v8080, %v9762
      %v9795 = vadd.f32 %v8081, %v9763
      %v9796 = vadd.f32 %v8082, %v9764
      %v9797 = vadd.f32 %v8083, %v9765
      %v9798 = vadd.f32 %v8084, %v9766
      %v9799 = vadd.f32 %v8085, %v9767
      %s9800 = scalar_lea.vmem [#allocation3], 40
      %v9801 = vld [vmem:[%s9800 + $0x4] sm:$0x8]
      %v9802 = vld [vmem:[%s9800 + $0x8] sm:$0xf]
      %v9803 = vld [vmem:[%s9800 + $0xc] sm:$0xf]
      %v9804 = vld [vmem:[%s9800 + $0x18] sm:$0x8]
      %v9805 = vld [vmem:[%s9800 + $0x1c] sm:$0xf]
      %v9806 = vld [vmem:[%s9800 + $0x20] sm:$0xf]
      %v9807 = vld [vmem:[%s9800 + $0x2c] sm:$0x8]
      %v9808 = vld [vmem:[%s9800 + $0x30] sm:$0xf]
      %v9809 = vld [vmem:[%s9800 + $0x34] sm:$0xf]
      %v9810 = vld [vmem:[%s9800 + $0x40] sm:$0x8]
      %v9811 = vld [vmem:[%s9800 + $0x44] sm:$0xf]
      %v9812 = vld [vmem:[%s9800 + $0x48] sm:$0xf]
      %v9813 = vld [vmem:[%s9800 + $0x54] sm:$0x8]
      %v9814 = vld [vmem:[%s9800 + $0x58] sm:$0xf]
      %v9815 = vld [vmem:[%s9800 + $0x5c] sm:$0xf]
      %v9816 = vld [vmem:[%s9800 + $0x68] sm:$0x8]
      %v9817 = vld [vmem:[%s9800 + $0x6c] sm:$0xf]
      %v9818 = vld [vmem:[%s9800 + $0x70] sm:$0xf]
      %v9819 = vld [vmem:[%s9800 + $0x7c] sm:$0x8]
      %v9820 = vld [vmem:[%s9800 + $0x80] sm:$0xf]
      %v9821 = vld [vmem:[%s9800 + $0x84] sm:$0xf]
      %v9822 = vld [vmem:[%s9800 + $0x90] sm:$0x8]
      %v9823 = vld [vmem:[%s9800 + $0x94] sm:$0xf]
      %v9824 = vld [vmem:[%s9800 + $0x98] sm:$0xf]
      %v9825 = vld [vmem:[%s9800 + $0xa4] sm:$0x8]
      %v9826 = vld [vmem:[%s9800 + $0xa8] sm:$0xf]
      %v9827 = vld [vmem:[%s9800 + $0xac] sm:$0xf]
      %v9828 = vld [vmem:[%s9800 + $0xb8] sm:$0x8]
      %v9829 = vld [vmem:[%s9800 + $0xbc] sm:$0xf]
      %v9830 = vld [vmem:[%s9800 + $0xc0] sm:$0xf]
      %v9831 = vld [vmem:[%s9800 + $0xcc] sm:$0x8]
      %v9832 = vld [vmem:[%s9800 + $0xd0] sm:$0xf]
      %v9833 = vld [vmem:[%s9800 + $0xd4] sm:$0xf]
      %v9834 = vld [vmem:[%s9800 + $0xe0] sm:$0x8]
      %v9835 = vld [vmem:[%s9800 + $0xe4] sm:$0xf]
      %v9836 = vld [vmem:[%s9800 + $0xe8] sm:$0xf]
      %v9837 = vld [vmem:[%s9800 + $0xf4] sm:$0x8]
      %v9838 = vld [vmem:[%s9800 + $0xf8] sm:$0xf]
      %v9839 = vld [vmem:[%s9800 + $0xfc] sm:$0xf]
      %v9840 = vld [vmem:[%s9800 + $0x108] sm:$0x8]
      %v9841 = vld [vmem:[%s9800 + $0x10c] sm:$0xf]
      %v9842 = vld [vmem:[%s9800 + $0x110] sm:$0xf]
      %v9843 = vld [vmem:[%s9800 + $0x11c] sm:$0x8]
      %v9844 = vld [vmem:[%s9800 + $0x120] sm:$0xf]
      %v9845 = vld [vmem:[%s9800 + $0x124] sm:$0xf]
      %v9846 = vld [vmem:[%s9800 + $0x130] sm:$0x8]
      %v9847 = vld [vmem:[%s9800 + $0x134] sm:$0xf]
      %v9848 = vld [vmem:[%s9800 + $0x138] sm:$0xf]
      %v9850 = vshrl.u32 %v9801, 16
      %v9852 = vrot.slane %v9850, 7
      %v9853 = vrot.slane %v9852, 4
      %v9855 = vshrl.u32 %v9802, 16
      %v9857 = vrot.slane %v9855, 7
      %v9858 = vshll.u32 %v9802, 16
      %v9860 = vor.u32 %v9857, %v9858
      %v9861 = vsel %vm1001, %v9853, %v9860
      %v9862 = vrot.slane %v9857, 4
      %v9864 = vshrl.u32 %v9803, 16
      %v9866 = vrot.slane %v9864, 7
      %v9867 = vshll.u32 %v9803, 16
      %v9869 = vor.u32 %v9866, %v9867
      %v9870 = vsel %vm1001, %v9862, %v9869
      %v9872 = vshrl.u32 %v9804, 16
      %v9874 = vrot.slane %v9872, 7
      %v9875 = vrot.slane %v9874, 4
      %v9877 = vshrl.u32 %v9805, 16
      %v9879 = vrot.slane %v9877, 7
      %v9880 = vshll.u32 %v9805, 16
      %v9882 = vor.u32 %v9879, %v9880
      %v9883 = vsel %vm1001, %v9875, %v9882
      %v9884 = vrot.slane %v9879, 4
      %v9886 = vshrl.u32 %v9806, 16
      %v9888 = vrot.slane %v9886, 7
      %v9889 = vshll.u32 %v9806, 16
      %v9891 = vor.u32 %v9888, %v9889
      %v9892 = vsel %vm1001, %v9884, %v9891
      %v9894 = vshrl.u32 %v9807, 16
      %v9896 = vrot.slane %v9894, 7
      %v9897 = vrot.slane %v9896, 4
      %v9899 = vshrl.u32 %v9808, 16
      %v9901 = vrot.slane %v9899, 7
      %v9902 = vshll.u32 %v9808, 16
      %v9904 = vor.u32 %v9901, %v9902
      %v9905 = vsel %vm1001, %v9897, %v9904
      %v9906 = vrot.slane %v9901, 4
      %v9908 = vshrl.u32 %v9809, 16
      %v9910 = vrot.slane %v9908, 7
      %v9911 = vshll.u32 %v9809, 16
      %v9913 = vor.u32 %v9910, %v9911
      %v9914 = vsel %vm1001, %v9906, %v9913
      %v9916 = vshrl.u32 %v9810, 16
      %v9918 = vrot.slane %v9916, 7
      %v9919 = vrot.slane %v9918, 4
      %v9921 = vshrl.u32 %v9811, 16
      %v9923 = vrot.slane %v9921, 7
      %v9924 = vshll.u32 %v9811, 16
      %v9926 = vor.u32 %v9923, %v9924
      %v9927 = vsel %vm1001, %v9919, %v9926
      %v9928 = vrot.slane %v9923, 4
      %v9930 = vshrl.u32 %v9812, 16
      %v9932 = vrot.slane %v9930, 7
      %v9933 = vshll.u32 %v9812, 16
      %v9935 = vor.u32 %v9932, %v9933
      %v9936 = vsel %vm1001, %v9928, %v9935
      %v9938 = vshrl.u32 %v9813, 16
      %v9940 = vrot.slane %v9938, 7
      %v9941 = vrot.slane %v9940, 4
      %v9943 = vshrl.u32 %v9814, 16
      %v9945 = vrot.slane %v9943, 7
      %v9946 = vshll.u32 %v9814, 16
      %v9948 = vor.u32 %v9945, %v9946
      %v9949 = vsel %vm1001, %v9941, %v9948
      %v9950 = vrot.slane %v9945, 4
      %v9952 = vshrl.u32 %v9815, 16
      %v9954 = vrot.slane %v9952, 7
      %v9955 = vshll.u32 %v9815, 16
      %v9957 = vor.u32 %v9954, %v9955
      %v9958 = vsel %vm1001, %v9950, %v9957
      %v9960 = vshrl.u32 %v9816, 16
      %v9962 = vrot.slane %v9960, 7
      %v9963 = vrot.slane %v9962, 4
      %v9965 = vshrl.u32 %v9817, 16
      %v9967 = vrot.slane %v9965, 7
      %v9968 = vshll.u32 %v9817, 16
      %v9970 = vor.u32 %v9967, %v9968
      %v9971 = vsel %vm1001, %v9963, %v9970
      %v9972 = vrot.slane %v9967, 4
      %v9974 = vshrl.u32 %v9818, 16
      %v9976 = vrot.slane %v9974, 7
      %v9977 = vshll.u32 %v9818, 16
      %v9979 = vor.u32 %v9976, %v9977
      %v9980 = vsel %vm1001, %v9972, %v9979
      %v9982 = vshrl.u32 %v9819, 16
      %v9984 = vrot.slane %v9982, 7
      %v9985 = vrot.slane %v9984, 4
      %v9987 = vshrl.u32 %v9820, 16
      %v9989 = vrot.slane %v9987, 7
      %v9990 = vshll.u32 %v9820, 16
      %v9992 = vor.u32 %v9989, %v9990
      %v9993 = vsel %vm1001, %v9985, %v9992
      %v9994 = vrot.slane %v9989, 4
      %v9996 = vshrl.u32 %v9821, 16
      %v9998 = vrot.slane %v9996, 7
      %v9999 = vshll.u32 %v9821, 16
      %v10001 = vor.u32 %v9998, %v9999
      %v10002 = vsel %vm1001, %v9994, %v10001
      %v10004 = vshrl.u32 %v9822, 16
      %v10006 = vrot.slane %v10004, 7
      %v10007 = vrot.slane %v10006, 4
      %v10009 = vshrl.u32 %v9823, 16
      %v10011 = vrot.slane %v10009, 7
      %v10012 = vshll.u32 %v9823, 16
      %v10014 = vor.u32 %v10011, %v10012
      %v10015 = vsel %vm1001, %v10007, %v10014
      %v10016 = vrot.slane %v10011, 4
      %v10018 = vshrl.u32 %v9824, 16
      %v10020 = vrot.slane %v10018, 7
      %v10021 = vshll.u32 %v9824, 16
      %v10023 = vor.u32 %v10020, %v10021
      %v10024 = vsel %vm1001, %v10016, %v10023
      %v10026 = vshrl.u32 %v9825, 16
      %v10028 = vrot.slane %v10026, 7
      %v10029 = vrot.slane %v10028, 4
      %v10031 = vshrl.u32 %v9826, 16
      %v10033 = vrot.slane %v10031, 7
      %v10034 = vshll.u32 %v9826, 16
      %v10036 = vor.u32 %v10033, %v10034
      %v10037 = vsel %vm1001, %v10029, %v10036
      %v10038 = vrot.slane %v10033, 4
      %v10040 = vshrl.u32 %v9827, 16
      %v10042 = vrot.slane %v10040, 7
      %v10043 = vshll.u32 %v9827, 16
      %v10045 = vor.u32 %v10042, %v10043
      %v10046 = vsel %vm1001, %v10038, %v10045
      %v10048 = vshrl.u32 %v9828, 16
      %v10050 = vrot.slane %v10048, 7
      %v10051 = vrot.slane %v10050, 4
      %v10053 = vshrl.u32 %v9829, 16
      %v10055 = vrot.slane %v10053, 7
      %v10056 = vshll.u32 %v9829, 16
      %v10058 = vor.u32 %v10055, %v10056
      %v10059 = vsel %vm1001, %v10051, %v10058
      %v10060 = vrot.slane %v10055, 4
      %v10062 = vshrl.u32 %v9830, 16
      %v10064 = vrot.slane %v10062, 7
      %v10065 = vshll.u32 %v9830, 16
      %v10067 = vor.u32 %v10064, %v10065
      %v10068 = vsel %vm1001, %v10060, %v10067
      %v10070 = vshrl.u32 %v9831, 16
      %v10072 = vrot.slane %v10070, 7
      %v10073 = vrot.slane %v10072, 4
      %v10075 = vshrl.u32 %v9832, 16
      %v10077 = vrot.slane %v10075, 7
      %v10078 = vshll.u32 %v9832, 16
      %v10080 = vor.u32 %v10077, %v10078
      %v10081 = vsel %vm1001, %v10073, %v10080
      %v10082 = vrot.slane %v10077, 4
      %v10084 = vshrl.u32 %v9833, 16
      %v10086 = vrot.slane %v10084, 7
      %v10087 = vshll.u32 %v9833, 16
      %v10089 = vor.u32 %v10086, %v10087
      %v10090 = vsel %vm1001, %v10082, %v10089
      %v10092 = vshrl.u32 %v9834, 16
      %v10094 = vrot.slane %v10092, 7
      %v10095 = vrot.slane %v10094, 4
      %v10097 = vshrl.u32 %v9835, 16
      %v10099 = vrot.slane %v10097, 7
      %v10100 = vshll.u32 %v9835, 16
      %v10102 = vor.u32 %v10099, %v10100
      %v10103 = vsel %vm1001, %v10095, %v10102
      %v10104 = vrot.slane %v10099, 4
      %v10106 = vshrl.u32 %v9836, 16
      %v10108 = vrot.slane %v10106, 7
      %v10109 = vshll.u32 %v9836, 16
      %v10111 = vor.u32 %v10108, %v10109
      %v10112 = vsel %vm1001, %v10104, %v10111
      %v10114 = vshrl.u32 %v9837, 16
      %v10116 = vrot.slane %v10114, 7
      %v10117 = vrot.slane %v10116, 4
      %v10119 = vshrl.u32 %v9838, 16
      %v10121 = vrot.slane %v10119, 7
      %v10122 = vshll.u32 %v9838, 16
      %v10124 = vor.u32 %v10121, %v10122
      %v10125 = vsel %vm1001, %v10117, %v10124
      %v10126 = vrot.slane %v10121, 4
      %v10128 = vshrl.u32 %v9839, 16
      %v10130 = vrot.slane %v10128, 7
      %v10131 = vshll.u32 %v9839, 16
      %v10133 = vor.u32 %v10130, %v10131
      %v10134 = vsel %vm1001, %v10126, %v10133
      %v10136 = vshrl.u32 %v9840, 16
      %v10138 = vrot.slane %v10136, 7
      %v10139 = vrot.slane %v10138, 4
      %v10141 = vshrl.u32 %v9841, 16
      %v10143 = vrot.slane %v10141, 7
      %v10144 = vshll.u32 %v9841, 16
      %v10146 = vor.u32 %v10143, %v10144
      %v10147 = vsel %vm1001, %v10139, %v10146
      %v10148 = vrot.slane %v10143, 4
      %v10150 = vshrl.u32 %v9842, 16
      %v10152 = vrot.slane %v10150, 7
      %v10153 = vshll.u32 %v9842, 16
      %v10155 = vor.u32 %v10152, %v10153
      %v10156 = vsel %vm1001, %v10148, %v10155
      %v10158 = vshrl.u32 %v9843, 16
      %v10160 = vrot.slane %v10158, 7
      %v10161 = vrot.slane %v10160, 4
      %v10163 = vshrl.u32 %v9844, 16
      %v10165 = vrot.slane %v10163, 7
      %v10166 = vshll.u32 %v9844, 16
      %v10168 = vor.u32 %v10165, %v10166
      %v10169 = vsel %vm1001, %v10161, %v10168
      %v10170 = vrot.slane %v10165, 4
      %v10172 = vshrl.u32 %v9845, 16
      %v10174 = vrot.slane %v10172, 7
      %v10175 = vshll.u32 %v9845, 16
      %v10177 = vor.u32 %v10174, %v10175
      %v10178 = vsel %vm1001, %v10170, %v10177
      %v10180 = vshrl.u32 %v9846, 16
      %v10182 = vrot.slane %v10180, 7
      %v10183 = vrot.slane %v10182, 4
      %v10185 = vshrl.u32 %v9847, 16
      %v10187 = vrot.slane %v10185, 7
      %v10188 = vshll.u32 %v9847, 16
      %v10190 = vor.u32 %v10187, %v10188
      %v10191 = vsel %vm1001, %v10183, %v10190
      %v10192 = vrot.slane %v10187, 4
      %v10194 = vshrl.u32 %v9848, 16
      %v10196 = vrot.slane %v10194, 7
      %v10197 = vshll.u32 %v9848, 16
      %v10199 = vor.u32 %v10196, %v10197
      %v10200 = vsel %vm1001, %v10192, %v10199
      %s10201 = scalar_lea.vmem %s5, 12
      %v10202 = vld [vmem:[%s10201] sm:$0x3]
      %s10203 = scalar_lea.vmem %s5, 14
      %v10204 = vld [vmem:[%s10203] sm:$0x3]
      %v10237 = vunpack.c.l.b16 %v9802
      %v10238 = vunpack.c.l.b16 %v9803
      %v10239 = vunpack.c.l.b16 %v9805
      %v10240 = vunpack.c.l.b16 %v9806
      %v10241 = vunpack.c.l.b16 %v9808
      %v10242 = vunpack.c.l.b16 %v9809
      %v10243 = vunpack.c.l.b16 %v9811
      %v10244 = vunpack.c.l.b16 %v9812
      %v10245 = vunpack.c.l.b16 %v9814
      %v10246 = vunpack.c.l.b16 %v9815
      %v10247 = vunpack.c.l.b16 %v9817
      %v10248 = vunpack.c.l.b16 %v9818
      %v10249 = vunpack.c.l.b16 %v9820
      %v10250 = vunpack.c.l.b16 %v9821
      %v10251 = vunpack.c.l.b16 %v9823
      %v10252 = vunpack.c.l.b16 %v9824
      %v10253 = vunpack.c.l.b16 %v9826
      %v10254 = vunpack.c.l.b16 %v9827
      %v10255 = vunpack.c.l.b16 %v9829
      %v10256 = vunpack.c.l.b16 %v9830
      %v10257 = vunpack.c.l.b16 %v9832
      %v10258 = vunpack.c.l.b16 %v9833
      %v10259 = vunpack.c.l.b16 %v9835
      %v10260 = vunpack.c.l.b16 %v9836
      %v10261 = vunpack.c.l.b16 %v9838
      %v10262 = vunpack.c.l.b16 %v9839
      %v10263 = vunpack.c.l.b16 %v9841
      %v10264 = vunpack.c.l.b16 %v9842
      %v10265 = vunpack.c.l.b16 %v9844
      %v10266 = vunpack.c.l.b16 %v9845
      %v10267 = vunpack.c.l.b16 %v9847
      %v10268 = vunpack.c.l.b16 %v9848
      %v10269 = vpack.c.b16 %v10238, %v10237
      %v10270 = vpack.c.b16 %v10240, %v10239
      %v10271 = vpack.c.b16 %v10242, %v10241
      %v10272 = vpack.c.b16 %v10244, %v10243
      %v10273 = vpack.c.b16 %v10246, %v10245
      %v10274 = vpack.c.b16 %v10248, %v10247
      %v10275 = vpack.c.b16 %v10250, %v10249
      %v10276 = vpack.c.b16 %v10252, %v10251
      %v10277 = vpack.c.b16 %v10254, %v10253
      %v10278 = vpack.c.b16 %v10256, %v10255
      %v10279 = vpack.c.b16 %v10258, %v10257
      %v10280 = vpack.c.b16 %v10260, %v10259
      %v10281 = vpack.c.b16 %v10262, %v10261
      %v10282 = vpack.c.b16 %v10264, %v10263
      %v10283 = vpack.c.b16 %v10266, %v10265
      %v10284 = vpack.c.b16 %v10268, %v10267
      %v10286 = vsel %vm6854, %v10269, 0
      %v10289 = vsel %vm6854, %v10270, 0
      %v10292 = vsel %vm6854, %v10271, 0
      %v10295 = vsel %vm6854, %v10272, 0
      %v10298 = vsel %vm6854, %v10273, 0
      %v10301 = vsel %vm6854, %v10274, 0
      %v10304 = vsel %vm6854, %v10275, 0
      %v10307 = vsel %vm6854, %v10276, 0
      %v10310 = vsel %vm6854, %v10277, 0
      %v10313 = vsel %vm6854, %v10278, 0
      %v10316 = vsel %vm6854, %v10279, 0
      %v10319 = vsel %vm6854, %v10280, 0
      %v10322 = vsel %vm6854, %v10281, 0
      %v10325 = vsel %vm6854, %v10282, 0
      %v10328 = vsel %vm6854, %v10283, 0
      %v10331 = vsel %vm6854, %v10284, 0
      %v10334 = vsel %vm6903, %v10204, 0
      %10336 = vmatprep.subr.bf16.mxu0 0
      %10337 = vmatpush1.bf16.msra.mxu0 0
      %10338 = vmatprep.subr.bf16.mxu0 0
      %10339 = vmatpush1.bf16.msra.mxu0 0
      %10340 = vmatprep.subr.bf16.mxu0 0
      %10341 = vmatpush1.bf16.msra.mxu0 0
      %10342 = vmatprep.subr.bf16.mxu0 0
      %10343 = vmatpush1.bf16.msra.mxu0 0
      %10344 = vmatprep.subr.bf16.mxu0 0
      %10345 = vmatpush1.bf16.msra.mxu0 0
      %10346 = vmatprep.subr.bf16.mxu0 0
      %10347 = vmatpush1.bf16.msra.mxu0 0
      %10348 = vmatprep.subr.bf16.mxu0 0
      %10349 = vmatpush1.bf16.msra.mxu0 0
      %10350 = vmatprep.subr.bf16.mxu0 0
      %10351 = vmatpush1.bf16.msra.mxu0 %v10334
      %10352 = vmatprep.subr.bf16.mxu0 0
      %10353 = vmatpush2.bf16.msra.mxu0 0
      %10354 = vmatprep.subr.bf16.mxu0 0
      %10355 = vmatpush2.bf16.msra.mxu0 0
      %10356 = vmatprep.subr.bf16.mxu0 0
      %10357 = vmatpush2.bf16.msra.mxu0 0
      %10358 = vmatprep.subr.bf16.mxu0 0
      %10359 = vmatpush2.bf16.msra.mxu0 0
      %10360 = vmatprep.subr.bf16.mxu0 0
      %10361 = vmatpush2.bf16.msra.mxu0 0
      %10362 = vmatprep.subr.bf16.mxu0 0
      %10363 = vmatpush2.bf16.msra.mxu0 0
      %10364 = vmatprep.subr.bf16.mxu0 0
      %10365 = vmatpush2.bf16.msra.mxu0 0
      %10366 = vmatprep.subr.bf16.mxu0 0
      %10367 = vmatpush2.bf16.msra.mxu0 0
      %10368 = vmatprep.mubr.bf16.mxu0 0
      %10369 = vmatmul.mubr.bf16.gmra.mxu0 %v10286
      %v10370 = vpop.f32.mrf.mxu0
      %v10371 = vadd.f32 0.0, %v10370
      %v10372 = vpop.f32.mrf.mxu0
      %v10373 = vpop.f32.mrf.mxu0
      %v10374 = vadd.f32 0.0, %v10373
      %v10375 = vpop.f32.mrf.mxu0
      %10376 = vmatprep.mubr.bf16.mxu0 0
      %10377 = vmatmul.mubr.bf16.gmra.mxu0 %v10289
      %v10378 = vpop.f32.mrf.mxu0
      %v10379 = vadd.f32 0.0, %v10378
      %v10380 = vpop.f32.mrf.mxu0
      %v10381 = vpop.f32.mrf.mxu0
      %v10382 = vadd.f32 0.0, %v10381
      %v10383 = vpop.f32.mrf.mxu0
      %10384 = vmatprep.mubr.bf16.mxu0 0
      %10385 = vmatmul.mubr.bf16.gmra.mxu0 %v10292
      %v10386 = vpop.f32.mrf.mxu0
      %v10387 = vadd.f32 0.0, %v10386
      %v10388 = vpop.f32.mrf.mxu0
      %v10389 = vpop.f32.mrf.mxu0
      %v10390 = vadd.f32 0.0, %v10389
      %v10391 = vpop.f32.mrf.mxu0
      %10392 = vmatprep.mubr.bf16.mxu0 0
      %10393 = vmatmul.mubr.bf16.gmra.mxu0 %v10295
      %v10394 = vpop.f32.mrf.mxu0
      %v10395 = vadd.f32 0.0, %v10394
      %v10396 = vpop.f32.mrf.mxu0
      %v10397 = vpop.f32.mrf.mxu0
      %v10398 = vadd.f32 0.0, %v10397
      %v10399 = vpop.f32.mrf.mxu0
      %10400 = vmatprep.mubr.bf16.mxu0 0
      %10401 = vmatmul.mubr.bf16.gmra.mxu0 %v10298
      %v10402 = vpop.f32.mrf.mxu0
      %v10403 = vadd.f32 0.0, %v10402
      %v10404 = vpop.f32.mrf.mxu0
      %v10405 = vpop.f32.mrf.mxu0
      %v10406 = vadd.f32 0.0, %v10405
      %v10407 = vpop.f32.mrf.mxu0
      %10408 = vmatprep.mubr.bf16.mxu0 0
      %10409 = vmatmul.mubr.bf16.gmra.mxu0 %v10301
      %v10410 = vpop.f32.mrf.mxu0
      %v10411 = vadd.f32 0.0, %v10410
      %v10412 = vpop.f32.mrf.mxu0
      %v10413 = vpop.f32.mrf.mxu0
      %v10414 = vadd.f32 0.0, %v10413
      %v10415 = vpop.f32.mrf.mxu0
      %10416 = vmatprep.mubr.bf16.mxu0 0
      %10417 = vmatmul.mubr.bf16.gmra.mxu0 %v10304
      %v10418 = vpop.f32.mrf.mxu0
      %v10419 = vadd.f32 0.0, %v10418
      %v10420 = vpop.f32.mrf.mxu0
      %v10421 = vpop.f32.mrf.mxu0
      %v10422 = vadd.f32 0.0, %v10421
      %v10423 = vpop.f32.mrf.mxu0
      %10424 = vmatprep.mubr.bf16.mxu0 0
      %10425 = vmatmul.mubr.bf16.gmra.mxu0 %v10307
      %v10426 = vpop.f32.mrf.mxu0
      %v10427 = vadd.f32 0.0, %v10426
      %v10428 = vpop.f32.mrf.mxu0
      %v10429 = vpop.f32.mrf.mxu0
      %v10430 = vadd.f32 0.0, %v10429
      %v10431 = vpop.f32.mrf.mxu0
      %10432 = vmatprep.mubr.bf16.mxu0 0
      %10433 = vmatmul.mubr.bf16.gmra.mxu0 %v10310
      %v10434 = vpop.f32.mrf.mxu0
      %v10435 = vadd.f32 0.0, %v10434
      %v10436 = vpop.f32.mrf.mxu0
      %v10437 = vpop.f32.mrf.mxu0
      %v10438 = vadd.f32 0.0, %v10437
      %v10439 = vpop.f32.mrf.mxu0
      %10440 = vmatprep.mubr.bf16.mxu0 0
      %10441 = vmatmul.mubr.bf16.gmra.mxu0 %v10313
      %v10442 = vpop.f32.mrf.mxu0
      %v10443 = vadd.f32 0.0, %v10442
      %v10444 = vpop.f32.mrf.mxu0
      %v10445 = vpop.f32.mrf.mxu0
      %v10446 = vadd.f32 0.0, %v10445
      %v10447 = vpop.f32.mrf.mxu0
      %10448 = vmatprep.mubr.bf16.mxu0 0
      %10449 = vmatmul.mubr.bf16.gmra.mxu0 %v10316
      %v10450 = vpop.f32.mrf.mxu0
      %v10451 = vadd.f32 0.0, %v10450
      %v10452 = vpop.f32.mrf.mxu0
      %v10453 = vpop.f32.mrf.mxu0
      %v10454 = vadd.f32 0.0, %v10453
      %v10455 = vpop.f32.mrf.mxu0
      %10456 = vmatprep.mubr.bf16.mxu0 0
      %10457 = vmatmul.mubr.bf16.gmra.mxu0 %v10319
      %v10458 = vpop.f32.mrf.mxu0
      %v10459 = vadd.f32 0.0, %v10458
      %v10460 = vpop.f32.mrf.mxu0
      %v10461 = vpop.f32.mrf.mxu0
      %v10462 = vadd.f32 0.0, %v10461
      %v10463 = vpop.f32.mrf.mxu0
      %10464 = vmatprep.mubr.bf16.mxu0 0
      %10465 = vmatmul.mubr.bf16.gmra.mxu0 %v10322
      %v10466 = vpop.f32.mrf.mxu0
      %v10467 = vadd.f32 0.0, %v10466
      %v10468 = vpop.f32.mrf.mxu0
      %v10469 = vpop.f32.mrf.mxu0
      %v10470 = vadd.f32 0.0, %v10469
      %v10471 = vpop.f32.mrf.mxu0
      %10472 = vmatprep.mubr.bf16.mxu0 0
      %10473 = vmatmul.mubr.bf16.gmra.mxu0 %v10325
      %v10474 = vpop.f32.mrf.mxu0
      %v10475 = vadd.f32 0.0, %v10474
      %v10476 = vpop.f32.mrf.mxu0
      %v10477 = vpop.f32.mrf.mxu0
      %v10478 = vadd.f32 0.0, %v10477
      %v10479 = vpop.f32.mrf.mxu0
      %10480 = vmatprep.mubr.bf16.mxu0 0
      %10481 = vmatmul.mubr.bf16.gmra.mxu0 %v10328
      %v10482 = vpop.f32.mrf.mxu0
      %v10483 = vadd.f32 0.0, %v10482
      %v10484 = vpop.f32.mrf.mxu0
      %v10485 = vpop.f32.mrf.mxu0
      %v10486 = vadd.f32 0.0, %v10485
      %v10487 = vpop.f32.mrf.mxu0
      %10488 = vmatprep.mubr.bf16.mxu0 0
      %10489 = vmatmul.mubr.bf16.gmra.mxu0 %v10331
      %v10490 = vpop.f32.mrf.mxu0
      %v10491 = vadd.f32 0.0, %v10490
      %v10492 = vpop.f32.mrf.mxu0
      %v10493 = vpop.f32.mrf.mxu0
      %v10494 = vadd.f32 0.0, %v10493
      %v10495 = vpop.f32.mrf.mxu0
      %10496 = vdwg.mxu0
      %v10497 = vunpack.c.l.b16 %v9861
      %v10498 = vunpack.c.l.b16 %v9870
      %v10499 = vunpack.c.l.b16 %v9883
      %v10500 = vunpack.c.l.b16 %v9892
      %v10501 = vunpack.c.l.b16 %v9905
      %v10502 = vunpack.c.l.b16 %v9914
      %v10503 = vunpack.c.l.b16 %v9927
      %v10504 = vunpack.c.l.b16 %v9936
      %v10505 = vunpack.c.l.b16 %v9949
      %v10506 = vunpack.c.l.b16 %v9958
      %v10507 = vunpack.c.l.b16 %v9971
      %v10508 = vunpack.c.l.b16 %v9980
      %v10509 = vunpack.c.l.b16 %v9993
      %v10510 = vunpack.c.l.b16 %v10002
      %v10511 = vunpack.c.l.b16 %v10015
      %v10512 = vunpack.c.l.b16 %v10024
      %v10513 = vunpack.c.l.b16 %v10037
      %v10514 = vunpack.c.l.b16 %v10046
      %v10515 = vunpack.c.l.b16 %v10059
      %v10516 = vunpack.c.l.b16 %v10068
      %v10517 = vunpack.c.l.b16 %v10081
      %v10518 = vunpack.c.l.b16 %v10090
      %v10519 = vunpack.c.l.b16 %v10103
      %v10520 = vunpack.c.l.b16 %v10112
      %v10521 = vunpack.c.l.b16 %v10125
      %v10522 = vunpack.c.l.b16 %v10134
      %v10523 = vunpack.c.l.b16 %v10147
      %v10524 = vunpack.c.l.b16 %v10156
      %v10525 = vunpack.c.l.b16 %v10169
      %v10526 = vunpack.c.l.b16 %v10178
      %v10527 = vunpack.c.l.b16 %v10191
      %v10528 = vunpack.c.l.b16 %v10200
      %v10529 = vpack.c.b16 %v10498, %v10497
      %v10530 = vpack.c.b16 %v10500, %v10499
      %v10531 = vpack.c.b16 %v10502, %v10501
      %v10532 = vpack.c.b16 %v10504, %v10503
      %v10533 = vpack.c.b16 %v10506, %v10505
      %v10534 = vpack.c.b16 %v10508, %v10507
      %v10535 = vpack.c.b16 %v10510, %v10509
      %v10536 = vpack.c.b16 %v10512, %v10511
      %v10537 = vpack.c.b16 %v10514, %v10513
      %v10538 = vpack.c.b16 %v10516, %v10515
      %v10539 = vpack.c.b16 %v10518, %v10517
      %v10540 = vpack.c.b16 %v10520, %v10519
      %v10541 = vpack.c.b16 %v10522, %v10521
      %v10542 = vpack.c.b16 %v10524, %v10523
      %v10543 = vpack.c.b16 %v10526, %v10525
      %v10544 = vpack.c.b16 %v10528, %v10527
      %v10546 = vsel %vm6854, %v10529, 0
      %v10549 = vsel %vm6854, %v10530, 0
      %v10552 = vsel %vm6854, %v10531, 0
      %v10555 = vsel %vm6854, %v10532, 0
      %v10558 = vsel %vm6854, %v10533, 0
      %v10561 = vsel %vm6854, %v10534, 0
      %v10564 = vsel %vm6854, %v10535, 0
      %v10567 = vsel %vm6854, %v10536, 0
      %v10570 = vsel %vm6854, %v10537, 0
      %v10573 = vsel %vm6854, %v10538, 0
      %v10576 = vsel %vm6854, %v10539, 0
      %v10579 = vsel %vm6854, %v10540, 0
      %v10582 = vsel %vm6854, %v10541, 0
      %v10585 = vsel %vm6854, %v10542, 0
      %v10588 = vsel %vm6854, %v10543, 0
      %v10591 = vsel %vm6854, %v10544, 0
      %v10594 = vsel %vm6903, %v10202, 0
      %10596 = vmatprep.subr.bf16.mxu0 0
      %10597 = vmatpush1.bf16.msra.mxu0 0
      %10598 = vmatprep.subr.bf16.mxu0 0
      %10599 = vmatpush1.bf16.msra.mxu0 0
      %10600 = vmatprep.subr.bf16.mxu0 0
      %10601 = vmatpush1.bf16.msra.mxu0 0
      %10602 = vmatprep.subr.bf16.mxu0 0
      %10603 = vmatpush1.bf16.msra.mxu0 0
      %10604 = vmatprep.subr.bf16.mxu0 0
      %10605 = vmatpush1.bf16.msra.mxu0 0
      %10606 = vmatprep.subr.bf16.mxu0 0
      %10607 = vmatpush1.bf16.msra.mxu0 0
      %10608 = vmatprep.subr.bf16.mxu0 0
      %10609 = vmatpush1.bf16.msra.mxu0 0
      %10610 = vmatprep.subr.bf16.mxu0 0
      %10611 = vmatpush1.bf16.msra.mxu0 %v10594
      %10612 = vmatprep.subr.bf16.mxu0 0
      %10613 = vmatpush2.bf16.msra.mxu0 0
      %10614 = vmatprep.subr.bf16.mxu0 0
      %10615 = vmatpush2.bf16.msra.mxu0 0
      %10616 = vmatprep.subr.bf16.mxu0 0
      %10617 = vmatpush2.bf16.msra.mxu0 0
      %10618 = vmatprep.subr.bf16.mxu0 0
      %10619 = vmatpush2.bf16.msra.mxu0 0
      %10620 = vmatprep.subr.bf16.mxu0 0
      %10621 = vmatpush2.bf16.msra.mxu0 0
      %10622 = vmatprep.subr.bf16.mxu0 0
      %10623 = vmatpush2.bf16.msra.mxu0 0
      %10624 = vmatprep.subr.bf16.mxu0 0
      %10625 = vmatpush2.bf16.msra.mxu0 0
      %10626 = vmatprep.subr.bf16.mxu0 0
      %10627 = vmatpush2.bf16.msra.mxu0 0
      %10628 = vmatprep.mubr.bf16.mxu0 0
      %10629 = vmatmul.mubr.bf16.gmra.mxu0 %v10546
      %v10630 = vpop.f32.mrf.mxu0
      %v10631 = vadd.f32 %v10371, %v10630
      %v10632 = vpop.f32.mrf.mxu0
      %v10633 = vpop.f32.mrf.mxu0
      %v10634 = vadd.f32 %v10374, %v10633
      %v10635 = vpop.f32.mrf.mxu0
      %10636 = vmatprep.mubr.bf16.mxu0 0
      %10637 = vmatmul.mubr.bf16.gmra.mxu0 %v10549
      %v10638 = vpop.f32.mrf.mxu0
      %v10639 = vadd.f32 %v10379, %v10638
      %v10640 = vpop.f32.mrf.mxu0
      %v10641 = vpop.f32.mrf.mxu0
      %v10642 = vadd.f32 %v10382, %v10641
      %v10643 = vpop.f32.mrf.mxu0
      %10644 = vmatprep.mubr.bf16.mxu0 0
      %10645 = vmatmul.mubr.bf16.gmra.mxu0 %v10552
      %v10646 = vpop.f32.mrf.mxu0
      %v10647 = vadd.f32 %v10387, %v10646
      %v10648 = vpop.f32.mrf.mxu0
      %v10649 = vpop.f32.mrf.mxu0
      %v10650 = vadd.f32 %v10390, %v10649
      %v10651 = vpop.f32.mrf.mxu0
      %10652 = vmatprep.mubr.bf16.mxu0 0
      %10653 = vmatmul.mubr.bf16.gmra.mxu0 %v10555
      %v10654 = vpop.f32.mrf.mxu0
      %v10655 = vadd.f32 %v10395, %v10654
      %v10656 = vpop.f32.mrf.mxu0
      %v10657 = vpop.f32.mrf.mxu0
      %v10658 = vadd.f32 %v10398, %v10657
      %v10659 = vpop.f32.mrf.mxu0
      %10660 = vmatprep.mubr.bf16.mxu0 0
      %10661 = vmatmul.mubr.bf16.gmra.mxu0 %v10558
      %v10662 = vpop.f32.mrf.mxu0
      %v10663 = vadd.f32 %v10403, %v10662
      %v10664 = vpop.f32.mrf.mxu0
      %v10665 = vpop.f32.mrf.mxu0
      %v10666 = vadd.f32 %v10406, %v10665
      %v10667 = vpop.f32.mrf.mxu0
      %10668 = vmatprep.mubr.bf16.mxu0 0
      %10669 = vmatmul.mubr.bf16.gmra.mxu0 %v10561
      %v10670 = vpop.f32.mrf.mxu0
      %v10671 = vadd.f32 %v10411, %v10670
      %v10672 = vpop.f32.mrf.mxu0
      %v10673 = vpop.f32.mrf.mxu0
      %v10674 = vadd.f32 %v10414, %v10673
      %v10675 = vpop.f32.mrf.mxu0
      %10676 = vmatprep.mubr.bf16.mxu0 0
      %10677 = vmatmul.mubr.bf16.gmra.mxu0 %v10564
      %v10678 = vpop.f32.mrf.mxu0
      %v10679 = vadd.f32 %v10419, %v10678
      %v10680 = vpop.f32.mrf.mxu0
      %v10681 = vpop.f32.mrf.mxu0
      %v10682 = vadd.f32 %v10422, %v10681
      %v10683 = vpop.f32.mrf.mxu0
      %10684 = vmatprep.mubr.bf16.mxu0 0
      %10685 = vmatmul.mubr.bf16.gmra.mxu0 %v10567
      %v10686 = vpop.f32.mrf.mxu0
      %v10687 = vadd.f32 %v10427, %v10686
      %v10688 = vpop.f32.mrf.mxu0
      %v10689 = vpop.f32.mrf.mxu0
      %v10690 = vadd.f32 %v10430, %v10689
      %v10691 = vpop.f32.mrf.mxu0
      %10692 = vmatprep.mubr.bf16.mxu0 0
      %10693 = vmatmul.mubr.bf16.gmra.mxu0 %v10570
      %v10694 = vpop.f32.mrf.mxu0
      %v10695 = vadd.f32 %v10435, %v10694
      %v10696 = vpop.f32.mrf.mxu0
      %v10697 = vpop.f32.mrf.mxu0
      %v10698 = vadd.f32 %v10438, %v10697
      %v10699 = vpop.f32.mrf.mxu0
      %10700 = vmatprep.mubr.bf16.mxu0 0
      %10701 = vmatmul.mubr.bf16.gmra.mxu0 %v10573
      %v10702 = vpop.f32.mrf.mxu0
      %v10703 = vadd.f32 %v10443, %v10702
      %v10704 = vpop.f32.mrf.mxu0
      %v10705 = vpop.f32.mrf.mxu0
      %v10706 = vadd.f32 %v10446, %v10705
      %v10707 = vpop.f32.mrf.mxu0
      %10708 = vmatprep.mubr.bf16.mxu0 0
      %10709 = vmatmul.mubr.bf16.gmra.mxu0 %v10576
      %v10710 = vpop.f32.mrf.mxu0
      %v10711 = vadd.f32 %v10451, %v10710
      %v10712 = vpop.f32.mrf.mxu0
      %v10713 = vpop.f32.mrf.mxu0
      %v10714 = vadd.f32 %v10454, %v10713
      %v10715 = vpop.f32.mrf.mxu0
      %10716 = vmatprep.mubr.bf16.mxu0 0
      %10717 = vmatmul.mubr.bf16.gmra.mxu0 %v10579
      %v10718 = vpop.f32.mrf.mxu0
      %v10719 = vadd.f32 %v10459, %v10718
      %v10720 = vpop.f32.mrf.mxu0
      %v10721 = vpop.f32.mrf.mxu0
      %v10722 = vadd.f32 %v10462, %v10721
      %v10723 = vpop.f32.mrf.mxu0
      %10724 = vmatprep.mubr.bf16.mxu0 0
      %10725 = vmatmul.mubr.bf16.gmra.mxu0 %v10582
      %v10726 = vpop.f32.mrf.mxu0
      %v10727 = vadd.f32 %v10467, %v10726
      %v10728 = vpop.f32.mrf.mxu0
      %v10729 = vpop.f32.mrf.mxu0
      %v10730 = vadd.f32 %v10470, %v10729
      %v10731 = vpop.f32.mrf.mxu0
      %10732 = vmatprep.mubr.bf16.mxu0 0
      %10733 = vmatmul.mubr.bf16.gmra.mxu0 %v10585
      %v10734 = vpop.f32.mrf.mxu0
      %v10735 = vadd.f32 %v10475, %v10734
      %v10736 = vpop.f32.mrf.mxu0
      %v10737 = vpop.f32.mrf.mxu0
      %v10738 = vadd.f32 %v10478, %v10737
      %v10739 = vpop.f32.mrf.mxu0
      %10740 = vmatprep.mubr.bf16.mxu0 0
      %10741 = vmatmul.mubr.bf16.gmra.mxu0 %v10588
      %v10742 = vpop.f32.mrf.mxu0
      %v10743 = vadd.f32 %v10483, %v10742
      %v10744 = vpop.f32.mrf.mxu0
      %v10745 = vpop.f32.mrf.mxu0
      %v10746 = vadd.f32 %v10486, %v10745
      %v10747 = vpop.f32.mrf.mxu0
      %10748 = vmatprep.mubr.bf16.mxu0 0
      %10749 = vmatmul.mubr.bf16.gmra.mxu0 %v10591
      %v10750 = vpop.f32.mrf.mxu0
      %v10751 = vadd.f32 %v10491, %v10750
      %v10752 = vpop.f32.mrf.mxu0
      %v10753 = vpop.f32.mrf.mxu0
      %v10754 = vadd.f32 %v10494, %v10753
      %v10755 = vpop.f32.mrf.mxu0
      %10756 = vdwg.mxu0
      %v10757 = vld [vmem:[%s9800 + $0x8] sm:$0xf]
      %v10758 = vld [vmem:[%s9800 + $0xc] sm:$0xf]
      %v10759 = vld [vmem:[%s9800 + $0x10] sm:$0x1]
      %v10760 = vld [vmem:[%s9800 + $0x1c] sm:$0xf]
      %v10761 = vld [vmem:[%s9800 + $0x20] sm:$0xf]
      %v10762 = vld [vmem:[%s9800 + $0x24] sm:$0x1]
      %v10763 = vld [vmem:[%s9800 + $0x30] sm:$0xf]
      %v10764 = vld [vmem:[%s9800 + $0x34] sm:$0xf]
      %v10765 = vld [vmem:[%s9800 + $0x38] sm:$0x1]
      %v10766 = vld [vmem:[%s9800 + $0x44] sm:$0xf]
      %v10767 = vld [vmem:[%s9800 + $0x48] sm:$0xf]
      %v10768 = vld [vmem:[%s9800 + $0x4c] sm:$0x1]
      %v10769 = vld [vmem:[%s9800 + $0x58] sm:$0xf]
      %v10770 = vld [vmem:[%s9800 + $0x5c] sm:$0xf]
      %v10771 = vld [vmem:[%s9800 + $0x60] sm:$0x1]
      %v10772 = vld [vmem:[%s9800 + $0x6c] sm:$0xf]
      %v10773 = vld [vmem:[%s9800 + $0x70] sm:$0xf]
      %v10774 = vld [vmem:[%s9800 + $0x74] sm:$0x1]
      %v10775 = vld [vmem:[%s9800 + $0x80] sm:$0xf]
      %v10776 = vld [vmem:[%s9800 + $0x84] sm:$0xf]
      %v10777 = vld [vmem:[%s9800 + $0x88] sm:$0x1]
      %v10778 = vld [vmem:[%s9800 + $0x94] sm:$0xf]
      %v10779 = vld [vmem:[%s9800 + $0x98] sm:$0xf]
      %v10780 = vld [vmem:[%s9800 + $0x9c] sm:$0x1]
      %v10781 = vld [vmem:[%s9800 + $0xa8] sm:$0xf]
      %v10782 = vld [vmem:[%s9800 + $0xac] sm:$0xf]
      %v10783 = vld [vmem:[%s9800 + $0xb0] sm:$0x1]
      %v10784 = vld [vmem:[%s9800 + $0xbc] sm:$0xf]
      %v10785 = vld [vmem:[%s9800 + $0xc0] sm:$0xf]
      %v10786 = vld [vmem:[%s9800 + $0xc4] sm:$0x1]
      %v10787 = vld [vmem:[%s9800 + $0xd0] sm:$0xf]
      %v10788 = vld [vmem:[%s9800 + $0xd4] sm:$0xf]
      %v10789 = vld [vmem:[%s9800 + $0xd8] sm:$0x1]
      %v10790 = vld [vmem:[%s9800 + $0xe4] sm:$0xf]
      %v10791 = vld [vmem:[%s9800 + $0xe8] sm:$0xf]
      %v10792 = vld [vmem:[%s9800 + $0xec] sm:$0x1]
      %v10793 = vld [vmem:[%s9800 + $0xf8] sm:$0xf]
      %v10794 = vld [vmem:[%s9800 + $0xfc] sm:$0xf]
      %v10795 = vld [vmem:[%s9800 + $0x100] sm:$0x1]
      %v10796 = vld [vmem:[%s9800 + $0x10c] sm:$0xf]
      %v10797 = vld [vmem:[%s9800 + $0x110] sm:$0xf]
      %v10798 = vld [vmem:[%s9800 + $0x114] sm:$0x1]
      %v10799 = vld [vmem:[%s9800 + $0x120] sm:$0xf]
      %v10800 = vld [vmem:[%s9800 + $0x124] sm:$0xf]
      %v10801 = vld [vmem:[%s9800 + $0x128] sm:$0x1]
      %v10802 = vld [vmem:[%s9800 + $0x134] sm:$0xf]
      %v10803 = vld [vmem:[%s9800 + $0x138] sm:$0xf]
      %v10804 = vld [vmem:[%s9800 + $0x13c] sm:$0x1]
      %v10806 = vshrl.u32 %v10757, 16
      %v10808 = vrot.slane %v10806, 4
      %v10809 = vshll.u32 %v10757, 16
      %v10811 = vrot.slane %v10809, 5
      %v10812 = vor.u32 %v10808, %v10811
      %v10813 = vrot.slane %v10812, 4
      %v10815 = vshll.u32 %v10758, 16
      %v10817 = vrot.slane %v10815, 5
      %v10818 = vsel %vm1961, %v10813, %v10817
      %v10819 = vshrl.u32 %v10758, 16
      %v10821 = vrot.slane %v10819, 4
      %v10822 = vor.u32 %v10821, %v10817
      %v10823 = vrot.slane %v10822, 4
      %v10825 = vshll.u32 %v10759, 16
      %v10827 = vrot.slane %v10825, 5
      %v10828 = vsel %vm1961, %v10823, %v10827
      %v10830 = vshrl.u32 %v10760, 16
      %v10832 = vrot.slane %v10830, 4
      %v10833 = vshll.u32 %v10760, 16
      %v10835 = vrot.slane %v10833, 5
      %v10836 = vor.u32 %v10832, %v10835
      %v10837 = vrot.slane %v10836, 4
      %v10839 = vshll.u32 %v10761, 16
      %v10841 = vrot.slane %v10839, 5
      %v10842 = vsel %vm1961, %v10837, %v10841
      %v10843 = vshrl.u32 %v10761, 16
      %v10845 = vrot.slane %v10843, 4
      %v10846 = vor.u32 %v10845, %v10841
      %v10847 = vrot.slane %v10846, 4
      %v10849 = vshll.u32 %v10762, 16
      %v10851 = vrot.slane %v10849, 5
      %v10852 = vsel %vm1961, %v10847, %v10851
      %v10854 = vshrl.u32 %v10763, 16
      %v10856 = vrot.slane %v10854, 4
      %v10857 = vshll.u32 %v10763, 16
      %v10859 = vrot.slane %v10857, 5
      %v10860 = vor.u32 %v10856, %v10859
      %v10861 = vrot.slane %v10860, 4
      %v10863 = vshll.u32 %v10764, 16
      %v10865 = vrot.slane %v10863, 5
      %v10866 = vsel %vm1961, %v10861, %v10865
      %v10867 = vshrl.u32 %v10764, 16
      %v10869 = vrot.slane %v10867, 4
      %v10870 = vor.u32 %v10869, %v10865
      %v10871 = vrot.slane %v10870, 4
      %v10873 = vshll.u32 %v10765, 16
      %v10875 = vrot.slane %v10873, 5
      %v10876 = vsel %vm1961, %v10871, %v10875
      %v10878 = vshrl.u32 %v10766, 16
      %v10880 = vrot.slane %v10878, 4
      %v10881 = vshll.u32 %v10766, 16
      %v10883 = vrot.slane %v10881, 5
      %v10884 = vor.u32 %v10880, %v10883
      %v10885 = vrot.slane %v10884, 4
      %v10887 = vshll.u32 %v10767, 16
      %v10889 = vrot.slane %v10887, 5
      %v10890 = vsel %vm1961, %v10885, %v10889
      %v10891 = vshrl.u32 %v10767, 16
      %v10893 = vrot.slane %v10891, 4
      %v10894 = vor.u32 %v10893, %v10889
      %v10895 = vrot.slane %v10894, 4
      %v10897 = vshll.u32 %v10768, 16
      %v10899 = vrot.slane %v10897, 5
      %v10900 = vsel %vm1961, %v10895, %v10899
      %v10902 = vshrl.u32 %v10769, 16
      %v10904 = vrot.slane %v10902, 4
      %v10905 = vshll.u32 %v10769, 16
      %v10907 = vrot.slane %v10905, 5
      %v10908 = vor.u32 %v10904, %v10907
      %v10909 = vrot.slane %v10908, 4
      %v10911 = vshll.u32 %v10770, 16
      %v10913 = vrot.slane %v10911, 5
      %v10914 = vsel %vm1961, %v10909, %v10913
      %v10915 = vshrl.u32 %v10770, 16
      %v10917 = vrot.slane %v10915, 4
      %v10918 = vor.u32 %v10917, %v10913
      %v10919 = vrot.slane %v10918, 4
      %v10921 = vshll.u32 %v10771, 16
      %v10923 = vrot.slane %v10921, 5
      %v10924 = vsel %vm1961, %v10919, %v10923
      %v10926 = vshrl.u32 %v10772, 16
      %v10928 = vrot.slane %v10926, 4
      %v10929 = vshll.u32 %v10772, 16
      %v10931 = vrot.slane %v10929, 5
      %v10932 = vor.u32 %v10928, %v10931
      %v10933 = vrot.slane %v10932, 4
      %v10935 = vshll.u32 %v10773, 16
      %v10937 = vrot.slane %v10935, 5
      %v10938 = vsel %vm1961, %v10933, %v10937
      %v10939 = vshrl.u32 %v10773, 16
      %v10941 = vrot.slane %v10939, 4
      %v10942 = vor.u32 %v10941, %v10937
      %v10943 = vrot.slane %v10942, 4
      %v10945 = vshll.u32 %v10774, 16
      %v10947 = vrot.slane %v10945, 5
      %v10948 = vsel %vm1961, %v10943, %v10947
      %v10950 = vshrl.u32 %v10775, 16
      %v10952 = vrot.slane %v10950, 4
      %v10953 = vshll.u32 %v10775, 16
      %v10955 = vrot.slane %v10953, 5
      %v10956 = vor.u32 %v10952, %v10955
      %v10957 = vrot.slane %v10956, 4
      %v10959 = vshll.u32 %v10776, 16
      %v10961 = vrot.slane %v10959, 5
      %v10962 = vsel %vm1961, %v10957, %v10961
      %v10963 = vshrl.u32 %v10776, 16
      %v10965 = vrot.slane %v10963, 4
      %v10966 = vor.u32 %v10965, %v10961
      %v10967 = vrot.slane %v10966, 4
      %v10969 = vshll.u32 %v10777, 16
      %v10971 = vrot.slane %v10969, 5
      %v10972 = vsel %vm1961, %v10967, %v10971
      %v10974 = vshrl.u32 %v10778, 16
      %v10976 = vrot.slane %v10974, 4
      %v10977 = vshll.u32 %v10778, 16
      %v10979 = vrot.slane %v10977, 5
      %v10980 = vor.u32 %v10976, %v10979
      %v10981 = vrot.slane %v10980, 4
      %v10983 = vshll.u32 %v10779, 16
      %v10985 = vrot.slane %v10983, 5
      %v10986 = vsel %vm1961, %v10981, %v10985
      %v10987 = vshrl.u32 %v10779, 16
      %v10989 = vrot.slane %v10987, 4
      %v10990 = vor.u32 %v10989, %v10985
      %v10991 = vrot.slane %v10990, 4
      %v10993 = vshll.u32 %v10780, 16
      %v10995 = vrot.slane %v10993, 5
      %v10996 = vsel %vm1961, %v10991, %v10995
      %v10998 = vshrl.u32 %v10781, 16
      %v11000 = vrot.slane %v10998, 4
      %v11001 = vshll.u32 %v10781, 16
      %v11003 = vrot.slane %v11001, 5
      %v11004 = vor.u32 %v11000, %v11003
      %v11005 = vrot.slane %v11004, 4
      %v11007 = vshll.u32 %v10782, 16
      %v11009 = vrot.slane %v11007, 5
      %v11010 = vsel %vm1961, %v11005, %v11009
      %v11011 = vshrl.u32 %v10782, 16
      %v11013 = vrot.slane %v11011, 4
      %v11014 = vor.u32 %v11013, %v11009
      %v11015 = vrot.slane %v11014, 4
      %v11017 = vshll.u32 %v10783, 16
      %v11019 = vrot.slane %v11017, 5
      %v11020 = vsel %vm1961, %v11015, %v11019
      %v11022 = vshrl.u32 %v10784, 16
      %v11024 = vrot.slane %v11022, 4
      %v11025 = vshll.u32 %v10784, 16
      %v11027 = vrot.slane %v11025, 5
      %v11028 = vor.u32 %v11024, %v11027
      %v11029 = vrot.slane %v11028, 4
      %v11031 = vshll.u32 %v10785, 16
      %v11033 = vrot.slane %v11031, 5
      %v11034 = vsel %vm1961, %v11029, %v11033
      %v11035 = vshrl.u32 %v10785, 16
      %v11037 = vrot.slane %v11035, 4
      %v11038 = vor.u32 %v11037, %v11033
      %v11039 = vrot.slane %v11038, 4
      %v11041 = vshll.u32 %v10786, 16
      %v11043 = vrot.slane %v11041, 5
      %v11044 = vsel %vm1961, %v11039, %v11043
      %v11046 = vshrl.u32 %v10787, 16
      %v11048 = vrot.slane %v11046, 4
      %v11049 = vshll.u32 %v10787, 16
      %v11051 = vrot.slane %v11049, 5
      %v11052 = vor.u32 %v11048, %v11051
      %v11053 = vrot.slane %v11052, 4
      %v11055 = vshll.u32 %v10788, 16
      %v11057 = vrot.slane %v11055, 5
      %v11058 = vsel %vm1961, %v11053, %v11057
      %v11059 = vshrl.u32 %v10788, 16
      %v11061 = vrot.slane %v11059, 4
      %v11062 = vor.u32 %v11061, %v11057
      %v11063 = vrot.slane %v11062, 4
      %v11065 = vshll.u32 %v10789, 16
      %v11067 = vrot.slane %v11065, 5
      %v11068 = vsel %vm1961, %v11063, %v11067
      %v11070 = vshrl.u32 %v10790, 16
      %v11072 = vrot.slane %v11070, 4
      %v11073 = vshll.u32 %v10790, 16
      %v11075 = vrot.slane %v11073, 5
      %v11076 = vor.u32 %v11072, %v11075
      %v11077 = vrot.slane %v11076, 4
      %v11079 = vshll.u32 %v10791, 16
      %v11081 = vrot.slane %v11079, 5
      %v11082 = vsel %vm1961, %v11077, %v11081
      %v11083 = vshrl.u32 %v10791, 16
      %v11085 = vrot.slane %v11083, 4
      %v11086 = vor.u32 %v11085, %v11081
      %v11087 = vrot.slane %v11086, 4
      %v11089 = vshll.u32 %v10792, 16
      %v11091 = vrot.slane %v11089, 5
      %v11092 = vsel %vm1961, %v11087, %v11091
      %v11094 = vshrl.u32 %v10793, 16
      %v11096 = vrot.slane %v11094, 4
      %v11097 = vshll.u32 %v10793, 16
      %v11099 = vrot.slane %v11097, 5
      %v11100 = vor.u32 %v11096, %v11099
      %v11101 = vrot.slane %v11100, 4
      %v11103 = vshll.u32 %v10794, 16
      %v11105 = vrot.slane %v11103, 5
      %v11106 = vsel %vm1961, %v11101, %v11105
      %v11107 = vshrl.u32 %v10794, 16
      %v11109 = vrot.slane %v11107, 4
      %v11110 = vor.u32 %v11109, %v11105
      %v11111 = vrot.slane %v11110, 4
      %v11113 = vshll.u32 %v10795, 16
      %v11115 = vrot.slane %v11113, 5
      %v11116 = vsel %vm1961, %v11111, %v11115
      %v11118 = vshrl.u32 %v10796, 16
      %v11120 = vrot.slane %v11118, 4
      %v11121 = vshll.u32 %v10796, 16
      %v11123 = vrot.slane %v11121, 5
      %v11124 = vor.u32 %v11120, %v11123
      %v11125 = vrot.slane %v11124, 4
      %v11127 = vshll.u32 %v10797, 16
      %v11129 = vrot.slane %v11127, 5
      %v11130 = vsel %vm1961, %v11125, %v11129
      %v11131 = vshrl.u32 %v10797, 16
      %v11133 = vrot.slane %v11131, 4
      %v11134 = vor.u32 %v11133, %v11129
      %v11135 = vrot.slane %v11134, 4
      %v11137 = vshll.u32 %v10798, 16
      %v11139 = vrot.slane %v11137, 5
      %v11140 = vsel %vm1961, %v11135, %v11139
      %v11142 = vshrl.u32 %v10799, 16
      %v11144 = vrot.slane %v11142, 4
      %v11145 = vshll.u32 %v10799, 16
      %v11147 = vrot.slane %v11145, 5
      %v11148 = vor.u32 %v11144, %v11147
      %v11149 = vrot.slane %v11148, 4
      %v11151 = vshll.u32 %v10800, 16
      %v11153 = vrot.slane %v11151, 5
      %v11154 = vsel %vm1961, %v11149, %v11153
      %v11155 = vshrl.u32 %v10800, 16
      %v11157 = vrot.slane %v11155, 4
      %v11158 = vor.u32 %v11157, %v11153
      %v11159 = vrot.slane %v11158, 4
      %v11161 = vshll.u32 %v10801, 16
      %v11163 = vrot.slane %v11161, 5
      %v11164 = vsel %vm1961, %v11159, %v11163
      %v11166 = vshrl.u32 %v10802, 16
      %v11168 = vrot.slane %v11166, 4
      %v11169 = vshll.u32 %v10802, 16
      %v11171 = vrot.slane %v11169, 5
      %v11172 = vor.u32 %v11168, %v11171
      %v11173 = vrot.slane %v11172, 4
      %v11175 = vshll.u32 %v10803, 16
      %v11177 = vrot.slane %v11175, 5
      %v11178 = vsel %vm1961, %v11173, %v11177
      %v11179 = vshrl.u32 %v10803, 16
      %v11181 = vrot.slane %v11179, 4
      %v11182 = vor.u32 %v11181, %v11177
      %v11183 = vrot.slane %v11182, 4
      %v11185 = vshll.u32 %v10804, 16
      %v11187 = vrot.slane %v11185, 5
      %v11188 = vsel %vm1961, %v11183, %v11187
      %s11189 = scalar_lea.vmem %s5, 16
      %v11190 = vld [vmem:[%s11189] sm:$0x3]
      %v11191 = vunpack.c.l.b16 %v10818
      %v11192 = vunpack.c.l.b16 %v10828
      %v11193 = vunpack.c.l.b16 %v10842
      %v11194 = vunpack.c.l.b16 %v10852
      %v11195 = vunpack.c.l.b16 %v10866
      %v11196 = vunpack.c.l.b16 %v10876
      %v11197 = vunpack.c.l.b16 %v10890
      %v11198 = vunpack.c.l.b16 %v10900
      %v11199 = vunpack.c.l.b16 %v10914
      %v11200 = vunpack.c.l.b16 %v10924
      %v11201 = vunpack.c.l.b16 %v10938
      %v11202 = vunpack.c.l.b16 %v10948
      %v11203 = vunpack.c.l.b16 %v10962
      %v11204 = vunpack.c.l.b16 %v10972
      %v11205 = vunpack.c.l.b16 %v10986
      %v11206 = vunpack.c.l.b16 %v10996
      %v11207 = vunpack.c.l.b16 %v11010
      %v11208 = vunpack.c.l.b16 %v11020
      %v11209 = vunpack.c.l.b16 %v11034
      %v11210 = vunpack.c.l.b16 %v11044
      %v11211 = vunpack.c.l.b16 %v11058
      %v11212 = vunpack.c.l.b16 %v11068
      %v11213 = vunpack.c.l.b16 %v11082
      %v11214 = vunpack.c.l.b16 %v11092
      %v11215 = vunpack.c.l.b16 %v11106
      %v11216 = vunpack.c.l.b16 %v11116
      %v11217 = vunpack.c.l.b16 %v11130
      %v11218 = vunpack.c.l.b16 %v11140
      %v11219 = vunpack.c.l.b16 %v11154
      %v11220 = vunpack.c.l.b16 %v11164
      %v11221 = vunpack.c.l.b16 %v11178
      %v11222 = vunpack.c.l.b16 %v11188
      %v11223 = vpack.c.b16 %v11192, %v11191
      %v11224 = vpack.c.b16 %v11194, %v11193
      %v11225 = vpack.c.b16 %v11196, %v11195
      %v11226 = vpack.c.b16 %v11198, %v11197
      %v11227 = vpack.c.b16 %v11200, %v11199
      %v11228 = vpack.c.b16 %v11202, %v11201
      %v11229 = vpack.c.b16 %v11204, %v11203
      %v11230 = vpack.c.b16 %v11206, %v11205
      %v11231 = vpack.c.b16 %v11208, %v11207
      %v11232 = vpack.c.b16 %v11210, %v11209
      %v11233 = vpack.c.b16 %v11212, %v11211
      %v11234 = vpack.c.b16 %v11214, %v11213
      %v11235 = vpack.c.b16 %v11216, %v11215
      %v11236 = vpack.c.b16 %v11218, %v11217
      %v11237 = vpack.c.b16 %v11220, %v11219
      %v11238 = vpack.c.b16 %v11222, %v11221
      %v11240 = vsel %vm6854, %v11223, 0
      %v11243 = vsel %vm6854, %v11224, 0
      %v11246 = vsel %vm6854, %v11225, 0
      %v11249 = vsel %vm6854, %v11226, 0
      %v11252 = vsel %vm6854, %v11227, 0
      %v11255 = vsel %vm6854, %v11228, 0
      %v11258 = vsel %vm6854, %v11229, 0
      %v11261 = vsel %vm6854, %v11230, 0
      %v11264 = vsel %vm6854, %v11231, 0
      %v11267 = vsel %vm6854, %v11232, 0
      %v11270 = vsel %vm6854, %v11233, 0
      %v11273 = vsel %vm6854, %v11234, 0
      %v11276 = vsel %vm6854, %v11235, 0
      %v11279 = vsel %vm6854, %v11236, 0
      %v11282 = vsel %vm6854, %v11237, 0
      %v11285 = vsel %vm6854, %v11238, 0
      %v11288 = vsel %vm6903, %v11190, 0
      %11290 = vmatprep.subr.bf16.mxu0 0
      %11291 = vmatpush1.bf16.msra.mxu0 0
      %11292 = vmatprep.subr.bf16.mxu0 0
      %11293 = vmatpush1.bf16.msra.mxu0 0
      %11294 = vmatprep.subr.bf16.mxu0 0
      %11295 = vmatpush1.bf16.msra.mxu0 0
      %11296 = vmatprep.subr.bf16.mxu0 0
      %11297 = vmatpush1.bf16.msra.mxu0 0
      %11298 = vmatprep.subr.bf16.mxu0 0
      %11299 = vmatpush1.bf16.msra.mxu0 0
      %11300 = vmatprep.subr.bf16.mxu0 0
      %11301 = vmatpush1.bf16.msra.mxu0 0
      %11302 = vmatprep.subr.bf16.mxu0 0
      %11303 = vmatpush1.bf16.msra.mxu0 0
      %11304 = vmatprep.subr.bf16.mxu0 0
      %11305 = vmatpush1.bf16.msra.mxu0 %v11288
      %11306 = vmatprep.subr.bf16.mxu0 0
      %11307 = vmatpush2.bf16.msra.mxu0 0
      %11308 = vmatprep.subr.bf16.mxu0 0
      %11309 = vmatpush2.bf16.msra.mxu0 0
      %11310 = vmatprep.subr.bf16.mxu0 0
      %11311 = vmatpush2.bf16.msra.mxu0 0
      %11312 = vmatprep.subr.bf16.mxu0 0
      %11313 = vmatpush2.bf16.msra.mxu0 0
      %11314 = vmatprep.subr.bf16.mxu0 0
      %11315 = vmatpush2.bf16.msra.mxu0 0
      %11316 = vmatprep.subr.bf16.mxu0 0
      %11317 = vmatpush2.bf16.msra.mxu0 0
      %11318 = vmatprep.subr.bf16.mxu0 0
      %11319 = vmatpush2.bf16.msra.mxu0 0
      %11320 = vmatprep.subr.bf16.mxu0 0
      %11321 = vmatpush2.bf16.msra.mxu0 0
      %11322 = vmatprep.mubr.bf16.mxu0 0
      %11323 = vmatmul.mubr.bf16.gmra.mxu0 %v11240
      %v11324 = vpop.f32.mrf.mxu0
      %v11325 = vadd.f32 0.0, %v11324
      %v11326 = vpop.f32.mrf.mxu0
      %v11327 = vpop.f32.mrf.mxu0
      %v11328 = vadd.f32 0.0, %v11327
      %v11329 = vpop.f32.mrf.mxu0
      %11330 = vmatprep.mubr.bf16.mxu0 0
      %11331 = vmatmul.mubr.bf16.gmra.mxu0 %v11243
      %v11332 = vpop.f32.mrf.mxu0
      %v11333 = vadd.f32 0.0, %v11332
      %v11334 = vpop.f32.mrf.mxu0
      %v11335 = vpop.f32.mrf.mxu0
      %v11336 = vadd.f32 0.0, %v11335
      %v11337 = vpop.f32.mrf.mxu0
      %11338 = vmatprep.mubr.bf16.mxu0 0
      %11339 = vmatmul.mubr.bf16.gmra.mxu0 %v11246
      %v11340 = vpop.f32.mrf.mxu0
      %v11341 = vadd.f32 0.0, %v11340
      %v11342 = vpop.f32.mrf.mxu0
      %v11343 = vpop.f32.mrf.mxu0
      %v11344 = vadd.f32 0.0, %v11343
      %v11345 = vpop.f32.mrf.mxu0
      %11346 = vmatprep.mubr.bf16.mxu0 0
      %11347 = vmatmul.mubr.bf16.gmra.mxu0 %v11249
      %v11348 = vpop.f32.mrf.mxu0
      %v11349 = vadd.f32 0.0, %v11348
      %v11350 = vpop.f32.mrf.mxu0
      %v11351 = vpop.f32.mrf.mxu0
      %v11352 = vadd.f32 0.0, %v11351
      %v11353 = vpop.f32.mrf.mxu0
      %11354 = vmatprep.mubr.bf16.mxu0 0
      %11355 = vmatmul.mubr.bf16.gmra.mxu0 %v11252
      %v11356 = vpop.f32.mrf.mxu0
      %v11357 = vadd.f32 0.0, %v11356
      %v11358 = vpop.f32.mrf.mxu0
      %v11359 = vpop.f32.mrf.mxu0
      %v11360 = vadd.f32 0.0, %v11359
      %v11361 = vpop.f32.mrf.mxu0
      %11362 = vmatprep.mubr.bf16.mxu0 0
      %11363 = vmatmul.mubr.bf16.gmra.mxu0 %v11255
      %v11364 = vpop.f32.mrf.mxu0
      %v11365 = vadd.f32 0.0, %v11364
      %v11366 = vpop.f32.mrf.mxu0
      %v11367 = vpop.f32.mrf.mxu0
      %v11368 = vadd.f32 0.0, %v11367
      %v11369 = vpop.f32.mrf.mxu0
      %11370 = vmatprep.mubr.bf16.mxu0 0
      %11371 = vmatmul.mubr.bf16.gmra.mxu0 %v11258
      %v11372 = vpop.f32.mrf.mxu0
      %v11373 = vadd.f32 0.0, %v11372
      %v11374 = vpop.f32.mrf.mxu0
      %v11375 = vpop.f32.mrf.mxu0
      %v11376 = vadd.f32 0.0, %v11375
      %v11377 = vpop.f32.mrf.mxu0
      %11378 = vmatprep.mubr.bf16.mxu0 0
      %11379 = vmatmul.mubr.bf16.gmra.mxu0 %v11261
      %v11380 = vpop.f32.mrf.mxu0
      %v11381 = vadd.f32 0.0, %v11380
      %v11382 = vpop.f32.mrf.mxu0
      %v11383 = vpop.f32.mrf.mxu0
      %v11384 = vadd.f32 0.0, %v11383
      %v11385 = vpop.f32.mrf.mxu0
      %11386 = vmatprep.mubr.bf16.mxu0 0
      %11387 = vmatmul.mubr.bf16.gmra.mxu0 %v11264
      %v11388 = vpop.f32.mrf.mxu0
      %v11389 = vadd.f32 0.0, %v11388
      %v11390 = vpop.f32.mrf.mxu0
      %v11391 = vpop.f32.mrf.mxu0
      %v11392 = vadd.f32 0.0, %v11391
      %v11393 = vpop.f32.mrf.mxu0
      %11394 = vmatprep.mubr.bf16.mxu0 0
      %11395 = vmatmul.mubr.bf16.gmra.mxu0 %v11267
      %v11396 = vpop.f32.mrf.mxu0
      %v11397 = vadd.f32 0.0, %v11396
      %v11398 = vpop.f32.mrf.mxu0
      %v11399 = vpop.f32.mrf.mxu0
      %v11400 = vadd.f32 0.0, %v11399
      %v11401 = vpop.f32.mrf.mxu0
      %11402 = vmatprep.mubr.bf16.mxu0 0
      %11403 = vmatmul.mubr.bf16.gmra.mxu0 %v11270
      %v11404 = vpop.f32.mrf.mxu0
      %v11405 = vadd.f32 0.0, %v11404
      %v11406 = vpop.f32.mrf.mxu0
      %v11407 = vpop.f32.mrf.mxu0
      %v11408 = vadd.f32 0.0, %v11407
      %v11409 = vpop.f32.mrf.mxu0
      %11410 = vmatprep.mubr.bf16.mxu0 0
      %11411 = vmatmul.mubr.bf16.gmra.mxu0 %v11273
      %v11412 = vpop.f32.mrf.mxu0
      %v11413 = vadd.f32 0.0, %v11412
      %v11414 = vpop.f32.mrf.mxu0
      %v11415 = vpop.f32.mrf.mxu0
      %v11416 = vadd.f32 0.0, %v11415
      %v11417 = vpop.f32.mrf.mxu0
      %11418 = vmatprep.mubr.bf16.mxu0 0
      %11419 = vmatmul.mubr.bf16.gmra.mxu0 %v11276
      %v11420 = vpop.f32.mrf.mxu0
      %v11421 = vadd.f32 0.0, %v11420
      %v11422 = vpop.f32.mrf.mxu0
      %v11423 = vpop.f32.mrf.mxu0
      %v11424 = vadd.f32 0.0, %v11423
      %v11425 = vpop.f32.mrf.mxu0
      %11426 = vmatprep.mubr.bf16.mxu0 0
      %11427 = vmatmul.mubr.bf16.gmra.mxu0 %v11279
      %v11428 = vpop.f32.mrf.mxu0
      %v11429 = vadd.f32 0.0, %v11428
      %v11430 = vpop.f32.mrf.mxu0
      %v11431 = vpop.f32.mrf.mxu0
      %v11432 = vadd.f32 0.0, %v11431
      %v11433 = vpop.f32.mrf.mxu0
      %11434 = vmatprep.mubr.bf16.mxu0 0
      %11435 = vmatmul.mubr.bf16.gmra.mxu0 %v11282
      %v11436 = vpop.f32.mrf.mxu0
      %v11437 = vadd.f32 0.0, %v11436
      %v11438 = vpop.f32.mrf.mxu0
      %v11439 = vpop.f32.mrf.mxu0
      %v11440 = vadd.f32 0.0, %v11439
      %v11441 = vpop.f32.mrf.mxu0
      %11442 = vmatprep.mubr.bf16.mxu0 0
      %11443 = vmatmul.mubr.bf16.gmra.mxu0 %v11285
      %v11444 = vpop.f32.mrf.mxu0
      %v11445 = vadd.f32 0.0, %v11444
      %v11446 = vpop.f32.mrf.mxu0
      %v11447 = vpop.f32.mrf.mxu0
      %v11448 = vadd.f32 0.0, %v11447
      %v11449 = vpop.f32.mrf.mxu0
      %11450 = vdwg.mxu0
      %v11451 = vadd.f32 %v10631, %v11325
      %v11452 = vadd.f32 %v10634, %v11328
      %v11453 = vadd.f32 %v10639, %v11333
      %v11454 = vadd.f32 %v10642, %v11336
      %v11455 = vadd.f32 %v10647, %v11341
      %v11456 = vadd.f32 %v10650, %v11344
      %v11457 = vadd.f32 %v10655, %v11349
      %v11458 = vadd.f32 %v10658, %v11352
      %v11459 = vadd.f32 %v10663, %v11357
      %v11460 = vadd.f32 %v10666, %v11360
      %v11461 = vadd.f32 %v10671, %v11365
      %v11462 = vadd.f32 %v10674, %v11368
      %v11463 = vadd.f32 %v10679, %v11373
      %v11464 = vadd.f32 %v10682, %v11376
      %v11465 = vadd.f32 %v10687, %v11381
      %v11466 = vadd.f32 %v10690, %v11384
      %v11467 = vadd.f32 %v10695, %v11389
      %v11468 = vadd.f32 %v10698, %v11392
      %v11469 = vadd.f32 %v10703, %v11397
      %v11470 = vadd.f32 %v10706, %v11400
      %v11471 = vadd.f32 %v10711, %v11405
      %v11472 = vadd.f32 %v10714, %v11408
      %v11473 = vadd.f32 %v10719, %v11413
      %v11474 = vadd.f32 %v10722, %v11416
      %v11475 = vadd.f32 %v10727, %v11421
      %v11476 = vadd.f32 %v10730, %v11424
      %v11477 = vadd.f32 %v10735, %v11429
      %v11478 = vadd.f32 %v10738, %v11432
      %v11479 = vadd.f32 %v10743, %v11437
      %v11480 = vadd.f32 %v10746, %v11440
      %v11481 = vadd.f32 %v10751, %v11445
      %v11482 = vadd.f32 %v10754, %v11448
      %v11483 = vadd.f32 %v9768, %v11451
      %v11484 = vadd.f32 %v9769, %v11452
      %v11485 = vadd.f32 %v9770, %v11453
      %v11486 = vadd.f32 %v9771, %v11454
      %v11487 = vadd.f32 %v9772, %v11455
      %v11488 = vadd.f32 %v9773, %v11456
      %v11489 = vadd.f32 %v9774, %v11457
      %v11490 = vadd.f32 %v9775, %v11458
      %v11491 = vadd.f32 %v9776, %v11459
      %v11492 = vadd.f32 %v9777, %v11460
      %v11493 = vadd.f32 %v9778, %v11461
      %v11494 = vadd.f32 %v9779, %v11462
      %v11495 = vadd.f32 %v9780, %v11463
      %v11496 = vadd.f32 %v9781, %v11464
      %v11497 = vadd.f32 %v9782, %v11465
      %v11498 = vadd.f32 %v9783, %v11466
      %v11499 = vadd.f32 %v9784, %v11467
      %v11500 = vadd.f32 %v9785, %v11468
      %v11501 = vadd.f32 %v9786, %v11469
      %v11502 = vadd.f32 %v9787, %v11470
      %v11503 = vadd.f32 %v9788, %v11471
      %v11504 = vadd.f32 %v9789, %v11472
      %v11505 = vadd.f32 %v9790, %v11473
      %v11506 = vadd.f32 %v9791, %v11474
      %v11507 = vadd.f32 %v9792, %v11475
      %v11508 = vadd.f32 %v9793, %v11476
      %v11509 = vadd.f32 %v9794, %v11477
      %v11510 = vadd.f32 %v9795, %v11478
      %v11511 = vadd.f32 %v9796, %v11479
      %v11512 = vadd.f32 %v9797, %v11480
      %v11513 = vadd.f32 %v9798, %v11481
      %v11514 = vadd.f32 %v9799, %v11482
      %v11515 = vld [vmem:[%s6] sm:$0x1]
      %v11517 = vlaneseq
      %v11518 = vshrl.u32 %v11517, 7
      %v11519 = vsub.s32 0, %v11518
      %v11520 = vrot.slane %v11515, %v11519
      %v11522 = vmul.f32 %v11483, %v11520
      %v11523 = vmul.f32 %v11484, %v11520
      %v11524 = vmul.f32 %v11485, %v11520
      %v11525 = vmul.f32 %v11486, %v11520
      %v11526 = vmul.f32 %v11487, %v11520
      %v11527 = vmul.f32 %v11488, %v11520
      %v11528 = vmul.f32 %v11489, %v11520
      %v11529 = vmul.f32 %v11490, %v11520
      %v11530 = vmul.f32 %v11491, %v11520
      %v11531 = vmul.f32 %v11492, %v11520
      %v11532 = vmul.f32 %v11493, %v11520
      %v11533 = vmul.f32 %v11494, %v11520
      %v11534 = vmul.f32 %v11495, %v11520
      %v11535 = vmul.f32 %v11496, %v11520
      %v11536 = vmul.f32 %v11497, %v11520
      %v11537 = vmul.f32 %v11498, %v11520
      %v11538 = vmul.f32 %v11499, %v11520
      %v11539 = vmul.f32 %v11500, %v11520
      %v11540 = vmul.f32 %v11501, %v11520
      %v11541 = vmul.f32 %v11502, %v11520
      %v11542 = vmul.f32 %v11503, %v11520
      %v11543 = vmul.f32 %v11504, %v11520
      %v11544 = vmul.f32 %v11505, %v11520
      %v11545 = vmul.f32 %v11506, %v11520
      %v11546 = vmul.f32 %v11507, %v11520
      %v11547 = vmul.f32 %v11508, %v11520
      %v11548 = vmul.f32 %v11509, %v11520
      %v11549 = vmul.f32 %v11510, %v11520
      %v11550 = vmul.f32 %v11511, %v11520
      %v11551 = vmul.f32 %v11512, %v11520
      %v11552 = vmul.f32 %v11513, %v11520
      %v11553 = vmul.f32 %v11514, %v11520
      %v11554 = vld [vmem:[%s7] sm:$0x1]
      %v11556 = vlaneseq
      %v11557 = vshrl.u32 %v11556, 7
      %v11558 = vsub.s32 0, %v11557
      %v11559 = vrot.slane %v11554, %v11558
      %v11561 = vadd.f32 %v11522, %v11559
      %v11562 = vadd.f32 %v11523, %v11559
      %v11563 = vadd.f32 %v11524, %v11559
      %v11564 = vadd.f32 %v11525, %v11559
      %v11565 = vadd.f32 %v11526, %v11559
      %v11566 = vadd.f32 %v11527, %v11559
      %v11567 = vadd.f32 %v11528, %v11559
      %v11568 = vadd.f32 %v11529, %v11559
      %v11569 = vadd.f32 %v11530, %v11559
      %v11570 = vadd.f32 %v11531, %v11559
      %v11571 = vadd.f32 %v11532, %v11559
      %v11572 = vadd.f32 %v11533, %v11559
      %v11573 = vadd.f32 %v11534, %v11559
      %v11574 = vadd.f32 %v11535, %v11559
      %v11575 = vadd.f32 %v11536, %v11559
      %v11576 = vadd.f32 %v11537, %v11559
      %v11577 = vadd.f32 %v11538, %v11559
      %v11578 = vadd.f32 %v11539, %v11559
      %v11579 = vadd.f32 %v11540, %v11559
      %v11580 = vadd.f32 %v11541, %v11559
      %v11581 = vadd.f32 %v11542, %v11559
      %v11582 = vadd.f32 %v11543, %v11559
      %v11583 = vadd.f32 %v11544, %v11559
      %v11584 = vadd.f32 %v11545, %v11559
      %v11585 = vadd.f32 %v11546, %v11559
      %v11586 = vadd.f32 %v11547, %v11559
      %v11587 = vadd.f32 %v11548, %v11559
      %v11588 = vadd.f32 %v11549, %v11559
      %v11589 = vadd.f32 %v11550, %v11559
      %v11590 = vadd.f32 %v11551, %v11559
      %v11591 = vadd.f32 %v11552, %v11559
      %v11592 = vadd.f32 %v11553, %v11559
      %v11593 = vmax.f32 %v11561, 0.0
      %v11594 = vmax.f32 %v11562, 0.0
      %v11595 = vmax.f32 %v11563, 0.0
      %v11596 = vmax.f32 %v11564, 0.0
      %v11597 = vmax.f32 %v11565, 0.0
      %v11598 = vmax.f32 %v11566, 0.0
      %v11599 = vmax.f32 %v11567, 0.0
      %v11600 = vmax.f32 %v11568, 0.0
      %v11601 = vmax.f32 %v11569, 0.0
      %v11602 = vmax.f32 %v11570, 0.0
      %v11603 = vmax.f32 %v11571, 0.0
      %v11604 = vmax.f32 %v11572, 0.0
      %v11605 = vmax.f32 %v11573, 0.0
      %v11606 = vmax.f32 %v11574, 0.0
      %v11607 = vmax.f32 %v11575, 0.0
      %v11608 = vmax.f32 %v11576, 0.0
      %v11609 = vmax.f32 %v11577, 0.0
      %v11610 = vmax.f32 %v11578, 0.0
      %v11611 = vmax.f32 %v11579, 0.0
      %v11612 = vmax.f32 %v11580, 0.0
      %v11613 = vmax.f32 %v11581, 0.0
      %v11614 = vmax.f32 %v11582, 0.0
      %v11615 = vmax.f32 %v11583, 0.0
      %v11616 = vmax.f32 %v11584, 0.0
      %v11617 = vmax.f32 %v11585, 0.0
      %v11618 = vmax.f32 %v11586, 0.0
      %v11619 = vmax.f32 %v11587, 0.0
      %v11620 = vmax.f32 %v11588, 0.0
      %v11621 = vmax.f32 %v11589, 0.0
      %v11622 = vmax.f32 %v11590, 0.0
      %v11623 = vmax.f32 %v11591, 0.0
      %v11624 = vmax.f32 %v11592, 0.0
      %11625 = vst.msk [vmem:[%s325] sm:$0xff] %vm6854, %v11593
      %11626 = vst.msk [vmem:[%s325 + $0x8] sm:$0xff] %vm6854, %v11594
      %11627 = vst.msk [vmem:[%s325 + $0x10] sm:$0xff] %vm6854, %v11595
      %11628 = vst.msk [vmem:[%s325 + $0x18] sm:$0xff] %vm6854, %v11596
      %11629 = vst.msk [vmem:[%s325 + $0x20] sm:$0xff] %vm6854, %v11597
      %11630 = vst.msk [vmem:[%s325 + $0x28] sm:$0xff] %vm6854, %v11598
      %11631 = vst.msk [vmem:[%s325 + $0x30] sm:$0xff] %vm6854, %v11599
      %11632 = vst.msk [vmem:[%s325 + $0x38] sm:$0xff] %vm6854, %v11600
      %11633 = vst.msk [vmem:[%s325 + $0x40] sm:$0xff] %vm6854, %v11601
      %11634 = vst.msk [vmem:[%s325 + $0x48] sm:$0xff] %vm6854, %v11602
      %11635 = vst.msk [vmem:[%s325 + $0x50] sm:$0xff] %vm6854, %v11603
      %11636 = vst.msk [vmem:[%s325 + $0x58] sm:$0xff] %vm6854, %v11604
      %11637 = vst.msk [vmem:[%s325 + $0x60] sm:$0xff] %vm6854, %v11605
      %11638 = vst.msk [vmem:[%s325 + $0x68] sm:$0xff] %vm6854, %v11606
      %11639 = vst.msk [vmem:[%s325 + $0x70] sm:$0xff] %vm6854, %v11607
      %11640 = vst.msk [vmem:[%s325 + $0x78] sm:$0xff] %vm6854, %v11608
      %11641 = vst.msk [vmem:[%s325 + $0x80] sm:$0xff] %vm6854, %v11609
      %11642 = vst.msk [vmem:[%s325 + $0x88] sm:$0xff] %vm6854, %v11610
      %11643 = vst.msk [vmem:[%s325 + $0x90] sm:$0xff] %vm6854, %v11611
      %11644 = vst.msk [vmem:[%s325 + $0x98] sm:$0xff] %vm6854, %v11612
      %11645 = vst.msk [vmem:[%s325 + $0xa0] sm:$0xff] %vm6854, %v11613
      %11646 = vst.msk [vmem:[%s325 + $0xa8] sm:$0xff] %vm6854, %v11614
      %11647 = vst.msk [vmem:[%s325 + $0xb0] sm:$0xff] %vm6854, %v11615
      %11648 = vst.msk [vmem:[%s325 + $0xb8] sm:$0xff] %vm6854, %v11616
      %11649 = vst.msk [vmem:[%s325 + $0xc0] sm:$0xff] %vm6854, %v11617
      %11650 = vst.msk [vmem:[%s325 + $0xc8] sm:$0xff] %vm6854, %v11618
      %11651 = vst.msk [vmem:[%s325 + $0xd0] sm:$0xff] %vm6854, %v11619
      %11652 = vst.msk [vmem:[%s325 + $0xd8] sm:$0xff] %vm6854, %v11620
      %11653 = vst.msk [vmem:[%s325 + $0xe0] sm:$0xff] %vm6854, %v11621
      %11654 = vst.msk [vmem:[%s325 + $0xe8] sm:$0xff] %vm6854, %v11622
      %11655 = vst.msk [vmem:[%s325 + $0xf0] sm:$0xff] %vm6854, %v11623
      %11656 = vst.msk [vmem:[%s325 + $0xf8] sm:$0xff] %vm6854, %v11624
      %p11657 = scmp.lt.s32.totalorder %s19, 1
      %s11658 = scalar_select %p11657, %s19, 1
      %s11659 = smul.addr %s11658, 32
      %s11660 = smul.addr %s11659, 8
      %s11661 = scalar_lea.vmem %s8, %s11660
      // Predicated region
      $region53: #{up_forward.1} parent=51 // pred_check
        %p11662 = pneg %p215
      $region54: #{up_forward.1} parent=51 // pred_check_branch
        %11664 = sbr.rel (%p11662) target = $region56
      $region55: #{up_forward.1} parent=51 // pred_region
        _
      $region56: #{up_forward.1} parent=51 // pred_fallthru
        _
    $region52: #{up_forward.1} parent=5 // pred_fallthru
      _
    %p11665 = scmp.le.s32.totalorder 2, %s14
    // Predicated region
    $region57: #{up_forward.1} parent=5 // pred_check
      %p11666 = pneg %p11665
    $region58: #{up_forward.1} parent=5 // pred_check_branch
      %11668 = sbr.rel (%p11666) target = $region60
    $region59: #{up_forward.1} parent=5 // pred_region
      %s11669 = ssub.s32 %s14, 2
      // Predicated region
      $region61: #{up_forward.1} parent=59 // pred_check
        %p11670 = pneg %p221
      $region62: #{up_forward.1} parent=59 // pred_check_branch
        %11672 = sbr.rel (%p11670) target = $region64
      $region63: #{up_forward.1} parent=59 // pred_region
        %p11673 = scmp.lt.s32.totalorder %s20, 1
        %s11674 = scalar_select %p11673, %s20, 1
        %s11675 = smul.addr %s11674, 32
        %s11676 = smul.addr %s11675, 8
        %s11677 = scalar_lea.vmem %s8, %s11676
      $region64: #{up_forward.1} parent=59 // pred_fallthru
        _
    $region60: #{up_forward.1} parent=5 // pred_fallthru
      _
  $region6: #{up_forward.1} parent=0 // loop_footer
    %s18 = sadd.s32 1, %s14
  $region7: #{up_forward.1} parent=0 // loop_footer_branch
    %13 = sbr.rel target = $region3
  $region8: #{up_forward.1} parent=0 // loop_exit
    _

</llo_original>
